<compile_context>
chip_gen: v6e
topology: v6e:2x2x1
jax: 0.10.0
libtpu: 0.0.40
codegen_flags: <defaults>
</compile_context>

<pallas_src>
import functools

import jax
import jax.numpy as jnp
from jax.experimental import pallas as pl
from jax.experimental.pallas import tpu as pltpu

LN_EPS = 1e-5  # PyTorch nn.LayerNorm default


# ----------------------------------------------------------------------------
# Kernel 1: all transformer blocks + final LayerNorm.
# Grid = (batch_tiles [parallel], num_blocks [arbitrary/sequential]).
# Activations stay resident in a VMEM scratch across the layer loop.
# ----------------------------------------------------------------------------
def fused_blocks_kernel(
        x_ref,
        g1_ref, b1_ref, wq_ref, wk_ref, wv_ref, wo_ref, bo_ref,
        g2_ref, b2_ref, w1_ref, fb1_ref, w2_ref, fb2_ref,
        fg_ref, fbe_ref,
        o_ref,
        x_scr,
        *, batch_tile, seq_len, num_heads, head_size):
    layer = pl.program_id(1)
    Bt, T, H, D = batch_tile, seq_len, num_heads, head_size

    # Load the row slab into the resident VMEM scratch on the first layer.
    @pl.when(layer == 0)
    def _():
        x_scr[...] = x_ref[...]

    x = x_scr[...]                                   # (N, E) f32
    N, E = x.shape
    G = H * Bt

    # Shared LayerNorm statistics: ln1 and ln2 normalize the same x (parallel
    # residual in the reference Block); only the (gamma, beta) affines differ.
    mu = jnp.mean(x, axis=-1, keepdims=True)
    xc = x - mu
    var = jnp.mean(xc * xc, axis=-1, keepdims=True)
    xn = xc * jax.lax.rsqrt(var + LN_EPS)
    ln1 = (xn * g1_ref[0] + b1_ref[0]).astype(jnp.bfloat16)
    ln2 = (xn * g2_ref[0] + b2_ref[0]).astype(jnp.bfloat16)

    # ------------------ multi-head self-attention branch --------------------
    # Head-major projections via head-batched matmuls against (H, E, D)
    # weights: no lane-splitting reshape of the 128-lane E dim.
    ln1h = jnp.broadcast_to(ln1[None], (H, N, E))
    q = jnp.einsum('hne,hed->hnd', ln1h, wq_ref[0],
                   preferred_element_type=jnp.float32)           # (H, N, D)
    k = jnp.einsum('hne,hed->hnd', ln1h, wk_ref[0],
                   preferred_element_type=jnp.float32)
    v = jnp.einsum('hne,hed->hnd', ln1h, wv_ref[0],
                   preferred_element_type=jnp.float32)
    q = q * (float(D) ** -0.5)          # fold 1/sqrt(head_size) into q

    # (H, Bt*T, D) -> (H*Bt, T, D): sublane-only regrouping (T % 8 == 0).
    qh = q.reshape(G, T, D).astype(jnp.bfloat16)
    kh = k.reshape(G, T, D).astype(jnp.bfloat16)
    vh = v.reshape(G, T, D).astype(jnp.bfloat16)

    # Plain softmax attention (no causal mask, matching the reference).
    # TODO(synk): tile over the key dim with online softmax for non-toy T.
    aff = jnp.einsum('gtd,gsd->gts', qh, kh,
                     preferred_element_type=jnp.float32)          # (G, T, T)
    aff = aff - jnp.max(aff, axis=-1, keepdims=True)
    e = jnp.exp(aff)
    p = (e * pl.reciprocal(jnp.sum(e, axis=-1, keepdims=True),
                           approx=True)).astype(jnp.bfloat16)
    att = jnp.einsum('gts,gsd->gtd', p, vh,
                     preferred_element_type=jnp.float32)          # (G, T, D)

    # Output projection: head-batched matmul against (H, D, E) slices of Wo,
    # summed over heads == concat(heads, feature dim) @ Wo, no lane relayout.
    # TODO(synk): original torch.cat(heads) uses dim=0 (only valid for 1 head).
    att_h = att.reshape(H, N, D).astype(jnp.bfloat16)
    att_out = (jnp.einsum('hnd,hde->hne', att_h, wo_ref[0],
                          preferred_element_type=jnp.float32).sum(axis=0)
               + bo_ref[0])                          # dropout: identity (eval)

    # --------------------------- feedforward branch -------------------------
    h1 = jnp.maximum(
        jnp.dot(ln2, w1_ref[0], preferred_element_type=jnp.float32)
        + fb1_ref[0], 0.0)
    ff = (jnp.dot(h1.astype(jnp.bfloat16), w2_ref[0],
                  preferred_element_type=jnp.float32)
          + fb2_ref[0])                              # dropout: identity (eval)

    # Parallel residual, exactly as the reference Block.
    x_new = x + ff + att_out
    x_scr[...] = x_new

    # Final LayerNorm fused here (activations already resident); the (E, V)
    # vocab projection runs in a separate call so final_w never sits in VMEM
    # during the layer loop.
    @pl.when(layer == pl.num_programs(1) - 1)
    def _():
        mu_f = jnp.mean(x_new, axis=-1, keepdims=True)
        xc_f = x_new - mu_f
        var_f = jnp.mean(xc_f * xc_f, axis=-1, keepdims=True)
        lnf = xc_f * jax.lax.rsqrt(var_f + LN_EPS) * fg_ref[...] + fbe_ref[...]
        o_ref[...] = lnf.astype(o_ref.dtype)         # bf16 handoff


# ----------------------------------------------------------------------------
# Kernel 2: vocab head (logits = lnf @ final_w + final_b), tiled over
# (row tiles, vocab tiles). At real E add a K reduction grid axis.
# ----------------------------------------------------------------------------
def vocab_head_kernel(x_ref, w_ref, b_ref, o_ref):
    o_ref[...] = (jnp.dot(x_ref[...], w_ref[...],
                          preferred_element_type=jnp.float32)
                  + b_ref[...]).astype(o_ref.dtype)


def transformer_forward(params, ex, targets, *, num_heads, head_size,
                        batch_tile=None):
    B, T = ex.shape
    E = params["tok_emb"].shape[1]
    V = params["final_w"].shape[1]
    L = params["wq"].shape[0]
    F = params["w1"].shape[2]
    H, D = num_heads, head_size

    # Embedding gathers (glue, plain JAX). NOTE: pos table indexed by token
    # ids exactly as in the reference forward.
    tok = params["tok_emb"][ex].astype(jnp.float32)      # (B, T, E)
    pos = params["pos_emb"][ex].astype(jnp.float32)      # (B, T, block_size==E)
    x = (tok + pos).reshape(B * T, E)                    # fold B into rows

    if batch_tile is None:
        # >= 2 batch tiles so the "parallel" axis shards across both v7x TCs,
        # while keeping Nt = batch_tile*T as large as possible to fill the MXU
        # and amortize per-tile weight streaming (v5e HBM).
        batch_tile = B // 2 if B % 2 == 0 else B
    assert B % batch_tile == 0
    n_btiles = B // batch_tile
    Nt = batch_tile * T                                  # rows per grid tile

    def layer_spec(shape):
        nd = len(shape)
        return pl.BlockSpec((1,) + shape[1:],
                            lambda bi, l: (l,) + (0,) * (nd - 1))

    def const_spec(shape):
        nd = len(shape)
        return pl.BlockSpec(shape, lambda bi, l: (0,) * nd)

    kern = functools.partial(fused_blocks_kernel, batch_tile=batch_tile,
                             seq_len=T, num_heads=H, head_size=D)

    # TODO(synk): at real E/F, add pipeline_mode=pl.Buffered(3) on w1/w2 only
    # if profiling shows exposed weight DMA (costs E*F bf16 per extra buffer).
    lnf = pl.pallas_call(
        kern,
        out_shape=jax.ShapeDtypeStruct((B * T, E), jnp.bfloat16),
        grid=(n_btiles, L),
        in_specs=[
            pl.BlockSpec((Nt, E), lambda bi, l: (bi, 0)),        # x row slab
            layer_spec((L, 1, E)), layer_spec((L, 1, E)),        # ln1 g, b
            layer_spec((L, H, E, D)), layer_spec((L, H, E, D)),  # wq, wk
            layer_spec((L, H, E, D)), layer_spec((L, H, D, E)),  # wv, wo
            layer_spec((L, 1, E)),                               # bo
            layer_spec((L, 1, E)), layer_spec((L, 1, E)),        # ln2 g, b
            layer_spec((L, E, F)), layer_spec((L, 1, F)),        # ff linear 1
            layer_spec((L, F, E)), layer_spec((L, 1, E)),        # ff linear 2
            const_spec((1, E)), const_spec((1, E)),              # final LN
        ],
        out_specs=pl.BlockSpec((Nt, E), lambda bi, l: (bi, 0)),
        scratch_shapes=[pltpu.VMEM((Nt, E), jnp.float32)],
        compiler_params=pltpu.CompilerParams(
            dimension_semantics=("parallel", "arbitrary"),
            vmem_limit_bytes=64 << 20),
    )(x, params["ln1_g"], params["ln1_b"], params["wq"], params["wk"],
      params["wv"], params["wo"], params["bo"], params["ln2_g"],
      params["ln2_b"], params["w1"], params["b1"], params["w2"], params["b2"],
      params["final_ln_g"], params["final_ln_b"])

    # Vocab head: its own call so final_w is streamed only here, tiled over
    # (rows, vocab) so it never needs to be fully VMEM-resident.
    row_tile = Nt
    vtile = 128 if V % 128 == 0 else V
    # TODO(synk): consider bf16 logits at real vocab sizes to halve writeback.
    logits = pl.pallas_call(
        vocab_head_kernel,
        out_shape=jax.ShapeDtypeStruct((B * T, V), jnp.float32),
        grid=((B * T) // row_tile, V // vtile),
        in_specs=[
            pl.BlockSpec((row_tile, E), lambda ri, vi: (ri, 0)),
            pl.BlockSpec((E, vtile), lambda ri, vi: (0, vi)),
            pl.BlockSpec((1, vtile), lambda ri, vi: (0, vi)),
        ],
        out_specs=pl.BlockSpec((row_tile, vtile), lambda ri, vi: (ri, vi)),
        compiler_params=pltpu.CompilerParams(
            dimension_semantics=("parallel", "parallel")),
    )(lnf, params["final_w"], params["final_b"])

    logits = logits.reshape(B, T, V)
    loss = None
    if targets is not None:
        lf = logits.reshape(B * T, V)
        tf = targets.reshape(B * T)
        logp = jax.nn.log_softmax(lf, axis=-1)
        loss = -jnp.mean(jnp.take_along_axis(logp, tf[:, None], axis=1))
    return logits, loss


# ----------------------------------------------------------------------------
# Parameter construction (mirrors _init_weights: N(0, 0.02) for Linear /
# Embedding weights, zeros for biases; LayerNorm gamma=1, beta=0).
# Per-layer params are stacked with a leading layer dim; projection weights
# are stored head-major and pre-transposed as (in, out) slices in bfloat16.
# ----------------------------------------------------------------------------
def init_params(key, vocab_size, emb_size, block_size, num_blocks, num_heads,
                ff_size):
    wdt = jnp.bfloat16
    L, E, F, V, H = num_blocks, emb_size, ff_size, vocab_size, num_heads
    D = E // H

    def nrm(k, shape, dtype=jnp.float32):
        return (0.02 * jax.random.normal(k, shape, jnp.float32)).astype(dtype)

    keys = iter(jax.random.split(key, 16))
    return {
        "tok_emb": nrm(next(keys), (V, E)),
        "pos_emb": nrm(next(keys), (V, block_size)),
        "final_ln_g": jnp.ones((1, E), jnp.float32),
        "final_ln_b": jnp.zeros((1, E), jnp.float32),
        "final_w": nrm(next(keys), (E, V), wdt),
        "final_b": jnp.zeros((1, V), jnp.float32),
        # per-layer stacks
        "ln1_g": jnp.ones((L, 1, E), jnp.float32),
        "ln1_b": jnp.zeros((L, 1, E), jnp.float32),
        "wq": nrm(next(keys), (L, H, E, D), wdt),    # per-head W_q^T slices
        "wk": nrm(next(keys), (L, H, E, D), wdt),
        "wv": nrm(next(keys), (L, H, E, D), wdt),
        "wo": nrm(next(keys), (L, H, D, E), wdt),    # att_linear^T split by head
        "bo": jnp.zeros((L, 1, E), jnp.float32),
        "ln2_g": jnp.ones((L, 1, E), jnp.float32),
        "ln2_b": jnp.zeros((L, 1, E), jnp.float32),
        "w1": nrm(next(keys), (L, E, F), wdt),
        "b1": jnp.zeros((L, 1, F), jnp.float32),
        "w2": nrm(next(keys), (L, F, E), wdt),
        "b2": jnp.zeros((L, 1, E), jnp.float32),
    }


if __name__ == "__main__":
    vocab_size = 256          # multiple of 128 -> lane-dense logits, 2 vocab tiles
    emb_size = 128            # multiple of 128 -> lane-dense activations
    block_size = emb_size     # must equal emb_size for tok_emb + pos_emb add
    num_blocks = 2
    num_heads = 2
    head_size = emb_size // num_heads
    ff_size = 4 * emb_size
    B, T = 32, 16             # total 512 rows
    batch_tile = 16           # Nt = 256 rows per matmul; 2 tiles -> both v7x TCs

    key = jax.random.PRNGKey(0)
    kp, kx, kt = jax.random.split(key, 3)
    params = init_params(kp, vocab_size, emb_size, block_size, num_blocks,
                         num_heads, ff_size)

    ex = jax.random.randint(kx, (B, T), 0, vocab_size, dtype=jnp.int32)
    targets = jax.random.randint(kt, (B, T), 0, vocab_size, dtype=jnp.int32)

    logits, loss = transformer_forward(params, ex, targets,
                                       num_heads=num_heads,
                                       head_size=head_size,
                                       batch_tile=batch_tile)
    jax.block_until_ready(logits)
    jax.block_until_ready(loss)
    assert logits.shape == (B, T, vocab_size)
    assert bool(jnp.isfinite(loss))
    print("KERNEL_OK")
</pallas_src>

<mosaic_0001>
module attributes {stable_mosaic.version = 11 : i64} {
  func.func @fused_blocks_kernel(%arg0: i32, %arg1: i32, %arg2: memref<256x128xf32, #tpu.memory_space<vmem>>, %arg3: memref<1x1x128xf32, #tpu.memory_space<vmem>>, %arg4: memref<1x1x128xf32, #tpu.memory_space<vmem>>, %arg5: memref<1x2x128x64xbf16, #tpu.memory_space<vmem>>, %arg6: memref<1x2x128x64xbf16, #tpu.memory_space<vmem>>, %arg7: memref<1x2x128x64xbf16, #tpu.memory_space<vmem>>, %arg8: memref<1x2x64x128xbf16, #tpu.memory_space<vmem>>, %arg9: memref<1x1x128xf32, #tpu.memory_space<vmem>>, %arg10: memref<1x1x128xf32, #tpu.memory_space<vmem>>, %arg11: memref<1x1x128xf32, #tpu.memory_space<vmem>>, %arg12: memref<1x128x512xbf16, #tpu.memory_space<vmem>>, %arg13: memref<1x1x512xf32, #tpu.memory_space<vmem>>, %arg14: memref<1x512x128xbf16, #tpu.memory_space<vmem>>, %arg15: memref<1x1x128xf32, #tpu.memory_space<vmem>>, %arg16: memref<1x128xf32, #tpu.memory_space<vmem>>, %arg17: memref<1x128xf32, #tpu.memory_space<vmem>>, %arg18: memref<256x128xbf16, #tpu.memory_space<vmem>>, %arg19: memref<256x128xf32, #tpu.memory_space<vmem>>) attributes {dimension_semantics = [#tpu.dimension_semantics<parallel>, #tpu.dimension_semantics<arbitrary>], iteration_bounds = array<i64: 2, 2>, scalar_prefetch = 0 : i64, scratch_operands = 1 : i64, tpu.core_type = #tpu.core_type<tc>, window_params = [{transform_indices = @transform_0, window_bounds = array<i64: 256, 128>}, {transform_indices = @transform_1, window_bounds = array<i64: 1, 1, 128>}, {transform_indices = @transform_2, window_bounds = array<i64: 1, 1, 128>}, {transform_indices = @transform_3, window_bounds = array<i64: 1, 2, 128, 64>}, {transform_indices = @transform_4, window_bounds = array<i64: 1, 2, 128, 64>}, {transform_indices = @transform_5, window_bounds = array<i64: 1, 2, 128, 64>}, {transform_indices = @transform_6, window_bounds = array<i64: 1, 2, 64, 128>}, {transform_indices = @transform_7, window_bounds = array<i64: 1, 1, 128>}, {transform_indices = @transform_8, window_bounds = array<i64: 1, 1, 128>}, {transform_indices = @transform_9, window_bounds = array<i64: 1, 1, 128>}, {transform_indices = @transform_10, window_bounds = array<i64: 1, 128, 512>}, {transform_indices = @transform_11, window_bounds = array<i64: 1, 1, 512>}, {transform_indices = @transform_12, window_bounds = array<i64: 1, 512, 128>}, {transform_indices = @transform_13, window_bounds = array<i64: 1, 1, 128>}, {pipeline_mode = #tpu.pipeline_mode<synchronous>, transform_indices = @transform_14, window_bounds = array<i64: 1, 128>}, {pipeline_mode = #tpu.pipeline_mode<synchronous>, transform_indices = @transform_15, window_bounds = array<i64: 1, 128>}, {transform_indices = @transform_16, window_bounds = array<i64: 256, 128>}]} {
    %c0_i32 = arith.constant 0 : i32
    %0 = arith.cmpi eq, %arg1, %c0_i32 : i32
    %1 = arith.extui %0 : i1 to i32
    %c0_i32_0 = arith.constant 0 : i32
    %2 = arith.cmpi ne, %1, %c0_i32_0 : i32
    scf.if %2 {
      %c0_65 = arith.constant 0 : index
      %c0_66 = arith.constant 0 : index
      %104 = vector.load %arg2[%c0_65, %c0_66] : memref<256x128xf32, #tpu.memory_space<vmem>>, vector<256x128xf32>
      %c0_67 = arith.constant 0 : index
      %c0_68 = arith.constant 0 : index
      %105 = vector.load %arg19[%c0_67, %c0_68] : memref<256x128xf32, #tpu.memory_space<vmem>>, vector<256x128xf32>
      tpu.vector_store %arg19[%c0_67, %c0_68], %104 {strides = array<i32>} : memref<256x128xf32, #tpu.memory_space<vmem>>, vector<256x128xf32>,
    } else {
    }
    %c0 = arith.constant 0 : index
    %c0_1 = arith.constant 0 : index
    %3 = vector.load %arg19[%c0, %c0_1] : memref<256x128xf32, #tpu.memory_space<vmem>>, vector<256x128xf32>
    %cst = arith.constant dense<0.000000e+00> : vector<256xf32>
    %4 = vector.multi_reduction <add>, %3, %cst [1] : vector<256x128xf32> to vector<256xf32>
    %5 = vector.shape_cast %4 : vector<256xf32> to vector<256x1xf32>
    %cst_2 = arith.constant 1.280000e+02 : f32
    %6 = vector.broadcast %cst_2 : f32 to vector<256x1xf32>
    %7 = arith.divf %5, %6 : vector<256x1xf32>
    %8 = vector.broadcast %7 : vector<256x1xf32> to vector<256x128xf32>
    %9 = arith.subf %3, %8 : vector<256x128xf32>
    %10 = arith.mulf %9, %9 : vector<256x128xf32>
    %cst_3 = arith.constant dense<0.000000e+00> : vector<256xf32>
    %11 = vector.multi_reduction <add>, %10, %cst_3 [1] : vector<256x128xf32> to vector<256xf32>
    %12 = vector.shape_cast %11 : vector<256xf32> to vector<256x1xf32>
    %cst_4 = arith.constant 1.280000e+02 : f32
    %13 = vector.broadcast %cst_4 : f32 to vector<256x1xf32>
    %14 = arith.divf %12, %13 : vector<256x1xf32>
    %cst_5 = arith.constant 9.99999974E-6 : f32
    %15 = vector.broadcast %cst_5 : f32 to vector<256x1xf32>
    %16 = arith.addf %14, %15 : vector<256x1xf32>
    %17 = math.rsqrt %16 : vector<256x1xf32>
    %18 = vector.broadcast %17 : vector<256x1xf32> to vector<256x128xf32>
    %19 = arith.mulf %9, %18 : vector<256x128xf32>
    %c0_6 = arith.constant 0 : index
    %c0_7 = arith.constant 0 : index
    %c0_8 = arith.constant 0 : index
    %20 = vector.load %arg3[%c0_6, %c0_7, %c0_8] : memref<1x1x128xf32, #tpu.memory_space<vmem>>, vector<1x1x128xf32>
    %21 = vector.shape_cast %20 : vector<1x1x128xf32> to vector<1x128xf32>
    %22 = vector.broadcast %21 : vector<1x128xf32> to vector<256x128xf32>
    %23 = arith.mulf %19, %22 : vector<256x128xf32>
    %c0_9 = arith.constant 0 : index
    %c0_10 = arith.constant 0 : index
    %c0_11 = arith.constant 0 : index
    %24 = vector.load %arg4[%c0_9, %c0_10, %c0_11] : memref<1x1x128xf32, #tpu.memory_space<vmem>>, vector<1x1x128xf32>
    %25 = vector.shape_cast %24 : vector<1x1x128xf32> to vector<1x128xf32>
    %26 = vector.broadcast %25 : vector<1x128xf32> to vector<256x128xf32>
    %27 = arith.addf %23, %26 : vector<256x128xf32>
    %28 = arith.truncf %27 : vector<256x128xf32> to vector<256x128xbf16>
    %c0_12 = arith.constant 0 : index
    %c0_13 = arith.constant 0 : index
    %c0_14 = arith.constant 0 : index
    %29 = vector.load %arg10[%c0_12, %c0_13, %c0_14] : memref<1x1x128xf32, #tpu.memory_space<vmem>>, vector<1x1x128xf32>
    %30 = vector.shape_cast %29 : vector<1x1x128xf32> to vector<1x128xf32>
    %31 = vector.broadcast %30 : vector<1x128xf32> to vector<256x128xf32>
    %32 = arith.mulf %19, %31 : vector<256x128xf32>
    %c0_15 = arith.constant 0 : index
    %c0_16 = arith.constant 0 : index
    %c0_17 = arith.constant 0 : index
    %33 = vector.load %arg11[%c0_15, %c0_16, %c0_17] : memref<1x1x128xf32, #tpu.memory_space<vmem>>, vector<1x1x128xf32>
    %34 = vector.shape_cast %33 : vector<1x1x128xf32> to vector<1x128xf32>
    %35 = vector.broadcast %34 : vector<1x128xf32> to vector<256x128xf32>
    %36 = arith.addf %32, %35 : vector<256x128xf32>
    %37 = arith.truncf %36 : vector<256x128xf32> to vector<256x128xbf16>
    %38 = vector.shape_cast %28 : vector<256x128xbf16> to vector<1x256x128xbf16>
    %39 = vector.shape_cast %38 : vector<1x256x128xbf16> to vector<1x256x128xbf16>
    %40 = vector.broadcast %39 : vector<1x256x128xbf16> to vector<2x256x128xbf16>
    %c0_18 = arith.constant 0 : index
    %c0_19 = arith.constant 0 : index
    %c0_20 = arith.constant 0 : index
    %c0_21 = arith.constant 0 : index
    %41 = vector.load %arg5[%c0_18, %c0_19, %c0_20, %c0_21] : memref<1x2x128x64xbf16, #tpu.memory_space<vmem>>, vector<1x2x128x64xbf16>
    %42 = vector.shape_cast %41 : vector<1x2x128x64xbf16> to vector<2x128x64xbf16>
    "tpu.trace_start"() <{level = 10 : i32, message = "hne,hed->hnd"}> : () -> ()
    %cst_22 = arith.constant dense<0.000000e+00> : vector<2x256x64xf32>
    %43 = tpu.matmul %40, %42, %cst_22 {dimension_numbers = #tpu.dot_dimension_numbers<[2], [1], [1], [2], [0, 0, 0, 1, 1, 2], [0], [0]>} : vector<2x256x128xbf16>, vector<2x128x64xbf16>, vector<2x256x64xf32> -> vector<2x256x64xf32>
    "tpu.trace_stop"() : () -> ()
    %c0_23 = arith.constant 0 : index
    %c0_24 = arith.constant 0 : index
    %c0_25 = arith.constant 0 : index
    %c0_26 = arith.constant 0 : index
    %44 = vector.load %arg6[%c0_23, %c0_24, %c0_25, %c0_26] : memref<1x2x128x64xbf16, #tpu.memory_space<vmem>>, vector<1x2x128x64xbf16>
    %45 = vector.shape_cast %44 : vector<1x2x128x64xbf16> to vector<2x128x64xbf16>
    "tpu.trace_start"() <{level = 10 : i32, message = "hne,hed->hnd"}> : () -> ()
    %cst_27 = arith.constant dense<0.000000e+00> : vector<2x256x64xf32>
    %46 = tpu.matmul %40, %45, %cst_27 {dimension_numbers = #tpu.dot_dimension_numbers<[2], [1], [1], [2], [0, 0, 0, 1, 1, 2], [0], [0]>} : vector<2x256x128xbf16>, vector<2x128x64xbf16>, vector<2x256x64xf32> -> vector<2x256x64xf32>
    "tpu.trace_stop"() : () -> ()
    %c0_28 = arith.constant 0 : index
    %c0_29 = arith.constant 0 : index
    %c0_30 = arith.constant 0 : index
    %c0_31 = arith.constant 0 : index
    %47 = vector.load %arg7[%c0_28, %c0_29, %c0_30, %c0_31] : memref<1x2x128x64xbf16, #tpu.memory_space<vmem>>, vector<1x2x128x64xbf16>
    %48 = vector.shape_cast %47 : vector<1x2x128x64xbf16> to vector<2x128x64xbf16>
    "tpu.trace_start"() <{level = 10 : i32, message = "hne,hed->hnd"}> : () -> ()
    %cst_32 = arith.constant dense<0.000000e+00> : vector<2x256x64xf32>
    %49 = tpu.matmul %40, %48, %cst_32 {dimension_numbers = #tpu.dot_dimension_numbers<[2], [1], [1], [2], [0, 0, 0, 1, 1, 2], [0], [0]>} : vector<2x256x128xbf16>, vector<2x128x64xbf16>, vector<2x256x64xf32> -> vector<2x256x64xf32>
    "tpu.trace_stop"() : () -> ()
    %cst_33 = arith.constant 1.250000e-01 : f32
    %50 = vector.broadcast %cst_33 : f32 to vector<2x256x64xf32>
    %51 = arith.mulf %43, %50 : vector<2x256x64xf32>
    %52 = vector.shape_cast %51 : vector<2x256x64xf32> to vector<32x16x64xf32>
    %53 = arith.truncf %52 : vector<32x16x64xf32> to vector<32x16x64xbf16>
    %54 = vector.shape_cast %46 : vector<2x256x64xf32> to vector<32x16x64xf32>
    %55 = arith.truncf %54 : vector<32x16x64xf32> to vector<32x16x64xbf16>
    %56 = vector.shape_cast %49 : vector<2x256x64xf32> to vector<32x16x64xf32>
    %57 = arith.truncf %56 : vector<32x16x64xf32> to vector<32x16x64xbf16>
    "tpu.trace_start"() <{level = 10 : i32, message = "gtd,gsd->gts"}> : () -> ()
    %cst_34 = arith.constant dense<0.000000e+00> : vector<32x16x16xf32>
    %58 = tpu.matmul %53, %55, %cst_34 {dimension_numbers = #tpu.dot_dimension_numbers<[2], [2], [1], [1], [0, 0, 0, 1, 1, 1], [0], [0]>} : vector<32x16x64xbf16>, vector<32x16x64xbf16>, vector<32x16x16xf32> -> vector<32x16x16xf32>
    "tpu.trace_stop"() : () -> ()
    %cst_35 = arith.constant dense<0xFF800000> : vector<32x16xf32>
    %59 = vector.multi_reduction <maximumf>, %58, %cst_35 [2] : vector<32x16x16xf32> to vector<32x16xf32>
    %60 = vector.shape_cast %59 : vector<32x16xf32> to vector<32x16x1xf32>
    %61 = vector.broadcast %60 : vector<32x16x1xf32> to vector<32x16x16xf32>
    %62 = arith.subf %58, %61 : vector<32x16x16xf32>
    %63 = math.exp %62 : vector<32x16x16xf32>
    %cst_36 = arith.constant dense<0.000000e+00> : vector<32x16xf32>
    %64 = vector.multi_reduction <add>, %63, %cst_36 [2] : vector<32x16x16xf32> to vector<32x16xf32>
    %65 = vector.shape_cast %64 : vector<32x16xf32> to vector<32x16x1xf32>
    %66 = tpu.reciprocal %65 {approx = true} : vector<32x16x1xf32> -> vector<32x16x1xf32>
    %67 = vector.broadcast %66 : vector<32x16x1xf32> to vector<32x16x16xf32>
    %68 = arith.mulf %63, %67 : vector<32x16x16xf32>
    %69 = arith.truncf %68 : vector<32x16x16xf32> to vector<32x16x16xbf16>
    "tpu.trace_start"() <{level = 10 : i32, message = "gts,gsd->gtd"}> : () -> ()
    %cst_37 = arith.constant dense<0.000000e+00> : vector<32x16x64xf32>
    %70 = tpu.matmul %69, %57, %cst_37 {dimension_numbers = #tpu.dot_dimension_numbers<[2], [1], [1], [2], [0, 0, 0, 1, 1, 2], [0], [0]>} : vector<32x16x16xbf16>, vector<32x16x64xbf16>, vector<32x16x64xf32> -> vector<32x16x64xf32>
    "tpu.trace_stop"() : () -> ()
    %71 = vector.shape_cast %70 : vector<32x16x64xf32> to vector<2x256x64xf32>
    %72 = arith.truncf %71 : vector<2x256x64xf32> to vector<2x256x64xbf16>
    %c0_38 = arith.constant 0 : index
    %c0_39 = arith.constant 0 : index
    %c0_40 = arith.constant 0 : index
    %c0_41 = arith.constant 0 : index
    %73 = vector.load %arg8[%c0_38, %c0_39, %c0_40, %c0_41] : memref<1x2x64x128xbf16, #tpu.memory_space<vmem>>, vector<1x2x64x128xbf16>
    %74 = vector.shape_cast %73 : vector<1x2x64x128xbf16> to vector<2x64x128xbf16>
    "tpu.trace_start"() <{level = 10 : i32, message = "hnd,hde->hne"}> : () -> ()
    %cst_42 = arith.constant dense<0.000000e+00> : vector<2x256x128xf32>
    %75 = tpu.matmul %72, %74, %cst_42 {dimension_numbers = #tpu.dot_dimension_numbers<[2], [1], [1], [2], [0, 0, 0, 1, 1, 2], [0], [0]>} : vector<2x256x64xbf16>, vector<2x64x128xbf16>, vector<2x256x128xf32> -> vector<2x256x128xf32>
    "tpu.trace_stop"() : () -> ()
    %cst_43 = arith.constant dense<0.000000e+00> : vector<256x128xf32>
    %76 = vector.multi_reduction <add>, %75, %cst_43 [0] : vector<2x256x128xf32> to vector<256x128xf32>
    %c0_44 = arith.constant 0 : index
    %c0_45 = arith.constant 0 : index
    %c0_46 = arith.constant 0 : index
    %77 = vector.load %arg9[%c0_44, %c0_45, %c0_46] : memref<1x1x128xf32, #tpu.memory_space<vmem>>, vector<1x1x128xf32>
    %78 = vector.shape_cast %77 : vector<1x1x128xf32> to vector<1x128xf32>
    %79 = vector.broadcast %78 : vector<1x128xf32> to vector<256x128xf32>
    %80 = arith.addf %76, %79 : vector<256x128xf32>
    %c0_47 = arith.constant 0 : index
    %c0_48 = arith.constant 0 : index
    %c0_49 = arith.constant 0 : index
    %81 = vector.load %arg12[%c0_47, %c0_48, %c0_49] : memref<1x128x512xbf16, #tpu.memory_space<vmem>>, vector<1x128x512xbf16>
    %82 = vector.shape_cast %81 : vector<1x128x512xbf16> to vector<128x512xbf16>
    %cst_50 = arith.constant dense<0.000000e+00> : vector<256x512xf32>
    %83 = tpu.matmul %37, %82, %cst_50 {dimension_numbers = #tpu.dot_dimension_numbers<[1], [0], [0], [1], [0, 0, 1, 1], [], []>} : vector<256x128xbf16>, vector<128x512xbf16>, vector<256x512xf32> -> vector<256x512xf32>
    %c0_51 = arith.constant 0 : index
    %c0_52 = arith.constant 0 : index
    %c0_53 = arith.constant 0 : index
    %84 = vector.load %arg13[%c0_51, %c0_52, %c0_53] : memref<1x1x512xf32, #tpu.memory_space<vmem>>, vector<1x1x512xf32>
    %85 = vector.shape_cast %84 : vector<1x1x512xf32> to vector<1x512xf32>
    %86 = vector.broadcast %85 : vector<1x512xf32> to vector<256x512xf32>
    %87 = arith.addf %83, %86 : vector<256x512xf32>
    %cst_54 = arith.constant 0.000000e+00 : f32
    %88 = vector.broadcast %cst_54 : f32 to vector<256x512xf32>
    %89 = arith.maximumf %87, %88 : vector<256x512xf32>
    %90 = arith.truncf %89 : vector<256x512xf32> to vector<256x512xbf16>
    %c0_55 = arith.constant 0 : index
    %c0_56 = arith.constant 0 : index
    %c0_57 = arith.constant 0 : index
    %91 = vector.load %arg14[%c0_55, %c0_56, %c0_57] : memref<1x512x128xbf16, #tpu.memory_space<vmem>>, vector<1x512x128xbf16>
    %92 = vector.shape_cast %91 : vector<1x512x128xbf16> to vector<512x128xbf16>
    %cst_58 = arith.constant dense<0.000000e+00> : vector<256x128xf32>
    %93 = tpu.matmul %90, %92, %cst_58 {dimension_numbers = #tpu.dot_dimension_numbers<[1], [0], [0], [1], [0, 0, 1, 1], [], []>} : vector<256x512xbf16>, vector<512x128xbf16>, vector<256x128xf32> -> vector<256x128xf32>
    %c0_59 = arith.constant 0 : index
    %c0_60 = arith.constant 0 : index
    %c0_61 = arith.constant 0 : index
    %94 = vector.load %arg15[%c0_59, %c0_60, %c0_61] : memref<1x1x128xf32, #tpu.memory_space<vmem>>, vector<1x1x128xf32>
    %95 = vector.shape_cast %94 : vector<1x1x128xf32> to vector<1x128xf32>
    %96 = vector.broadcast %95 : vector<1x128xf32> to vector<256x128xf32>
    %97 = arith.addf %93, %96 : vector<256x128xf32>
    %98 = arith.addf %3, %97 : vector<256x128xf32>
    %99 = arith.addf %98, %80 : vector<256x128xf32>
    %c0_62 = arith.constant 0 : index
    %c0_63 = arith.constant 0 : index
    %100 = vector.load %arg19[%c0_62, %c0_63] : memref<256x128xf32, #tpu.memory_space<vmem>>, vector<256x128xf32>
    tpu.vector_store %arg19[%c0_62, %c0_63], %99 {strides = array<i32>} : memref<256x128xf32, #tpu.memory_space<vmem>>, vector<256x128xf32>,
    %c1_i32 = arith.constant 1 : i32
    %101 = arith.cmpi eq, %arg1, %c1_i32 : i32
    %102 = arith.extui %101 : i1 to i32
    %c0_i32_64 = arith.constant 0 : i32
    %103 = arith.cmpi ne, %102, %c0_i32_64 : i32
    scf.if %103 {
      %cst_65 = arith.constant dense<0.000000e+00> : vector<256xf32>
      %104 = vector.multi_reduction <add>, %99, %cst_65 [1] : vector<256x128xf32> to vector<256xf32>
      %105 = vector.shape_cast %104 : vector<256xf32> to vector<256x1xf32>
      %cst_66 = arith.constant 1.280000e+02 : f32
      %106 = vector.broadcast %cst_66 : f32 to vector<256x1xf32>
      %107 = arith.divf %105, %106 : vector<256x1xf32>
      %108 = vector.broadcast %107 : vector<256x1xf32> to vector<256x128xf32>
      %109 = arith.subf %99, %108 : vector<256x128xf32>
      %110 = arith.mulf %109, %109 : vector<256x128xf32>
      %cst_67 = arith.constant dense<0.000000e+00> : vector<256xf32>
      %111 = vector.multi_reduction <add>, %110, %cst_67 [1] : vector<256x128xf32> to vector<256xf32>
      %112 = vector.shape_cast %111 : vector<256xf32> to vector<256x1xf32>
      %cst_68 = arith.constant 1.280000e+02 : f32
      %113 = vector.broadcast %cst_68 : f32 to vector<256x1xf32>
      %114 = arith.divf %112, %113 : vector<256x1xf32>
      %cst_69 = arith.constant 9.99999974E-6 : f32
      %115 = vector.broadcast %cst_69 : f32 to vector<256x1xf32>
      %116 = arith.addf %114, %115 : vector<256x1xf32>
      %117 = math.rsqrt %116 : vector<256x1xf32>
      %118 = vector.broadcast %117 : vector<256x1xf32> to vector<256x128xf32>
      %119 = arith.mulf %109, %118 : vector<256x128xf32>
      %c0_70 = arith.constant 0 : index
      %c0_71 = arith.constant 0 : index
      %120 = vector.load %arg16[%c0_70, %c0_71] : memref<1x128xf32, #tpu.memory_space<vmem>>, vector<1x128xf32>
      %121 = vector.broadcast %120 : vector<1x128xf32> to vector<256x128xf32>
      %122 = arith.mulf %119, %121 : vector<256x128xf32>
      %c0_72 = arith.constant 0 : index
      %c0_73 = arith.constant 0 : index
      %123 = vector.load %arg17[%c0_72, %c0_73] : memref<1x128xf32, #tpu.memory_space<vmem>>, vector<1x128xf32>
      %124 = vector.broadcast %123 : vector<1x128xf32> to vector<256x128xf32>
      %125 = arith.addf %122, %124 : vector<256x128xf32>
      %126 = arith.truncf %125 : vector<256x128xf32> to vector<256x128xbf16>
      %c0_74 = arith.constant 0 : index
      %c0_75 = arith.constant 0 : index
      %127 = vector.load %arg18[%c0_74, %c0_75] : memref<256x128xbf16, #tpu.memory_space<vmem>>, vector<256x128xbf16>
      tpu.vector_store %arg18[%c0_74, %c0_75], %126 {strides = array<i32>} : memref<256x128xbf16, #tpu.memory_space<vmem>>, vector<256x128xbf16>,
    } else {
    }
    return
  }
  func.func @transform_0(%arg0: i32, %arg1: i32) -> (i32, i32) {
    %c0_i32 = arith.constant 0 : i32
    %c0_i32_0 = arith.constant 0 : i32
    return %arg0, %c0_i32 : i32, i32
  }
  func.func @transform_1(%arg0: i32, %arg1: i32) -> (i32, i32, i32) {
    %c0_i32 = arith.constant 0 : i32
    %c0_i32_0 = arith.constant 0 : i32
    %c0_i32_1 = arith.constant 0 : i32
    return %arg1, %c0_i32, %c0_i32_0 : i32, i32, i32
  }
  func.func @transform_2(%arg0: i32, %arg1: i32) -> (i32, i32, i32) {
    %c0_i32 = arith.constant 0 : i32
    %c0_i32_0 = arith.constant 0 : i32
    %c0_i32_1 = arith.constant 0 : i32
    return %arg1, %c0_i32, %c0_i32_0 : i32, i32, i32
  }
  func.func @transform_3(%arg0: i32, %arg1: i32) -> (i32, i32, i32, i32) {
    %c0_i32 = arith.constant 0 : i32
    %c0_i32_0 = arith.constant 0 : i32
    %c0_i32_1 = arith.constant 0 : i32
    %c0_i32_2 = arith.constant 0 : i32
    return %arg1, %c0_i32, %c0_i32_0, %c0_i32_1 : i32, i32, i32, i32
  }
  func.func @transform_4(%arg0: i32, %arg1: i32) -> (i32, i32, i32, i32) {
    %c0_i32 = arith.constant 0 : i32
    %c0_i32_0 = arith.constant 0 : i32
    %c0_i32_1 = arith.constant 0 : i32
    %c0_i32_2 = arith.constant 0 : i32
    return %arg1, %c0_i32, %c0_i32_0, %c0_i32_1 : i32, i32, i32, i32
  }
  func.func @transform_5(%arg0: i32, %arg1: i32) -> (i32, i32, i32, i32) {
    %c0_i32 = arith.constant 0 : i32
    %c0_i32_0 = arith.constant 0 : i32
    %c0_i32_1 = arith.constant 0 : i32
    %c0_i32_2 = arith.constant 0 : i32
    return %arg1, %c0_i32, %c0_i32_0, %c0_i32_1 : i32, i32, i32, i32
  }
  func.func @transform_6(%arg0: i32, %arg1: i32) -> (i32, i32, i32, i32) {
    %c0_i32 = arith.constant 0 : i32
    %c0_i32_0 = arith.constant 0 : i32
    %c0_i32_1 = arith.constant 0 : i32
    %c0_i32_2 = arith.constant 0 : i32
    return %arg1, %c0_i32, %c0_i32_0, %c0_i32_1 : i32, i32, i32, i32
  }
  func.func @transform_7(%arg0: i32, %arg1: i32) -> (i32, i32, i32) {
    %c0_i32 = arith.constant 0 : i32
    %c0_i32_0 = arith.constant 0 : i32
    %c0_i32_1 = arith.constant 0 : i32
    return %arg1, %c0_i32, %c0_i32_0 : i32, i32, i32
  }
  func.func @transform_8(%arg0: i32, %arg1: i32) -> (i32, i32, i32) {
    %c0_i32 = arith.constant 0 : i32
    %c0_i32_0 = arith.constant 0 : i32
    %c0_i32_1 = arith.constant 0 : i32
    return %arg1, %c0_i32, %c0_i32_0 : i32, i32, i32
  }
  func.func @transform_9(%arg0: i32, %arg1: i32) -> (i32, i32, i32) {
    %c0_i32 = arith.constant 0 : i32
    %c0_i32_0 = arith.constant 0 : i32
    %c0_i32_1 = arith.constant 0 : i32
    return %arg1, %c0_i32, %c0_i32_0 : i32, i32, i32
  }
  func.func @transform_10(%arg0: i32, %arg1: i32) -> (i32, i32, i32) {
    %c0_i32 = arith.constant 0 : i32
    %c0_i32_0 = arith.constant 0 : i32
    %c0_i32_1 = arith.constant 0 : i32
    return %arg1, %c0_i32, %c0_i32_0 : i32, i32, i32
  }
  func.func @transform_11(%arg0: i32, %arg1: i32) -> (i32, i32, i32) {
    %c0_i32 = arith.constant 0 : i32
    %c0_i32_0 = arith.constant 0 : i32
    %c0_i32_1 = arith.constant 0 : i32
    return %arg1, %c0_i32, %c0_i32_0 : i32, i32, i32
  }
  func.func @transform_12(%arg0: i32, %arg1: i32) -> (i32, i32, i32) {
    %c0_i32 = arith.constant 0 : i32
    %c0_i32_0 = arith.constant 0 : i32
    %c0_i32_1 = arith.constant 0 : i32
    return %arg1, %c0_i32, %c0_i32_0 : i32, i32, i32
  }
  func.func @transform_13(%arg0: i32, %arg1: i32) -> (i32, i32, i32) {
    %c0_i32 = arith.constant 0 : i32
    %c0_i32_0 = arith.constant 0 : i32
    %c0_i32_1 = arith.constant 0 : i32
    return %arg1, %c0_i32, %c0_i32_0 : i32, i32, i32
  }
  func.func @transform_14(%arg0: i32, %arg1: i32) -> (i32, i32) {
    %c0_i32 = arith.constant 0 : i32
    %c0_i32_0 = arith.constant 0 : i32
    %c0_i32_1 = arith.constant 0 : i32
    return %c0_i32, %c0_i32_0 : i32, i32
  }
  func.func @transform_15(%arg0: i32, %arg1: i32) -> (i32, i32) {
    %c0_i32 = arith.constant 0 : i32
    %c0_i32_0 = arith.constant 0 : i32
    %c0_i32_1 = arith.constant 0 : i32
    return %c0_i32, %c0_i32_0 : i32, i32
  }
  func.func @transform_16(%arg0: i32, %arg1: i32) -> (i32, i32) {
    %c0_i32 = arith.constant 0 : i32
    %c0_i32_0 = arith.constant 0 : i32
    return %arg0, %c0_i32 : i32, i32
  }
}

</mosaic_0001>

<llo_original>
// kernel: tpu_custom_call.1
$region0: #{tpu_custom_call.1}
  #allocation0 [shape = 'u32[]', space=smem, size = 0x4, offset = 0x4, fixed_abs, tag = 'smem constant byte address 0x4 - core index']
  #allocation1 [shape = 'u32[144,128]{1,0:T(1,128)}', space=vmem, size = 0x12000, scoped, tag = 'internal scratch']
  #allocation2 [shape = 'f32[256,128]{1,0:T(8,128)}', space=vmem, size = 0x20000, scoped, tag = 'scratch operand']
  %s0 = inlined_call_operand.vmem [shape: f32[512,128], index: 0, kind: input, shape index: {}]
  %s1 = inlined_call_operand.hbm [shape: f32[2,1,128], index: 1, kind: input, shape index: {}]
  %s2 = inlined_call_operand.hbm [shape: f32[2,1,128], index: 2, kind: input, shape index: {}]
  %s3 = inlined_call_operand.vmem [shape: bf16[2,2,128,64], index: 3, kind: input, shape index: {}]
  %s4 = inlined_call_operand.vmem [shape: bf16[2,2,128,64], index: 4, kind: input, shape index: {}]
  %s5 = inlined_call_operand.vmem [shape: bf16[2,2,128,64], index: 5, kind: input, shape index: {}]
  %s6 = inlined_call_operand.vmem [shape: bf16[2,2,64,128], index: 6, kind: input, shape index: {}]
  %s7 = inlined_call_operand.vmem [shape: f32[2,1,128], index: 7, kind: input, shape index: {}]
  %s8 = inlined_call_operand.vmem [shape: f32[2,1,128], index: 8, kind: input, shape index: {}]
  %s9 = inlined_call_operand.hbm [shape: f32[2,1,128], index: 9, kind: input, shape index: {}]
  %s10 = inlined_call_operand.vmem [shape: bf16[2,128,512], index: 10, kind: input, shape index: {}]
  %s11 = inlined_call_operand.vmem [shape: f32[2,1,512], index: 11, kind: input, shape index: {}]
  %s12 = inlined_call_operand.hbm [shape: bf16[2,512,128], index: 12, kind: input, shape index: {}]
  %s13 = inlined_call_operand.hbm [shape: f32[2,1,128], index: 13, kind: input, shape index: {}]
  %s14 = inlined_call_operand.vmem [shape: f32[1,128], index: 14, kind: input, shape index: {}]
  %s15 = inlined_call_operand.vmem [shape: f32[1,128], index: 15, kind: input, shape index: {}]
  %s16 = inlined_call_operand.hbm [shape: bf16[512,128], index: 16, kind: output, shape index: {}]
  %s17 = sld [smem:[#allocation0]]
  $region125: #{tpu_custom_call.1} parent=0
    _
  %s19 = ssub.s32 1, %s17
  %s20 = scalar_select 0, %s19, %s17
  $region1: #{tpu_custom_call.1} parent=0
    #allocation3 [shape = 'u8[1024]{0}', space=vmem, size = 0x400, scoped, tag = 'input window, operand 1']
    #allocation4 [shape = 's32[2]{0}', space=sflag, size = 0x8, scoped, tag = 'scoped memory for tpu_custom_call.1']
    #allocation5 [shape = 's32[2]{0}', space=sflag, size = 0x8, scoped, tag = 'scoped memory for tpu_custom_call.1']
    #allocation6 [shape = 'u8[1024]{0}', space=vmem, size = 0x400, scoped, tag = 'input window, operand 2']
    #allocation7 [shape = 's32[2]{0}', space=sflag, size = 0x8, scoped, tag = 'scoped memory for tpu_custom_call.1']
    #allocation8 [shape = 'u8[1024]{0}', space=vmem, size = 0x400, scoped, tag = 'input window, operand 9']
    #allocation9 [shape = 'u8[262144]{0}', space=vmem, size = 0x40000, scoped, tag = 'input window, operand 12']
    #allocation10 [shape = 's32[2]{0}', space=sflag, size = 0x8, scoped, tag = 'scoped memory for tpu_custom_call.1']
    #allocation11 [shape = 'u8[1024]{0}', space=vmem, size = 0x400, scoped, tag = 'input window, operand 13']
    #allocation12 [shape = 'u8[131072]{0}', space=vmem, size = 0x20000, scoped, tag = 'output window, operand 0']
    %21 = vsyncpa [#allocation4], 0
    %s22 = scalar_lea.sflag [#allocation4], 1
    %23 = vsyncpa %s22, 0
    %24 = vsyncpa [#allocation7], 0
    %s25 = scalar_lea.sflag [#allocation7], 1
    %26 = vsyncpa %s25, 0
    %27 = vsyncpa [#allocation10], 0
    %s28 = scalar_lea.sflag [#allocation10], 1
    %29 = vsyncpa %s28, 0
    %30 = vsyncpa [#allocation5], 0
    %s31 = scalar_lea.sflag [#allocation5], 1
    %32 = vsyncpa %s31, 0
    loop: start=0, step=1, limit=6
    $region2: #{tpu_custom_call.1} parent=1 // loop_pre_header
      _
    $region3: #{tpu_custom_call.1} parent=1 // loop_header
      %s34 = sphi 0, %s38
      %p35 = scmp.ge.s32.totalorder %s34, 6
      %s41 = sphi 0, %s53
      %s42 = sphi 0, %s49
      %s43 = sphi 0, %s41
      %s44 = sphi 0, %s42
      %s45 = sphi 0, %s43
      %s46 = sphi 0, %s44
      %s56 = sphi 0, %s58
      %s59 = sphi 0, %s56
      %s60 = sphi 0, %s59
      %s76 = sphi 0, %s60
      %s82 = sphi 0, %s84
      %s85 = sphi 0, %s82
      %s86 = sphi 0, %s85
      %s102 = sphi 0, %s86
      %s108 = sphi 0, %s110
      %s111 = sphi 0, %s108
      %s112 = sphi 0, %s111
      %s128 = sphi 0, %s112
      %s134 = sphi 0, %s136
      %s137 = sphi 0, %s134
      %s138 = sphi 0, %s137
      %s154 = sphi 0, %s138
      %s160 = sphi 0, %s162
      %s163 = sphi 0, %s160
      %s164 = sphi 0, %s163
      %s180 = sphi 0, %s164
      %s186 = sphi 0, %s188
      %s189 = sphi 0, %s186
      %s190 = sphi 0, %s189
      %s206 = sphi 0, %s190
      %s212 = sphi 0, %s214
      %s215 = sphi 0, %s212
      %s216 = sphi 0, %s215
      %s232 = sphi 0, %s216
      %s238 = sphi 0, %s240
      %s241 = sphi 0, %s238
      %s242 = sphi 0, %s241
      %s258 = sphi 0, %s242
      %s264 = sphi 0, %s266
      %s267 = sphi 0, %s264
      %s268 = sphi 0, %s267
      %s284 = sphi 0, %s268
      %s290 = sphi 0, %s292
      %s293 = sphi 0, %s290
      %s294 = sphi 0, %s293
      %s310 = sphi 0, %s294
      %s316 = sphi 0, %s318
      %s319 = sphi 0, %s316
      %s320 = sphi 0, %s319
      %s336 = sphi 0, %s320
      %s342 = sphi 0, %s344
      %s345 = sphi 0, %s342
      %s346 = sphi 0, %s345
      %s362 = sphi 0, %s346
      %s368 = sphi 0, %s370
      %s371 = sphi 0, %s368
      %s372 = sphi 0, %s371
      %s388 = sphi 0, %s372
      %s394 = sphi 0, %s396
      %s397 = sphi 0, %s394
      %s398 = sphi 0, %s397
      %s414 = sphi 0, %s398
      %s418 = sphi 0, %s418
      %s420 = sphi 0, %s418
      %s421 = sphi 0, %s420
      %s435 = sphi 0, %s421
      %s439 = sphi 0, %s439
      %s441 = sphi 0, %s439
      %s442 = sphi 0, %s441
      %s456 = sphi 0, %s442
      %s462 = sphi 0, %s464
      %s465 = sphi 0, %s462
      %s466 = sphi 0, %s465
      %s482 = sphi 0, %s466
    $region4: #{tpu_custom_call.1} parent=1 // loop_header_branch
      %37 = sbr.rel (%p35) target = $region8
    $region5: #{tpu_custom_call.1} parent=1 // loop_body
      %s39 = ssub.s32 %s34, 1
      %s40 = ssub.s32 %s34, 2
      %s47 = sadd.s32 1, %s42
      %p48 = scmp.ge.s32.totalorder %s47, 2
      %s49 = scalar_select %p48, 0, %s47
      %s50 = sadd.s32 1, %s41
      %s51 = scalar_select %p48, %s50, %s41
      %p52 = scmp.ge.s32.totalorder %s51, 2
      %s53 = scalar_select %p52, 0, %s51
      %s54 = ssub.s32 %s41, %s53
      %p55 = scmp.eq.s32.totalorder %s54, 0
      %s57 = sadd.s32 %s56, 1
      %s58 = scalar_select %p55, %s56, %s57
      %p61 = pneg %p55
      %p62 = scmp.eq.s32.totalorder %s34, 3
      %p63 = por %p61, %p62
      %p64 = scmp.ne.s32.totalorder %s56, %s59
      %p65 = scmp.eq.s32.totalorder %s34, 0
      %p66 = por %p64, %p65
      %p67 = scmp.ne.s32.totalorder %s56, %s59
      %p68 = scmp.eq.s32.totalorder %s39, 3
      %p69 = por %p67, %p68
      %p70 = scmp.ne.s32.totalorder %s59, %s60
      %p71 = scmp.eq.s32.totalorder %s39, 0
      %p72 = por %p70, %p71
      %p73 = scmp.ne.s32.totalorder %s59, %s60
      %p74 = scmp.eq.s32.totalorder %s40, 3
      %p75 = por %p73, %p74
      %p77 = scmp.ne.s32.totalorder %s60, %s76
      %p78 = scmp.eq.s32.totalorder %s40, 0
      %p79 = por %p77, %p78
      %s80 = ssub.s32 %s42, %s49
      %p81 = scmp.eq.s32.totalorder %s80, 0
      %s83 = sadd.s32 %s82, 1
      %s84 = scalar_select %p81, %s82, %s83
      %p87 = pneg %p81
      %p88 = scmp.eq.s32.totalorder %s34, 3
      %p89 = por %p87, %p88
      %p90 = scmp.ne.s32.totalorder %s82, %s85
      %p91 = scmp.eq.s32.totalorder %s34, 0
      %p92 = por %p90, %p91
      %p93 = scmp.ne.s32.totalorder %s82, %s85
      %p94 = scmp.eq.s32.totalorder %s39, 3
      %p95 = por %p93, %p94
      %p96 = scmp.ne.s32.totalorder %s85, %s86
      %p97 = scmp.eq.s32.totalorder %s39, 0
      %p98 = por %p96, %p97
      %p99 = scmp.ne.s32.totalorder %s85, %s86
      %p100 = scmp.eq.s32.totalorder %s40, 3
      %p101 = por %p99, %p100
      %p103 = scmp.ne.s32.totalorder %s86, %s102
      %p104 = scmp.eq.s32.totalorder %s40, 0
      %p105 = por %p103, %p104
      %s106 = ssub.s32 %s42, %s49
      %p107 = scmp.eq.s32.totalorder %s106, 0
      %s109 = sadd.s32 %s108, 1
      %s110 = scalar_select %p107, %s108, %s109
      %p113 = pneg %p107
      %p114 = scmp.eq.s32.totalorder %s34, 3
      %p115 = por %p113, %p114
      %p116 = scmp.ne.s32.totalorder %s108, %s111
      %p117 = scmp.eq.s32.totalorder %s34, 0
      %p118 = por %p116, %p117
      %p119 = scmp.ne.s32.totalorder %s108, %s111
      %p120 = scmp.eq.s32.totalorder %s39, 3
      %p121 = por %p119, %p120
      %p122 = scmp.ne.s32.totalorder %s111, %s112
      %p123 = scmp.eq.s32.totalorder %s39, 0
      %p124 = por %p122, %p123
      %p125 = scmp.ne.s32.totalorder %s111, %s112
      %p126 = scmp.eq.s32.totalorder %s40, 3
      %p127 = por %p125, %p126
      %p129 = scmp.ne.s32.totalorder %s112, %s128
      %p130 = scmp.eq.s32.totalorder %s40, 0
      %p131 = por %p129, %p130
      %s132 = ssub.s32 %s42, %s49
      %p133 = scmp.eq.s32.totalorder %s132, 0
      %s135 = sadd.s32 %s134, 1
      %s136 = scalar_select %p133, %s134, %s135
      %p139 = pneg %p133
      %p140 = scmp.eq.s32.totalorder %s34, 3
      %p141 = por %p139, %p140
      %p142 = scmp.ne.s32.totalorder %s134, %s137
      %p143 = scmp.eq.s32.totalorder %s34, 0
      %p144 = por %p142, %p143
      %p145 = scmp.ne.s32.totalorder %s134, %s137
      %p146 = scmp.eq.s32.totalorder %s39, 3
      %p147 = por %p145, %p146
      %p148 = scmp.ne.s32.totalorder %s137, %s138
      %p149 = scmp.eq.s32.totalorder %s39, 0
      %p150 = por %p148, %p149
      %p151 = scmp.ne.s32.totalorder %s137, %s138
      %p152 = scmp.eq.s32.totalorder %s40, 3
      %p153 = por %p151, %p152
      %p155 = scmp.ne.s32.totalorder %s138, %s154
      %p156 = scmp.eq.s32.totalorder %s40, 0
      %p157 = por %p155, %p156
      %s158 = ssub.s32 %s42, %s49
      %p159 = scmp.eq.s32.totalorder %s158, 0
      %s161 = sadd.s32 %s160, 1
      %s162 = scalar_select %p159, %s160, %s161
      %p165 = pneg %p159
      %p166 = scmp.eq.s32.totalorder %s34, 3
      %p167 = por %p165, %p166
      %p168 = scmp.ne.s32.totalorder %s160, %s163
      %p169 = scmp.eq.s32.totalorder %s34, 0
      %p170 = por %p168, %p169
      %p171 = scmp.ne.s32.totalorder %s160, %s163
      %p172 = scmp.eq.s32.totalorder %s39, 3
      %p173 = por %p171, %p172
      %p174 = scmp.ne.s32.totalorder %s163, %s164
      %p175 = scmp.eq.s32.totalorder %s39, 0
      %p176 = por %p174, %p175
      %p177 = scmp.ne.s32.totalorder %s163, %s164
      %p178 = scmp.eq.s32.totalorder %s40, 3
      %p179 = por %p177, %p178
      %p181 = scmp.ne.s32.totalorder %s164, %s180
      %p182 = scmp.eq.s32.totalorder %s40, 0
      %p183 = por %p181, %p182
      %s184 = ssub.s32 %s42, %s49
      %p185 = scmp.eq.s32.totalorder %s184, 0
      %s187 = sadd.s32 %s186, 1
      %s188 = scalar_select %p185, %s186, %s187
      %p191 = pneg %p185
      %p192 = scmp.eq.s32.totalorder %s34, 3
      %p193 = por %p191, %p192
      %p194 = scmp.ne.s32.totalorder %s186, %s189
      %p195 = scmp.eq.s32.totalorder %s34, 0
      %p196 = por %p194, %p195
      %p197 = scmp.ne.s32.totalorder %s186, %s189
      %p198 = scmp.eq.s32.totalorder %s39, 3
      %p199 = por %p197, %p198
      %p200 = scmp.ne.s32.totalorder %s189, %s190
      %p201 = scmp.eq.s32.totalorder %s39, 0
      %p202 = por %p200, %p201
      %p203 = scmp.ne.s32.totalorder %s189, %s190
      %p204 = scmp.eq.s32.totalorder %s40, 3
      %p205 = por %p203, %p204
      %p207 = scmp.ne.s32.totalorder %s190, %s206
      %p208 = scmp.eq.s32.totalorder %s40, 0
      %p209 = por %p207, %p208
      %s210 = ssub.s32 %s42, %s49
      %p211 = scmp.eq.s32.totalorder %s210, 0
      %s213 = sadd.s32 %s212, 1
      %s214 = scalar_select %p211, %s212, %s213
      %p217 = pneg %p211
      %p218 = scmp.eq.s32.totalorder %s34, 3
      %p219 = por %p217, %p218
      %p220 = scmp.ne.s32.totalorder %s212, %s215
      %p221 = scmp.eq.s32.totalorder %s34, 0
      %p222 = por %p220, %p221
      %p223 = scmp.ne.s32.totalorder %s212, %s215
      %p224 = scmp.eq.s32.totalorder %s39, 3
      %p225 = por %p223, %p224
      %p226 = scmp.ne.s32.totalorder %s215, %s216
      %p227 = scmp.eq.s32.totalorder %s39, 0
      %p228 = por %p226, %p227
      %p229 = scmp.ne.s32.totalorder %s215, %s216
      %p230 = scmp.eq.s32.totalorder %s40, 3
      %p231 = por %p229, %p230
      %p233 = scmp.ne.s32.totalorder %s216, %s232
      %p234 = scmp.eq.s32.totalorder %s40, 0
      %p235 = por %p233, %p234
      %s236 = ssub.s32 %s42, %s49
      %p237 = scmp.eq.s32.totalorder %s236, 0
      %s239 = sadd.s32 %s238, 1
      %s240 = scalar_select %p237, %s238, %s239
      %p243 = pneg %p237
      %p244 = scmp.eq.s32.totalorder %s34, 3
      %p245 = por %p243, %p244
      %p246 = scmp.ne.s32.totalorder %s238, %s241
      %p247 = scmp.eq.s32.totalorder %s34, 0
      %p248 = por %p246, %p247
      %p249 = scmp.ne.s32.totalorder %s238, %s241
      %p250 = scmp.eq.s32.totalorder %s39, 3
      %p251 = por %p249, %p250
      %p252 = scmp.ne.s32.totalorder %s241, %s242
      %p253 = scmp.eq.s32.totalorder %s39, 0
      %p254 = por %p252, %p253
      %p255 = scmp.ne.s32.totalorder %s241, %s242
      %p256 = scmp.eq.s32.totalorder %s40, 3
      %p257 = por %p255, %p256
      %p259 = scmp.ne.s32.totalorder %s242, %s258
      %p260 = scmp.eq.s32.totalorder %s40, 0
      %p261 = por %p259, %p260
      %s262 = ssub.s32 %s42, %s49
      %p263 = scmp.eq.s32.totalorder %s262, 0
      %s265 = sadd.s32 %s264, 1
      %s266 = scalar_select %p263, %s264, %s265
      %p269 = pneg %p263
      %p270 = scmp.eq.s32.totalorder %s34, 3
      %p271 = por %p269, %p270
      %p272 = scmp.ne.s32.totalorder %s264, %s267
      %p273 = scmp.eq.s32.totalorder %s34, 0
      %p274 = por %p272, %p273
      %p275 = scmp.ne.s32.totalorder %s264, %s267
      %p276 = scmp.eq.s32.totalorder %s39, 3
      %p277 = por %p275, %p276
      %p278 = scmp.ne.s32.totalorder %s267, %s268
      %p279 = scmp.eq.s32.totalorder %s39, 0
      %p280 = por %p278, %p279
      %p281 = scmp.ne.s32.totalorder %s267, %s268
      %p282 = scmp.eq.s32.totalorder %s40, 3
      %p283 = por %p281, %p282
      %p285 = scmp.ne.s32.totalorder %s268, %s284
      %p286 = scmp.eq.s32.totalorder %s40, 0
      %p287 = por %p285, %p286
      %s288 = ssub.s32 %s42, %s49
      %p289 = scmp.eq.s32.totalorder %s288, 0
      %s291 = sadd.s32 %s290, 1
      %s292 = scalar_select %p289, %s290, %s291
      %p295 = pneg %p289
      %p296 = scmp.eq.s32.totalorder %s34, 3
      %p297 = por %p295, %p296
      %p298 = scmp.ne.s32.totalorder %s290, %s293
      %p299 = scmp.eq.s32.totalorder %s34, 0
      %p300 = por %p298, %p299
      %p301 = scmp.ne.s32.totalorder %s290, %s293
      %p302 = scmp.eq.s32.totalorder %s39, 3
      %p303 = por %p301, %p302
      %p304 = scmp.ne.s32.totalorder %s293, %s294
      %p305 = scmp.eq.s32.totalorder %s39, 0
      %p306 = por %p304, %p305
      %p307 = scmp.ne.s32.totalorder %s293, %s294
      %p308 = scmp.eq.s32.totalorder %s40, 3
      %p309 = por %p307, %p308
      %p311 = scmp.ne.s32.totalorder %s294, %s310
      %p312 = scmp.eq.s32.totalorder %s40, 0
      %p313 = por %p311, %p312
      %s314 = ssub.s32 %s42, %s49
      %p315 = scmp.eq.s32.totalorder %s314, 0
      %s317 = sadd.s32 %s316, 1
      %s318 = scalar_select %p315, %s316, %s317
      %p321 = pneg %p315
      %p322 = scmp.eq.s32.totalorder %s34, 3
      %p323 = por %p321, %p322
      %p324 = scmp.ne.s32.totalorder %s316, %s319
      %p325 = scmp.eq.s32.totalorder %s34, 0
      %p326 = por %p324, %p325
      %p327 = scmp.ne.s32.totalorder %s316, %s319
      %p328 = scmp.eq.s32.totalorder %s39, 3
      %p329 = por %p327, %p328
      %p330 = scmp.ne.s32.totalorder %s319, %s320
      %p331 = scmp.eq.s32.totalorder %s39, 0
      %p332 = por %p330, %p331
      %p333 = scmp.ne.s32.totalorder %s319, %s320
      %p334 = scmp.eq.s32.totalorder %s40, 3
      %p335 = por %p333, %p334
      %p337 = scmp.ne.s32.totalorder %s320, %s336
      %p338 = scmp.eq.s32.totalorder %s40, 0
      %p339 = por %p337, %p338
      %s340 = ssub.s32 %s42, %s49
      %p341 = scmp.eq.s32.totalorder %s340, 0
      %s343 = sadd.s32 %s342, 1
      %s344 = scalar_select %p341, %s342, %s343
      %p347 = pneg %p341
      %p348 = scmp.eq.s32.totalorder %s34, 3
      %p349 = por %p347, %p348
      %p350 = scmp.ne.s32.totalorder %s342, %s345
      %p351 = scmp.eq.s32.totalorder %s34, 0
      %p352 = por %p350, %p351
      %p353 = scmp.ne.s32.totalorder %s342, %s345
      %p354 = scmp.eq.s32.totalorder %s39, 3
      %p355 = por %p353, %p354
      %p356 = scmp.ne.s32.totalorder %s345, %s346
      %p357 = scmp.eq.s32.totalorder %s39, 0
      %p358 = por %p356, %p357
      %p359 = scmp.ne.s32.totalorder %s345, %s346
      %p360 = scmp.eq.s32.totalorder %s40, 3
      %p361 = por %p359, %p360
      %p363 = scmp.ne.s32.totalorder %s346, %s362
      %p364 = scmp.eq.s32.totalorder %s40, 0
      %p365 = por %p363, %p364
      %s366 = ssub.s32 %s42, %s49
      %p367 = scmp.eq.s32.totalorder %s366, 0
      %s369 = sadd.s32 %s368, 1
      %s370 = scalar_select %p367, %s368, %s369
      %p373 = pneg %p367
      %p374 = scmp.eq.s32.totalorder %s34, 3
      %p375 = por %p373, %p374
      %p376 = scmp.ne.s32.totalorder %s368, %s371
      %p377 = scmp.eq.s32.totalorder %s34, 0
      %p378 = por %p376, %p377
      %p379 = scmp.ne.s32.totalorder %s368, %s371
      %p380 = scmp.eq.s32.totalorder %s39, 3
      %p381 = por %p379, %p380
      %p382 = scmp.ne.s32.totalorder %s371, %s372
      %p383 = scmp.eq.s32.totalorder %s39, 0
      %p384 = por %p382, %p383
      %p385 = scmp.ne.s32.totalorder %s371, %s372
      %p386 = scmp.eq.s32.totalorder %s40, 3
      %p387 = por %p385, %p386
      %p389 = scmp.ne.s32.totalorder %s372, %s388
      %p390 = scmp.eq.s32.totalorder %s40, 0
      %p391 = por %p389, %p390
      %s392 = ssub.s32 %s42, %s49
      %p393 = scmp.eq.s32.totalorder %s392, 0
      %s395 = sadd.s32 %s394, 1
      %s396 = scalar_select %p393, %s394, %s395
      %p399 = pneg %p393
      %p400 = scmp.eq.s32.totalorder %s34, 3
      %p401 = por %p399, %p400
      %p402 = scmp.ne.s32.totalorder %s394, %s397
      %p403 = scmp.eq.s32.totalorder %s34, 0
      %p404 = por %p402, %p403
      %p405 = scmp.ne.s32.totalorder %s394, %s397
      %p406 = scmp.eq.s32.totalorder %s39, 3
      %p407 = por %p405, %p406
      %p408 = scmp.ne.s32.totalorder %s397, %s398
      %p409 = scmp.eq.s32.totalorder %s39, 0
      %p410 = por %p408, %p409
      %p411 = scmp.ne.s32.totalorder %s397, %s398
      %p412 = scmp.eq.s32.totalorder %s40, 3
      %p413 = por %p411, %p412
      %p415 = scmp.ne.s32.totalorder %s398, %s414
      %p416 = scmp.eq.s32.totalorder %s40, 0
      %p417 = por %p415, %p416
      %s419 = sadd.s32 %s418, 1
      %p422 = scmp.eq.s32.totalorder %s34, 3
      %p423 = scmp.ne.s32.totalorder %s418, %s420
      %p424 = scmp.eq.s32.totalorder %s34, 0
      %p425 = por %p423, %p424
      %p426 = scmp.ne.s32.totalorder %s418, %s420
      %p427 = scmp.eq.s32.totalorder %s39, 3
      %p428 = por %p426, %p427
      %p429 = scmp.ne.s32.totalorder %s420, %s421
      %p430 = scmp.eq.s32.totalorder %s39, 0
      %p431 = por %p429, %p430
      %p432 = scmp.ne.s32.totalorder %s420, %s421
      %p433 = scmp.eq.s32.totalorder %s40, 3
      %p434 = por %p432, %p433
      %p436 = scmp.ne.s32.totalorder %s421, %s435
      %p437 = scmp.eq.s32.totalorder %s40, 0
      %p438 = por %p436, %p437
      %s440 = sadd.s32 %s439, 1
      %p443 = scmp.eq.s32.totalorder %s34, 3
      %p444 = scmp.ne.s32.totalorder %s439, %s441
      %p445 = scmp.eq.s32.totalorder %s34, 0
      %p446 = por %p444, %p445
      %p447 = scmp.ne.s32.totalorder %s439, %s441
      %p448 = scmp.eq.s32.totalorder %s39, 3
      %p449 = por %p447, %p448
      %p450 = scmp.ne.s32.totalorder %s441, %s442
      %p451 = scmp.eq.s32.totalorder %s39, 0
      %p452 = por %p450, %p451
      %p453 = scmp.ne.s32.totalorder %s441, %s442
      %p454 = scmp.eq.s32.totalorder %s40, 3
      %p455 = por %p453, %p454
      %p457 = scmp.ne.s32.totalorder %s442, %s456
      %p458 = scmp.eq.s32.totalorder %s40, 0
      %p459 = por %p457, %p458
      %s460 = ssub.s32 %s41, %s53
      %p461 = scmp.eq.s32.totalorder %s460, 0
      %s463 = sadd.s32 %s462, 1
      %s464 = scalar_select %p461, %s462, %s463
      %p467 = pneg %p461
      %p468 = scmp.eq.s32.totalorder %s34, 3
      %p469 = por %p467, %p468
      %p470 = scmp.ne.s32.totalorder %s462, %s465
      %p471 = scmp.eq.s32.totalorder %s34, 0
      %p472 = por %p470, %p471
      %p473 = scmp.ne.s32.totalorder %s462, %s465
      %p474 = scmp.eq.s32.totalorder %s39, 3
      %p475 = por %p473, %p474
      %p476 = scmp.ne.s32.totalorder %s465, %s466
      %p477 = scmp.eq.s32.totalorder %s39, 0
      %p478 = por %p476, %p477
      %p479 = scmp.ne.s32.totalorder %s465, %s466
      %p480 = scmp.eq.s32.totalorder %s40, 3
      %p481 = por %p479, %p480
      %p483 = scmp.ne.s32.totalorder %s466, %s482
      %p484 = scmp.eq.s32.totalorder %s40, 0
      %p485 = por %p483, %p484
      %p486 = scmp.le.s32.totalorder 1, %s34
      %p487 = scmp.lt.s32.totalorder %s34, 5
      %p488 = pnand %p486, %p487
      %p489 = pneg %p488
      // Predicated region
      $region9: #{tpu_custom_call.1} parent=5 // pred_check
        _
      $region10: #{tpu_custom_call.1} parent=5 // pred_check_branch
        %491 = sbr.rel (%p488) target = $region12
      $region11: #{tpu_custom_call.1} parent=5 // pred_region
        %s492 = ssub.s32 %s34, 1
        // Predicated region
        $region13: #{tpu_custom_call.1} parent=11 // pred_check
          %p493 = pneg %p431
        $region14: #{tpu_custom_call.1} parent=11 // pred_check_branch
          %495 = sbr.rel (%p493) target = $region16
        $region15: #{tpu_custom_call.1} parent=11 // pred_region
          _
        $region16: #{tpu_custom_call.1} parent=11 // pred_fallthru
          _
        // Predicated region
        $region17: #{tpu_custom_call.1} parent=11 // pred_check
          %p496 = pneg %p452
        $region18: #{tpu_custom_call.1} parent=11 // pred_check_branch
          %498 = sbr.rel (%p496) target = $region20
        $region19: #{tpu_custom_call.1} parent=11 // pred_region
          _
        $region20: #{tpu_custom_call.1} parent=11 // pred_fallthru
          _
      $region12: #{tpu_custom_call.1} parent=5 // pred_fallthru
        _
      %p499 = scmp.lt.s32.totalorder %s34, 4
      // Predicated region
      $region21: #{tpu_custom_call.1} parent=5 // pred_check
        %p500 = pneg %p499
      $region22: #{tpu_custom_call.1} parent=5 // pred_check_branch
        %502 = sbr.rel (%p500) target = $region24
      $region23: #{tpu_custom_call.1} parent=5 // pred_region
        // Predicated region
        $region25: #{tpu_custom_call.1} parent=23 // pred_check
          %p503 = pneg %p66
        $region26: #{tpu_custom_call.1} parent=23 // pred_check_branch
          %505 = sbr.rel (%p503) target = $region28
        $region27: #{tpu_custom_call.1} parent=23 // pred_region
          %s506 = smul.u32 32, %s41
          %p507 = scmp.lt.s32.totalorder %s506, 63
          %s508 = scalar_select %p507, %s506, 63
          %s509 = smul.addr %s508, 8
          %s510 = scalar_lea.vmem %s0, %s509
          %s511 = smul.u32 32, %s41
        $region28: #{tpu_custom_call.1} parent=23 // pred_fallthru
          _
        // Predicated region
        $region29: #{tpu_custom_call.1} parent=23 // pred_check
          %p512 = pneg %p92
        $region30: #{tpu_custom_call.1} parent=23 // pred_check_branch
          %514 = sbr.rel (%p512) target = $region32
        $region31: #{tpu_custom_call.1} parent=23 // pred_region
          %s515 = sand.u32 %s82, 1
          %s516 = scalar_lea.sflag [#allocation4], %s515
          %s517 = sand.u32 %s82, 1
          %s518 = scalar_lea.vmem [#allocation3], %s517
          %s520 = ssub.s32 16, 16
          %521 = vsyncadd %s516, %s520
          %s522 = smul.addr %s42, 16
          %s523 = scalar_lea.hbm %s1, %s522
          %s525 = sshll.u32 %s518, 4
          %s526 = int_to_ptr.vmem [resolvable:$true] %s525
          %528 = dma.hbm_to_vmem [thread:$0]  %s523, 16, %s526, %s516
        $region32: #{tpu_custom_call.1} parent=23 // pred_fallthru
          _
        // Predicated region
        $region33: #{tpu_custom_call.1} parent=23 // pred_check
          %p529 = pneg %p118
        $region34: #{tpu_custom_call.1} parent=23 // pred_check_branch
          %531 = sbr.rel (%p529) target = $region36
        $region35: #{tpu_custom_call.1} parent=23 // pred_region
          %s532 = sand.u32 %s34, 1
          %s533 = scalar_lea.sflag [#allocation7], %s532
          %s534 = sand.u32 %s108, 1
          %s535 = scalar_lea.vmem [#allocation6], %s534
          %s537 = ssub.s32 16, 16
          %538 = vsyncadd %s533, %s537
          %s539 = smul.addr %s42, 16
          %s540 = scalar_lea.hbm %s2, %s539
          %s542 = sshll.u32 %s535, 4
          %s543 = int_to_ptr.vmem [resolvable:$true] %s542
          %545 = dma.hbm_to_vmem [thread:$0]  %s540, 16, %s543, %s533
        $region36: #{tpu_custom_call.1} parent=23 // pred_fallthru
          _
        // Predicated region
        $region37: #{tpu_custom_call.1} parent=23 // pred_check
          %p546 = pneg %p144
        $region38: #{tpu_custom_call.1} parent=23 // pred_check_branch
          %548 = sbr.rel (%p546) target = $region40
        $region39: #{tpu_custom_call.1} parent=23 // pred_region
          %p549 = scmp.lt.s32.totalorder %s42, 1
          %s550 = scalar_select %p549, %s42, 1
          %s551 = smul.addr %s550, 32
          %s552 = smul.addr %s551, 4
          %s553 = scalar_lea.vmem %s3, %s552
        $region40: #{tpu_custom_call.1} parent=23 // pred_fallthru
          _
        // Predicated region
        $region41: #{tpu_custom_call.1} parent=23 // pred_check
          %p554 = pneg %p170
        $region42: #{tpu_custom_call.1} parent=23 // pred_check_branch
          %556 = sbr.rel (%p554) target = $region44
        $region43: #{tpu_custom_call.1} parent=23 // pred_region
          %p557 = scmp.lt.s32.totalorder %s42, 1
          %s558 = scalar_select %p557, %s42, 1
          %s559 = smul.addr %s558, 32
          %s560 = smul.addr %s559, 4
          %s561 = scalar_lea.vmem %s4, %s560
        $region44: #{tpu_custom_call.1} parent=23 // pred_fallthru
          _
        // Predicated region
        $region45: #{tpu_custom_call.1} parent=23 // pred_check
          %p562 = pneg %p196
        $region46: #{tpu_custom_call.1} parent=23 // pred_check_branch
          %564 = sbr.rel (%p562) target = $region48
        $region47: #{tpu_custom_call.1} parent=23 // pred_region
          %p565 = scmp.lt.s32.totalorder %s42, 1
          %s566 = scalar_select %p565, %s42, 1
          %s567 = smul.addr %s566, 32
          %s568 = smul.addr %s567, 4
          %s569 = scalar_lea.vmem %s5, %s568
        $region48: #{tpu_custom_call.1} parent=23 // pred_fallthru
          _
        // Predicated region
        $region49: #{tpu_custom_call.1} parent=23 // pred_check
          %p570 = pneg %p222
        $region50: #{tpu_custom_call.1} parent=23 // pred_check_branch
          %572 = sbr.rel (%p570) target = $region52
        $region51: #{tpu_custom_call.1} parent=23 // pred_region
          %p573 = scmp.lt.s32.totalorder %s42, 1
          %s574 = scalar_select %p573, %s42, 1
          %s575 = smul.addr %s574, 16
          %s576 = smul.addr %s575, 4
          %s577 = scalar_lea.vmem %s6, %s576
        $region52: #{tpu_custom_call.1} parent=23 // pred_fallthru
          _
        // Predicated region
        $region53: #{tpu_custom_call.1} parent=23 // pred_check
          %p578 = pneg %p248
        $region54: #{tpu_custom_call.1} parent=23 // pred_check_branch
          %580 = sbr.rel (%p578) target = $region56
        $region55: #{tpu_custom_call.1} parent=23 // pred_region
          %p581 = scmp.lt.s32.totalorder %s42, 1
          %s582 = scalar_select %p581, %s42, 1
          %s583 = scalar_lea.vmem %s7, %s582
        $region56: #{tpu_custom_call.1} parent=23 // pred_fallthru
          _
        // Predicated region
        $region57: #{tpu_custom_call.1} parent=23 // pred_check
          %p584 = pneg %p274
        $region58: #{tpu_custom_call.1} parent=23 // pred_check_branch
          %586 = sbr.rel (%p584) target = $region60
        $region59: #{tpu_custom_call.1} parent=23 // pred_region
          %p587 = scmp.lt.s32.totalorder %s42, 1
          %s588 = scalar_select %p587, %s42, 1
          %s589 = scalar_lea.vmem %s8, %s588
        $region60: #{tpu_custom_call.1} parent=23 // pred_fallthru
          _
        // Predicated region
        $region61: #{tpu_custom_call.1} parent=23 // pred_check
          %p590 = pneg %p300
        $region62: #{tpu_custom_call.1} parent=23 // pred_check_branch
          %592 = sbr.rel (%p590) target = $region64
        $region63: #{tpu_custom_call.1} parent=23 // pred_region
          %s593 = sand.u32 %s34, 1
          %s594 = scalar_lea.sflag [#allocation7], %s593
          %s595 = sand.u32 %s290, 1
          %s596 = scalar_lea.vmem [#allocation8], %s595
          %s598 = ssub.s32 16, 16
          %599 = vsyncadd %s594, %s598
          %s600 = smul.addr %s42, 16
          %s601 = scalar_lea.hbm %s9, %s600
          %s603 = sshll.u32 %s596, 4
          %s604 = int_to_ptr.vmem [resolvable:$true] %s603
          %606 = dma.hbm_to_vmem [thread:$0]  %s601, 16, %s604, %s594
        $region64: #{tpu_custom_call.1} parent=23 // pred_fallthru
          _
        // Predicated region
        $region65: #{tpu_custom_call.1} parent=23 // pred_check
          %p607 = pneg %p326
        $region66: #{tpu_custom_call.1} parent=23 // pred_check_branch
          %609 = sbr.rel (%p607) target = $region68
        $region67: #{tpu_custom_call.1} parent=23 // pred_region
          %p610 = scmp.lt.s32.totalorder %s42, 1
          %s611 = scalar_select %p610, %s42, 1
          %s612 = smul.addr %s611, 64
          %s613 = smul.addr %s612, 4
          %s614 = scalar_lea.vmem %s10, %s613
        $region68: #{tpu_custom_call.1} parent=23 // pred_fallthru
          _
        // Predicated region
        $region69: #{tpu_custom_call.1} parent=23 // pred_check
          %p615 = pneg %p352
        $region70: #{tpu_custom_call.1} parent=23 // pred_check_branch
          %617 = sbr.rel (%p615) target = $region72
        $region71: #{tpu_custom_call.1} parent=23 // pred_region
          %p618 = scmp.lt.s32.totalorder %s42, 1
          %s619 = scalar_select %p618, %s42, 1
          %s620 = smul.addr %s619, 4
          %s621 = scalar_lea.vmem %s11, %s620
        $region72: #{tpu_custom_call.1} parent=23 // pred_fallthru
          _
        // Predicated region
        $region73: #{tpu_custom_call.1} parent=23 // pred_check
          %p622 = pneg %p378
        $region74: #{tpu_custom_call.1} parent=23 // pred_check_branch
          %624 = sbr.rel (%p622) target = $region76
        $region75: #{tpu_custom_call.1} parent=23 // pred_region
          %s625 = sand.u32 %s34, 1
          %s626 = scalar_lea.sflag [#allocation10], %s625
          %s627 = sand.u32 %s368, 1
          %s628 = smul.addr %s627, 256
          %s629 = scalar_lea.vmem [#allocation9], %s628
          %s631 = ssub.s32 4096, 4096
          %632 = vsyncadd %s626, %s631
          %s633 = smul.addr %s42, 64
          %s634 = smul.addr %s633, 64
          %s635 = scalar_lea.hbm %s12, %s634
          %s636 = sshll.u32 %s629, 4
          %s637 = int_to_ptr.vmem [resolvable:$true] %s636
          %642 = dma.hbm_to_vmem [thread:$0]  %s635, 4096, %s637, %s626, 64, 64, 4
        $region76: #{tpu_custom_call.1} parent=23 // pred_fallthru
          _
        // Predicated region
        $region77: #{tpu_custom_call.1} parent=23 // pred_check
          %p643 = pneg %p404
        $region78: #{tpu_custom_call.1} parent=23 // pred_check_branch
          %645 = sbr.rel (%p643) target = $region80
        $region79: #{tpu_custom_call.1} parent=23 // pred_region
          %s646 = sand.u32 %s34, 1
          %s647 = scalar_lea.sflag [#allocation10], %s646
          %s648 = sand.u32 %s394, 1
          %s649 = scalar_lea.vmem [#allocation11], %s648
          %s651 = ssub.s32 16, 16
          %652 = vsyncadd %s647, %s651
          %s653 = smul.addr %s42, 16
          %s654 = scalar_lea.hbm %s13, %s653
          %s656 = sshll.u32 %s649, 4
          %s657 = int_to_ptr.vmem [resolvable:$true] %s656
          %659 = dma.hbm_to_vmem [thread:$0]  %s654, 16, %s657, %s647
        $region80: #{tpu_custom_call.1} parent=23 // pred_fallthru
          _
      $region24: #{tpu_custom_call.1} parent=5 // pred_fallthru
        _
      %p660 = scmp.le.s32.totalorder 1, %s34
      %p661 = scmp.lt.s32.totalorder %s34, 5
      %p662 = pnand %p660, %p661
      %p663 = pneg %p662
      // Predicated region
      $region81: #{tpu_custom_call.1} parent=5 // pred_check
        _
      $region82: #{tpu_custom_call.1} parent=5 // pred_check_branch
        %665 = sbr.rel (%p662) target = $region84
      $region83: #{tpu_custom_call.1} parent=5 // pred_region
        %s666 = ssub.s32 %s34, 1
        %s667 = sand.u32 %s85, 1
        %s668 = scalar_lea.sflag [#allocation4], %s667
        %s669 = sand.u32 %s85, 1
        %s670 = scalar_lea.vmem [#allocation3], %s669
        // Predicated region
        $region85: #{tpu_custom_call.1} parent=83 // pred_check
          %p671 = pneg %p98
        $region86: #{tpu_custom_call.1} parent=83 // pred_check_branch
          %673 = sbr.rel (%p671) target = $region88
        $region87: #{tpu_custom_call.1} parent=83 // pred_region
          %674 = dma.done %s668, 16
        $region88: #{tpu_custom_call.1} parent=83 // pred_fallthru
          _
        %s675 = sand.u32 %s39, 1
        %s676 = scalar_lea.sflag [#allocation7], %s675
        %s677 = sand.u32 %s111, 1
        %s678 = scalar_lea.vmem [#allocation6], %s677
        // Predicated region
        $region89: #{tpu_custom_call.1} parent=83 // pred_check
          %p679 = pneg %p124
        $region90: #{tpu_custom_call.1} parent=83 // pred_check_branch
          %681 = sbr.rel (%p679) target = $region92
        $region91: #{tpu_custom_call.1} parent=83 // pred_region
          %682 = dma.done %s676, 16
        $region92: #{tpu_custom_call.1} parent=83 // pred_fallthru
          _
        %s683 = sand.u32 %s39, 1
        %s684 = scalar_lea.sflag [#allocation7], %s683
        %s685 = sand.u32 %s293, 1
        %s686 = scalar_lea.vmem [#allocation8], %s685
        // Predicated region
        $region93: #{tpu_custom_call.1} parent=83 // pred_check
          %p687 = pneg %p306
        $region94: #{tpu_custom_call.1} parent=83 // pred_check_branch
          %689 = sbr.rel (%p687) target = $region96
        $region95: #{tpu_custom_call.1} parent=83 // pred_region
          %690 = dma.done %s684, 16
        $region96: #{tpu_custom_call.1} parent=83 // pred_fallthru
          _
        %s691 = sand.u32 %s39, 1
        %s692 = scalar_lea.sflag [#allocation10], %s691
        %s693 = sand.u32 %s371, 1
        %s694 = smul.addr %s693, 256
        %s695 = scalar_lea.vmem [#allocation9], %s694
        // Predicated region
        $region97: #{tpu_custom_call.1} parent=83 // pred_check
          %p696 = pneg %p384
        $region98: #{tpu_custom_call.1} parent=83 // pred_check_branch
          %698 = sbr.rel (%p696) target = $region100
        $region99: #{tpu_custom_call.1} parent=83 // pred_region
          %699 = dma.done %s692, 4096
        $region100: #{tpu_custom_call.1} parent=83 // pred_fallthru
          _
        %s700 = sand.u32 %s39, 1
        %s701 = scalar_lea.sflag [#allocation10], %s700
        %s702 = sand.u32 %s397, 1
        %s703 = scalar_lea.vmem [#allocation11], %s702
        // Predicated region
        $region101: #{tpu_custom_call.1} parent=83 // pred_check
          %p704 = pneg %p410
        $region102: #{tpu_custom_call.1} parent=83 // pred_check_branch
          %706 = sbr.rel (%p704) target = $region104
        $region103: #{tpu_custom_call.1} parent=83 // pred_region
          %707 = dma.done %s701, 16
        $region104: #{tpu_custom_call.1} parent=83 // pred_fallthru
          _
        %s708 = smul.u32 32, %s43
        %p709 = scmp.lt.s32.totalorder %s708, 63
        %s710 = scalar_select %p709, %s708, 63
        %s711 = smul.addr %s710, 8
        %s712 = scalar_lea.vmem %s0, %s711
        %p713 = pneg %p72
        %p714 = pneg %p69
        %s715 = sand.u32 %s85, 1
        %s716 = scalar_lea.sflag [#allocation4], %s715
        %s717 = sand.u32 %s85, 1
        %s718 = scalar_lea.vmem [#allocation3], %s717
        %p719 = pneg %p98
        %p720 = pneg %p95
        %s721 = sand.u32 %s39, 1
        %s722 = scalar_lea.sflag [#allocation7], %s721
        %s723 = sand.u32 %s111, 1
        %s724 = scalar_lea.vmem [#allocation6], %s723
        %p725 = pneg %p124
        %p726 = pneg %p121
        %p727 = scmp.lt.s32.totalorder %s44, 1
        %s728 = scalar_select %p727, %s44, 1
        %s729 = smul.addr %s728, 32
        %s730 = smul.addr %s729, 4
        %s731 = scalar_lea.vmem %s3, %s730
        %p732 = pneg %p150
        %p733 = pneg %p147
        %p734 = scmp.lt.s32.totalorder %s44, 1
        %s735 = scalar_select %p734, %s44, 1
        %s736 = smul.addr %s735, 32
        %s737 = smul.addr %s736, 4
        %s738 = scalar_lea.vmem %s4, %s737
        %p739 = pneg %p176
        %p740 = pneg %p173
        %p741 = scmp.lt.s32.totalorder %s44, 1
        %s742 = scalar_select %p741, %s44, 1
        %s743 = smul.addr %s742, 32
        %s744 = smul.addr %s743, 4
        %s745 = scalar_lea.vmem %s5, %s744
        %p746 = pneg %p202
        %p747 = pneg %p199
        %p748 = scmp.lt.s32.totalorder %s44, 1
        %s749 = scalar_select %p748, %s44, 1
        %s750 = smul.addr %s749, 16
        %s751 = smul.addr %s750, 4
        %s752 = scalar_lea.vmem %s6, %s751
        %p753 = pneg %p228
        %p754 = pneg %p225
        %p755 = scmp.lt.s32.totalorder %s44, 1
        %s756 = scalar_select %p755, %s44, 1
        %s757 = scalar_lea.vmem %s7, %s756
        %p758 = pneg %p254
        %p759 = pneg %p251
        %p760 = scmp.lt.s32.totalorder %s44, 1
        %s761 = scalar_select %p760, %s44, 1
        %s762 = scalar_lea.vmem %s8, %s761
        %p763 = pneg %p280
        %p764 = pneg %p277
        %s765 = sand.u32 %s39, 1
        %s766 = scalar_lea.sflag [#allocation7], %s765
        %s767 = sand.u32 %s293, 1
        %s768 = scalar_lea.vmem [#allocation8], %s767
        %p769 = pneg %p306
        %p770 = pneg %p303
        %p771 = scmp.lt.s32.totalorder %s44, 1
        %s772 = scalar_select %p771, %s44, 1
        %s773 = smul.addr %s772, 64
        %s774 = smul.addr %s773, 4
        %s775 = scalar_lea.vmem %s10, %s774
        %p776 = pneg %p332
        %p777 = pneg %p329
        %p778 = scmp.lt.s32.totalorder %s44, 1
        %s779 = scalar_select %p778, %s44, 1
        %s780 = smul.addr %s779, 4
        %s781 = scalar_lea.vmem %s11, %s780
        %p782 = pneg %p358
        %p783 = pneg %p355
        %s784 = sand.u32 %s39, 1
        %s785 = scalar_lea.sflag [#allocation10], %s784
        %s786 = sand.u32 %s371, 1
        %s787 = smul.addr %s786, 256
        %s788 = scalar_lea.vmem [#allocation9], %s787
        %p789 = pneg %p384
        %p790 = pneg %p381
        %s791 = sand.u32 %s39, 1
        %s792 = scalar_lea.sflag [#allocation10], %s791
        %s793 = sand.u32 %s397, 1
        %s794 = scalar_lea.vmem [#allocation11], %s793
        %p795 = pneg %p410
        %p796 = pneg %p407
        %p797 = pneg %p431
        %p798 = pneg %p428
        %p799 = pneg %p452
        %p800 = pneg %p449
        %p801 = pneg %p478
        %p802 = pneg %p475
        %s803 = sand.u32 %s465, 1
        %s804 = scalar_lea.sflag [#allocation5], %s803
        %s805 = sand.u32 %s465, 1
        %s806 = smul.addr %s805, 128
        %s807 = scalar_lea.vmem [#allocation12], %s806
        %s808 = smul.u32 32, %s43
        %p809 = scmp.lt.s32.totalorder %s808, 63
        %s810 = scalar_select %p809, %s808, 63
        %s811 = smul.addr %s810, 8
        %s812 = scalar_lea.vmem %s0, %s811
        %s813 = smul.u32 32, %s43
        %p814 = scmp.lt.s32.totalorder %s44, 1
        %s815 = scalar_select %p814, %s44, 1
        %s816 = smul.addr %s815, 32
        %s817 = smul.addr %s816, 4
        %s818 = scalar_lea.vmem %s3, %s817
        %p819 = scmp.lt.s32.totalorder %s44, 1
        %s820 = scalar_select %p819, %s44, 1
        %s821 = smul.addr %s820, 32
        %s822 = smul.addr %s821, 4
        %s823 = scalar_lea.vmem %s4, %s822
        %p824 = scmp.lt.s32.totalorder %s44, 1
        %s825 = scalar_select %p824, %s44, 1
        %s826 = smul.addr %s825, 32
        %s827 = smul.addr %s826, 4
        %s828 = scalar_lea.vmem %s5, %s827
        %p829 = scmp.lt.s32.totalorder %s44, 1
        %s830 = scalar_select %p829, %s44, 1
        %s831 = smul.addr %s830, 16
        %s832 = smul.addr %s831, 4
        %s833 = scalar_lea.vmem %s6, %s832
        %p834 = scmp.lt.s32.totalorder %s44, 1
        %s835 = scalar_select %p834, %s44, 1
        %s836 = scalar_lea.vmem %s7, %s835
        %p837 = scmp.lt.s32.totalorder %s44, 1
        %s838 = scalar_select %p837, %s44, 1
        %s839 = scalar_lea.vmem %s8, %s838
        %p840 = scmp.lt.s32.totalorder %s44, 1
        %s841 = scalar_select %p840, %s44, 1
        %s842 = smul.addr %s841, 64
        %s843 = smul.addr %s842, 4
        %s844 = scalar_lea.vmem %s10, %s843
        %p845 = scmp.lt.s32.totalorder %s44, 1
        %s846 = scalar_select %p845, %s44, 1
        %s847 = smul.addr %s846, 4
        %s848 = scalar_lea.vmem %s11, %s847
        %s849 = smul.u32 32, %s43
        %p851 = scmp.eq.s32.totalorder %s44, 0
        // Predicated region
        $region105: #{tpu_custom_call.1} parent=83 // pred_check
          %p852 = pneg %p851
        $region106: #{tpu_custom_call.1} parent=83 // pred_check_branch
          %854 = sbr.rel (%p852) target = $region108
        $region107: #{tpu_custom_call.1} parent=83 // pred_region
          %v855 = vld [vmem:[%s812] sm:$0xff]
          %v856 = vld [vmem:[%s812 + $0x8] sm:$0xff]
          %v857 = vld [vmem:[%s812 + $0x10] sm:$0xff]
          %v858 = vld [vmem:[%s812 + $0x18] sm:$0xff]
          %v859 = vld [vmem:[%s812 + $0x20] sm:$0xff]
          %v860 = vld [vmem:[%s812 + $0x28] sm:$0xff]
          %v861 = vld [vmem:[%s812 + $0x30] sm:$0xff]
          %v862 = vld [vmem:[%s812 + $0x38] sm:$0xff]
          %v863 = vld [vmem:[%s812 + $0x40] sm:$0xff]
          %v864 = vld [vmem:[%s812 + $0x48] sm:$0xff]
          %v865 = vld [vmem:[%s812 + $0x50] sm:$0xff]
          %v866 = vld [vmem:[%s812 + $0x58] sm:$0xff]
          %v867 = vld [vmem:[%s812 + $0x60] sm:$0xff]
          %v868 = vld [vmem:[%s812 + $0x68] sm:$0xff]
          %v869 = vld [vmem:[%s812 + $0x70] sm:$0xff]
          %v870 = vld [vmem:[%s812 + $0x78] sm:$0xff]
          %v871 = vld [vmem:[%s812 + $0x80] sm:$0xff]
          %v872 = vld [vmem:[%s812 + $0x88] sm:$0xff]
          %v873 = vld [vmem:[%s812 + $0x90] sm:$0xff]
          %v874 = vld [vmem:[%s812 + $0x98] sm:$0xff]
          %v875 = vld [vmem:[%s812 + $0xa0] sm:$0xff]
          %v876 = vld [vmem:[%s812 + $0xa8] sm:$0xff]
          %v877 = vld [vmem:[%s812 + $0xb0] sm:$0xff]
          %v878 = vld [vmem:[%s812 + $0xb8] sm:$0xff]
          %v879 = vld [vmem:[%s812 + $0xc0] sm:$0xff]
          %v880 = vld [vmem:[%s812 + $0xc8] sm:$0xff]
          %v881 = vld [vmem:[%s812 + $0xd0] sm:$0xff]
          %v882 = vld [vmem:[%s812 + $0xd8] sm:$0xff]
          %v883 = vld [vmem:[%s812 + $0xe0] sm:$0xff]
          %v884 = vld [vmem:[%s812 + $0xe8] sm:$0xff]
          %v885 = vld [vmem:[%s812 + $0xf0] sm:$0xff]
          %v886 = vld [vmem:[%s812 + $0xf8] sm:$0xff]
          %887 = vst [vmem:[#allocation2] sm:$0xff] %v855
          %888 = vst [vmem:[#allocation2 + $0x8] sm:$0xff] %v856
          %889 = vst [vmem:[#allocation2 + $0x10] sm:$0xff] %v857
          %890 = vst [vmem:[#allocation2 + $0x18] sm:$0xff] %v858
          %891 = vst [vmem:[#allocation2 + $0x20] sm:$0xff] %v859
          %892 = vst [vmem:[#allocation2 + $0x28] sm:$0xff] %v860
          %893 = vst [vmem:[#allocation2 + $0x30] sm:$0xff] %v861
          %894 = vst [vmem:[#allocation2 + $0x38] sm:$0xff] %v862
          %895 = vst [vmem:[#allocation2 + $0x40] sm:$0xff] %v863
          %896 = vst [vmem:[#allocation2 + $0x48] sm:$0xff] %v864
          %897 = vst [vmem:[#allocation2 + $0x50] sm:$0xff] %v865
          %898 = vst [vmem:[#allocation2 + $0x58] sm:$0xff] %v866
          %899 = vst [vmem:[#allocation2 + $0x60] sm:$0xff] %v867
          %900 = vst [vmem:[#allocation2 + $0x68] sm:$0xff] %v868
          %901 = vst [vmem:[#allocation2 + $0x70] sm:$0xff] %v869
          %902 = vst [vmem:[#allocation2 + $0x78] sm:$0xff] %v870
          %903 = vst [vmem:[#allocation2 + $0x80] sm:$0xff] %v871
          %904 = vst [vmem:[#allocation2 + $0x88] sm:$0xff] %v872
          %905 = vst [vmem:[#allocation2 + $0x90] sm:$0xff] %v873
          %906 = vst [vmem:[#allocation2 + $0x98] sm:$0xff] %v874
          %907 = vst [vmem:[#allocation2 + $0xa0] sm:$0xff] %v875
          %908 = vst [vmem:[#allocation2 + $0xa8] sm:$0xff] %v876
          %909 = vst [vmem:[#allocation2 + $0xb0] sm:$0xff] %v877
          %910 = vst [vmem:[#allocation2 + $0xb8] sm:$0xff] %v878
          %911 = vst [vmem:[#allocation2 + $0xc0] sm:$0xff] %v879
          %912 = vst [vmem:[#allocation2 + $0xc8] sm:$0xff] %v880
          %913 = vst [vmem:[#allocation2 + $0xd0] sm:$0xff] %v881
          %914 = vst [vmem:[#allocation2 + $0xd8] sm:$0xff] %v882
          %915 = vst [vmem:[#allocation2 + $0xe0] sm:$0xff] %v883
          %916 = vst [vmem:[#allocation2 + $0xe8] sm:$0xff] %v884
          %917 = vst [vmem:[#allocation2 + $0xf0] sm:$0xff] %v885
          %918 = vst [vmem:[#allocation2 + $0xf8] sm:$0xff] %v886
        $region108: #{tpu_custom_call.1} parent=83 // pred_fallthru
          _
        %v919 = vld [vmem:[#allocation2] sm:$0xff]
        %v920 = vld [vmem:[#allocation2 + $0x8] sm:$0xff]
        %v921 = vld [vmem:[#allocation2 + $0x10] sm:$0xff]
        %v922 = vld [vmem:[#allocation2 + $0x18] sm:$0xff]
        %v923 = vld [vmem:[#allocation2 + $0x20] sm:$0xff]
        %v924 = vld [vmem:[#allocation2 + $0x28] sm:$0xff]
        %v925 = vld [vmem:[#allocation2 + $0x30] sm:$0xff]
        %v926 = vld [vmem:[#allocation2 + $0x38] sm:$0xff]
        %v927 = vld [vmem:[#allocation2 + $0x40] sm:$0xff]
        %v928 = vld [vmem:[#allocation2 + $0x48] sm:$0xff]
        %v929 = vld [vmem:[#allocation2 + $0x50] sm:$0xff]
        %v930 = vld [vmem:[#allocation2 + $0x58] sm:$0xff]
        %v931 = vld [vmem:[#allocation2 + $0x60] sm:$0xff]
        %v932 = vld [vmem:[#allocation2 + $0x68] sm:$0xff]
        %v933 = vld [vmem:[#allocation2 + $0x70] sm:$0xff]
        %v934 = vld [vmem:[#allocation2 + $0x78] sm:$0xff]
        %v935 = vld [vmem:[#allocation2 + $0x80] sm:$0xff]
        %v936 = vld [vmem:[#allocation2 + $0x88] sm:$0xff]
        %v937 = vld [vmem:[#allocation2 + $0x90] sm:$0xff]
        %v938 = vld [vmem:[#allocation2 + $0x98] sm:$0xff]
        %v939 = vld [vmem:[#allocation2 + $0xa0] sm:$0xff]
        %v940 = vld [vmem:[#allocation2 + $0xa8] sm:$0xff]
        %v941 = vld [vmem:[#allocation2 + $0xb0] sm:$0xff]
        %v942 = vld [vmem:[#allocation2 + $0xb8] sm:$0xff]
        %v943 = vld [vmem:[#allocation2 + $0xc0] sm:$0xff]
        %v944 = vld [vmem:[#allocation2 + $0xc8] sm:$0xff]
        %v945 = vld [vmem:[#allocation2 + $0xd0] sm:$0xff]
        %v946 = vld [vmem:[#allocation2 + $0xd8] sm:$0xff]
        %v947 = vld [vmem:[#allocation2 + $0xe0] sm:$0xff]
        %v948 = vld [vmem:[#allocation2 + $0xe8] sm:$0xff]
        %v949 = vld [vmem:[#allocation2 + $0xf0] sm:$0xff]
        %v950 = vld [vmem:[#allocation2 + $0xf8] sm:$0xff]
        %951 = vadd.xlane.f32.xlu0 %v919
        %v952 = vpop.xlane.xlu0 %951
        %953 = vadd.xlane.f32.xlu0 %v920
        %v954 = vpop.xlane.xlu0 %953
        %955 = vadd.xlane.f32.xlu0 %v921
        %v956 = vpop.xlane.xlu0 %955
        %957 = vadd.xlane.f32.xlu0 %v922
        %v958 = vpop.xlane.xlu0 %957
        %959 = vadd.xlane.f32.xlu0 %v923
        %v960 = vpop.xlane.xlu0 %959
        %961 = vadd.xlane.f32.xlu0 %v924
        %v962 = vpop.xlane.xlu0 %961
        %963 = vadd.xlane.f32.xlu0 %v925
        %v964 = vpop.xlane.xlu0 %963
        %965 = vadd.xlane.f32.xlu0 %v926
        %v966 = vpop.xlane.xlu0 %965
        %967 = vadd.xlane.f32.xlu0 %v927
        %v968 = vpop.xlane.xlu0 %967
        %969 = vadd.xlane.f32.xlu0 %v928
        %v970 = vpop.xlane.xlu0 %969
        %971 = vadd.xlane.f32.xlu0 %v929
        %v972 = vpop.xlane.xlu0 %971
        %973 = vadd.xlane.f32.xlu0 %v930
        %v974 = vpop.xlane.xlu0 %973
        %975 = vadd.xlane.f32.xlu0 %v931
        %v976 = vpop.xlane.xlu0 %975
        %977 = vadd.xlane.f32.xlu0 %v932
        %v978 = vpop.xlane.xlu0 %977
        %979 = vadd.xlane.f32.xlu0 %v933
        %v980 = vpop.xlane.xlu0 %979
        %981 = vadd.xlane.f32.xlu0 %v934
        %v982 = vpop.xlane.xlu0 %981
        %983 = vadd.xlane.f32.xlu0 %v935
        %v984 = vpop.xlane.xlu0 %983
        %985 = vadd.xlane.f32.xlu0 %v936
        %v986 = vpop.xlane.xlu0 %985
        %987 = vadd.xlane.f32.xlu0 %v937
        %v988 = vpop.xlane.xlu0 %987
        %989 = vadd.xlane.f32.xlu0 %v938
        %v990 = vpop.xlane.xlu0 %989
        %991 = vadd.xlane.f32.xlu0 %v939
        %v992 = vpop.xlane.xlu0 %991
        %993 = vadd.xlane.f32.xlu0 %v940
        %v994 = vpop.xlane.xlu0 %993
        %995 = vadd.xlane.f32.xlu0 %v941
        %v996 = vpop.xlane.xlu0 %995
        %997 = vadd.xlane.f32.xlu0 %v942
        %v998 = vpop.xlane.xlu0 %997
        %999 = vadd.xlane.f32.xlu0 %v943
        %v1000 = vpop.xlane.xlu0 %999
        %1001 = vadd.xlane.f32.xlu0 %v944
        %v1002 = vpop.xlane.xlu0 %1001
        %1003 = vadd.xlane.f32.xlu0 %v945
        %v1004 = vpop.xlane.xlu0 %1003
        %1005 = vadd.xlane.f32.xlu0 %v946
        %v1006 = vpop.xlane.xlu0 %1005
        %1007 = vadd.xlane.f32.xlu0 %v947
        %v1008 = vpop.xlane.xlu0 %1007
        %1009 = vadd.xlane.f32.xlu0 %v948
        %v1010 = vpop.xlane.xlu0 %1009
        %1011 = vadd.xlane.f32.xlu0 %v949
        %v1012 = vpop.xlane.xlu0 %1011
        %1013 = vadd.xlane.f32.xlu0 %v950
        %v1014 = vpop.xlane.xlu0 %1013
        %v1015 = vrcp.pop 128.0
        %v1016 = vmul.f32 %v952, %v1015
        %v1017 = vmul.f32 %v954, %v1015
        %v1018 = vmul.f32 %v956, %v1015
        %v1019 = vmul.f32 %v958, %v1015
        %v1020 = vmul.f32 %v960, %v1015
        %v1021 = vmul.f32 %v962, %v1015
        %v1022 = vmul.f32 %v964, %v1015
        %v1023 = vmul.f32 %v966, %v1015
        %v1024 = vmul.f32 %v968, %v1015
        %v1025 = vmul.f32 %v970, %v1015
        %v1026 = vmul.f32 %v972, %v1015
        %v1027 = vmul.f32 %v974, %v1015
        %v1028 = vmul.f32 %v976, %v1015
        %v1029 = vmul.f32 %v978, %v1015
        %v1030 = vmul.f32 %v980, %v1015
        %v1031 = vmul.f32 %v982, %v1015
        %v1032 = vmul.f32 %v984, %v1015
        %v1033 = vmul.f32 %v986, %v1015
        %v1034 = vmul.f32 %v988, %v1015
        %v1035 = vmul.f32 %v990, %v1015
        %v1036 = vmul.f32 %v992, %v1015
        %v1037 = vmul.f32 %v994, %v1015
        %v1038 = vmul.f32 %v996, %v1015
        %v1039 = vmul.f32 %v998, %v1015
        %v1040 = vmul.f32 %v1000, %v1015
        %v1041 = vmul.f32 %v1002, %v1015
        %v1042 = vmul.f32 %v1004, %v1015
        %v1043 = vmul.f32 %v1006, %v1015
        %v1044 = vmul.f32 %v1008, %v1015
        %v1045 = vmul.f32 %v1010, %v1015
        %v1046 = vmul.f32 %v1012, %v1015
        %v1047 = vmul.f32 %v1014, %v1015
        %v1048 = vsub.f32 %v919, %v1016
        %v1049 = vsub.f32 %v920, %v1017
        %v1050 = vsub.f32 %v921, %v1018
        %v1051 = vsub.f32 %v922, %v1019
        %v1052 = vsub.f32 %v923, %v1020
        %v1053 = vsub.f32 %v924, %v1021
        %v1054 = vsub.f32 %v925, %v1022
        %v1055 = vsub.f32 %v926, %v1023
        %v1056 = vsub.f32 %v927, %v1024
        %v1057 = vsub.f32 %v928, %v1025
        %v1058 = vsub.f32 %v929, %v1026
        %v1059 = vsub.f32 %v930, %v1027
        %v1060 = vsub.f32 %v931, %v1028
        %v1061 = vsub.f32 %v932, %v1029
        %v1062 = vsub.f32 %v933, %v1030
        %v1063 = vsub.f32 %v934, %v1031
        %v1064 = vsub.f32 %v935, %v1032
        %v1065 = vsub.f32 %v936, %v1033
        %v1066 = vsub.f32 %v937, %v1034
        %v1067 = vsub.f32 %v938, %v1035
        %v1068 = vsub.f32 %v939, %v1036
        %v1069 = vsub.f32 %v940, %v1037
        %v1070 = vsub.f32 %v941, %v1038
        %v1071 = vsub.f32 %v942, %v1039
        %v1072 = vsub.f32 %v943, %v1040
        %v1073 = vsub.f32 %v944, %v1041
        %v1074 = vsub.f32 %v945, %v1042
        %v1075 = vsub.f32 %v946, %v1043
        %v1076 = vsub.f32 %v947, %v1044
        %v1077 = vsub.f32 %v948, %v1045
        %v1078 = vsub.f32 %v949, %v1046
        %v1079 = vsub.f32 %v950, %v1047
        %v1080 = vmul.f32 %v1048, %v1048
        %v1081 = vmul.f32 %v1049, %v1049
        %v1082 = vmul.f32 %v1050, %v1050
        %v1083 = vmul.f32 %v1051, %v1051
        %v1084 = vmul.f32 %v1052, %v1052
        %v1085 = vmul.f32 %v1053, %v1053
        %v1086 = vmul.f32 %v1054, %v1054
        %v1087 = vmul.f32 %v1055, %v1055
        %v1088 = vmul.f32 %v1056, %v1056
        %v1089 = vmul.f32 %v1057, %v1057
        %v1090 = vmul.f32 %v1058, %v1058
        %v1091 = vmul.f32 %v1059, %v1059
        %v1092 = vmul.f32 %v1060, %v1060
        %v1093 = vmul.f32 %v1061, %v1061
        %v1094 = vmul.f32 %v1062, %v1062
        %v1095 = vmul.f32 %v1063, %v1063
        %v1096 = vmul.f32 %v1064, %v1064
        %v1097 = vmul.f32 %v1065, %v1065
        %v1098 = vmul.f32 %v1066, %v1066
        %v1099 = vmul.f32 %v1067, %v1067
        %v1100 = vmul.f32 %v1068, %v1068
        %v1101 = vmul.f32 %v1069, %v1069
        %v1102 = vmul.f32 %v1070, %v1070
        %v1103 = vmul.f32 %v1071, %v1071
        %v1104 = vmul.f32 %v1072, %v1072
        %v1105 = vmul.f32 %v1073, %v1073
        %v1106 = vmul.f32 %v1074, %v1074
        %v1107 = vmul.f32 %v1075, %v1075
        %v1108 = vmul.f32 %v1076, %v1076
        %v1109 = vmul.f32 %v1077, %v1077
        %v1110 = vmul.f32 %v1078, %v1078
        %v1111 = vmul.f32 %v1079, %v1079
        %1112 = vadd.xlane.f32.xlu0 %v1080
        %v1113 = vpop.xlane.xlu0 %1112
        %1114 = vadd.xlane.f32.xlu0 %v1081
        %v1115 = vpop.xlane.xlu0 %1114
        %1116 = vadd.xlane.f32.xlu0 %v1082
        %v1117 = vpop.xlane.xlu0 %1116
        %1118 = vadd.xlane.f32.xlu0 %v1083
        %v1119 = vpop.xlane.xlu0 %1118
        %1120 = vadd.xlane.f32.xlu0 %v1084
        %v1121 = vpop.xlane.xlu0 %1120
        %1122 = vadd.xlane.f32.xlu0 %v1085
        %v1123 = vpop.xlane.xlu0 %1122
        %1124 = vadd.xlane.f32.xlu0 %v1086
        %v1125 = vpop.xlane.xlu0 %1124
        %1126 = vadd.xlane.f32.xlu0 %v1087
        %v1127 = vpop.xlane.xlu0 %1126
        %1128 = vadd.xlane.f32.xlu0 %v1088
        %v1129 = vpop.xlane.xlu0 %1128
        %1130 = vadd.xlane.f32.xlu0 %v1089
        %v1131 = vpop.xlane.xlu0 %1130
        %1132 = vadd.xlane.f32.xlu0 %v1090
        %v1133 = vpop.xlane.xlu0 %1132
        %1134 = vadd.xlane.f32.xlu0 %v1091
        %v1135 = vpop.xlane.xlu0 %1134
        %1136 = vadd.xlane.f32.xlu0 %v1092
        %v1137 = vpop.xlane.xlu0 %1136
        %1138 = vadd.xlane.f32.xlu0 %v1093
        %v1139 = vpop.xlane.xlu0 %1138
        %1140 = vadd.xlane.f32.xlu0 %v1094
        %v1141 = vpop.xlane.xlu0 %1140
        %1142 = vadd.xlane.f32.xlu0 %v1095
        %v1143 = vpop.xlane.xlu0 %1142
        %1144 = vadd.xlane.f32.xlu0 %v1096
        %v1145 = vpop.xlane.xlu0 %1144
        %1146 = vadd.xlane.f32.xlu0 %v1097
        %v1147 = vpop.xlane.xlu0 %1146
        %1148 = vadd.xlane.f32.xlu0 %v1098
        %v1149 = vpop.xlane.xlu0 %1148
        %1150 = vadd.xlane.f32.xlu0 %v1099
        %v1151 = vpop.xlane.xlu0 %1150
        %1152 = vadd.xlane.f32.xlu0 %v1100
        %v1153 = vpop.xlane.xlu0 %1152
        %1154 = vadd.xlane.f32.xlu0 %v1101
        %v1155 = vpop.xlane.xlu0 %1154
        %1156 = vadd.xlane.f32.xlu0 %v1102
        %v1157 = vpop.xlane.xlu0 %1156
        %1158 = vadd.xlane.f32.xlu0 %v1103
        %v1159 = vpop.xlane.xlu0 %1158
        %1160 = vadd.xlane.f32.xlu0 %v1104
        %v1161 = vpop.xlane.xlu0 %1160
        %1162 = vadd.xlane.f32.xlu0 %v1105
        %v1163 = vpop.xlane.xlu0 %1162
        %1164 = vadd.xlane.f32.xlu0 %v1106
        %v1165 = vpop.xlane.xlu0 %1164
        %1166 = vadd.xlane.f32.xlu0 %v1107
        %v1167 = vpop.xlane.xlu0 %1166
        %1168 = vadd.xlane.f32.xlu0 %v1108
        %v1169 = vpop.xlane.xlu0 %1168
        %1170 = vadd.xlane.f32.xlu0 %v1109
        %v1171 = vpop.xlane.xlu0 %1170
        %1172 = vadd.xlane.f32.xlu0 %v1110
        %v1173 = vpop.xlane.xlu0 %1172
        %1174 = vadd.xlane.f32.xlu0 %v1111
        %v1175 = vpop.xlane.xlu0 %1174
        %v1176 = vmul.f32 %v1113, %v1015
        %v1177 = vmul.f32 %v1115, %v1015
        %v1178 = vmul.f32 %v1117, %v1015
        %v1179 = vmul.f32 %v1119, %v1015
        %v1180 = vmul.f32 %v1121, %v1015
        %v1181 = vmul.f32 %v1123, %v1015
        %v1182 = vmul.f32 %v1125, %v1015
        %v1183 = vmul.f32 %v1127, %v1015
        %v1184 = vmul.f32 %v1129, %v1015
        %v1185 = vmul.f32 %v1131, %v1015
        %v1186 = vmul.f32 %v1133, %v1015
        %v1187 = vmul.f32 %v1135, %v1015
        %v1188 = vmul.f32 %v1137, %v1015
        %v1189 = vmul.f32 %v1139, %v1015
        %v1190 = vmul.f32 %v1141, %v1015
        %v1191 = vmul.f32 %v1143, %v1015
        %v1192 = vmul.f32 %v1145, %v1015
        %v1193 = vmul.f32 %v1147, %v1015
        %v1194 = vmul.f32 %v1149, %v1015
        %v1195 = vmul.f32 %v1151, %v1015
        %v1196 = vmul.f32 %v1153, %v1015
        %v1197 = vmul.f32 %v1155, %v1015
        %v1198 = vmul.f32 %v1157, %v1015
        %v1199 = vmul.f32 %v1159, %v1015
        %v1200 = vmul.f32 %v1161, %v1015
        %v1201 = vmul.f32 %v1163, %v1015
        %v1202 = vmul.f32 %v1165, %v1015
        %v1203 = vmul.f32 %v1167, %v1015
        %v1204 = vmul.f32 %v1169, %v1015
        %v1205 = vmul.f32 %v1171, %v1015
        %v1206 = vmul.f32 %v1173, %v1015
        %v1207 = vmul.f32 %v1175, %v1015
        %v1208 = vadd.f32 %v1176, 1e-05
        %v1209 = vadd.f32 %v1177, 1e-05
        %v1210 = vadd.f32 %v1178, 1e-05
        %v1211 = vadd.f32 %v1179, 1e-05
        %v1212 = vadd.f32 %v1180, 1e-05
        %v1213 = vadd.f32 %v1181, 1e-05
        %v1214 = vadd.f32 %v1182, 1e-05
        %v1215 = vadd.f32 %v1183, 1e-05
        %v1216 = vadd.f32 %v1184, 1e-05
        %v1217 = vadd.f32 %v1185, 1e-05
        %v1218 = vadd.f32 %v1186, 1e-05
        %v1219 = vadd.f32 %v1187, 1e-05
        %v1220 = vadd.f32 %v1188, 1e-05
        %v1221 = vadd.f32 %v1189, 1e-05
        %v1222 = vadd.f32 %v1190, 1e-05
        %v1223 = vadd.f32 %v1191, 1e-05
        %v1224 = vadd.f32 %v1192, 1e-05
        %v1225 = vadd.f32 %v1193, 1e-05
        %v1226 = vadd.f32 %v1194, 1e-05
        %v1227 = vadd.f32 %v1195, 1e-05
        %v1228 = vadd.f32 %v1196, 1e-05
        %v1229 = vadd.f32 %v1197, 1e-05
        %v1230 = vadd.f32 %v1198, 1e-05
        %v1231 = vadd.f32 %v1199, 1e-05
        %v1232 = vadd.f32 %v1200, 1e-05
        %v1233 = vadd.f32 %v1201, 1e-05
        %v1234 = vadd.f32 %v1202, 1e-05
        %v1235 = vadd.f32 %v1203, 1e-05
        %v1236 = vadd.f32 %v1204, 1e-05
        %v1237 = vadd.f32 %v1205, 1e-05
        %v1238 = vadd.f32 %v1206, 1e-05
        %v1239 = vadd.f32 %v1207, 1e-05
        %v1240 = vrsqrt.pop %v1208
        %v1241 = vrsqrt.pop %v1209
        %v1242 = vrsqrt.pop %v1210
        %v1243 = vrsqrt.pop %v1211
        %v1244 = vrsqrt.pop %v1212
        %v1245 = vrsqrt.pop %v1213
        %v1246 = vrsqrt.pop %v1214
        %v1247 = vrsqrt.pop %v1215
        %v1248 = vrsqrt.pop %v1216
        %v1249 = vrsqrt.pop %v1217
        %v1250 = vrsqrt.pop %v1218
        %v1251 = vrsqrt.pop %v1219
        %v1252 = vrsqrt.pop %v1220
        %v1253 = vrsqrt.pop %v1221
        %v1254 = vrsqrt.pop %v1222
        %v1255 = vrsqrt.pop %v1223
        %v1256 = vrsqrt.pop %v1224
        %v1257 = vrsqrt.pop %v1225
        %v1258 = vrsqrt.pop %v1226
        %v1259 = vrsqrt.pop %v1227
        %v1260 = vrsqrt.pop %v1228
        %v1261 = vrsqrt.pop %v1229
        %v1262 = vrsqrt.pop %v1230
        %v1263 = vrsqrt.pop %v1231
        %v1264 = vrsqrt.pop %v1232
        %v1265 = vrsqrt.pop %v1233
        %v1266 = vrsqrt.pop %v1234
        %v1267 = vrsqrt.pop %v1235
        %v1268 = vrsqrt.pop %v1236
        %v1269 = vrsqrt.pop %v1237
        %v1270 = vrsqrt.pop %v1238
        %v1271 = vrsqrt.pop %v1239
        %v1272 = vmul.f32 %v1048, %v1240
        %v1273 = vmul.f32 %v1049, %v1241
        %v1274 = vmul.f32 %v1050, %v1242
        %v1275 = vmul.f32 %v1051, %v1243
        %v1276 = vmul.f32 %v1052, %v1244
        %v1277 = vmul.f32 %v1053, %v1245
        %v1278 = vmul.f32 %v1054, %v1246
        %v1279 = vmul.f32 %v1055, %v1247
        %v1280 = vmul.f32 %v1056, %v1248
        %v1281 = vmul.f32 %v1057, %v1249
        %v1282 = vmul.f32 %v1058, %v1250
        %v1283 = vmul.f32 %v1059, %v1251
        %v1284 = vmul.f32 %v1060, %v1252
        %v1285 = vmul.f32 %v1061, %v1253
        %v1286 = vmul.f32 %v1062, %v1254
        %v1287 = vmul.f32 %v1063, %v1255
        %v1288 = vmul.f32 %v1064, %v1256
        %v1289 = vmul.f32 %v1065, %v1257
        %v1290 = vmul.f32 %v1066, %v1258
        %v1291 = vmul.f32 %v1067, %v1259
        %v1292 = vmul.f32 %v1068, %v1260
        %v1293 = vmul.f32 %v1069, %v1261
        %v1294 = vmul.f32 %v1070, %v1262
        %v1295 = vmul.f32 %v1071, %v1263
        %v1296 = vmul.f32 %v1072, %v1264
        %v1297 = vmul.f32 %v1073, %v1265
        %v1298 = vmul.f32 %v1074, %v1266
        %v1299 = vmul.f32 %v1075, %v1267
        %v1300 = vmul.f32 %v1076, %v1268
        %v1301 = vmul.f32 %v1077, %v1269
        %v1302 = vmul.f32 %v1078, %v1270
        %v1303 = vmul.f32 %v1079, %v1271
        %v1304 = vld [vmem:[%s670] sm:$0x1]
        %v1306 = vlaneseq
        %v1307 = vshrl.u32 %v1306, 7
        %v1308 = vsub.s32 0, %v1307
        %v1309 = vrot.slane %v1304, %v1308
        %v1311 = vmul.f32 %v1272, %v1309
        %v1312 = vmul.f32 %v1273, %v1309
        %v1313 = vmul.f32 %v1274, %v1309
        %v1314 = vmul.f32 %v1275, %v1309
        %v1315 = vmul.f32 %v1276, %v1309
        %v1316 = vmul.f32 %v1277, %v1309
        %v1317 = vmul.f32 %v1278, %v1309
        %v1318 = vmul.f32 %v1279, %v1309
        %v1319 = vmul.f32 %v1280, %v1309
        %v1320 = vmul.f32 %v1281, %v1309
        %v1321 = vmul.f32 %v1282, %v1309
        %v1322 = vmul.f32 %v1283, %v1309
        %v1323 = vmul.f32 %v1284, %v1309
        %v1324 = vmul.f32 %v1285, %v1309
        %v1325 = vmul.f32 %v1286, %v1309
        %v1326 = vmul.f32 %v1287, %v1309
        %v1327 = vmul.f32 %v1288, %v1309
        %v1328 = vmul.f32 %v1289, %v1309
        %v1329 = vmul.f32 %v1290, %v1309
        %v1330 = vmul.f32 %v1291, %v1309
        %v1331 = vmul.f32 %v1292, %v1309
        %v1332 = vmul.f32 %v1293, %v1309
        %v1333 = vmul.f32 %v1294, %v1309
        %v1334 = vmul.f32 %v1295, %v1309
        %v1335 = vmul.f32 %v1296, %v1309
        %v1336 = vmul.f32 %v1297, %v1309
        %v1337 = vmul.f32 %v1298, %v1309
        %v1338 = vmul.f32 %v1299, %v1309
        %v1339 = vmul.f32 %v1300, %v1309
        %v1340 = vmul.f32 %v1301, %v1309
        %v1341 = vmul.f32 %v1302, %v1309
        %v1342 = vmul.f32 %v1303, %v1309
        %v1343 = vld [vmem:[%s678] sm:$0x1]
        %v1345 = vlaneseq
        %v1346 = vshrl.u32 %v1345, 7
        %v1347 = vsub.s32 0, %v1346
        %v1348 = vrot.slane %v1343, %v1347
        %v1350 = vadd.f32 %v1311, %v1348
        %v1351 = vadd.f32 %v1312, %v1348
        %v1352 = vadd.f32 %v1313, %v1348
        %v1353 = vadd.f32 %v1314, %v1348
        %v1354 = vadd.f32 %v1315, %v1348
        %v1355 = vadd.f32 %v1316, %v1348
        %v1356 = vadd.f32 %v1317, %v1348
        %v1357 = vadd.f32 %v1318, %v1348
        %v1358 = vadd.f32 %v1319, %v1348
        %v1359 = vadd.f32 %v1320, %v1348
        %v1360 = vadd.f32 %v1321, %v1348
        %v1361 = vadd.f32 %v1322, %v1348
        %v1362 = vadd.f32 %v1323, %v1348
        %v1363 = vadd.f32 %v1324, %v1348
        %v1364 = vadd.f32 %v1325, %v1348
        %v1365 = vadd.f32 %v1326, %v1348
        %v1366 = vadd.f32 %v1327, %v1348
        %v1367 = vadd.f32 %v1328, %v1348
        %v1368 = vadd.f32 %v1329, %v1348
        %v1369 = vadd.f32 %v1330, %v1348
        %v1370 = vadd.f32 %v1331, %v1348
        %v1371 = vadd.f32 %v1332, %v1348
        %v1372 = vadd.f32 %v1333, %v1348
        %v1373 = vadd.f32 %v1334, %v1348
        %v1374 = vadd.f32 %v1335, %v1348
        %v1375 = vadd.f32 %v1336, %v1348
        %v1376 = vadd.f32 %v1337, %v1348
        %v1377 = vadd.f32 %v1338, %v1348
        %v1378 = vadd.f32 %v1339, %v1348
        %v1379 = vadd.f32 %v1340, %v1348
        %v1380 = vadd.f32 %v1341, %v1348
        %v1381 = vadd.f32 %v1342, %v1348
        %v1382 = vpack.c.bf16 %v1351, %v1350
        %v1383 = vpack.c.bf16 %v1353, %v1352
        %v1384 = vpack.c.bf16 %v1355, %v1354
        %v1385 = vpack.c.bf16 %v1357, %v1356
        %v1386 = vpack.c.bf16 %v1359, %v1358
        %v1387 = vpack.c.bf16 %v1361, %v1360
        %v1388 = vpack.c.bf16 %v1363, %v1362
        %v1389 = vpack.c.bf16 %v1365, %v1364
        %v1390 = vpack.c.bf16 %v1367, %v1366
        %v1391 = vpack.c.bf16 %v1369, %v1368
        %v1392 = vpack.c.bf16 %v1371, %v1370
        %v1393 = vpack.c.bf16 %v1373, %v1372
        %v1394 = vpack.c.bf16 %v1375, %v1374
        %v1395 = vpack.c.bf16 %v1377, %v1376
        %v1396 = vpack.c.bf16 %v1379, %v1378
        %v1397 = vpack.c.bf16 %v1381, %v1380
        %v1398 = vld [vmem:[%s839] sm:$0x1]
        %v1400 = vlaneseq
        %v1401 = vshrl.u32 %v1400, 7
        %v1402 = vsub.s32 0, %v1401
        %v1403 = vrot.slane %v1398, %v1402
        %v1405 = vmul.f32 %v1272, %v1403
        %v1406 = vmul.f32 %v1273, %v1403
        %v1407 = vmul.f32 %v1274, %v1403
        %v1408 = vmul.f32 %v1275, %v1403
        %v1409 = vmul.f32 %v1276, %v1403
        %v1410 = vmul.f32 %v1277, %v1403
        %v1411 = vmul.f32 %v1278, %v1403
        %v1412 = vmul.f32 %v1279, %v1403
        %v1413 = vmul.f32 %v1280, %v1403
        %v1414 = vmul.f32 %v1281, %v1403
        %v1415 = vmul.f32 %v1282, %v1403
        %v1416 = vmul.f32 %v1283, %v1403
        %v1417 = vmul.f32 %v1284, %v1403
        %v1418 = vmul.f32 %v1285, %v1403
        %v1419 = vmul.f32 %v1286, %v1403
        %v1420 = vmul.f32 %v1287, %v1403
        %v1421 = vmul.f32 %v1288, %v1403
        %v1422 = vmul.f32 %v1289, %v1403
        %v1423 = vmul.f32 %v1290, %v1403
        %v1424 = vmul.f32 %v1291, %v1403
        %v1425 = vmul.f32 %v1292, %v1403
        %v1426 = vmul.f32 %v1293, %v1403
        %v1427 = vmul.f32 %v1294, %v1403
        %v1428 = vmul.f32 %v1295, %v1403
        %v1429 = vmul.f32 %v1296, %v1403
        %v1430 = vmul.f32 %v1297, %v1403
        %v1431 = vmul.f32 %v1298, %v1403
        %v1432 = vmul.f32 %v1299, %v1403
        %v1433 = vmul.f32 %v1300, %v1403
        %v1434 = vmul.f32 %v1301, %v1403
        %v1435 = vmul.f32 %v1302, %v1403
        %v1436 = vmul.f32 %v1303, %v1403
        %v1437 = vld [vmem:[%s686] sm:$0x1]
        %v1439 = vlaneseq
        %v1440 = vshrl.u32 %v1439, 7
        %v1441 = vsub.s32 0, %v1440
        %v1442 = vrot.slane %v1437, %v1441
        %v1444 = vadd.f32 %v1405, %v1442
        %v1445 = vadd.f32 %v1406, %v1442
        %v1446 = vadd.f32 %v1407, %v1442
        %v1447 = vadd.f32 %v1408, %v1442
        %v1448 = vadd.f32 %v1409, %v1442
        %v1449 = vadd.f32 %v1410, %v1442
        %v1450 = vadd.f32 %v1411, %v1442
        %v1451 = vadd.f32 %v1412, %v1442
        %v1452 = vadd.f32 %v1413, %v1442
        %v1453 = vadd.f32 %v1414, %v1442
        %v1454 = vadd.f32 %v1415, %v1442
        %v1455 = vadd.f32 %v1416, %v1442
        %v1456 = vadd.f32 %v1417, %v1442
        %v1457 = vadd.f32 %v1418, %v1442
        %v1458 = vadd.f32 %v1419, %v1442
        %v1459 = vadd.f32 %v1420, %v1442
        %v1460 = vadd.f32 %v1421, %v1442
        %v1461 = vadd.f32 %v1422, %v1442
        %v1462 = vadd.f32 %v1423, %v1442
        %v1463 = vadd.f32 %v1424, %v1442
        %v1464 = vadd.f32 %v1425, %v1442
        %v1465 = vadd.f32 %v1426, %v1442
        %v1466 = vadd.f32 %v1427, %v1442
        %v1467 = vadd.f32 %v1428, %v1442
        %v1468 = vadd.f32 %v1429, %v1442
        %v1469 = vadd.f32 %v1430, %v1442
        %v1470 = vadd.f32 %v1431, %v1442
        %v1471 = vadd.f32 %v1432, %v1442
        %v1472 = vadd.f32 %v1433, %v1442
        %v1473 = vadd.f32 %v1434, %v1442
        %v1474 = vadd.f32 %v1435, %v1442
        %v1475 = vadd.f32 %v1436, %v1442
        %v1476 = vpack.c.bf16 %v1445, %v1444
        %v1477 = vpack.c.bf16 %v1447, %v1446
        %v1478 = vpack.c.bf16 %v1449, %v1448
        %v1479 = vpack.c.bf16 %v1451, %v1450
        %v1480 = vpack.c.bf16 %v1453, %v1452
        %v1481 = vpack.c.bf16 %v1455, %v1454
        %v1482 = vpack.c.bf16 %v1457, %v1456
        %v1483 = vpack.c.bf16 %v1459, %v1458
        %v1484 = vpack.c.bf16 %v1461, %v1460
        %v1485 = vpack.c.bf16 %v1463, %v1462
        %v1486 = vpack.c.bf16 %v1465, %v1464
        %v1487 = vpack.c.bf16 %v1467, %v1466
        %v1488 = vpack.c.bf16 %v1469, %v1468
        %v1489 = vpack.c.bf16 %v1471, %v1470
        %v1490 = vpack.c.bf16 %v1473, %v1472
        %v1491 = vpack.c.bf16 %v1475, %v1474
        %v1492 = vld [vmem:[%s818] sm:$0xf]
        %v1493 = vld [vmem:[%s818 + $0x4] sm:$0xf]
        %v1494 = vld [vmem:[%s818 + $0x8] sm:$0xf]
        %v1495 = vld [vmem:[%s818 + $0xc] sm:$0xf]
        %v1496 = vld [vmem:[%s818 + $0x10] sm:$0xf]
        %v1497 = vld [vmem:[%s818 + $0x14] sm:$0xf]
        %v1498 = vld [vmem:[%s818 + $0x18] sm:$0xf]
        %v1499 = vld [vmem:[%s818 + $0x1c] sm:$0xf]
        %v1500 = vld [vmem:[%s818 + $0x20] sm:$0xf]
        %v1501 = vld [vmem:[%s818 + $0x24] sm:$0xf]
        %v1502 = vld [vmem:[%s818 + $0x28] sm:$0xf]
        %v1503 = vld [vmem:[%s818 + $0x2c] sm:$0xf]
        %v1504 = vld [vmem:[%s818 + $0x30] sm:$0xf]
        %v1505 = vld [vmem:[%s818 + $0x34] sm:$0xf]
        %v1506 = vld [vmem:[%s818 + $0x38] sm:$0xf]
        %v1507 = vld [vmem:[%s818 + $0x3c] sm:$0xf]
        %v1508 = vld [vmem:[%s818 + $0x40] sm:$0xf]
        %v1509 = vld [vmem:[%s818 + $0x44] sm:$0xf]
        %v1510 = vld [vmem:[%s818 + $0x48] sm:$0xf]
        %v1511 = vld [vmem:[%s818 + $0x4c] sm:$0xf]
        %v1512 = vld [vmem:[%s818 + $0x50] sm:$0xf]
        %v1513 = vld [vmem:[%s818 + $0x54] sm:$0xf]
        %v1514 = vld [vmem:[%s818 + $0x58] sm:$0xf]
        %v1515 = vld [vmem:[%s818 + $0x5c] sm:$0xf]
        %v1516 = vld [vmem:[%s818 + $0x60] sm:$0xf]
        %v1517 = vld [vmem:[%s818 + $0x64] sm:$0xf]
        %v1518 = vld [vmem:[%s818 + $0x68] sm:$0xf]
        %v1519 = vld [vmem:[%s818 + $0x6c] sm:$0xf]
        %v1520 = vld [vmem:[%s818 + $0x70] sm:$0xf]
        %v1521 = vld [vmem:[%s818 + $0x74] sm:$0xf]
        %v1522 = vld [vmem:[%s818 + $0x78] sm:$0xf]
        %v1523 = vld [vmem:[%s818 + $0x7c] sm:$0xf]
        %v1540 = vunpack.c.l.b16 %v1492
        %v1541 = vunpack.c.l.b16 %v1493
        %v1542 = vunpack.c.l.b16 %v1494
        %v1543 = vunpack.c.l.b16 %v1495
        %v1544 = vunpack.c.l.b16 %v1496
        %v1545 = vunpack.c.l.b16 %v1497
        %v1546 = vunpack.c.l.b16 %v1498
        %v1547 = vunpack.c.l.b16 %v1499
        %v1548 = vunpack.c.l.b16 %v1500
        %v1549 = vunpack.c.l.b16 %v1501
        %v1550 = vunpack.c.l.b16 %v1502
        %v1551 = vunpack.c.l.b16 %v1503
        %v1552 = vunpack.c.l.b16 %v1504
        %v1553 = vunpack.c.l.b16 %v1505
        %v1554 = vunpack.c.l.b16 %v1506
        %v1555 = vunpack.c.l.b16 %v1507
        %v1556 = vpack.c.b16 %v1541, %v1540
        %v1557 = vpack.c.b16 %v1543, %v1542
        %v1558 = vpack.c.b16 %v1545, %v1544
        %v1559 = vpack.c.b16 %v1547, %v1546
        %v1560 = vpack.c.b16 %v1549, %v1548
        %v1561 = vpack.c.b16 %v1551, %v1550
        %v1562 = vpack.c.b16 %v1553, %v1552
        %v1563 = vpack.c.b16 %v1555, %v1554
        %1572 = vmatprep.subr.bf16.mxu0 0
        %1573 = vmatpush1.bf16.msra.mxu0 %v1563
        %1574 = vmatprep.subr.bf16.mxu0 0
        %1575 = vmatpush1.bf16.msra.mxu0 %v1562
        %1576 = vmatprep.subr.bf16.mxu0 0
        %1577 = vmatpush1.bf16.msra.mxu0 %v1561
        %1578 = vmatprep.subr.bf16.mxu0 0
        %1579 = vmatpush1.bf16.msra.mxu0 %v1560
        %1580 = vmatprep.subr.bf16.mxu0 0
        %1581 = vmatpush1.bf16.msra.mxu0 %v1559
        %1582 = vmatprep.subr.bf16.mxu0 0
        %1583 = vmatpush1.bf16.msra.mxu0 %v1558
        %1584 = vmatprep.subr.bf16.mxu0 0
        %1585 = vmatpush1.bf16.msra.mxu0 %v1557
        %1586 = vmatprep.subr.bf16.mxu0 0
        %1587 = vmatpush1.bf16.msra.mxu0 %v1556
        %1588 = vmatprep.subr.bf16.mxu0 0
        %1589 = vmatpush2.bf16.msra.mxu0 0
        %1590 = vmatprep.subr.bf16.mxu0 0
        %1591 = vmatpush2.bf16.msra.mxu0 0
        %1592 = vmatprep.subr.bf16.mxu0 0
        %1593 = vmatpush2.bf16.msra.mxu0 0
        %1594 = vmatprep.subr.bf16.mxu0 0
        %1595 = vmatpush2.bf16.msra.mxu0 0
        %1596 = vmatprep.subr.bf16.mxu0 0
        %1597 = vmatpush2.bf16.msra.mxu0 0
        %1598 = vmatprep.subr.bf16.mxu0 0
        %1599 = vmatpush2.bf16.msra.mxu0 0
        %1600 = vmatprep.subr.bf16.mxu0 0
        %1601 = vmatpush2.bf16.msra.mxu0 0
        %1602 = vmatprep.subr.bf16.mxu0 0
        %1603 = vmatpush2.bf16.msra.mxu0 0
        %1604 = vmatprep.mubr.bf16.mxu0 0
        %1605 = vmatmul.mubr.bf16.gmra.mxu0 %v1382
        %v1606 = vpop.f32.mrf.mxu0
        %v1607 = vadd.f32 0.0, %v1606
        %v1608 = vpop.f32.mrf.mxu0
        %v1609 = vpop.f32.mrf.mxu0
        %v1610 = vadd.f32 0.0, %v1609
        %v1611 = vpop.f32.mrf.mxu0
        %1612 = vmatprep.mubr.bf16.mxu0 0
        %1613 = vmatmul.mubr.bf16.gmra.mxu0 %v1383
        %v1614 = vpop.f32.mrf.mxu0
        %v1615 = vadd.f32 0.0, %v1614
        %v1616 = vpop.f32.mrf.mxu0
        %v1617 = vpop.f32.mrf.mxu0
        %v1618 = vadd.f32 0.0, %v1617
        %v1619 = vpop.f32.mrf.mxu0
        %1620 = vmatprep.mubr.bf16.mxu0 0
        %1621 = vmatmul.mubr.bf16.gmra.mxu0 %v1384
        %v1622 = vpop.f32.mrf.mxu0
        %v1623 = vadd.f32 0.0, %v1622
        %v1624 = vpop.f32.mrf.mxu0
        %v1625 = vpop.f32.mrf.mxu0
        %v1626 = vadd.f32 0.0, %v1625
        %v1627 = vpop.f32.mrf.mxu0
        %1628 = vmatprep.mubr.bf16.mxu0 0
        %1629 = vmatmul.mubr.bf16.gmra.mxu0 %v1385
        %v1630 = vpop.f32.mrf.mxu0
        %v1631 = vadd.f32 0.0, %v1630
        %v1632 = vpop.f32.mrf.mxu0
        %v1633 = vpop.f32.mrf.mxu0
        %v1634 = vadd.f32 0.0, %v1633
        %v1635 = vpop.f32.mrf.mxu0
        %1636 = vmatprep.mubr.bf16.mxu0 0
        %1637 = vmatmul.mubr.bf16.gmra.mxu0 %v1386
        %v1638 = vpop.f32.mrf.mxu0
        %v1639 = vadd.f32 0.0, %v1638
        %v1640 = vpop.f32.mrf.mxu0
        %v1641 = vpop.f32.mrf.mxu0
        %v1642 = vadd.f32 0.0, %v1641
        %v1643 = vpop.f32.mrf.mxu0
        %1644 = vmatprep.mubr.bf16.mxu0 0
        %1645 = vmatmul.mubr.bf16.gmra.mxu0 %v1387
        %v1646 = vpop.f32.mrf.mxu0
        %v1647 = vadd.f32 0.0, %v1646
        %v1648 = vpop.f32.mrf.mxu0
        %v1649 = vpop.f32.mrf.mxu0
        %v1650 = vadd.f32 0.0, %v1649
        %v1651 = vpop.f32.mrf.mxu0
        %1652 = vmatprep.mubr.bf16.mxu0 0
        %1653 = vmatmul.mubr.bf16.gmra.mxu0 %v1388
        %v1654 = vpop.f32.mrf.mxu0
        %v1655 = vadd.f32 0.0, %v1654
        %v1656 = vpop.f32.mrf.mxu0
        %v1657 = vpop.f32.mrf.mxu0
        %v1658 = vadd.f32 0.0, %v1657
        %v1659 = vpop.f32.mrf.mxu0
        %1660 = vmatprep.mubr.bf16.mxu0 0
        %1661 = vmatmul.mubr.bf16.gmra.mxu0 %v1389
        %v1662 = vpop.f32.mrf.mxu0
        %v1663 = vadd.f32 0.0, %v1662
        %v1664 = vpop.f32.mrf.mxu0
        %v1665 = vpop.f32.mrf.mxu0
        %v1666 = vadd.f32 0.0, %v1665
        %v1667 = vpop.f32.mrf.mxu0
        %1668 = vmatprep.mubr.bf16.mxu0 0
        %1669 = vmatmul.mubr.bf16.gmra.mxu0 %v1390
        %v1670 = vpop.f32.mrf.mxu0
        %v1671 = vadd.f32 0.0, %v1670
        %v1672 = vpop.f32.mrf.mxu0
        %v1673 = vpop.f32.mrf.mxu0
        %v1674 = vadd.f32 0.0, %v1673
        %v1675 = vpop.f32.mrf.mxu0
        %1676 = vmatprep.mubr.bf16.mxu0 0
        %1677 = vmatmul.mubr.bf16.gmra.mxu0 %v1391
        %v1678 = vpop.f32.mrf.mxu0
        %v1679 = vadd.f32 0.0, %v1678
        %v1680 = vpop.f32.mrf.mxu0
        %v1681 = vpop.f32.mrf.mxu0
        %v1682 = vadd.f32 0.0, %v1681
        %v1683 = vpop.f32.mrf.mxu0
        %1684 = vmatprep.mubr.bf16.mxu0 0
        %1685 = vmatmul.mubr.bf16.gmra.mxu0 %v1392
        %v1686 = vpop.f32.mrf.mxu0
        %v1687 = vadd.f32 0.0, %v1686
        %v1688 = vpop.f32.mrf.mxu0
        %v1689 = vpop.f32.mrf.mxu0
        %v1690 = vadd.f32 0.0, %v1689
        %v1691 = vpop.f32.mrf.mxu0
        %1692 = vmatprep.mubr.bf16.mxu0 0
        %1693 = vmatmul.mubr.bf16.gmra.mxu0 %v1393
        %v1694 = vpop.f32.mrf.mxu0
        %v1695 = vadd.f32 0.0, %v1694
        %v1696 = vpop.f32.mrf.mxu0
        %v1697 = vpop.f32.mrf.mxu0
        %v1698 = vadd.f32 0.0, %v1697
        %v1699 = vpop.f32.mrf.mxu0
        %1700 = vmatprep.mubr.bf16.mxu0 0
        %1701 = vmatmul.mubr.bf16.gmra.mxu0 %v1394
        %v1702 = vpop.f32.mrf.mxu0
        %v1703 = vadd.f32 0.0, %v1702
        %v1704 = vpop.f32.mrf.mxu0
        %v1705 = vpop.f32.mrf.mxu0
        %v1706 = vadd.f32 0.0, %v1705
        %v1707 = vpop.f32.mrf.mxu0
        %1708 = vmatprep.mubr.bf16.mxu0 0
        %1709 = vmatmul.mubr.bf16.gmra.mxu0 %v1395
        %v1710 = vpop.f32.mrf.mxu0
        %v1711 = vadd.f32 0.0, %v1710
        %v1712 = vpop.f32.mrf.mxu0
        %v1713 = vpop.f32.mrf.mxu0
        %v1714 = vadd.f32 0.0, %v1713
        %v1715 = vpop.f32.mrf.mxu0
        %1716 = vmatprep.mubr.bf16.mxu0 0
        %1717 = vmatmul.mubr.bf16.gmra.mxu0 %v1396
        %v1718 = vpop.f32.mrf.mxu0
        %v1719 = vadd.f32 0.0, %v1718
        %v1720 = vpop.f32.mrf.mxu0
        %v1721 = vpop.f32.mrf.mxu0
        %v1722 = vadd.f32 0.0, %v1721
        %v1723 = vpop.f32.mrf.mxu0
        %1724 = vmatprep.mubr.bf16.mxu0 0
        %1725 = vmatmul.mubr.bf16.gmra.mxu0 %v1397
        %v1726 = vpop.f32.mrf.mxu0
        %v1727 = vadd.f32 0.0, %v1726
        %v1728 = vpop.f32.mrf.mxu0
        %v1729 = vpop.f32.mrf.mxu0
        %v1730 = vadd.f32 0.0, %v1729
        %v1731 = vpop.f32.mrf.mxu0
        %1732 = vdwg.mxu0
        %v1749 = vunpack.c.l.b16 %v1508
        %v1750 = vunpack.c.l.b16 %v1509
        %v1751 = vunpack.c.l.b16 %v1510
        %v1752 = vunpack.c.l.b16 %v1511
        %v1753 = vunpack.c.l.b16 %v1512
        %v1754 = vunpack.c.l.b16 %v1513
        %v1755 = vunpack.c.l.b16 %v1514
        %v1756 = vunpack.c.l.b16 %v1515
        %v1757 = vunpack.c.l.b16 %v1516
        %v1758 = vunpack.c.l.b16 %v1517
        %v1759 = vunpack.c.l.b16 %v1518
        %v1760 = vunpack.c.l.b16 %v1519
        %v1761 = vunpack.c.l.b16 %v1520
        %v1762 = vunpack.c.l.b16 %v1521
        %v1763 = vunpack.c.l.b16 %v1522
        %v1764 = vunpack.c.l.b16 %v1523
        %v1765 = vpack.c.b16 %v1750, %v1749
        %v1766 = vpack.c.b16 %v1752, %v1751
        %v1767 = vpack.c.b16 %v1754, %v1753
        %v1768 = vpack.c.b16 %v1756, %v1755
        %v1769 = vpack.c.b16 %v1758, %v1757
        %v1770 = vpack.c.b16 %v1760, %v1759
        %v1771 = vpack.c.b16 %v1762, %v1761
        %v1772 = vpack.c.b16 %v1764, %v1763
        %1781 = vmatprep.subr.bf16.mxu0 0
        %1782 = vmatpush1.bf16.msra.mxu0 %v1772
        %1783 = vmatprep.subr.bf16.mxu0 0
        %1784 = vmatpush1.bf16.msra.mxu0 %v1771
        %1785 = vmatprep.subr.bf16.mxu0 0
        %1786 = vmatpush1.bf16.msra.mxu0 %v1770
        %1787 = vmatprep.subr.bf16.mxu0 0
        %1788 = vmatpush1.bf16.msra.mxu0 %v1769
        %1789 = vmatprep.subr.bf16.mxu0 0
        %1790 = vmatpush1.bf16.msra.mxu0 %v1768
        %1791 = vmatprep.subr.bf16.mxu0 0
        %1792 = vmatpush1.bf16.msra.mxu0 %v1767
        %1793 = vmatprep.subr.bf16.mxu0 0
        %1794 = vmatpush1.bf16.msra.mxu0 %v1766
        %1795 = vmatprep.subr.bf16.mxu0 0
        %1796 = vmatpush1.bf16.msra.mxu0 %v1765
        %1797 = vmatprep.subr.bf16.mxu0 0
        %1798 = vmatpush2.bf16.msra.mxu0 0
        %1799 = vmatprep.subr.bf16.mxu0 0
        %1800 = vmatpush2.bf16.msra.mxu0 0
        %1801 = vmatprep.subr.bf16.mxu0 0
        %1802 = vmatpush2.bf16.msra.mxu0 0
        %1803 = vmatprep.subr.bf16.mxu0 0
        %1804 = vmatpush2.bf16.msra.mxu0 0
        %1805 = vmatprep.subr.bf16.mxu0 0
        %1806 = vmatpush2.bf16.msra.mxu0 0
        %1807 = vmatprep.subr.bf16.mxu0 0
        %1808 = vmatpush2.bf16.msra.mxu0 0
        %1809 = vmatprep.subr.bf16.mxu0 0
        %1810 = vmatpush2.bf16.msra.mxu0 0
        %1811 = vmatprep.subr.bf16.mxu0 0
        %1812 = vmatpush2.bf16.msra.mxu0 0
        %1813 = vmatprep.mubr.bf16.mxu0 0
        %1814 = vmatmul.mubr.bf16.gmra.mxu0 %v1382
        %v1815 = vpop.f32.mrf.mxu0
        %v1816 = vadd.f32 0.0, %v1815
        %v1817 = vpop.f32.mrf.mxu0
        %v1818 = vpop.f32.mrf.mxu0
        %v1819 = vadd.f32 0.0, %v1818
        %v1820 = vpop.f32.mrf.mxu0
        %1821 = vmatprep.mubr.bf16.mxu0 0
        %1822 = vmatmul.mubr.bf16.gmra.mxu0 %v1383
        %v1823 = vpop.f32.mrf.mxu0
        %v1824 = vadd.f32 0.0, %v1823
        %v1825 = vpop.f32.mrf.mxu0
        %v1826 = vpop.f32.mrf.mxu0
        %v1827 = vadd.f32 0.0, %v1826
        %v1828 = vpop.f32.mrf.mxu0
        %1829 = vmatprep.mubr.bf16.mxu0 0
        %1830 = vmatmul.mubr.bf16.gmra.mxu0 %v1384
        %v1831 = vpop.f32.mrf.mxu0
        %v1832 = vadd.f32 0.0, %v1831
        %v1833 = vpop.f32.mrf.mxu0
        %v1834 = vpop.f32.mrf.mxu0
        %v1835 = vadd.f32 0.0, %v1834
        %v1836 = vpop.f32.mrf.mxu0
        %1837 = vmatprep.mubr.bf16.mxu0 0
        %1838 = vmatmul.mubr.bf16.gmra.mxu0 %v1385
        %v1839 = vpop.f32.mrf.mxu0
        %v1840 = vadd.f32 0.0, %v1839
        %v1841 = vpop.f32.mrf.mxu0
        %v1842 = vpop.f32.mrf.mxu0
        %v1843 = vadd.f32 0.0, %v1842
        %v1844 = vpop.f32.mrf.mxu0
        %1845 = vmatprep.mubr.bf16.mxu0 0
        %1846 = vmatmul.mubr.bf16.gmra.mxu0 %v1386
        %v1847 = vpop.f32.mrf.mxu0
        %v1848 = vadd.f32 0.0, %v1847
        %v1849 = vpop.f32.mrf.mxu0
        %v1850 = vpop.f32.mrf.mxu0
        %v1851 = vadd.f32 0.0, %v1850
        %v1852 = vpop.f32.mrf.mxu0
        %1853 = vmatprep.mubr.bf16.mxu0 0
        %1854 = vmatmul.mubr.bf16.gmra.mxu0 %v1387
        %v1855 = vpop.f32.mrf.mxu0
        %v1856 = vadd.f32 0.0, %v1855
        %v1857 = vpop.f32.mrf.mxu0
        %v1858 = vpop.f32.mrf.mxu0
        %v1859 = vadd.f32 0.0, %v1858
        %v1860 = vpop.f32.mrf.mxu0
        %1861 = vmatprep.mubr.bf16.mxu0 0
        %1862 = vmatmul.mubr.bf16.gmra.mxu0 %v1388
        %v1863 = vpop.f32.mrf.mxu0
        %v1864 = vadd.f32 0.0, %v1863
        %v1865 = vpop.f32.mrf.mxu0
        %v1866 = vpop.f32.mrf.mxu0
        %v1867 = vadd.f32 0.0, %v1866
        %v1868 = vpop.f32.mrf.mxu0
        %1869 = vmatprep.mubr.bf16.mxu0 0
        %1870 = vmatmul.mubr.bf16.gmra.mxu0 %v1389
        %v1871 = vpop.f32.mrf.mxu0
        %v1872 = vadd.f32 0.0, %v1871
        %v1873 = vpop.f32.mrf.mxu0
        %v1874 = vpop.f32.mrf.mxu0
        %v1875 = vadd.f32 0.0, %v1874
        %v1876 = vpop.f32.mrf.mxu0
        %1877 = vmatprep.mubr.bf16.mxu0 0
        %1878 = vmatmul.mubr.bf16.gmra.mxu0 %v1390
        %v1879 = vpop.f32.mrf.mxu0
        %v1880 = vadd.f32 0.0, %v1879
        %v1881 = vpop.f32.mrf.mxu0
        %v1882 = vpop.f32.mrf.mxu0
        %v1883 = vadd.f32 0.0, %v1882
        %v1884 = vpop.f32.mrf.mxu0
        %1885 = vmatprep.mubr.bf16.mxu0 0
        %1886 = vmatmul.mubr.bf16.gmra.mxu0 %v1391
        %v1887 = vpop.f32.mrf.mxu0
        %v1888 = vadd.f32 0.0, %v1887
        %v1889 = vpop.f32.mrf.mxu0
        %v1890 = vpop.f32.mrf.mxu0
        %v1891 = vadd.f32 0.0, %v1890
        %v1892 = vpop.f32.mrf.mxu0
        %1893 = vmatprep.mubr.bf16.mxu0 0
        %1894 = vmatmul.mubr.bf16.gmra.mxu0 %v1392
        %v1895 = vpop.f32.mrf.mxu0
        %v1896 = vadd.f32 0.0, %v1895
        %v1897 = vpop.f32.mrf.mxu0
        %v1898 = vpop.f32.mrf.mxu0
        %v1899 = vadd.f32 0.0, %v1898
        %v1900 = vpop.f32.mrf.mxu0
        %1901 = vmatprep.mubr.bf16.mxu0 0
        %1902 = vmatmul.mubr.bf16.gmra.mxu0 %v1393
        %v1903 = vpop.f32.mrf.mxu0
        %v1904 = vadd.f32 0.0, %v1903
        %v1905 = vpop.f32.mrf.mxu0
        %v1906 = vpop.f32.mrf.mxu0
        %v1907 = vadd.f32 0.0, %v1906
        %v1908 = vpop.f32.mrf.mxu0
        %1909 = vmatprep.mubr.bf16.mxu0 0
        %1910 = vmatmul.mubr.bf16.gmra.mxu0 %v1394
        %v1911 = vpop.f32.mrf.mxu0
        %v1912 = vadd.f32 0.0, %v1911
        %v1913 = vpop.f32.mrf.mxu0
        %v1914 = vpop.f32.mrf.mxu0
        %v1915 = vadd.f32 0.0, %v1914
        %v1916 = vpop.f32.mrf.mxu0
        %1917 = vmatprep.mubr.bf16.mxu0 0
        %1918 = vmatmul.mubr.bf16.gmra.mxu0 %v1395
        %v1919 = vpop.f32.mrf.mxu0
        %v1920 = vadd.f32 0.0, %v1919
        %v1921 = vpop.f32.mrf.mxu0
        %v1922 = vpop.f32.mrf.mxu0
        %v1923 = vadd.f32 0.0, %v1922
        %v1924 = vpop.f32.mrf.mxu0
        %1925 = vmatprep.mubr.bf16.mxu0 0
        %1926 = vmatmul.mubr.bf16.gmra.mxu0 %v1396
        %v1927 = vpop.f32.mrf.mxu0
        %v1928 = vadd.f32 0.0, %v1927
        %v1929 = vpop.f32.mrf.mxu0
        %v1930 = vpop.f32.mrf.mxu0
        %v1931 = vadd.f32 0.0, %v1930
        %v1932 = vpop.f32.mrf.mxu0
        %1933 = vmatprep.mubr.bf16.mxu0 0
        %1934 = vmatmul.mubr.bf16.gmra.mxu0 %v1397
        %v1935 = vpop.f32.mrf.mxu0
        %v1936 = vadd.f32 0.0, %v1935
        %v1937 = vpop.f32.mrf.mxu0
        %v1938 = vpop.f32.mrf.mxu0
        %v1939 = vadd.f32 0.0, %v1938
        %v1940 = vpop.f32.mrf.mxu0
        %1941 = vdwg.mxu0
        %v1942 = vld [vmem:[%s823] sm:$0xf]
        %v1943 = vld [vmem:[%s823 + $0x4] sm:$0xf]
        %v1944 = vld [vmem:[%s823 + $0x8] sm:$0xf]
        %v1945 = vld [vmem:[%s823 + $0xc] sm:$0xf]
        %v1946 = vld [vmem:[%s823 + $0x10] sm:$0xf]
        %v1947 = vld [vmem:[%s823 + $0x14] sm:$0xf]
        %v1948 = vld [vmem:[%s823 + $0x18] sm:$0xf]
        %v1949 = vld [vmem:[%s823 + $0x1c] sm:$0xf]
        %v1950 = vld [vmem:[%s823 + $0x20] sm:$0xf]
        %v1951 = vld [vmem:[%s823 + $0x24] sm:$0xf]
        %v1952 = vld [vmem:[%s823 + $0x28] sm:$0xf]
        %v1953 = vld [vmem:[%s823 + $0x2c] sm:$0xf]
        %v1954 = vld [vmem:[%s823 + $0x30] sm:$0xf]
        %v1955 = vld [vmem:[%s823 + $0x34] sm:$0xf]
        %v1956 = vld [vmem:[%s823 + $0x38] sm:$0xf]
        %v1957 = vld [vmem:[%s823 + $0x3c] sm:$0xf]
        %v1958 = vld [vmem:[%s823 + $0x40] sm:$0xf]
        %v1959 = vld [vmem:[%s823 + $0x44] sm:$0xf]
        %v1960 = vld [vmem:[%s823 + $0x48] sm:$0xf]
        %v1961 = vld [vmem:[%s823 + $0x4c] sm:$0xf]
        %v1962 = vld [vmem:[%s823 + $0x50] sm:$0xf]
        %v1963 = vld [vmem:[%s823 + $0x54] sm:$0xf]
        %v1964 = vld [vmem:[%s823 + $0x58] sm:$0xf]
        %v1965 = vld [vmem:[%s823 + $0x5c] sm:$0xf]
        %v1966 = vld [vmem:[%s823 + $0x60] sm:$0xf]
        %v1967 = vld [vmem:[%s823 + $0x64] sm:$0xf]
        %v1968 = vld [vmem:[%s823 + $0x68] sm:$0xf]
        %v1969 = vld [vmem:[%s823 + $0x6c] sm:$0xf]
        %v1970 = vld [vmem:[%s823 + $0x70] sm:$0xf]
        %v1971 = vld [vmem:[%s823 + $0x74] sm:$0xf]
        %v1972 = vld [vmem:[%s823 + $0x78] sm:$0xf]
        %v1973 = vld [vmem:[%s823 + $0x7c] sm:$0xf]
        %v1990 = vunpack.c.l.b16 %v1942
        %v1991 = vunpack.c.l.b16 %v1943
        %v1992 = vunpack.c.l.b16 %v1944
        %v1993 = vunpack.c.l.b16 %v1945
        %v1994 = vunpack.c.l.b16 %v1946
        %v1995 = vunpack.c.l.b16 %v1947
        %v1996 = vunpack.c.l.b16 %v1948
        %v1997 = vunpack.c.l.b16 %v1949
        %v1998 = vunpack.c.l.b16 %v1950
        %v1999 = vunpack.c.l.b16 %v1951
        %v2000 = vunpack.c.l.b16 %v1952
        %v2001 = vunpack.c.l.b16 %v1953
        %v2002 = vunpack.c.l.b16 %v1954
        %v2003 = vunpack.c.l.b16 %v1955
        %v2004 = vunpack.c.l.b16 %v1956
        %v2005 = vunpack.c.l.b16 %v1957
        %v2006 = vpack.c.b16 %v1991, %v1990
        %v2007 = vpack.c.b16 %v1993, %v1992
        %v2008 = vpack.c.b16 %v1995, %v1994
        %v2009 = vpack.c.b16 %v1997, %v1996
        %v2010 = vpack.c.b16 %v1999, %v1998
        %v2011 = vpack.c.b16 %v2001, %v2000
        %v2012 = vpack.c.b16 %v2003, %v2002
        %v2013 = vpack.c.b16 %v2005, %v2004
        %2022 = vmatprep.subr.bf16.mxu0 0
        %2023 = vmatpush1.bf16.msra.mxu0 %v2013
        %2024 = vmatprep.subr.bf16.mxu0 0
        %2025 = vmatpush1.bf16.msra.mxu0 %v2012
        %2026 = vmatprep.subr.bf16.mxu0 0
        %2027 = vmatpush1.bf16.msra.mxu0 %v2011
        %2028 = vmatprep.subr.bf16.mxu0 0
        %2029 = vmatpush1.bf16.msra.mxu0 %v2010
        %2030 = vmatprep.subr.bf16.mxu0 0
        %2031 = vmatpush1.bf16.msra.mxu0 %v2009
        %2032 = vmatprep.subr.bf16.mxu0 0
        %2033 = vmatpush1.bf16.msra.mxu0 %v2008
        %2034 = vmatprep.subr.bf16.mxu0 0
        %2035 = vmatpush1.bf16.msra.mxu0 %v2007
        %2036 = vmatprep.subr.bf16.mxu0 0
        %2037 = vmatpush1.bf16.msra.mxu0 %v2006
        %2038 = vmatprep.subr.bf16.mxu0 0
        %2039 = vmatpush2.bf16.msra.mxu0 0
        %2040 = vmatprep.subr.bf16.mxu0 0
        %2041 = vmatpush2.bf16.msra.mxu0 0
        %2042 = vmatprep.subr.bf16.mxu0 0
        %2043 = vmatpush2.bf16.msra.mxu0 0
        %2044 = vmatprep.subr.bf16.mxu0 0
        %2045 = vmatpush2.bf16.msra.mxu0 0
        %2046 = vmatprep.subr.bf16.mxu0 0
        %2047 = vmatpush2.bf16.msra.mxu0 0
        %2048 = vmatprep.subr.bf16.mxu0 0
        %2049 = vmatpush2.bf16.msra.mxu0 0
        %2050 = vmatprep.subr.bf16.mxu0 0
        %2051 = vmatpush2.bf16.msra.mxu0 0
        %2052 = vmatprep.subr.bf16.mxu0 0
        %2053 = vmatpush2.bf16.msra.mxu0 0
        %2054 = vmatprep.mubr.bf16.mxu0 0
        %2055 = vmatmul.mubr.bf16.gmra.mxu0 %v1382
        %v2056 = vpop.f32.mrf.mxu0
        %v2057 = vadd.f32 0.0, %v2056
        %v2058 = vpop.f32.mrf.mxu0
        %v2059 = vpop.f32.mrf.mxu0
        %v2060 = vadd.f32 0.0, %v2059
        %v2061 = vpop.f32.mrf.mxu0
        %2062 = vmatprep.mubr.bf16.mxu0 0
        %2063 = vmatmul.mubr.bf16.gmra.mxu0 %v1383
        %v2064 = vpop.f32.mrf.mxu0
        %v2065 = vadd.f32 0.0, %v2064
        %v2066 = vpop.f32.mrf.mxu0
        %v2067 = vpop.f32.mrf.mxu0
        %v2068 = vadd.f32 0.0, %v2067
        %v2069 = vpop.f32.mrf.mxu0
        %2070 = vmatprep.mubr.bf16.mxu0 0
        %2071 = vmatmul.mubr.bf16.gmra.mxu0 %v1384
        %v2072 = vpop.f32.mrf.mxu0
        %v2073 = vadd.f32 0.0, %v2072
        %v2074 = vpop.f32.mrf.mxu0
        %v2075 = vpop.f32.mrf.mxu0
        %v2076 = vadd.f32 0.0, %v2075
        %v2077 = vpop.f32.mrf.mxu0
        %2078 = vmatprep.mubr.bf16.mxu0 0
        %2079 = vmatmul.mubr.bf16.gmra.mxu0 %v1385
        %v2080 = vpop.f32.mrf.mxu0
        %v2081 = vadd.f32 0.0, %v2080
        %v2082 = vpop.f32.mrf.mxu0
        %v2083 = vpop.f32.mrf.mxu0
        %v2084 = vadd.f32 0.0, %v2083
        %v2085 = vpop.f32.mrf.mxu0
        %2086 = vmatprep.mubr.bf16.mxu0 0
        %2087 = vmatmul.mubr.bf16.gmra.mxu0 %v1386
        %v2088 = vpop.f32.mrf.mxu0
        %v2089 = vadd.f32 0.0, %v2088
        %v2090 = vpop.f32.mrf.mxu0
        %v2091 = vpop.f32.mrf.mxu0
        %v2092 = vadd.f32 0.0, %v2091
        %v2093 = vpop.f32.mrf.mxu0
        %2094 = vmatprep.mubr.bf16.mxu0 0
        %2095 = vmatmul.mubr.bf16.gmra.mxu0 %v1387
        %v2096 = vpop.f32.mrf.mxu0
        %v2097 = vadd.f32 0.0, %v2096
        %v2098 = vpop.f32.mrf.mxu0
        %v2099 = vpop.f32.mrf.mxu0
        %v2100 = vadd.f32 0.0, %v2099
        %v2101 = vpop.f32.mrf.mxu0
        %2102 = vmatprep.mubr.bf16.mxu0 0
        %2103 = vmatmul.mubr.bf16.gmra.mxu0 %v1388
        %v2104 = vpop.f32.mrf.mxu0
        %v2105 = vadd.f32 0.0, %v2104
        %v2106 = vpop.f32.mrf.mxu0
        %v2107 = vpop.f32.mrf.mxu0
        %v2108 = vadd.f32 0.0, %v2107
        %v2109 = vpop.f32.mrf.mxu0
        %2110 = vmatprep.mubr.bf16.mxu0 0
        %2111 = vmatmul.mubr.bf16.gmra.mxu0 %v1389
        %v2112 = vpop.f32.mrf.mxu0
        %v2113 = vadd.f32 0.0, %v2112
        %v2114 = vpop.f32.mrf.mxu0
        %v2115 = vpop.f32.mrf.mxu0
        %v2116 = vadd.f32 0.0, %v2115
        %v2117 = vpop.f32.mrf.mxu0
        %2118 = vmatprep.mubr.bf16.mxu0 0
        %2119 = vmatmul.mubr.bf16.gmra.mxu0 %v1390
        %v2120 = vpop.f32.mrf.mxu0
        %v2121 = vadd.f32 0.0, %v2120
        %v2122 = vpop.f32.mrf.mxu0
        %v2123 = vpop.f32.mrf.mxu0
        %v2124 = vadd.f32 0.0, %v2123
        %v2125 = vpop.f32.mrf.mxu0
        %2126 = vmatprep.mubr.bf16.mxu0 0
        %2127 = vmatmul.mubr.bf16.gmra.mxu0 %v1391
        %v2128 = vpop.f32.mrf.mxu0
        %v2129 = vadd.f32 0.0, %v2128
        %v2130 = vpop.f32.mrf.mxu0
        %v2131 = vpop.f32.mrf.mxu0
        %v2132 = vadd.f32 0.0, %v2131
        %v2133 = vpop.f32.mrf.mxu0
        %2134 = vmatprep.mubr.bf16.mxu0 0
        %2135 = vmatmul.mubr.bf16.gmra.mxu0 %v1392
        %v2136 = vpop.f32.mrf.mxu0
        %v2137 = vadd.f32 0.0, %v2136
        %v2138 = vpop.f32.mrf.mxu0
        %v2139 = vpop.f32.mrf.mxu0
        %v2140 = vadd.f32 0.0, %v2139
        %v2141 = vpop.f32.mrf.mxu0
        %2142 = vmatprep.mubr.bf16.mxu0 0
        %2143 = vmatmul.mubr.bf16.gmra.mxu0 %v1393
        %v2144 = vpop.f32.mrf.mxu0
        %v2145 = vadd.f32 0.0, %v2144
        %v2146 = vpop.f32.mrf.mxu0
        %v2147 = vpop.f32.mrf.mxu0
        %v2148 = vadd.f32 0.0, %v2147
        %v2149 = vpop.f32.mrf.mxu0
        %2150 = vmatprep.mubr.bf16.mxu0 0
        %2151 = vmatmul.mubr.bf16.gmra.mxu0 %v1394
        %v2152 = vpop.f32.mrf.mxu0
        %v2153 = vadd.f32 0.0, %v2152
        %v2154 = vpop.f32.mrf.mxu0
        %v2155 = vpop.f32.mrf.mxu0
        %v2156 = vadd.f32 0.0, %v2155
        %v2157 = vpop.f32.mrf.mxu0
        %2158 = vmatprep.mubr.bf16.mxu0 0
        %2159 = vmatmul.mubr.bf16.gmra.mxu0 %v1395
        %v2160 = vpop.f32.mrf.mxu0
        %v2161 = vadd.f32 0.0, %v2160
        %v2162 = vpop.f32.mrf.mxu0
        %v2163 = vpop.f32.mrf.mxu0
        %v2164 = vadd.f32 0.0, %v2163
        %v2165 = vpop.f32.mrf.mxu0
        %2166 = vmatprep.mubr.bf16.mxu0 0
        %2167 = vmatmul.mubr.bf16.gmra.mxu0 %v1396
        %v2168 = vpop.f32.mrf.mxu0
        %v2169 = vadd.f32 0.0, %v2168
        %v2170 = vpop.f32.mrf.mxu0
        %v2171 = vpop.f32.mrf.mxu0
        %v2172 = vadd.f32 0.0, %v2171
        %v2173 = vpop.f32.mrf.mxu0
        %2174 = vmatprep.mubr.bf16.mxu0 0
        %2175 = vmatmul.mubr.bf16.gmra.mxu0 %v1397
        %v2176 = vpop.f32.mrf.mxu0
        %v2177 = vadd.f32 0.0, %v2176
        %v2178 = vpop.f32.mrf.mxu0
        %v2179 = vpop.f32.mrf.mxu0
        %v2180 = vadd.f32 0.0, %v2179
        %v2181 = vpop.f32.mrf.mxu0
        %2182 = vdwg.mxu0
        %v2199 = vunpack.c.l.b16 %v1958
        %v2200 = vunpack.c.l.b16 %v1959
        %v2201 = vunpack.c.l.b16 %v1960
        %v2202 = vunpack.c.l.b16 %v1961
        %v2203 = vunpack.c.l.b16 %v1962
        %v2204 = vunpack.c.l.b16 %v1963
        %v2205 = vunpack.c.l.b16 %v1964
        %v2206 = vunpack.c.l.b16 %v1965
        %v2207 = vunpack.c.l.b16 %v1966
        %v2208 = vunpack.c.l.b16 %v1967
        %v2209 = vunpack.c.l.b16 %v1968
        %v2210 = vunpack.c.l.b16 %v1969
        %v2211 = vunpack.c.l.b16 %v1970
        %v2212 = vunpack.c.l.b16 %v1971
        %v2213 = vunpack.c.l.b16 %v1972
        %v2214 = vunpack.c.l.b16 %v1973
        %v2215 = vpack.c.b16 %v2200, %v2199
        %v2216 = vpack.c.b16 %v2202, %v2201
        %v2217 = vpack.c.b16 %v2204, %v2203
        %v2218 = vpack.c.b16 %v2206, %v2205
        %v2219 = vpack.c.b16 %v2208, %v2207
        %v2220 = vpack.c.b16 %v2210, %v2209
        %v2221 = vpack.c.b16 %v2212, %v2211
        %v2222 = vpack.c.b16 %v2214, %v2213
        %2231 = vmatprep.subr.bf16.mxu0 0
        %2232 = vmatpush1.bf16.msra.mxu0 %v2222
        %2233 = vmatprep.subr.bf16.mxu0 0
        %2234 = vmatpush1.bf16.msra.mxu0 %v2221
        %2235 = vmatprep.subr.bf16.mxu0 0
        %2236 = vmatpush1.bf16.msra.mxu0 %v2220
        %2237 = vmatprep.subr.bf16.mxu0 0
        %2238 = vmatpush1.bf16.msra.mxu0 %v2219
        %2239 = vmatprep.subr.bf16.mxu0 0
        %2240 = vmatpush1.bf16.msra.mxu0 %v2218
        %2241 = vmatprep.subr.bf16.mxu0 0
        %2242 = vmatpush1.bf16.msra.mxu0 %v2217
        %2243 = vmatprep.subr.bf16.mxu0 0
        %2244 = vmatpush1.bf16.msra.mxu0 %v2216
        %2245 = vmatprep.subr.bf16.mxu0 0
        %2246 = vmatpush1.bf16.msra.mxu0 %v2215
        %2247 = vmatprep.subr.bf16.mxu0 0
        %2248 = vmatpush2.bf16.msra.mxu0 0
        %2249 = vmatprep.subr.bf16.mxu0 0
        %2250 = vmatpush2.bf16.msra.mxu0 0
        %2251 = vmatprep.subr.bf16.mxu0 0
        %2252 = vmatpush2.bf16.msra.mxu0 0
        %2253 = vmatprep.subr.bf16.mxu0 0
        %2254 = vmatpush2.bf16.msra.mxu0 0
        %2255 = vmatprep.subr.bf16.mxu0 0
        %2256 = vmatpush2.bf16.msra.mxu0 0
        %2257 = vmatprep.subr.bf16.mxu0 0
        %2258 = vmatpush2.bf16.msra.mxu0 0
        %2259 = vmatprep.subr.bf16.mxu0 0
        %2260 = vmatpush2.bf16.msra.mxu0 0
        %2261 = vmatprep.subr.bf16.mxu0 0
        %2262 = vmatpush2.bf16.msra.mxu0 0
        %2263 = vmatprep.mubr.bf16.mxu0 0
        %2264 = vmatmul.mubr.bf16.gmra.mxu0 %v1382
        %v2265 = vpop.f32.mrf.mxu0
        %v2266 = vadd.f32 0.0, %v2265
        %v2267 = vpop.f32.mrf.mxu0
        %v2268 = vpop.f32.mrf.mxu0
        %v2269 = vadd.f32 0.0, %v2268
        %v2270 = vpop.f32.mrf.mxu0
        %2271 = vmatprep.mubr.bf16.mxu0 0
        %2272 = vmatmul.mubr.bf16.gmra.mxu0 %v1383
        %v2273 = vpop.f32.mrf.mxu0
        %v2274 = vadd.f32 0.0, %v2273
        %v2275 = vpop.f32.mrf.mxu0
        %v2276 = vpop.f32.mrf.mxu0
        %v2277 = vadd.f32 0.0, %v2276
        %v2278 = vpop.f32.mrf.mxu0
        %2279 = vmatprep.mubr.bf16.mxu0 0
        %2280 = vmatmul.mubr.bf16.gmra.mxu0 %v1384
        %v2281 = vpop.f32.mrf.mxu0
        %v2282 = vadd.f32 0.0, %v2281
        %v2283 = vpop.f32.mrf.mxu0
        %v2284 = vpop.f32.mrf.mxu0
        %v2285 = vadd.f32 0.0, %v2284
        %v2286 = vpop.f32.mrf.mxu0
        %2287 = vmatprep.mubr.bf16.mxu0 0
        %2288 = vmatmul.mubr.bf16.gmra.mxu0 %v1385
        %v2289 = vpop.f32.mrf.mxu0
        %v2290 = vadd.f32 0.0, %v2289
        %v2291 = vpop.f32.mrf.mxu0
        %v2292 = vpop.f32.mrf.mxu0
        %v2293 = vadd.f32 0.0, %v2292
        %v2294 = vpop.f32.mrf.mxu0
        %2295 = vmatprep.mubr.bf16.mxu0 0
        %2296 = vmatmul.mubr.bf16.gmra.mxu0 %v1386
        %v2297 = vpop.f32.mrf.mxu0
        %v2298 = vadd.f32 0.0, %v2297
        %v2299 = vpop.f32.mrf.mxu0
        %v2300 = vpop.f32.mrf.mxu0
        %v2301 = vadd.f32 0.0, %v2300
        %v2302 = vpop.f32.mrf.mxu0
        %2303 = vmatprep.mubr.bf16.mxu0 0
        %2304 = vmatmul.mubr.bf16.gmra.mxu0 %v1387
        %v2305 = vpop.f32.mrf.mxu0
        %v2306 = vadd.f32 0.0, %v2305
        %v2307 = vpop.f32.mrf.mxu0
        %v2308 = vpop.f32.mrf.mxu0
        %v2309 = vadd.f32 0.0, %v2308
        %v2310 = vpop.f32.mrf.mxu0
        %2311 = vmatprep.mubr.bf16.mxu0 0
        %2312 = vmatmul.mubr.bf16.gmra.mxu0 %v1388
        %v2313 = vpop.f32.mrf.mxu0
        %v2314 = vadd.f32 0.0, %v2313
        %v2315 = vpop.f32.mrf.mxu0
        %v2316 = vpop.f32.mrf.mxu0
        %v2317 = vadd.f32 0.0, %v2316
        %v2318 = vpop.f32.mrf.mxu0
        %2319 = vmatprep.mubr.bf16.mxu0 0
        %2320 = vmatmul.mubr.bf16.gmra.mxu0 %v1389
        %v2321 = vpop.f32.mrf.mxu0
        %v2322 = vadd.f32 0.0, %v2321
        %v2323 = vpop.f32.mrf.mxu0
        %v2324 = vpop.f32.mrf.mxu0
        %v2325 = vadd.f32 0.0, %v2324
        %v2326 = vpop.f32.mrf.mxu0
        %2327 = vmatprep.mubr.bf16.mxu0 0
        %2328 = vmatmul.mubr.bf16.gmra.mxu0 %v1390
        %v2329 = vpop.f32.mrf.mxu0
        %v2330 = vadd.f32 0.0, %v2329
        %v2331 = vpop.f32.mrf.mxu0
        %v2332 = vpop.f32.mrf.mxu0
        %v2333 = vadd.f32 0.0, %v2332
        %v2334 = vpop.f32.mrf.mxu0
        %2335 = vmatprep.mubr.bf16.mxu0 0
        %2336 = vmatmul.mubr.bf16.gmra.mxu0 %v1391
        %v2337 = vpop.f32.mrf.mxu0
        %v2338 = vadd.f32 0.0, %v2337
        %v2339 = vpop.f32.mrf.mxu0
        %v2340 = vpop.f32.mrf.mxu0
        %v2341 = vadd.f32 0.0, %v2340
        %v2342 = vpop.f32.mrf.mxu0
        %2343 = vmatprep.mubr.bf16.mxu0 0
        %2344 = vmatmul.mubr.bf16.gmra.mxu0 %v1392
        %v2345 = vpop.f32.mrf.mxu0
        %v2346 = vadd.f32 0.0, %v2345
        %v2347 = vpop.f32.mrf.mxu0
        %v2348 = vpop.f32.mrf.mxu0
        %v2349 = vadd.f32 0.0, %v2348
        %v2350 = vpop.f32.mrf.mxu0
        %2351 = vmatprep.mubr.bf16.mxu0 0
        %2352 = vmatmul.mubr.bf16.gmra.mxu0 %v1393
        %v2353 = vpop.f32.mrf.mxu0
        %v2354 = vadd.f32 0.0, %v2353
        %v2355 = vpop.f32.mrf.mxu0
        %v2356 = vpop.f32.mrf.mxu0
        %v2357 = vadd.f32 0.0, %v2356
        %v2358 = vpop.f32.mrf.mxu0
        %2359 = vmatprep.mubr.bf16.mxu0 0
        %2360 = vmatmul.mubr.bf16.gmra.mxu0 %v1394
        %v2361 = vpop.f32.mrf.mxu0
        %v2362 = vadd.f32 0.0, %v2361
        %v2363 = vpop.f32.mrf.mxu0
        %v2364 = vpop.f32.mrf.mxu0
        %v2365 = vadd.f32 0.0, %v2364
        %v2366 = vpop.f32.mrf.mxu0
        %2367 = vmatprep.mubr.bf16.mxu0 0
        %2368 = vmatmul.mubr.bf16.gmra.mxu0 %v1395
        %v2369 = vpop.f32.mrf.mxu0
        %v2370 = vadd.f32 0.0, %v2369
        %v2371 = vpop.f32.mrf.mxu0
        %v2372 = vpop.f32.mrf.mxu0
        %v2373 = vadd.f32 0.0, %v2372
        %v2374 = vpop.f32.mrf.mxu0
        %2375 = vmatprep.mubr.bf16.mxu0 0
        %2376 = vmatmul.mubr.bf16.gmra.mxu0 %v1396
        %v2377 = vpop.f32.mrf.mxu0
        %v2378 = vadd.f32 0.0, %v2377
        %v2379 = vpop.f32.mrf.mxu0
        %v2380 = vpop.f32.mrf.mxu0
        %v2381 = vadd.f32 0.0, %v2380
        %v2382 = vpop.f32.mrf.mxu0
        %2383 = vmatprep.mubr.bf16.mxu0 0
        %2384 = vmatmul.mubr.bf16.gmra.mxu0 %v1397
        %v2385 = vpop.f32.mrf.mxu0
        %v2386 = vadd.f32 0.0, %v2385
        %v2387 = vpop.f32.mrf.mxu0
        %v2388 = vpop.f32.mrf.mxu0
        %v2389 = vadd.f32 0.0, %v2388
        %v2390 = vpop.f32.mrf.mxu0
        %2391 = vdwg.mxu0
        %v2392 = vld [vmem:[%s828] sm:$0xf]
        %v2393 = vld [vmem:[%s828 + $0x4] sm:$0xf]
        %v2394 = vld [vmem:[%s828 + $0x8] sm:$0xf]
        %v2395 = vld [vmem:[%s828 + $0xc] sm:$0xf]
        %v2396 = vld [vmem:[%s828 + $0x10] sm:$0xf]
        %v2397 = vld [vmem:[%s828 + $0x14] sm:$0xf]
        %v2398 = vld [vmem:[%s828 + $0x18] sm:$0xf]
        %v2399 = vld [vmem:[%s828 + $0x1c] sm:$0xf]
        %v2400 = vld [vmem:[%s828 + $0x20] sm:$0xf]
        %v2401 = vld [vmem:[%s828 + $0x24] sm:$0xf]
        %v2402 = vld [vmem:[%s828 + $0x28] sm:$0xf]
        %v2403 = vld [vmem:[%s828 + $0x2c] sm:$0xf]
        %v2404 = vld [vmem:[%s828 + $0x30] sm:$0xf]
        %v2405 = vld [vmem:[%s828 + $0x34] sm:$0xf]
        %v2406 = vld [vmem:[%s828 + $0x38] sm:$0xf]
        %v2407 = vld [vmem:[%s828 + $0x3c] sm:$0xf]
        %v2408 = vld [vmem:[%s828 + $0x40] sm:$0xf]
        %v2409 = vld [vmem:[%s828 + $0x44] sm:$0xf]
        %v2410 = vld [vmem:[%s828 + $0x48] sm:$0xf]
        %v2411 = vld [vmem:[%s828 + $0x4c] sm:$0xf]
        %v2412 = vld [vmem:[%s828 + $0x50] sm:$0xf]
        %v2413 = vld [vmem:[%s828 + $0x54] sm:$0xf]
        %v2414 = vld [vmem:[%s828 + $0x58] sm:$0xf]
        %v2415 = vld [vmem:[%s828 + $0x5c] sm:$0xf]
        %v2416 = vld [vmem:[%s828 + $0x60] sm:$0xf]
        %v2417 = vld [vmem:[%s828 + $0x64] sm:$0xf]
        %v2418 = vld [vmem:[%s828 + $0x68] sm:$0xf]
        %v2419 = vld [vmem:[%s828 + $0x6c] sm:$0xf]
        %v2420 = vld [vmem:[%s828 + $0x70] sm:$0xf]
        %v2421 = vld [vmem:[%s828 + $0x74] sm:$0xf]
        %v2422 = vld [vmem:[%s828 + $0x78] sm:$0xf]
        %v2423 = vld [vmem:[%s828 + $0x7c] sm:$0xf]
        %v2440 = vunpack.c.l.b16 %v2392
        %v2441 = vunpack.c.l.b16 %v2393
        %v2442 = vunpack.c.l.b16 %v2394
        %v2443 = vunpack.c.l.b16 %v2395
        %v2444 = vunpack.c.l.b16 %v2396
        %v2445 = vunpack.c.l.b16 %v2397
        %v2446 = vunpack.c.l.b16 %v2398
        %v2447 = vunpack.c.l.b16 %v2399
        %v2448 = vunpack.c.l.b16 %v2400
        %v2449 = vunpack.c.l.b16 %v2401
        %v2450 = vunpack.c.l.b16 %v2402
        %v2451 = vunpack.c.l.b16 %v2403
        %v2452 = vunpack.c.l.b16 %v2404
        %v2453 = vunpack.c.l.b16 %v2405
        %v2454 = vunpack.c.l.b16 %v2406
        %v2455 = vunpack.c.l.b16 %v2407
        %v2456 = vpack.c.b16 %v2441, %v2440
        %v2457 = vpack.c.b16 %v2443, %v2442
        %v2458 = vpack.c.b16 %v2445, %v2444
        %v2459 = vpack.c.b16 %v2447, %v2446
        %v2460 = vpack.c.b16 %v2449, %v2448
        %v2461 = vpack.c.b16 %v2451, %v2450
        %v2462 = vpack.c.b16 %v2453, %v2452
        %v2463 = vpack.c.b16 %v2455, %v2454
        %2472 = vmatprep.subr.bf16.mxu0 0
        %2473 = vmatpush1.bf16.msra.mxu0 %v2463
        %2474 = vmatprep.subr.bf16.mxu0 0
        %2475 = vmatpush1.bf16.msra.mxu0 %v2462
        %2476 = vmatprep.subr.bf16.mxu0 0
        %2477 = vmatpush1.bf16.msra.mxu0 %v2461
        %2478 = vmatprep.subr.bf16.mxu0 0
        %2479 = vmatpush1.bf16.msra.mxu0 %v2460
        %2480 = vmatprep.subr.bf16.mxu0 0
        %2481 = vmatpush1.bf16.msra.mxu0 %v2459
        %2482 = vmatprep.subr.bf16.mxu0 0
        %2483 = vmatpush1.bf16.msra.mxu0 %v2458
        %2484 = vmatprep.subr.bf16.mxu0 0
        %2485 = vmatpush1.bf16.msra.mxu0 %v2457
        %2486 = vmatprep.subr.bf16.mxu0 0
        %2487 = vmatpush1.bf16.msra.mxu0 %v2456
        %2488 = vmatprep.subr.bf16.mxu0 0
        %2489 = vmatpush2.bf16.msra.mxu0 0
        %2490 = vmatprep.subr.bf16.mxu0 0
        %2491 = vmatpush2.bf16.msra.mxu0 0
        %2492 = vmatprep.subr.bf16.mxu0 0
        %2493 = vmatpush2.bf16.msra.mxu0 0
        %2494 = vmatprep.subr.bf16.mxu0 0
        %2495 = vmatpush2.bf16.msra.mxu0 0
        %2496 = vmatprep.subr.bf16.mxu0 0
        %2497 = vmatpush2.bf16.msra.mxu0 0
        %2498 = vmatprep.subr.bf16.mxu0 0
        %2499 = vmatpush2.bf16.msra.mxu0 0
        %2500 = vmatprep.subr.bf16.mxu0 0
        %2501 = vmatpush2.bf16.msra.mxu0 0
        %2502 = vmatprep.subr.bf16.mxu0 0
        %2503 = vmatpush2.bf16.msra.mxu0 0
        %2504 = vmatprep.mubr.bf16.mxu0 0
        %2505 = vmatmul.mubr.bf16.gmra.mxu0 %v1382
        %v2506 = vpop.f32.mrf.mxu0
        %v2507 = vadd.f32 0.0, %v2506
        %v2508 = vpop.f32.mrf.mxu0
        %v2509 = vpop.f32.mrf.mxu0
        %v2510 = vadd.f32 0.0, %v2509
        %v2511 = vpop.f32.mrf.mxu0
        %2512 = vmatprep.mubr.bf16.mxu0 0
        %2513 = vmatmul.mubr.bf16.gmra.mxu0 %v1383
        %v2514 = vpop.f32.mrf.mxu0
        %v2515 = vadd.f32 0.0, %v2514
        %v2516 = vpop.f32.mrf.mxu0
        %v2517 = vpop.f32.mrf.mxu0
        %v2518 = vadd.f32 0.0, %v2517
        %v2519 = vpop.f32.mrf.mxu0
        %2520 = vmatprep.mubr.bf16.mxu0 0
        %2521 = vmatmul.mubr.bf16.gmra.mxu0 %v1384
        %v2522 = vpop.f32.mrf.mxu0
        %v2523 = vadd.f32 0.0, %v2522
        %v2524 = vpop.f32.mrf.mxu0
        %v2525 = vpop.f32.mrf.mxu0
        %v2526 = vadd.f32 0.0, %v2525
        %v2527 = vpop.f32.mrf.mxu0
        %2528 = vmatprep.mubr.bf16.mxu0 0
        %2529 = vmatmul.mubr.bf16.gmra.mxu0 %v1385
        %v2530 = vpop.f32.mrf.mxu0
        %v2531 = vadd.f32 0.0, %v2530
        %v2532 = vpop.f32.mrf.mxu0
        %v2533 = vpop.f32.mrf.mxu0
        %v2534 = vadd.f32 0.0, %v2533
        %v2535 = vpop.f32.mrf.mxu0
        %2536 = vmatprep.mubr.bf16.mxu0 0
        %2537 = vmatmul.mubr.bf16.gmra.mxu0 %v1386
        %v2538 = vpop.f32.mrf.mxu0
        %v2539 = vadd.f32 0.0, %v2538
        %v2540 = vpop.f32.mrf.mxu0
        %v2541 = vpop.f32.mrf.mxu0
        %v2542 = vadd.f32 0.0, %v2541
        %v2543 = vpop.f32.mrf.mxu0
        %2544 = vmatprep.mubr.bf16.mxu0 0
        %2545 = vmatmul.mubr.bf16.gmra.mxu0 %v1387
        %v2546 = vpop.f32.mrf.mxu0
        %v2547 = vadd.f32 0.0, %v2546
        %v2548 = vpop.f32.mrf.mxu0
        %v2549 = vpop.f32.mrf.mxu0
        %v2550 = vadd.f32 0.0, %v2549
        %v2551 = vpop.f32.mrf.mxu0
        %2552 = vmatprep.mubr.bf16.mxu0 0
        %2553 = vmatmul.mubr.bf16.gmra.mxu0 %v1388
        %v2554 = vpop.f32.mrf.mxu0
        %v2555 = vadd.f32 0.0, %v2554
        %v2556 = vpop.f32.mrf.mxu0
        %v2557 = vpop.f32.mrf.mxu0
        %v2558 = vadd.f32 0.0, %v2557
        %v2559 = vpop.f32.mrf.mxu0
        %2560 = vmatprep.mubr.bf16.mxu0 0
        %2561 = vmatmul.mubr.bf16.gmra.mxu0 %v1389
        %v2562 = vpop.f32.mrf.mxu0
        %v2563 = vadd.f32 0.0, %v2562
        %v2564 = vpop.f32.mrf.mxu0
        %v2565 = vpop.f32.mrf.mxu0
        %v2566 = vadd.f32 0.0, %v2565
        %v2567 = vpop.f32.mrf.mxu0
        %2568 = vmatprep.mubr.bf16.mxu0 0
        %2569 = vmatmul.mubr.bf16.gmra.mxu0 %v1390
        %v2570 = vpop.f32.mrf.mxu0
        %v2571 = vadd.f32 0.0, %v2570
        %v2572 = vpop.f32.mrf.mxu0
        %v2573 = vpop.f32.mrf.mxu0
        %v2574 = vadd.f32 0.0, %v2573
        %v2575 = vpop.f32.mrf.mxu0
        %2576 = vmatprep.mubr.bf16.mxu0 0
        %2577 = vmatmul.mubr.bf16.gmra.mxu0 %v1391
        %v2578 = vpop.f32.mrf.mxu0
        %v2579 = vadd.f32 0.0, %v2578
        %v2580 = vpop.f32.mrf.mxu0
        %v2581 = vpop.f32.mrf.mxu0
        %v2582 = vadd.f32 0.0, %v2581
        %v2583 = vpop.f32.mrf.mxu0
        %2584 = vmatprep.mubr.bf16.mxu0 0
        %2585 = vmatmul.mubr.bf16.gmra.mxu0 %v1392
        %v2586 = vpop.f32.mrf.mxu0
        %v2587 = vadd.f32 0.0, %v2586
        %v2588 = vpop.f32.mrf.mxu0
        %v2589 = vpop.f32.mrf.mxu0
        %v2590 = vadd.f32 0.0, %v2589
        %v2591 = vpop.f32.mrf.mxu0
        %2592 = vmatprep.mubr.bf16.mxu0 0
        %2593 = vmatmul.mubr.bf16.gmra.mxu0 %v1393
        %v2594 = vpop.f32.mrf.mxu0
        %v2595 = vadd.f32 0.0, %v2594
        %v2596 = vpop.f32.mrf.mxu0
        %v2597 = vpop.f32.mrf.mxu0
        %v2598 = vadd.f32 0.0, %v2597
        %v2599 = vpop.f32.mrf.mxu0
        %2600 = vmatprep.mubr.bf16.mxu0 0
        %2601 = vmatmul.mubr.bf16.gmra.mxu0 %v1394
        %v2602 = vpop.f32.mrf.mxu0
        %v2603 = vadd.f32 0.0, %v2602
        %v2604 = vpop.f32.mrf.mxu0
        %v2605 = vpop.f32.mrf.mxu0
        %v2606 = vadd.f32 0.0, %v2605
        %v2607 = vpop.f32.mrf.mxu0
        %2608 = vmatprep.mubr.bf16.mxu0 0
        %2609 = vmatmul.mubr.bf16.gmra.mxu0 %v1395
        %v2610 = vpop.f32.mrf.mxu0
        %v2611 = vadd.f32 0.0, %v2610
        %v2612 = vpop.f32.mrf.mxu0
        %v2613 = vpop.f32.mrf.mxu0
        %v2614 = vadd.f32 0.0, %v2613
        %v2615 = vpop.f32.mrf.mxu0
        %2616 = vmatprep.mubr.bf16.mxu0 0
        %2617 = vmatmul.mubr.bf16.gmra.mxu0 %v1396
        %v2618 = vpop.f32.mrf.mxu0
        %v2619 = vadd.f32 0.0, %v2618
        %v2620 = vpop.f32.mrf.mxu0
        %v2621 = vpop.f32.mrf.mxu0
        %v2622 = vadd.f32 0.0, %v2621
        %v2623 = vpop.f32.mrf.mxu0
        %2624 = vmatprep.mubr.bf16.mxu0 0
        %2625 = vmatmul.mubr.bf16.gmra.mxu0 %v1397
        %v2626 = vpop.f32.mrf.mxu0
        %v2627 = vadd.f32 0.0, %v2626
        %v2628 = vpop.f32.mrf.mxu0
        %v2629 = vpop.f32.mrf.mxu0
        %v2630 = vadd.f32 0.0, %v2629
        %v2631 = vpop.f32.mrf.mxu0
        %2632 = vdwg.mxu0
        %v2649 = vunpack.c.l.b16 %v2408
        %v2650 = vunpack.c.l.b16 %v2409
        %v2651 = vunpack.c.l.b16 %v2410
        %v2652 = vunpack.c.l.b16 %v2411
        %v2653 = vunpack.c.l.b16 %v2412
        %v2654 = vunpack.c.l.b16 %v2413
        %v2655 = vunpack.c.l.b16 %v2414
        %v2656 = vunpack.c.l.b16 %v2415
        %v2657 = vunpack.c.l.b16 %v2416
        %v2658 = vunpack.c.l.b16 %v2417
        %v2659 = vunpack.c.l.b16 %v2418
        %v2660 = vunpack.c.l.b16 %v2419
        %v2661 = vunpack.c.l.b16 %v2420
        %v2662 = vunpack.c.l.b16 %v2421
        %v2663 = vunpack.c.l.b16 %v2422
        %v2664 = vunpack.c.l.b16 %v2423
        %v2665 = vpack.c.b16 %v2650, %v2649
        %v2666 = vpack.c.b16 %v2652, %v2651
        %v2667 = vpack.c.b16 %v2654, %v2653
        %v2668 = vpack.c.b16 %v2656, %v2655
        %v2669 = vpack.c.b16 %v2658, %v2657
        %v2670 = vpack.c.b16 %v2660, %v2659
        %v2671 = vpack.c.b16 %v2662, %v2661
        %v2672 = vpack.c.b16 %v2664, %v2663
        %2681 = vmatprep.subr.bf16.mxu0 0
        %2682 = vmatpush1.bf16.msra.mxu0 %v2672
        %2683 = vmatprep.subr.bf16.mxu0 0
        %2684 = vmatpush1.bf16.msra.mxu0 %v2671
        %2685 = vmatprep.subr.bf16.mxu0 0
        %2686 = vmatpush1.bf16.msra.mxu0 %v2670
        %2687 = vmatprep.subr.bf16.mxu0 0
        %2688 = vmatpush1.bf16.msra.mxu0 %v2669
        %2689 = vmatprep.subr.bf16.mxu0 0
        %2690 = vmatpush1.bf16.msra.mxu0 %v2668
        %2691 = vmatprep.subr.bf16.mxu0 0
        %2692 = vmatpush1.bf16.msra.mxu0 %v2667
        %2693 = vmatprep.subr.bf16.mxu0 0
        %2694 = vmatpush1.bf16.msra.mxu0 %v2666
        %2695 = vmatprep.subr.bf16.mxu0 0
        %2696 = vmatpush1.bf16.msra.mxu0 %v2665
        %2697 = vmatprep.subr.bf16.mxu0 0
        %2698 = vmatpush2.bf16.msra.mxu0 0
        %2699 = vmatprep.subr.bf16.mxu0 0
        %2700 = vmatpush2.bf16.msra.mxu0 0
        %2701 = vmatprep.subr.bf16.mxu0 0
        %2702 = vmatpush2.bf16.msra.mxu0 0
        %2703 = vmatprep.subr.bf16.mxu0 0
        %2704 = vmatpush2.bf16.msra.mxu0 0
        %2705 = vmatprep.subr.bf16.mxu0 0
        %2706 = vmatpush2.bf16.msra.mxu0 0
        %2707 = vmatprep.subr.bf16.mxu0 0
        %2708 = vmatpush2.bf16.msra.mxu0 0
        %2709 = vmatprep.subr.bf16.mxu0 0
        %2710 = vmatpush2.bf16.msra.mxu0 0
        %2711 = vmatprep.subr.bf16.mxu0 0
        %2712 = vmatpush2.bf16.msra.mxu0 0
        %2713 = vmatprep.mubr.bf16.mxu0 0
        %2714 = vmatmul.mubr.bf16.gmra.mxu0 %v1382
        %v2715 = vpop.f32.mrf.mxu0
        %v2716 = vadd.f32 0.0, %v2715
        %v2717 = vpop.f32.mrf.mxu0
        %v2718 = vpop.f32.mrf.mxu0
        %v2719 = vadd.f32 0.0, %v2718
        %v2720 = vpop.f32.mrf.mxu0
        %2721 = vmatprep.mubr.bf16.mxu0 0
        %2722 = vmatmul.mubr.bf16.gmra.mxu0 %v1383
        %v2723 = vpop.f32.mrf.mxu0
        %v2724 = vadd.f32 0.0, %v2723
        %v2725 = vpop.f32.mrf.mxu0
        %v2726 = vpop.f32.mrf.mxu0
        %v2727 = vadd.f32 0.0, %v2726
        %v2728 = vpop.f32.mrf.mxu0
        %2729 = vmatprep.mubr.bf16.mxu0 0
        %2730 = vmatmul.mubr.bf16.gmra.mxu0 %v1384
        %v2731 = vpop.f32.mrf.mxu0
        %v2732 = vadd.f32 0.0, %v2731
        %v2733 = vpop.f32.mrf.mxu0
        %v2734 = vpop.f32.mrf.mxu0
        %v2735 = vadd.f32 0.0, %v2734
        %v2736 = vpop.f32.mrf.mxu0
        %2737 = vmatprep.mubr.bf16.mxu0 0
        %2738 = vmatmul.mubr.bf16.gmra.mxu0 %v1385
        %v2739 = vpop.f32.mrf.mxu0
        %v2740 = vadd.f32 0.0, %v2739
        %v2741 = vpop.f32.mrf.mxu0
        %v2742 = vpop.f32.mrf.mxu0
        %v2743 = vadd.f32 0.0, %v2742
        %v2744 = vpop.f32.mrf.mxu0
        %2745 = vmatprep.mubr.bf16.mxu0 0
        %2746 = vmatmul.mubr.bf16.gmra.mxu0 %v1386
        %v2747 = vpop.f32.mrf.mxu0
        %v2748 = vadd.f32 0.0, %v2747
        %v2749 = vpop.f32.mrf.mxu0
        %v2750 = vpop.f32.mrf.mxu0
        %v2751 = vadd.f32 0.0, %v2750
        %v2752 = vpop.f32.mrf.mxu0
        %2753 = vmatprep.mubr.bf16.mxu0 0
        %2754 = vmatmul.mubr.bf16.gmra.mxu0 %v1387
        %v2755 = vpop.f32.mrf.mxu0
        %v2756 = vadd.f32 0.0, %v2755
        %v2757 = vpop.f32.mrf.mxu0
        %v2758 = vpop.f32.mrf.mxu0
        %v2759 = vadd.f32 0.0, %v2758
        %v2760 = vpop.f32.mrf.mxu0
        %2761 = vmatprep.mubr.bf16.mxu0 0
        %2762 = vmatmul.mubr.bf16.gmra.mxu0 %v1388
        %v2763 = vpop.f32.mrf.mxu0
        %v2764 = vadd.f32 0.0, %v2763
        %v2765 = vpop.f32.mrf.mxu0
        %v2766 = vpop.f32.mrf.mxu0
        %v2767 = vadd.f32 0.0, %v2766
        %v2768 = vpop.f32.mrf.mxu0
        %2769 = vmatprep.mubr.bf16.mxu0 0
        %2770 = vmatmul.mubr.bf16.gmra.mxu0 %v1389
        %v2771 = vpop.f32.mrf.mxu0
        %v2772 = vadd.f32 0.0, %v2771
        %v2773 = vpop.f32.mrf.mxu0
        %v2774 = vpop.f32.mrf.mxu0
        %v2775 = vadd.f32 0.0, %v2774
        %v2776 = vpop.f32.mrf.mxu0
        %2777 = vmatprep.mubr.bf16.mxu0 0
        %2778 = vmatmul.mubr.bf16.gmra.mxu0 %v1390
        %v2779 = vpop.f32.mrf.mxu0
        %v2780 = vadd.f32 0.0, %v2779
        %v2781 = vpop.f32.mrf.mxu0
        %v2782 = vpop.f32.mrf.mxu0
        %v2783 = vadd.f32 0.0, %v2782
        %v2784 = vpop.f32.mrf.mxu0
        %2785 = vmatprep.mubr.bf16.mxu0 0
        %2786 = vmatmul.mubr.bf16.gmra.mxu0 %v1391
        %v2787 = vpop.f32.mrf.mxu0
        %v2788 = vadd.f32 0.0, %v2787
        %v2789 = vpop.f32.mrf.mxu0
        %v2790 = vpop.f32.mrf.mxu0
        %v2791 = vadd.f32 0.0, %v2790
        %v2792 = vpop.f32.mrf.mxu0
        %2793 = vmatprep.mubr.bf16.mxu0 0
        %2794 = vmatmul.mubr.bf16.gmra.mxu0 %v1392
        %v2795 = vpop.f32.mrf.mxu0
        %v2796 = vadd.f32 0.0, %v2795
        %v2797 = vpop.f32.mrf.mxu0
        %v2798 = vpop.f32.mrf.mxu0
        %v2799 = vadd.f32 0.0, %v2798
        %v2800 = vpop.f32.mrf.mxu0
        %2801 = vmatprep.mubr.bf16.mxu0 0
        %2802 = vmatmul.mubr.bf16.gmra.mxu0 %v1393
        %v2803 = vpop.f32.mrf.mxu0
        %v2804 = vadd.f32 0.0, %v2803
        %v2805 = vpop.f32.mrf.mxu0
        %v2806 = vpop.f32.mrf.mxu0
        %v2807 = vadd.f32 0.0, %v2806
        %v2808 = vpop.f32.mrf.mxu0
        %2809 = vmatprep.mubr.bf16.mxu0 0
        %2810 = vmatmul.mubr.bf16.gmra.mxu0 %v1394
        %v2811 = vpop.f32.mrf.mxu0
        %v2812 = vadd.f32 0.0, %v2811
        %v2813 = vpop.f32.mrf.mxu0
        %v2814 = vpop.f32.mrf.mxu0
        %v2815 = vadd.f32 0.0, %v2814
        %v2816 = vpop.f32.mrf.mxu0
        %2817 = vmatprep.mubr.bf16.mxu0 0
        %2818 = vmatmul.mubr.bf16.gmra.mxu0 %v1395
        %v2819 = vpop.f32.mrf.mxu0
        %v2820 = vadd.f32 0.0, %v2819
        %v2821 = vpop.f32.mrf.mxu0
        %v2822 = vpop.f32.mrf.mxu0
        %v2823 = vadd.f32 0.0, %v2822
        %v2824 = vpop.f32.mrf.mxu0
        %2825 = vmatprep.mubr.bf16.mxu0 0
        %2826 = vmatmul.mubr.bf16.gmra.mxu0 %v1396
        %v2827 = vpop.f32.mrf.mxu0
        %v2828 = vadd.f32 0.0, %v2827
        %v2829 = vpop.f32.mrf.mxu0
        %v2830 = vpop.f32.mrf.mxu0
        %v2831 = vadd.f32 0.0, %v2830
        %v2832 = vpop.f32.mrf.mxu0
        %2833 = vmatprep.mubr.bf16.mxu0 0
        %2834 = vmatmul.mubr.bf16.gmra.mxu0 %v1397
        %v2835 = vpop.f32.mrf.mxu0
        %v2836 = vadd.f32 0.0, %v2835
        %v2837 = vpop.f32.mrf.mxu0
        %v2838 = vpop.f32.mrf.mxu0
        %v2839 = vadd.f32 0.0, %v2838
        %v2840 = vpop.f32.mrf.mxu0
        %2841 = vdwg.mxu0
        %v2842 = vmul.f32 %v1607, 0.125
        %v2843 = vmul.f32 %v1610, 0.125
        %v2844 = vmul.f32 %v1615, 0.125
        %v2845 = vmul.f32 %v1618, 0.125
        %v2846 = vmul.f32 %v1623, 0.125
        %v2847 = vmul.f32 %v1626, 0.125
        %v2848 = vmul.f32 %v1631, 0.125
        %v2849 = vmul.f32 %v1634, 0.125
        %v2850 = vmul.f32 %v1639, 0.125
        %v2851 = vmul.f32 %v1642, 0.125
        %v2852 = vmul.f32 %v1647, 0.125
        %v2853 = vmul.f32 %v1650, 0.125
        %v2854 = vmul.f32 %v1655, 0.125
        %v2855 = vmul.f32 %v1658, 0.125
        %v2856 = vmul.f32 %v1663, 0.125
        %v2857 = vmul.f32 %v1666, 0.125
        %v2858 = vmul.f32 %v1671, 0.125
        %v2859 = vmul.f32 %v1674, 0.125
        %v2860 = vmul.f32 %v1679, 0.125
        %v2861 = vmul.f32 %v1682, 0.125
        %v2862 = vmul.f32 %v1687, 0.125
        %v2863 = vmul.f32 %v1690, 0.125
        %v2864 = vmul.f32 %v1695, 0.125
        %v2865 = vmul.f32 %v1698, 0.125
        %v2866 = vmul.f32 %v1703, 0.125
        %v2867 = vmul.f32 %v1706, 0.125
        %v2868 = vmul.f32 %v1711, 0.125
        %v2869 = vmul.f32 %v1714, 0.125
        %v2870 = vmul.f32 %v1719, 0.125
        %v2871 = vmul.f32 %v1722, 0.125
        %v2872 = vmul.f32 %v1727, 0.125
        %v2873 = vmul.f32 %v1730, 0.125
        %v2874 = vmul.f32 %v1816, 0.125
        %v2875 = vmul.f32 %v1819, 0.125
        %v2876 = vmul.f32 %v1824, 0.125
        %v2877 = vmul.f32 %v1827, 0.125
        %v2878 = vmul.f32 %v1832, 0.125
        %v2879 = vmul.f32 %v1835, 0.125
        %v2880 = vmul.f32 %v1840, 0.125
        %v2881 = vmul.f32 %v1843, 0.125
        %v2882 = vmul.f32 %v1848, 0.125
        %v2883 = vmul.f32 %v1851, 0.125
        %v2884 = vmul.f32 %v1856, 0.125
        %v2885 = vmul.f32 %v1859, 0.125
        %v2886 = vmul.f32 %v1864, 0.125
        %v2887 = vmul.f32 %v1867, 0.125
        %v2888 = vmul.f32 %v1872, 0.125
        %v2889 = vmul.f32 %v1875, 0.125
        %v2890 = vmul.f32 %v1880, 0.125
        %v2891 = vmul.f32 %v1883, 0.125
        %v2892 = vmul.f32 %v1888, 0.125
        %v2893 = vmul.f32 %v1891, 0.125
        %v2894 = vmul.f32 %v1896, 0.125
        %v2895 = vmul.f32 %v1899, 0.125
        %v2896 = vmul.f32 %v1904, 0.125
        %v2897 = vmul.f32 %v1907, 0.125
        %v2898 = vmul.f32 %v1912, 0.125
        %v2899 = vmul.f32 %v1915, 0.125
        %v2900 = vmul.f32 %v1920, 0.125
        %v2901 = vmul.f32 %v1923, 0.125
        %v2902 = vmul.f32 %v1928, 0.125
        %v2903 = vmul.f32 %v1931, 0.125
        %v2904 = vmul.f32 %v1936, 0.125
        %v2905 = vmul.f32 %v1939, 0.125
        %v2906 = vpack.c.bf16 %v2843, %v2842
        %v2907 = vpack.c.bf16 %v2845, %v2844
        %v2908 = vpack.c.bf16 %v2847, %v2846
        %v2909 = vpack.c.bf16 %v2849, %v2848
        %v2910 = vpack.c.bf16 %v2851, %v2850
        %v2911 = vpack.c.bf16 %v2853, %v2852
        %v2912 = vpack.c.bf16 %v2855, %v2854
        %v2913 = vpack.c.bf16 %v2857, %v2856
        %v2914 = vpack.c.bf16 %v2859, %v2858
        %v2915 = vpack.c.bf16 %v2861, %v2860
        %v2916 = vpack.c.bf16 %v2863, %v2862
        %v2917 = vpack.c.bf16 %v2865, %v2864
        %v2918 = vpack.c.bf16 %v2867, %v2866
        %v2919 = vpack.c.bf16 %v2869, %v2868
        %v2920 = vpack.c.bf16 %v2871, %v2870
        %v2921 = vpack.c.bf16 %v2873, %v2872
        %v2922 = vpack.c.bf16 %v2875, %v2874
        %v2923 = vpack.c.bf16 %v2877, %v2876
        %v2924 = vpack.c.bf16 %v2879, %v2878
        %v2925 = vpack.c.bf16 %v2881, %v2880
        %v2926 = vpack.c.bf16 %v2883, %v2882
        %v2927 = vpack.c.bf16 %v2885, %v2884
        %v2928 = vpack.c.bf16 %v2887, %v2886
        %v2929 = vpack.c.bf16 %v2889, %v2888
        %v2930 = vpack.c.bf16 %v2891, %v2890
        %v2931 = vpack.c.bf16 %v2893, %v2892
        %v2932 = vpack.c.bf16 %v2895, %v2894
        %v2933 = vpack.c.bf16 %v2897, %v2896
        %v2934 = vpack.c.bf16 %v2899, %v2898
        %v2935 = vpack.c.bf16 %v2901, %v2900
        %v2936 = vpack.c.bf16 %v2903, %v2902
        %v2937 = vpack.c.bf16 %v2905, %v2904
        %v2938 = vpack.c.bf16 %v2060, %v2057
        %v2939 = vpack.c.bf16 %v2068, %v2065
        %v2940 = vpack.c.bf16 %v2076, %v2073
        %v2941 = vpack.c.bf16 %v2084, %v2081
        %v2942 = vpack.c.bf16 %v2092, %v2089
        %v2943 = vpack.c.bf16 %v2100, %v2097
        %v2944 = vpack.c.bf16 %v2108, %v2105
        %v2945 = vpack.c.bf16 %v2116, %v2113
        %v2946 = vpack.c.bf16 %v2124, %v2121
        %v2947 = vpack.c.bf16 %v2132, %v2129
        %v2948 = vpack.c.bf16 %v2140, %v2137
        %v2949 = vpack.c.bf16 %v2148, %v2145
        %v2950 = vpack.c.bf16 %v2156, %v2153
        %v2951 = vpack.c.bf16 %v2164, %v2161
        %v2952 = vpack.c.bf16 %v2172, %v2169
        %v2953 = vpack.c.bf16 %v2180, %v2177
        %v2954 = vpack.c.bf16 %v2269, %v2266
        %v2955 = vpack.c.bf16 %v2277, %v2274
        %v2956 = vpack.c.bf16 %v2285, %v2282
        %v2957 = vpack.c.bf16 %v2293, %v2290
        %v2958 = vpack.c.bf16 %v2301, %v2298
        %v2959 = vpack.c.bf16 %v2309, %v2306
        %v2960 = vpack.c.bf16 %v2317, %v2314
        %v2961 = vpack.c.bf16 %v2325, %v2322
        %v2962 = vpack.c.bf16 %v2333, %v2330
        %v2963 = vpack.c.bf16 %v2341, %v2338
        %v2964 = vpack.c.bf16 %v2349, %v2346
        %v2965 = vpack.c.bf16 %v2357, %v2354
        %v2966 = vpack.c.bf16 %v2365, %v2362
        %v2967 = vpack.c.bf16 %v2373, %v2370
        %v2968 = vpack.c.bf16 %v2381, %v2378
        %v2969 = vpack.c.bf16 %v2389, %v2386
        %v2970 = vpack.c.bf16 %v2510, %v2507
        %v2971 = vpack.c.bf16 %v2518, %v2515
        %v2972 = vpack.c.bf16 %v2526, %v2523
        %v2973 = vpack.c.bf16 %v2534, %v2531
        %v2974 = vpack.c.bf16 %v2542, %v2539
        %v2975 = vpack.c.bf16 %v2550, %v2547
        %v2976 = vpack.c.bf16 %v2558, %v2555
        %v2977 = vpack.c.bf16 %v2566, %v2563
        %v2978 = vpack.c.bf16 %v2574, %v2571
        %v2979 = vpack.c.bf16 %v2582, %v2579
        %v2980 = vpack.c.bf16 %v2590, %v2587
        %v2981 = vpack.c.bf16 %v2598, %v2595
        %v2982 = vpack.c.bf16 %v2606, %v2603
        %v2983 = vpack.c.bf16 %v2614, %v2611
        %v2984 = vpack.c.bf16 %v2622, %v2619
        %v2985 = vpack.c.bf16 %v2630, %v2627
        %v2986 = vpack.c.bf16 %v2719, %v2716
        %v2987 = vpack.c.bf16 %v2727, %v2724
        %v2988 = vpack.c.bf16 %v2735, %v2732
        %v2989 = vpack.c.bf16 %v2743, %v2740
        %v2990 = vpack.c.bf16 %v2751, %v2748
        %v2991 = vpack.c.bf16 %v2759, %v2756
        %v2992 = vpack.c.bf16 %v2767, %v2764
        %v2993 = vpack.c.bf16 %v2775, %v2772
        %v2994 = vpack.c.bf16 %v2783, %v2780
        %v2995 = vpack.c.bf16 %v2791, %v2788
        %v2996 = vpack.c.bf16 %v2799, %v2796
        %v2997 = vpack.c.bf16 %v2807, %v2804
        %v2998 = vpack.c.bf16 %v2815, %v2812
        %v2999 = vpack.c.bf16 %v2823, %v2820
        %v3000 = vpack.c.bf16 %v2831, %v2828
        %v3001 = vpack.c.bf16 %v2839, %v2836
        %vm3002 = vcmask 523264
        %v3004 = vsel %vm3002, %v2906, 0
        %v3007 = vsel %vm3002, %v2938, 0
        %3009 = vmatprep.subr.bf16.mxu0 0
        %3010 = vmatpush1.bf16.xpose.msra.mxu0 0
        %3011 = vmatprep.subr.bf16.mxu0 0
        %3012 = vmatpush1.bf16.xpose.msra.mxu0 0
        %3013 = vmatprep.subr.bf16.mxu0 0
        %3014 = vmatpush1.bf16.xpose.msra.mxu0 0
        %3015 = vmatprep.subr.bf16.mxu0 0
        %3016 = vmatpush1.bf16.xpose.msra.mxu0 0
        %3017 = vmatprep.subr.bf16.mxu0 0
        %3018 = vmatpush1.bf16.xpose.msra.mxu0 0
        %3019 = vmatprep.subr.bf16.mxu0 0
        %3020 = vmatpush1.bf16.xpose.msra.mxu0 0
        %3021 = vmatprep.subr.bf16.mxu0 0
        %3022 = vmatpush1.bf16.xpose.msra.mxu0 0
        %3023 = vmatprep.subr.bf16.mxu0 0
        %3024 = vmatpush1.bf16.xpose.msra.mxu0 %v3007
        %3025 = vmatprep.subr.bf16.mxu0 0
        %3026 = vmatpush2.bf16.xpose.msra.mxu0 0
        %3027 = vmatprep.subr.bf16.mxu0 0
        %3028 = vmatpush2.bf16.xpose.msra.mxu0 0
        %3029 = vmatprep.subr.bf16.mxu0 0
        %3030 = vmatpush2.bf16.xpose.msra.mxu0 0
        %3031 = vmatprep.subr.bf16.mxu0 0
        %3032 = vmatpush2.bf16.xpose.msra.mxu0 0
        %3033 = vmatprep.subr.bf16.mxu0 0
        %3034 = vmatpush2.bf16.xpose.msra.mxu0 0
        %3035 = vmatprep.subr.bf16.mxu0 0
        %3036 = vmatpush2.bf16.xpose.msra.mxu0 0
        %3037 = vmatprep.subr.bf16.mxu0 0
        %3038 = vmatpush2.bf16.xpose.msra.mxu0 0
        %3039 = vmatprep.subr.bf16.mxu0 0
        %3040 = vmatpush2.bf16.xpose.msra.mxu0 0
        %3041 = vmatprep.mubr.bf16.mxu0 0
        %3042 = vmatmul.mubr.bf16.gmra.mxu0 %v3004
        %v3043 = vpop.f32.mrf.mxu0
        %v3044 = vadd.f32 0.0, %v3043
        %v3045 = vpop.f32.mrf.mxu0
        %v3046 = vpop.f32.mrf.mxu0
        %v3047 = vadd.f32 0.0, %v3046
        %v3048 = vpop.f32.mrf.mxu0
        %3049 = vdwg.mxu0
        %v3051 = vsel %vm3002, %v2907, 0
        %v3054 = vsel %vm3002, %v2939, 0
        %3056 = vmatprep.subr.bf16.mxu0 0
        %3057 = vmatpush1.bf16.xpose.msra.mxu0 0
        %3058 = vmatprep.subr.bf16.mxu0 0
        %3059 = vmatpush1.bf16.xpose.msra.mxu0 0
        %3060 = vmatprep.subr.bf16.mxu0 0
        %3061 = vmatpush1.bf16.xpose.msra.mxu0 0
        %3062 = vmatprep.subr.bf16.mxu0 0
        %3063 = vmatpush1.bf16.xpose.msra.mxu0 0
        %3064 = vmatprep.subr.bf16.mxu0 0
        %3065 = vmatpush1.bf16.xpose.msra.mxu0 0
        %3066 = vmatprep.subr.bf16.mxu0 0
        %3067 = vmatpush1.bf16.xpose.msra.mxu0 0
        %3068 = vmatprep.subr.bf16.mxu0 0
        %3069 = vmatpush1.bf16.xpose.msra.mxu0 0
        %3070 = vmatprep.subr.bf16.mxu0 0
        %3071 = vmatpush1.bf16.xpose.msra.mxu0 %v3054
        %3072 = vmatprep.subr.bf16.mxu0 0
        %3073 = vmatpush2.bf16.xpose.msra.mxu0 0
        %3074 = vmatprep.subr.bf16.mxu0 0
        %3075 = vmatpush2.bf16.xpose.msra.mxu0 0
        %3076 = vmatprep.subr.bf16.mxu0 0
        %3077 = vmatpush2.bf16.xpose.msra.mxu0 0
        %3078 = vmatprep.subr.bf16.mxu0 0
        %3079 = vmatpush2.bf16.xpose.msra.mxu0 0
        %3080 = vmatprep.subr.bf16.mxu0 0
        %3081 = vmatpush2.bf16.xpose.msra.mxu0 0
        %3082 = vmatprep.subr.bf16.mxu0 0
        %3083 = vmatpush2.bf16.xpose.msra.mxu0 0
        %3084 = vmatprep.subr.bf16.mxu0 0
        %3085 = vmatpush2.bf16.xpose.msra.mxu0 0
        %3086 = vmatprep.subr.bf16.mxu0 0
        %3087 = vmatpush2.bf16.xpose.msra.mxu0 0
        %3088 = vmatprep.mubr.bf16.mxu0 0
        %3089 = vmatmul.mubr.bf16.gmra.mxu0 %v3051
        %v3090 = vpop.f32.mrf.mxu0
        %v3091 = vadd.f32 0.0, %v3090
        %v3092 = vpop.f32.mrf.mxu0
        %v3093 = vpop.f32.mrf.mxu0
        %v3094 = vadd.f32 0.0, %v3093
        %v3095 = vpop.f32.mrf.mxu0
        %3096 = vdwg.mxu0
        %v3098 = vsel %vm3002, %v2908, 0
        %v3101 = vsel %vm3002, %v2940, 0
        %3103 = vmatprep.subr.bf16.mxu0 0
        %3104 = vmatpush1.bf16.xpose.msra.mxu0 0
        %3105 = vmatprep.subr.bf16.mxu0 0
        %3106 = vmatpush1.bf16.xpose.msra.mxu0 0
        %3107 = vmatprep.subr.bf16.mxu0 0
        %3108 = vmatpush1.bf16.xpose.msra.mxu0 0
        %3109 = vmatprep.subr.bf16.mxu0 0
        %3110 = vmatpush1.bf16.xpose.msra.mxu0 0
        %3111 = vmatprep.subr.bf16.mxu0 0
        %3112 = vmatpush1.bf16.xpose.msra.mxu0 0
        %3113 = vmatprep.subr.bf16.mxu0 0
        %3114 = vmatpush1.bf16.xpose.msra.mxu0 0
        %3115 = vmatprep.subr.bf16.mxu0 0
        %3116 = vmatpush1.bf16.xpose.msra.mxu0 0
        %3117 = vmatprep.subr.bf16.mxu0 0
        %3118 = vmatpush1.bf16.xpose.msra.mxu0 %v3101
        %3119 = vmatprep.subr.bf16.mxu0 0
        %3120 = vmatpush2.bf16.xpose.msra.mxu0 0
        %3121 = vmatprep.subr.bf16.mxu0 0
        %3122 = vmatpush2.bf16.xpose.msra.mxu0 0
        %3123 = vmatprep.subr.bf16.mxu0 0
        %3124 = vmatpush2.bf16.xpose.msra.mxu0 0
        %3125 = vmatprep.subr.bf16.mxu0 0
        %3126 = vmatpush2.bf16.xpose.msra.mxu0 0
        %3127 = vmatprep.subr.bf16.mxu0 0
        %3128 = vmatpush2.bf16.xpose.msra.mxu0 0
        %3129 = vmatprep.subr.bf16.mxu0 0
        %3130 = vmatpush2.bf16.xpose.msra.mxu0 0
        %3131 = vmatprep.subr.bf16.mxu0 0
        %3132 = vmatpush2.bf16.xpose.msra.mxu0 0
        %3133 = vmatprep.subr.bf16.mxu0 0
        %3134 = vmatpush2.bf16.xpose.msra.mxu0 0
        %3135 = vmatprep.mubr.bf16.mxu0 0
        %3136 = vmatmul.mubr.bf16.gmra.mxu0 %v3098
        %v3137 = vpop.f32.mrf.mxu0
        %v3138 = vadd.f32 0.0, %v3137
        %v3139 = vpop.f32.mrf.mxu0
        %v3140 = vpop.f32.mrf.mxu0
        %v3141 = vadd.f32 0.0, %v3140
        %v3142 = vpop.f32.mrf.mxu0
        %3143 = vdwg.mxu0
        %v3145 = vsel %vm3002, %v2909, 0
        %v3148 = vsel %vm3002, %v2941, 0
        %3150 = vmatprep.subr.bf16.mxu0 0
        %3151 = vmatpush1.bf16.xpose.msra.mxu0 0
        %3152 = vmatprep.subr.bf16.mxu0 0
        %3153 = vmatpush1.bf16.xpose.msra.mxu0 0
        %3154 = vmatprep.subr.bf16.mxu0 0
        %3155 = vmatpush1.bf16.xpose.msra.mxu0 0
        %3156 = vmatprep.subr.bf16.mxu0 0
        %3157 = vmatpush1.bf16.xpose.msra.mxu0 0
        %3158 = vmatprep.subr.bf16.mxu0 0
        %3159 = vmatpush1.bf16.xpose.msra.mxu0 0
        %3160 = vmatprep.subr.bf16.mxu0 0
        %3161 = vmatpush1.bf16.xpose.msra.mxu0 0
        %3162 = vmatprep.subr.bf16.mxu0 0
        %3163 = vmatpush1.bf16.xpose.msra.mxu0 0
        %3164 = vmatprep.subr.bf16.mxu0 0
        %3165 = vmatpush1.bf16.xpose.msra.mxu0 %v3148
        %3166 = vmatprep.subr.bf16.mxu0 0
        %3167 = vmatpush2.bf16.xpose.msra.mxu0 0
        %3168 = vmatprep.subr.bf16.mxu0 0
        %3169 = vmatpush2.bf16.xpose.msra.mxu0 0
        %3170 = vmatprep.subr.bf16.mxu0 0
        %3171 = vmatpush2.bf16.xpose.msra.mxu0 0
        %3172 = vmatprep.subr.bf16.mxu0 0
        %3173 = vmatpush2.bf16.xpose.msra.mxu0 0
        %3174 = vmatprep.subr.bf16.mxu0 0
        %3175 = vmatpush2.bf16.xpose.msra.mxu0 0
        %3176 = vmatprep.subr.bf16.mxu0 0
        %3177 = vmatpush2.bf16.xpose.msra.mxu0 0
        %3178 = vmatprep.subr.bf16.mxu0 0
        %3179 = vmatpush2.bf16.xpose.msra.mxu0 0
        %3180 = vmatprep.subr.bf16.mxu0 0
        %3181 = vmatpush2.bf16.xpose.msra.mxu0 0
        %3182 = vmatprep.mubr.bf16.mxu0 0
        %3183 = vmatmul.mubr.bf16.gmra.mxu0 %v3145
        %v3184 = vpop.f32.mrf.mxu0
        %v3185 = vadd.f32 0.0, %v3184
        %v3186 = vpop.f32.mrf.mxu0
        %v3187 = vpop.f32.mrf.mxu0
        %v3188 = vadd.f32 0.0, %v3187
        %v3189 = vpop.f32.mrf.mxu0
        %3190 = vdwg.mxu0
        %v3192 = vsel %vm3002, %v2910, 0
        %v3195 = vsel %vm3002, %v2942, 0
        %3197 = vmatprep.subr.bf16.mxu0 0
        %3198 = vmatpush1.bf16.xpose.msra.mxu0 0
        %3199 = vmatprep.subr.bf16.mxu0 0
        %3200 = vmatpush1.bf16.xpose.msra.mxu0 0
        %3201 = vmatprep.subr.bf16.mxu0 0
        %3202 = vmatpush1.bf16.xpose.msra.mxu0 0
        %3203 = vmatprep.subr.bf16.mxu0 0
        %3204 = vmatpush1.bf16.xpose.msra.mxu0 0
        %3205 = vmatprep.subr.bf16.mxu0 0
        %3206 = vmatpush1.bf16.xpose.msra.mxu0 0
        %3207 = vmatprep.subr.bf16.mxu0 0
        %3208 = vmatpush1.bf16.xpose.msra.mxu0 0
        %3209 = vmatprep.subr.bf16.mxu0 0
        %3210 = vmatpush1.bf16.xpose.msra.mxu0 0
        %3211 = vmatprep.subr.bf16.mxu0 0
        %3212 = vmatpush1.bf16.xpose.msra.mxu0 %v3195
        %3213 = vmatprep.subr.bf16.mxu0 0
        %3214 = vmatpush2.bf16.xpose.msra.mxu0 0
        %3215 = vmatprep.subr.bf16.mxu0 0
        %3216 = vmatpush2.bf16.xpose.msra.mxu0 0
        %3217 = vmatprep.subr.bf16.mxu0 0
        %3218 = vmatpush2.bf16.xpose.msra.mxu0 0
        %3219 = vmatprep.subr.bf16.mxu0 0
        %3220 = vmatpush2.bf16.xpose.msra.mxu0 0
        %3221 = vmatprep.subr.bf16.mxu0 0
        %3222 = vmatpush2.bf16.xpose.msra.mxu0 0
        %3223 = vmatprep.subr.bf16.mxu0 0
        %3224 = vmatpush2.bf16.xpose.msra.mxu0 0
        %3225 = vmatprep.subr.bf16.mxu0 0
        %3226 = vmatpush2.bf16.xpose.msra.mxu0 0
        %3227 = vmatprep.subr.bf16.mxu0 0
        %3228 = vmatpush2.bf16.xpose.msra.mxu0 0
        %3229 = vmatprep.mubr.bf16.mxu0 0
        %3230 = vmatmul.mubr.bf16.gmra.mxu0 %v3192
        %v3231 = vpop.f32.mrf.mxu0
        %v3232 = vadd.f32 0.0, %v3231
        %v3233 = vpop.f32.mrf.mxu0
        %v3234 = vpop.f32.mrf.mxu0
        %v3235 = vadd.f32 0.0, %v3234
        %v3236 = vpop.f32.mrf.mxu0
        %3237 = vdwg.mxu0
        %v3239 = vsel %vm3002, %v2911, 0
        %v3242 = vsel %vm3002, %v2943, 0
        %3244 = vmatprep.subr.bf16.mxu0 0
        %3245 = vmatpush1.bf16.xpose.msra.mxu0 0
        %3246 = vmatprep.subr.bf16.mxu0 0
        %3247 = vmatpush1.bf16.xpose.msra.mxu0 0
        %3248 = vmatprep.subr.bf16.mxu0 0
        %3249 = vmatpush1.bf16.xpose.msra.mxu0 0
        %3250 = vmatprep.subr.bf16.mxu0 0
        %3251 = vmatpush1.bf16.xpose.msra.mxu0 0
        %3252 = vmatprep.subr.bf16.mxu0 0
        %3253 = vmatpush1.bf16.xpose.msra.mxu0 0
        %3254 = vmatprep.subr.bf16.mxu0 0
        %3255 = vmatpush1.bf16.xpose.msra.mxu0 0
        %3256 = vmatprep.subr.bf16.mxu0 0
        %3257 = vmatpush1.bf16.xpose.msra.mxu0 0
        %3258 = vmatprep.subr.bf16.mxu0 0
        %3259 = vmatpush1.bf16.xpose.msra.mxu0 %v3242
        %3260 = vmatprep.subr.bf16.mxu0 0
        %3261 = vmatpush2.bf16.xpose.msra.mxu0 0
        %3262 = vmatprep.subr.bf16.mxu0 0
        %3263 = vmatpush2.bf16.xpose.msra.mxu0 0
        %3264 = vmatprep.subr.bf16.mxu0 0
        %3265 = vmatpush2.bf16.xpose.msra.mxu0 0
        %3266 = vmatprep.subr.bf16.mxu0 0
        %3267 = vmatpush2.bf16.xpose.msra.mxu0 0
        %3268 = vmatprep.subr.bf16.mxu0 0
        %3269 = vmatpush2.bf16.xpose.msra.mxu0 0
        %3270 = vmatprep.subr.bf16.mxu0 0
        %3271 = vmatpush2.bf16.xpose.msra.mxu0 0
        %3272 = vmatprep.subr.bf16.mxu0 0
        %3273 = vmatpush2.bf16.xpose.msra.mxu0 0
        %3274 = vmatprep.subr.bf16.mxu0 0
        %3275 = vmatpush2.bf16.xpose.msra.mxu0 0
        %3276 = vmatprep.mubr.bf16.mxu0 0
        %3277 = vmatmul.mubr.bf16.gmra.mxu0 %v3239
        %v3278 = vpop.f32.mrf.mxu0
        %v3279 = vadd.f32 0.0, %v3278
        %v3280 = vpop.f32.mrf.mxu0
        %v3281 = vpop.f32.mrf.mxu0
        %v3282 = vadd.f32 0.0, %v3281
        %v3283 = vpop.f32.mrf.mxu0
        %3284 = vdwg.mxu0
        %v3286 = vsel %vm3002, %v2912, 0
        %v3289 = vsel %vm3002, %v2944, 0
        %3291 = vmatprep.subr.bf16.mxu0 0
        %3292 = vmatpush1.bf16.xpose.msra.mxu0 0
        %3293 = vmatprep.subr.bf16.mxu0 0
        %3294 = vmatpush1.bf16.xpose.msra.mxu0 0
        %3295 = vmatprep.subr.bf16.mxu0 0
        %3296 = vmatpush1.bf16.xpose.msra.mxu0 0
        %3297 = vmatprep.subr.bf16.mxu0 0
        %3298 = vmatpush1.bf16.xpose.msra.mxu0 0
        %3299 = vmatprep.subr.bf16.mxu0 0
        %3300 = vmatpush1.bf16.xpose.msra.mxu0 0
        %3301 = vmatprep.subr.bf16.mxu0 0
        %3302 = vmatpush1.bf16.xpose.msra.mxu0 0
        %3303 = vmatprep.subr.bf16.mxu0 0
        %3304 = vmatpush1.bf16.xpose.msra.mxu0 0
        %3305 = vmatprep.subr.bf16.mxu0 0
        %3306 = vmatpush1.bf16.xpose.msra.mxu0 %v3289
        %3307 = vmatprep.subr.bf16.mxu0 0
        %3308 = vmatpush2.bf16.xpose.msra.mxu0 0
        %3309 = vmatprep.subr.bf16.mxu0 0
        %3310 = vmatpush2.bf16.xpose.msra.mxu0 0
        %3311 = vmatprep.subr.bf16.mxu0 0
        %3312 = vmatpush2.bf16.xpose.msra.mxu0 0
        %3313 = vmatprep.subr.bf16.mxu0 0
        %3314 = vmatpush2.bf16.xpose.msra.mxu0 0
        %3315 = vmatprep.subr.bf16.mxu0 0
        %3316 = vmatpush2.bf16.xpose.msra.mxu0 0
        %3317 = vmatprep.subr.bf16.mxu0 0
        %3318 = vmatpush2.bf16.xpose.msra.mxu0 0
        %3319 = vmatprep.subr.bf16.mxu0 0
        %3320 = vmatpush2.bf16.xpose.msra.mxu0 0
        %3321 = vmatprep.subr.bf16.mxu0 0
        %3322 = vmatpush2.bf16.xpose.msra.mxu0 0
        %3323 = vmatprep.mubr.bf16.mxu0 0
        %3324 = vmatmul.mubr.bf16.gmra.mxu0 %v3286
        %v3325 = vpop.f32.mrf.mxu0
        %v3326 = vadd.f32 0.0, %v3325
        %v3327 = vpop.f32.mrf.mxu0
        %v3328 = vpop.f32.mrf.mxu0
        %v3329 = vadd.f32 0.0, %v3328
        %v3330 = vpop.f32.mrf.mxu0
        %3331 = vdwg.mxu0
        %v3333 = vsel %vm3002, %v2913, 0
        %v3336 = vsel %vm3002, %v2945, 0
        %3338 = vmatprep.subr.bf16.mxu0 0
        %3339 = vmatpush1.bf16.xpose.msra.mxu0 0
        %3340 = vmatprep.subr.bf16.mxu0 0
        %3341 = vmatpush1.bf16.xpose.msra.mxu0 0
        %3342 = vmatprep.subr.bf16.mxu0 0
        %3343 = vmatpush1.bf16.xpose.msra.mxu0 0
        %3344 = vmatprep.subr.bf16.mxu0 0
        %3345 = vmatpush1.bf16.xpose.msra.mxu0 0
        %3346 = vmatprep.subr.bf16.mxu0 0
        %3347 = vmatpush1.bf16.xpose.msra.mxu0 0
        %3348 = vmatprep.subr.bf16.mxu0 0
        %3349 = vmatpush1.bf16.xpose.msra.mxu0 0
        %3350 = vmatprep.subr.bf16.mxu0 0
        %3351 = vmatpush1.bf16.xpose.msra.mxu0 0
        %3352 = vmatprep.subr.bf16.mxu0 0
        %3353 = vmatpush1.bf16.xpose.msra.mxu0 %v3336
        %3354 = vmatprep.subr.bf16.mxu0 0
        %3355 = vmatpush2.bf16.xpose.msra.mxu0 0
        %3356 = vmatprep.subr.bf16.mxu0 0
        %3357 = vmatpush2.bf16.xpose.msra.mxu0 0
        %3358 = vmatprep.subr.bf16.mxu0 0
        %3359 = vmatpush2.bf16.xpose.msra.mxu0 0
        %3360 = vmatprep.subr.bf16.mxu0 0
        %3361 = vmatpush2.bf16.xpose.msra.mxu0 0
        %3362 = vmatprep.subr.bf16.mxu0 0
        %3363 = vmatpush2.bf16.xpose.msra.mxu0 0
        %3364 = vmatprep.subr.bf16.mxu0 0
        %3365 = vmatpush2.bf16.xpose.msra.mxu0 0
        %3366 = vmatprep.subr.bf16.mxu0 0
        %3367 = vmatpush2.bf16.xpose.msra.mxu0 0
        %3368 = vmatprep.subr.bf16.mxu0 0
        %3369 = vmatpush2.bf16.xpose.msra.mxu0 0
        %3370 = vmatprep.mubr.bf16.mxu0 0
        %3371 = vmatmul.mubr.bf16.gmra.mxu0 %v3333
        %v3372 = vpop.f32.mrf.mxu0
        %v3373 = vadd.f32 0.0, %v3372
        %v3374 = vpop.f32.mrf.mxu0
        %v3375 = vpop.f32.mrf.mxu0
        %v3376 = vadd.f32 0.0, %v3375
        %v3377 = vpop.f32.mrf.mxu0
        %3378 = vdwg.mxu0
        %v3380 = vsel %vm3002, %v2914, 0
        %v3383 = vsel %vm3002, %v2946, 0
        %3385 = vmatprep.subr.bf16.mxu0 0
        %3386 = vmatpush1.bf16.xpose.msra.mxu0 0
        %3387 = vmatprep.subr.bf16.mxu0 0
        %3388 = vmatpush1.bf16.xpose.msra.mxu0 0
        %3389 = vmatprep.subr.bf16.mxu0 0
        %3390 = vmatpush1.bf16.xpose.msra.mxu0 0
        %3391 = vmatprep.subr.bf16.mxu0 0
        %3392 = vmatpush1.bf16.xpose.msra.mxu0 0
        %3393 = vmatprep.subr.bf16.mxu0 0
        %3394 = vmatpush1.bf16.xpose.msra.mxu0 0
        %3395 = vmatprep.subr.bf16.mxu0 0
        %3396 = vmatpush1.bf16.xpose.msra.mxu0 0
        %3397 = vmatprep.subr.bf16.mxu0 0
        %3398 = vmatpush1.bf16.xpose.msra.mxu0 0
        %3399 = vmatprep.subr.bf16.mxu0 0
        %3400 = vmatpush1.bf16.xpose.msra.mxu0 %v3383
        %3401 = vmatprep.subr.bf16.mxu0 0
        %3402 = vmatpush2.bf16.xpose.msra.mxu0 0
        %3403 = vmatprep.subr.bf16.mxu0 0
        %3404 = vmatpush2.bf16.xpose.msra.mxu0 0
        %3405 = vmatprep.subr.bf16.mxu0 0
        %3406 = vmatpush2.bf16.xpose.msra.mxu0 0
        %3407 = vmatprep.subr.bf16.mxu0 0
        %3408 = vmatpush2.bf16.xpose.msra.mxu0 0
        %3409 = vmatprep.subr.bf16.mxu0 0
        %3410 = vmatpush2.bf16.xpose.msra.mxu0 0
        %3411 = vmatprep.subr.bf16.mxu0 0
        %3412 = vmatpush2.bf16.xpose.msra.mxu0 0
        %3413 = vmatprep.subr.bf16.mxu0 0
        %3414 = vmatpush2.bf16.xpose.msra.mxu0 0
        %3415 = vmatprep.subr.bf16.mxu0 0
        %3416 = vmatpush2.bf16.xpose.msra.mxu0 0
        %3417 = vmatprep.mubr.bf16.mxu0 0
        %3418 = vmatmul.mubr.bf16.gmra.mxu0 %v3380
        %v3419 = vpop.f32.mrf.mxu0
        %v3420 = vadd.f32 0.0, %v3419
        %v3421 = vpop.f32.mrf.mxu0
        %v3422 = vpop.f32.mrf.mxu0
        %v3423 = vadd.f32 0.0, %v3422
        %v3424 = vpop.f32.mrf.mxu0
        %3425 = vdwg.mxu0
        %v3427 = vsel %vm3002, %v2915, 0
        %v3430 = vsel %vm3002, %v2947, 0
        %3432 = vmatprep.subr.bf16.mxu0 0
        %3433 = vmatpush1.bf16.xpose.msra.mxu0 0
        %3434 = vmatprep.subr.bf16.mxu0 0
        %3435 = vmatpush1.bf16.xpose.msra.mxu0 0
        %3436 = vmatprep.subr.bf16.mxu0 0
        %3437 = vmatpush1.bf16.xpose.msra.mxu0 0
        %3438 = vmatprep.subr.bf16.mxu0 0
        %3439 = vmatpush1.bf16.xpose.msra.mxu0 0
        %3440 = vmatprep.subr.bf16.mxu0 0
        %3441 = vmatpush1.bf16.xpose.msra.mxu0 0
        %3442 = vmatprep.subr.bf16.mxu0 0
        %3443 = vmatpush1.bf16.xpose.msra.mxu0 0
        %3444 = vmatprep.subr.bf16.mxu0 0
        %3445 = vmatpush1.bf16.xpose.msra.mxu0 0
        %3446 = vmatprep.subr.bf16.mxu0 0
        %3447 = vmatpush1.bf16.xpose.msra.mxu0 %v3430
        %3448 = vmatprep.subr.bf16.mxu0 0
        %3449 = vmatpush2.bf16.xpose.msra.mxu0 0
        %3450 = vmatprep.subr.bf16.mxu0 0
        %3451 = vmatpush2.bf16.xpose.msra.mxu0 0
        %3452 = vmatprep.subr.bf16.mxu0 0
        %3453 = vmatpush2.bf16.xpose.msra.mxu0 0
        %3454 = vmatprep.subr.bf16.mxu0 0
        %3455 = vmatpush2.bf16.xpose.msra.mxu0 0
        %3456 = vmatprep.subr.bf16.mxu0 0
        %3457 = vmatpush2.bf16.xpose.msra.mxu0 0
        %3458 = vmatprep.subr.bf16.mxu0 0
        %3459 = vmatpush2.bf16.xpose.msra.mxu0 0
        %3460 = vmatprep.subr.bf16.mxu0 0
        %3461 = vmatpush2.bf16.xpose.msra.mxu0 0
        %3462 = vmatprep.subr.bf16.mxu0 0
        %3463 = vmatpush2.bf16.xpose.msra.mxu0 0
        %3464 = vmatprep.mubr.bf16.mxu0 0
        %3465 = vmatmul.mubr.bf16.gmra.mxu0 %v3427
        %v3466 = vpop.f32.mrf.mxu0
        %v3467 = vadd.f32 0.0, %v3466
        %v3468 = vpop.f32.mrf.mxu0
        %v3469 = vpop.f32.mrf.mxu0
        %v3470 = vadd.f32 0.0, %v3469
        %v3471 = vpop.f32.mrf.mxu0
        %3472 = vdwg.mxu0
        %v3474 = vsel %vm3002, %v2916, 0
        %v3477 = vsel %vm3002, %v2948, 0
        %3479 = vmatprep.subr.bf16.mxu0 0
        %3480 = vmatpush1.bf16.xpose.msra.mxu0 0
        %3481 = vmatprep.subr.bf16.mxu0 0
        %3482 = vmatpush1.bf16.xpose.msra.mxu0 0
        %3483 = vmatprep.subr.bf16.mxu0 0
        %3484 = vmatpush1.bf16.xpose.msra.mxu0 0
        %3485 = vmatprep.subr.bf16.mxu0 0
        %3486 = vmatpush1.bf16.xpose.msra.mxu0 0
        %3487 = vmatprep.subr.bf16.mxu0 0
        %3488 = vmatpush1.bf16.xpose.msra.mxu0 0
        %3489 = vmatprep.subr.bf16.mxu0 0
        %3490 = vmatpush1.bf16.xpose.msra.mxu0 0
        %3491 = vmatprep.subr.bf16.mxu0 0
        %3492 = vmatpush1.bf16.xpose.msra.mxu0 0
        %3493 = vmatprep.subr.bf16.mxu0 0
        %3494 = vmatpush1.bf16.xpose.msra.mxu0 %v3477
        %3495 = vmatprep.subr.bf16.mxu0 0
        %3496 = vmatpush2.bf16.xpose.msra.mxu0 0
        %3497 = vmatprep.subr.bf16.mxu0 0
        %3498 = vmatpush2.bf16.xpose.msra.mxu0 0
        %3499 = vmatprep.subr.bf16.mxu0 0
        %3500 = vmatpush2.bf16.xpose.msra.mxu0 0
        %3501 = vmatprep.subr.bf16.mxu0 0
        %3502 = vmatpush2.bf16.xpose.msra.mxu0 0
        %3503 = vmatprep.subr.bf16.mxu0 0
        %3504 = vmatpush2.bf16.xpose.msra.mxu0 0
        %3505 = vmatprep.subr.bf16.mxu0 0
        %3506 = vmatpush2.bf16.xpose.msra.mxu0 0
        %3507 = vmatprep.subr.bf16.mxu0 0
        %3508 = vmatpush2.bf16.xpose.msra.mxu0 0
        %3509 = vmatprep.subr.bf16.mxu0 0
        %3510 = vmatpush2.bf16.xpose.msra.mxu0 0
        %3511 = vmatprep.mubr.bf16.mxu0 0
        %3512 = vmatmul.mubr.bf16.gmra.mxu0 %v3474
        %v3513 = vpop.f32.mrf.mxu0
        %v3514 = vadd.f32 0.0, %v3513
        %v3515 = vpop.f32.mrf.mxu0
        %v3516 = vpop.f32.mrf.mxu0
        %v3517 = vadd.f32 0.0, %v3516
        %v3518 = vpop.f32.mrf.mxu0
        %3519 = vdwg.mxu0
        %v3521 = vsel %vm3002, %v2917, 0
        %v3524 = vsel %vm3002, %v2949, 0
        %3526 = vmatprep.subr.bf16.mxu0 0
        %3527 = vmatpush1.bf16.xpose.msra.mxu0 0
        %3528 = vmatprep.subr.bf16.mxu0 0
        %3529 = vmatpush1.bf16.xpose.msra.mxu0 0
        %3530 = vmatprep.subr.bf16.mxu0 0
        %3531 = vmatpush1.bf16.xpose.msra.mxu0 0
        %3532 = vmatprep.subr.bf16.mxu0 0
        %3533 = vmatpush1.bf16.xpose.msra.mxu0 0
        %3534 = vmatprep.subr.bf16.mxu0 0
        %3535 = vmatpush1.bf16.xpose.msra.mxu0 0
        %3536 = vmatprep.subr.bf16.mxu0 0
        %3537 = vmatpush1.bf16.xpose.msra.mxu0 0
        %3538 = vmatprep.subr.bf16.mxu0 0
        %3539 = vmatpush1.bf16.xpose.msra.mxu0 0
        %3540 = vmatprep.subr.bf16.mxu0 0
        %3541 = vmatpush1.bf16.xpose.msra.mxu0 %v3524
        %3542 = vmatprep.subr.bf16.mxu0 0
        %3543 = vmatpush2.bf16.xpose.msra.mxu0 0
        %3544 = vmatprep.subr.bf16.mxu0 0
        %3545 = vmatpush2.bf16.xpose.msra.mxu0 0
        %3546 = vmatprep.subr.bf16.mxu0 0
        %3547 = vmatpush2.bf16.xpose.msra.mxu0 0
        %3548 = vmatprep.subr.bf16.mxu0 0
        %3549 = vmatpush2.bf16.xpose.msra.mxu0 0
        %3550 = vmatprep.subr.bf16.mxu0 0
        %3551 = vmatpush2.bf16.xpose.msra.mxu0 0
        %3552 = vmatprep.subr.bf16.mxu0 0
        %3553 = vmatpush2.bf16.xpose.msra.mxu0 0
        %3554 = vmatprep.subr.bf16.mxu0 0
        %3555 = vmatpush2.bf16.xpose.msra.mxu0 0
        %3556 = vmatprep.subr.bf16.mxu0 0
        %3557 = vmatpush2.bf16.xpose.msra.mxu0 0
        %3558 = vmatprep.mubr.bf16.mxu0 0
        %3559 = vmatmul.mubr.bf16.gmra.mxu0 %v3521
        %v3560 = vpop.f32.mrf.mxu0
        %v3561 = vadd.f32 0.0, %v3560
        %v3562 = vpop.f32.mrf.mxu0
        %v3563 = vpop.f32.mrf.mxu0
        %v3564 = vadd.f32 0.0, %v3563
        %v3565 = vpop.f32.mrf.mxu0
        %3566 = vdwg.mxu0
        %v3568 = vsel %vm3002, %v2918, 0
        %v3571 = vsel %vm3002, %v2950, 0
        %3573 = vmatprep.subr.bf16.mxu0 0
        %3574 = vmatpush1.bf16.xpose.msra.mxu0 0
        %3575 = vmatprep.subr.bf16.mxu0 0
        %3576 = vmatpush1.bf16.xpose.msra.mxu0 0
        %3577 = vmatprep.subr.bf16.mxu0 0
        %3578 = vmatpush1.bf16.xpose.msra.mxu0 0
        %3579 = vmatprep.subr.bf16.mxu0 0
        %3580 = vmatpush1.bf16.xpose.msra.mxu0 0
        %3581 = vmatprep.subr.bf16.mxu0 0
        %3582 = vmatpush1.bf16.xpose.msra.mxu0 0
        %3583 = vmatprep.subr.bf16.mxu0 0
        %3584 = vmatpush1.bf16.xpose.msra.mxu0 0
        %3585 = vmatprep.subr.bf16.mxu0 0
        %3586 = vmatpush1.bf16.xpose.msra.mxu0 0
        %3587 = vmatprep.subr.bf16.mxu0 0
        %3588 = vmatpush1.bf16.xpose.msra.mxu0 %v3571
        %3589 = vmatprep.subr.bf16.mxu0 0
        %3590 = vmatpush2.bf16.xpose.msra.mxu0 0
        %3591 = vmatprep.subr.bf16.mxu0 0
        %3592 = vmatpush2.bf16.xpose.msra.mxu0 0
        %3593 = vmatprep.subr.bf16.mxu0 0
        %3594 = vmatpush2.bf16.xpose.msra.mxu0 0
        %3595 = vmatprep.subr.bf16.mxu0 0
        %3596 = vmatpush2.bf16.xpose.msra.mxu0 0
        %3597 = vmatprep.subr.bf16.mxu0 0
        %3598 = vmatpush2.bf16.xpose.msra.mxu0 0
        %3599 = vmatprep.subr.bf16.mxu0 0
        %3600 = vmatpush2.bf16.xpose.msra.mxu0 0
        %3601 = vmatprep.subr.bf16.mxu0 0
        %3602 = vmatpush2.bf16.xpose.msra.mxu0 0
        %3603 = vmatprep.subr.bf16.mxu0 0
        %3604 = vmatpush2.bf16.xpose.msra.mxu0 0
        %3605 = vmatprep.mubr.bf16.mxu0 0
        %3606 = vmatmul.mubr.bf16.gmra.mxu0 %v3568
        %v3607 = vpop.f32.mrf.mxu0
        %v3608 = vadd.f32 0.0, %v3607
        %v3609 = vpop.f32.mrf.mxu0
        %v3610 = vpop.f32.mrf.mxu0
        %v3611 = vadd.f32 0.0, %v3610
        %v3612 = vpop.f32.mrf.mxu0
        %3613 = vdwg.mxu0
        %v3615 = vsel %vm3002, %v2919, 0
        %v3618 = vsel %vm3002, %v2951, 0
        %3620 = vmatprep.subr.bf16.mxu0 0
        %3621 = vmatpush1.bf16.xpose.msra.mxu0 0
        %3622 = vmatprep.subr.bf16.mxu0 0
        %3623 = vmatpush1.bf16.xpose.msra.mxu0 0
        %3624 = vmatprep.subr.bf16.mxu0 0
        %3625 = vmatpush1.bf16.xpose.msra.mxu0 0
        %3626 = vmatprep.subr.bf16.mxu0 0
        %3627 = vmatpush1.bf16.xpose.msra.mxu0 0
        %3628 = vmatprep.subr.bf16.mxu0 0
        %3629 = vmatpush1.bf16.xpose.msra.mxu0 0
        %3630 = vmatprep.subr.bf16.mxu0 0
        %3631 = vmatpush1.bf16.xpose.msra.mxu0 0
        %3632 = vmatprep.subr.bf16.mxu0 0
        %3633 = vmatpush1.bf16.xpose.msra.mxu0 0
        %3634 = vmatprep.subr.bf16.mxu0 0
        %3635 = vmatpush1.bf16.xpose.msra.mxu0 %v3618
        %3636 = vmatprep.subr.bf16.mxu0 0
        %3637 = vmatpush2.bf16.xpose.msra.mxu0 0
        %3638 = vmatprep.subr.bf16.mxu0 0
        %3639 = vmatpush2.bf16.xpose.msra.mxu0 0
        %3640 = vmatprep.subr.bf16.mxu0 0
        %3641 = vmatpush2.bf16.xpose.msra.mxu0 0
        %3642 = vmatprep.subr.bf16.mxu0 0
        %3643 = vmatpush2.bf16.xpose.msra.mxu0 0
        %3644 = vmatprep.subr.bf16.mxu0 0
        %3645 = vmatpush2.bf16.xpose.msra.mxu0 0
        %3646 = vmatprep.subr.bf16.mxu0 0
        %3647 = vmatpush2.bf16.xpose.msra.mxu0 0
        %3648 = vmatprep.subr.bf16.mxu0 0
        %3649 = vmatpush2.bf16.xpose.msra.mxu0 0
        %3650 = vmatprep.subr.bf16.mxu0 0
        %3651 = vmatpush2.bf16.xpose.msra.mxu0 0
        %3652 = vmatprep.mubr.bf16.mxu0 0
        %3653 = vmatmul.mubr.bf16.gmra.mxu0 %v3615
        %v3654 = vpop.f32.mrf.mxu0
        %v3655 = vadd.f32 0.0, %v3654
        %v3656 = vpop.f32.mrf.mxu0
        %v3657 = vpop.f32.mrf.mxu0
        %v3658 = vadd.f32 0.0, %v3657
        %v3659 = vpop.f32.mrf.mxu0
        %3660 = vdwg.mxu0
        %v3662 = vsel %vm3002, %v2920, 0
        %v3665 = vsel %vm3002, %v2952, 0
        %3667 = vmatprep.subr.bf16.mxu0 0
        %3668 = vmatpush1.bf16.xpose.msra.mxu0 0
        %3669 = vmatprep.subr.bf16.mxu0 0
        %3670 = vmatpush1.bf16.xpose.msra.mxu0 0
        %3671 = vmatprep.subr.bf16.mxu0 0
        %3672 = vmatpush1.bf16.xpose.msra.mxu0 0
        %3673 = vmatprep.subr.bf16.mxu0 0
        %3674 = vmatpush1.bf16.xpose.msra.mxu0 0
        %3675 = vmatprep.subr.bf16.mxu0 0
        %3676 = vmatpush1.bf16.xpose.msra.mxu0 0
        %3677 = vmatprep.subr.bf16.mxu0 0
        %3678 = vmatpush1.bf16.xpose.msra.mxu0 0
        %3679 = vmatprep.subr.bf16.mxu0 0
        %3680 = vmatpush1.bf16.xpose.msra.mxu0 0
        %3681 = vmatprep.subr.bf16.mxu0 0
        %3682 = vmatpush1.bf16.xpose.msra.mxu0 %v3665
        %3683 = vmatprep.subr.bf16.mxu0 0
        %3684 = vmatpush2.bf16.xpose.msra.mxu0 0
        %3685 = vmatprep.subr.bf16.mxu0 0
        %3686 = vmatpush2.bf16.xpose.msra.mxu0 0
        %3687 = vmatprep.subr.bf16.mxu0 0
        %3688 = vmatpush2.bf16.xpose.msra.mxu0 0
        %3689 = vmatprep.subr.bf16.mxu0 0
        %3690 = vmatpush2.bf16.xpose.msra.mxu0 0
        %3691 = vmatprep.subr.bf16.mxu0 0
        %3692 = vmatpush2.bf16.xpose.msra.mxu0 0
        %3693 = vmatprep.subr.bf16.mxu0 0
        %3694 = vmatpush2.bf16.xpose.msra.mxu0 0
        %3695 = vmatprep.subr.bf16.mxu0 0
        %3696 = vmatpush2.bf16.xpose.msra.mxu0 0
        %3697 = vmatprep.subr.bf16.mxu0 0
        %3698 = vmatpush2.bf16.xpose.msra.mxu0 0
        %3699 = vmatprep.mubr.bf16.mxu0 0
        %3700 = vmatmul.mubr.bf16.gmra.mxu0 %v3662
        %v3701 = vpop.f32.mrf.mxu0
        %v3702 = vadd.f32 0.0, %v3701
        %v3703 = vpop.f32.mrf.mxu0
        %v3704 = vpop.f32.mrf.mxu0
        %v3705 = vadd.f32 0.0, %v3704
        %v3706 = vpop.f32.mrf.mxu0
        %3707 = vdwg.mxu0
        %v3709 = vsel %vm3002, %v2921, 0
        %v3712 = vsel %vm3002, %v2953, 0
        %3714 = vmatprep.subr.bf16.mxu0 0
        %3715 = vmatpush1.bf16.xpose.msra.mxu0 0
        %3716 = vmatprep.subr.bf16.mxu0 0
        %3717 = vmatpush1.bf16.xpose.msra.mxu0 0
        %3718 = vmatprep.subr.bf16.mxu0 0
        %3719 = vmatpush1.bf16.xpose.msra.mxu0 0
        %3720 = vmatprep.subr.bf16.mxu0 0
        %3721 = vmatpush1.bf16.xpose.msra.mxu0 0
        %3722 = vmatprep.subr.bf16.mxu0 0
        %3723 = vmatpush1.bf16.xpose.msra.mxu0 0
        %3724 = vmatprep.subr.bf16.mxu0 0
        %3725 = vmatpush1.bf16.xpose.msra.mxu0 0
        %3726 = vmatprep.subr.bf16.mxu0 0
        %3727 = vmatpush1.bf16.xpose.msra.mxu0 0
        %3728 = vmatprep.subr.bf16.mxu0 0
        %3729 = vmatpush1.bf16.xpose.msra.mxu0 %v3712
        %3730 = vmatprep.subr.bf16.mxu0 0
        %3731 = vmatpush2.bf16.xpose.msra.mxu0 0
        %3732 = vmatprep.subr.bf16.mxu0 0
        %3733 = vmatpush2.bf16.xpose.msra.mxu0 0
        %3734 = vmatprep.subr.bf16.mxu0 0
        %3735 = vmatpush2.bf16.xpose.msra.mxu0 0
        %3736 = vmatprep.subr.bf16.mxu0 0
        %3737 = vmatpush2.bf16.xpose.msra.mxu0 0
        %3738 = vmatprep.subr.bf16.mxu0 0
        %3739 = vmatpush2.bf16.xpose.msra.mxu0 0
        %3740 = vmatprep.subr.bf16.mxu0 0
        %3741 = vmatpush2.bf16.xpose.msra.mxu0 0
        %3742 = vmatprep.subr.bf16.mxu0 0
        %3743 = vmatpush2.bf16.xpose.msra.mxu0 0
        %3744 = vmatprep.subr.bf16.mxu0 0
        %3745 = vmatpush2.bf16.xpose.msra.mxu0 0
        %3746 = vmatprep.mubr.bf16.mxu0 0
        %3747 = vmatmul.mubr.bf16.gmra.mxu0 %v3709
        %v3748 = vpop.f32.mrf.mxu0
        %v3749 = vadd.f32 0.0, %v3748
        %v3750 = vpop.f32.mrf.mxu0
        %v3751 = vpop.f32.mrf.mxu0
        %v3752 = vadd.f32 0.0, %v3751
        %v3753 = vpop.f32.mrf.mxu0
        %3754 = vdwg.mxu0
        %v3756 = vsel %vm3002, %v2922, 0
        %v3759 = vsel %vm3002, %v2954, 0
        %3761 = vmatprep.subr.bf16.mxu0 0
        %3762 = vmatpush1.bf16.xpose.msra.mxu0 0
        %3763 = vmatprep.subr.bf16.mxu0 0
        %3764 = vmatpush1.bf16.xpose.msra.mxu0 0
        %3765 = vmatprep.subr.bf16.mxu0 0
        %3766 = vmatpush1.bf16.xpose.msra.mxu0 0
        %3767 = vmatprep.subr.bf16.mxu0 0
        %3768 = vmatpush1.bf16.xpose.msra.mxu0 0
        %3769 = vmatprep.subr.bf16.mxu0 0
        %3770 = vmatpush1.bf16.xpose.msra.mxu0 0
        %3771 = vmatprep.subr.bf16.mxu0 0
        %3772 = vmatpush1.bf16.xpose.msra.mxu0 0
        %3773 = vmatprep.subr.bf16.mxu0 0
        %3774 = vmatpush1.bf16.xpose.msra.mxu0 0
        %3775 = vmatprep.subr.bf16.mxu0 0
        %3776 = vmatpush1.bf16.xpose.msra.mxu0 %v3759
        %3777 = vmatprep.subr.bf16.mxu0 0
        %3778 = vmatpush2.bf16.xpose.msra.mxu0 0
        %3779 = vmatprep.subr.bf16.mxu0 0
        %3780 = vmatpush2.bf16.xpose.msra.mxu0 0
        %3781 = vmatprep.subr.bf16.mxu0 0
        %3782 = vmatpush2.bf16.xpose.msra.mxu0 0
        %3783 = vmatprep.subr.bf16.mxu0 0
        %3784 = vmatpush2.bf16.xpose.msra.mxu0 0
        %3785 = vmatprep.subr.bf16.mxu0 0
        %3786 = vmatpush2.bf16.xpose.msra.mxu0 0
        %3787 = vmatprep.subr.bf16.mxu0 0
        %3788 = vmatpush2.bf16.xpose.msra.mxu0 0
        %3789 = vmatprep.subr.bf16.mxu0 0
        %3790 = vmatpush2.bf16.xpose.msra.mxu0 0
        %3791 = vmatprep.subr.bf16.mxu0 0
        %3792 = vmatpush2.bf16.xpose.msra.mxu0 0
        %3793 = vmatprep.mubr.bf16.mxu0 0
        %3794 = vmatmul.mubr.bf16.gmra.mxu0 %v3756
        %v3795 = vpop.f32.mrf.mxu0
        %v3796 = vadd.f32 0.0, %v3795
        %v3797 = vpop.f32.mrf.mxu0
        %v3798 = vpop.f32.mrf.mxu0
        %v3799 = vadd.f32 0.0, %v3798
        %v3800 = vpop.f32.mrf.mxu0
        %3801 = vdwg.mxu0
        %v3803 = vsel %vm3002, %v2923, 0
        %v3806 = vsel %vm3002, %v2955, 0
        %3808 = vmatprep.subr.bf16.mxu0 0
        %3809 = vmatpush1.bf16.xpose.msra.mxu0 0
        %3810 = vmatprep.subr.bf16.mxu0 0
        %3811 = vmatpush1.bf16.xpose.msra.mxu0 0
        %3812 = vmatprep.subr.bf16.mxu0 0
        %3813 = vmatpush1.bf16.xpose.msra.mxu0 0
        %3814 = vmatprep.subr.bf16.mxu0 0
        %3815 = vmatpush1.bf16.xpose.msra.mxu0 0
        %3816 = vmatprep.subr.bf16.mxu0 0
        %3817 = vmatpush1.bf16.xpose.msra.mxu0 0
        %3818 = vmatprep.subr.bf16.mxu0 0
        %3819 = vmatpush1.bf16.xpose.msra.mxu0 0
        %3820 = vmatprep.subr.bf16.mxu0 0
        %3821 = vmatpush1.bf16.xpose.msra.mxu0 0
        %3822 = vmatprep.subr.bf16.mxu0 0
        %3823 = vmatpush1.bf16.xpose.msra.mxu0 %v3806
        %3824 = vmatprep.subr.bf16.mxu0 0
        %3825 = vmatpush2.bf16.xpose.msra.mxu0 0
        %3826 = vmatprep.subr.bf16.mxu0 0
        %3827 = vmatpush2.bf16.xpose.msra.mxu0 0
        %3828 = vmatprep.subr.bf16.mxu0 0
        %3829 = vmatpush2.bf16.xpose.msra.mxu0 0
        %3830 = vmatprep.subr.bf16.mxu0 0
        %3831 = vmatpush2.bf16.xpose.msra.mxu0 0
        %3832 = vmatprep.subr.bf16.mxu0 0
        %3833 = vmatpush2.bf16.xpose.msra.mxu0 0
        %3834 = vmatprep.subr.bf16.mxu0 0
        %3835 = vmatpush2.bf16.xpose.msra.mxu0 0
        %3836 = vmatprep.subr.bf16.mxu0 0
        %3837 = vmatpush2.bf16.xpose.msra.mxu0 0
        %3838 = vmatprep.subr.bf16.mxu0 0
        %3839 = vmatpush2.bf16.xpose.msra.mxu0 0
        %3840 = vmatprep.mubr.bf16.mxu0 0
        %3841 = vmatmul.mubr.bf16.gmra.mxu0 %v3803
        %v3842 = vpop.f32.mrf.mxu0
        %v3843 = vadd.f32 0.0, %v3842
        %v3844 = vpop.f32.mrf.mxu0
        %v3845 = vpop.f32.mrf.mxu0
        %v3846 = vadd.f32 0.0, %v3845
        %v3847 = vpop.f32.mrf.mxu0
        %3848 = vdwg.mxu0
        %v3850 = vsel %vm3002, %v2924, 0
        %v3853 = vsel %vm3002, %v2956, 0
        %3855 = vmatprep.subr.bf16.mxu0 0
        %3856 = vmatpush1.bf16.xpose.msra.mxu0 0
        %3857 = vmatprep.subr.bf16.mxu0 0
        %3858 = vmatpush1.bf16.xpose.msra.mxu0 0
        %3859 = vmatprep.subr.bf16.mxu0 0
        %3860 = vmatpush1.bf16.xpose.msra.mxu0 0
        %3861 = vmatprep.subr.bf16.mxu0 0
        %3862 = vmatpush1.bf16.xpose.msra.mxu0 0
        %3863 = vmatprep.subr.bf16.mxu0 0
        %3864 = vmatpush1.bf16.xpose.msra.mxu0 0
        %3865 = vmatprep.subr.bf16.mxu0 0
        %3866 = vmatpush1.bf16.xpose.msra.mxu0 0
        %3867 = vmatprep.subr.bf16.mxu0 0
        %3868 = vmatpush1.bf16.xpose.msra.mxu0 0
        %3869 = vmatprep.subr.bf16.mxu0 0
        %3870 = vmatpush1.bf16.xpose.msra.mxu0 %v3853
        %3871 = vmatprep.subr.bf16.mxu0 0
        %3872 = vmatpush2.bf16.xpose.msra.mxu0 0
        %3873 = vmatprep.subr.bf16.mxu0 0
        %3874 = vmatpush2.bf16.xpose.msra.mxu0 0
        %3875 = vmatprep.subr.bf16.mxu0 0
        %3876 = vmatpush2.bf16.xpose.msra.mxu0 0
        %3877 = vmatprep.subr.bf16.mxu0 0
        %3878 = vmatpush2.bf16.xpose.msra.mxu0 0
        %3879 = vmatprep.subr.bf16.mxu0 0
        %3880 = vmatpush2.bf16.xpose.msra.mxu0 0
        %3881 = vmatprep.subr.bf16.mxu0 0
        %3882 = vmatpush2.bf16.xpose.msra.mxu0 0
        %3883 = vmatprep.subr.bf16.mxu0 0
        %3884 = vmatpush2.bf16.xpose.msra.mxu0 0
        %3885 = vmatprep.subr.bf16.mxu0 0
        %3886 = vmatpush2.bf16.xpose.msra.mxu0 0
        %3887 = vmatprep.mubr.bf16.mxu0 0
        %3888 = vmatmul.mubr.bf16.gmra.mxu0 %v3850
        %v3889 = vpop.f32.mrf.mxu0
        %v3890 = vadd.f32 0.0, %v3889
        %v3891 = vpop.f32.mrf.mxu0
        %v3892 = vpop.f32.mrf.mxu0
        %v3893 = vadd.f32 0.0, %v3892
        %v3894 = vpop.f32.mrf.mxu0
        %3895 = vdwg.mxu0
        %v3897 = vsel %vm3002, %v2925, 0
        %v3900 = vsel %vm3002, %v2957, 0
        %3902 = vmatprep.subr.bf16.mxu0 0
        %3903 = vmatpush1.bf16.xpose.msra.mxu0 0
        %3904 = vmatprep.subr.bf16.mxu0 0
        %3905 = vmatpush1.bf16.xpose.msra.mxu0 0
        %3906 = vmatprep.subr.bf16.mxu0 0
        %3907 = vmatpush1.bf16.xpose.msra.mxu0 0
        %3908 = vmatprep.subr.bf16.mxu0 0
        %3909 = vmatpush1.bf16.xpose.msra.mxu0 0
        %3910 = vmatprep.subr.bf16.mxu0 0
        %3911 = vmatpush1.bf16.xpose.msra.mxu0 0
        %3912 = vmatprep.subr.bf16.mxu0 0
        %3913 = vmatpush1.bf16.xpose.msra.mxu0 0
        %3914 = vmatprep.subr.bf16.mxu0 0
        %3915 = vmatpush1.bf16.xpose.msra.mxu0 0
        %3916 = vmatprep.subr.bf16.mxu0 0
        %3917 = vmatpush1.bf16.xpose.msra.mxu0 %v3900
        %3918 = vmatprep.subr.bf16.mxu0 0
        %3919 = vmatpush2.bf16.xpose.msra.mxu0 0
        %3920 = vmatprep.subr.bf16.mxu0 0
        %3921 = vmatpush2.bf16.xpose.msra.mxu0 0
        %3922 = vmatprep.subr.bf16.mxu0 0
        %3923 = vmatpush2.bf16.xpose.msra.mxu0 0
        %3924 = vmatprep.subr.bf16.mxu0 0
        %3925 = vmatpush2.bf16.xpose.msra.mxu0 0
        %3926 = vmatprep.subr.bf16.mxu0 0
        %3927 = vmatpush2.bf16.xpose.msra.mxu0 0
        %3928 = vmatprep.subr.bf16.mxu0 0
        %3929 = vmatpush2.bf16.xpose.msra.mxu0 0
        %3930 = vmatprep.subr.bf16.mxu0 0
        %3931 = vmatpush2.bf16.xpose.msra.mxu0 0
        %3932 = vmatprep.subr.bf16.mxu0 0
        %3933 = vmatpush2.bf16.xpose.msra.mxu0 0
        %3934 = vmatprep.mubr.bf16.mxu0 0
        %3935 = vmatmul.mubr.bf16.gmra.mxu0 %v3897
        %v3936 = vpop.f32.mrf.mxu0
        %v3937 = vadd.f32 0.0, %v3936
        %v3938 = vpop.f32.mrf.mxu0
        %v3939 = vpop.f32.mrf.mxu0
        %v3940 = vadd.f32 0.0, %v3939
        %v3941 = vpop.f32.mrf.mxu0
        %3942 = vdwg.mxu0
        %v3944 = vsel %vm3002, %v2926, 0
        %v3947 = vsel %vm3002, %v2958, 0
        %3949 = vmatprep.subr.bf16.mxu0 0
        %3950 = vmatpush1.bf16.xpose.msra.mxu0 0
        %3951 = vmatprep.subr.bf16.mxu0 0
        %3952 = vmatpush1.bf16.xpose.msra.mxu0 0
        %3953 = vmatprep.subr.bf16.mxu0 0
        %3954 = vmatpush1.bf16.xpose.msra.mxu0 0
        %3955 = vmatprep.subr.bf16.mxu0 0
        %3956 = vmatpush1.bf16.xpose.msra.mxu0 0
        %3957 = vmatprep.subr.bf16.mxu0 0
        %3958 = vmatpush1.bf16.xpose.msra.mxu0 0
        %3959 = vmatprep.subr.bf16.mxu0 0
        %3960 = vmatpush1.bf16.xpose.msra.mxu0 0
        %3961 = vmatprep.subr.bf16.mxu0 0
        %3962 = vmatpush1.bf16.xpose.msra.mxu0 0
        %3963 = vmatprep.subr.bf16.mxu0 0
        %3964 = vmatpush1.bf16.xpose.msra.mxu0 %v3947
        %3965 = vmatprep.subr.bf16.mxu0 0
        %3966 = vmatpush2.bf16.xpose.msra.mxu0 0
        %3967 = vmatprep.subr.bf16.mxu0 0
        %3968 = vmatpush2.bf16.xpose.msra.mxu0 0
        %3969 = vmatprep.subr.bf16.mxu0 0
        %3970 = vmatpush2.bf16.xpose.msra.mxu0 0
        %3971 = vmatprep.subr.bf16.mxu0 0
        %3972 = vmatpush2.bf16.xpose.msra.mxu0 0
        %3973 = vmatprep.subr.bf16.mxu0 0
        %3974 = vmatpush2.bf16.xpose.msra.mxu0 0
        %3975 = vmatprep.subr.bf16.mxu0 0
        %3976 = vmatpush2.bf16.xpose.msra.mxu0 0
        %3977 = vmatprep.subr.bf16.mxu0 0
        %3978 = vmatpush2.bf16.xpose.msra.mxu0 0
        %3979 = vmatprep.subr.bf16.mxu0 0
        %3980 = vmatpush2.bf16.xpose.msra.mxu0 0
        %3981 = vmatprep.mubr.bf16.mxu0 0
        %3982 = vmatmul.mubr.bf16.gmra.mxu0 %v3944
        %v3983 = vpop.f32.mrf.mxu0
        %v3984 = vadd.f32 0.0, %v3983
        %v3985 = vpop.f32.mrf.mxu0
        %v3986 = vpop.f32.mrf.mxu0
        %v3987 = vadd.f32 0.0, %v3986
        %v3988 = vpop.f32.mrf.mxu0
        %3989 = vdwg.mxu0
        %v3991 = vsel %vm3002, %v2927, 0
        %v3994 = vsel %vm3002, %v2959, 0
        %3996 = vmatprep.subr.bf16.mxu0 0
        %3997 = vmatpush1.bf16.xpose.msra.mxu0 0
        %3998 = vmatprep.subr.bf16.mxu0 0
        %3999 = vmatpush1.bf16.xpose.msra.mxu0 0
        %4000 = vmatprep.subr.bf16.mxu0 0
        %4001 = vmatpush1.bf16.xpose.msra.mxu0 0
        %4002 = vmatprep.subr.bf16.mxu0 0
        %4003 = vmatpush1.bf16.xpose.msra.mxu0 0
        %4004 = vmatprep.subr.bf16.mxu0 0
        %4005 = vmatpush1.bf16.xpose.msra.mxu0 0
        %4006 = vmatprep.subr.bf16.mxu0 0
        %4007 = vmatpush1.bf16.xpose.msra.mxu0 0
        %4008 = vmatprep.subr.bf16.mxu0 0
        %4009 = vmatpush1.bf16.xpose.msra.mxu0 0
        %4010 = vmatprep.subr.bf16.mxu0 0
        %4011 = vmatpush1.bf16.xpose.msra.mxu0 %v3994
        %4012 = vmatprep.subr.bf16.mxu0 0
        %4013 = vmatpush2.bf16.xpose.msra.mxu0 0
        %4014 = vmatprep.subr.bf16.mxu0 0
        %4015 = vmatpush2.bf16.xpose.msra.mxu0 0
        %4016 = vmatprep.subr.bf16.mxu0 0
        %4017 = vmatpush2.bf16.xpose.msra.mxu0 0
        %4018 = vmatprep.subr.bf16.mxu0 0
        %4019 = vmatpush2.bf16.xpose.msra.mxu0 0
        %4020 = vmatprep.subr.bf16.mxu0 0
        %4021 = vmatpush2.bf16.xpose.msra.mxu0 0
        %4022 = vmatprep.subr.bf16.mxu0 0
        %4023 = vmatpush2.bf16.xpose.msra.mxu0 0
        %4024 = vmatprep.subr.bf16.mxu0 0
        %4025 = vmatpush2.bf16.xpose.msra.mxu0 0
        %4026 = vmatprep.subr.bf16.mxu0 0
        %4027 = vmatpush2.bf16.xpose.msra.mxu0 0
        %4028 = vmatprep.mubr.bf16.mxu0 0
        %4029 = vmatmul.mubr.bf16.gmra.mxu0 %v3991
        %v4030 = vpop.f32.mrf.mxu0
        %v4031 = vadd.f32 0.0, %v4030
        %v4032 = vpop.f32.mrf.mxu0
        %v4033 = vpop.f32.mrf.mxu0
        %v4034 = vadd.f32 0.0, %v4033
        %v4035 = vpop.f32.mrf.mxu0
        %4036 = vdwg.mxu0
        %v4038 = vsel %vm3002, %v2928, 0
        %v4041 = vsel %vm3002, %v2960, 0
        %4043 = vmatprep.subr.bf16.mxu0 0
        %4044 = vmatpush1.bf16.xpose.msra.mxu0 0
        %4045 = vmatprep.subr.bf16.mxu0 0
        %4046 = vmatpush1.bf16.xpose.msra.mxu0 0
        %4047 = vmatprep.subr.bf16.mxu0 0
        %4048 = vmatpush1.bf16.xpose.msra.mxu0 0
        %4049 = vmatprep.subr.bf16.mxu0 0
        %4050 = vmatpush1.bf16.xpose.msra.mxu0 0
        %4051 = vmatprep.subr.bf16.mxu0 0
        %4052 = vmatpush1.bf16.xpose.msra.mxu0 0
        %4053 = vmatprep.subr.bf16.mxu0 0
        %4054 = vmatpush1.bf16.xpose.msra.mxu0 0
        %4055 = vmatprep.subr.bf16.mxu0 0
        %4056 = vmatpush1.bf16.xpose.msra.mxu0 0
        %4057 = vmatprep.subr.bf16.mxu0 0
        %4058 = vmatpush1.bf16.xpose.msra.mxu0 %v4041
        %4059 = vmatprep.subr.bf16.mxu0 0
        %4060 = vmatpush2.bf16.xpose.msra.mxu0 0
        %4061 = vmatprep.subr.bf16.mxu0 0
        %4062 = vmatpush2.bf16.xpose.msra.mxu0 0
        %4063 = vmatprep.subr.bf16.mxu0 0
        %4064 = vmatpush2.bf16.xpose.msra.mxu0 0
        %4065 = vmatprep.subr.bf16.mxu0 0
        %4066 = vmatpush2.bf16.xpose.msra.mxu0 0
        %4067 = vmatprep.subr.bf16.mxu0 0
        %4068 = vmatpush2.bf16.xpose.msra.mxu0 0
        %4069 = vmatprep.subr.bf16.mxu0 0
        %4070 = vmatpush2.bf16.xpose.msra.mxu0 0
        %4071 = vmatprep.subr.bf16.mxu0 0
        %4072 = vmatpush2.bf16.xpose.msra.mxu0 0
        %4073 = vmatprep.subr.bf16.mxu0 0
        %4074 = vmatpush2.bf16.xpose.msra.mxu0 0
        %4075 = vmatprep.mubr.bf16.mxu0 0
        %4076 = vmatmul.mubr.bf16.gmra.mxu0 %v4038
        %v4077 = vpop.f32.mrf.mxu0
        %v4078 = vadd.f32 0.0, %v4077
        %v4079 = vpop.f32.mrf.mxu0
        %v4080 = vpop.f32.mrf.mxu0
        %v4081 = vadd.f32 0.0, %v4080
        %v4082 = vpop.f32.mrf.mxu0
        %4083 = vdwg.mxu0
        %v4085 = vsel %vm3002, %v2929, 0
        %v4088 = vsel %vm3002, %v2961, 0
        %4090 = vmatprep.subr.bf16.mxu0 0
        %4091 = vmatpush1.bf16.xpose.msra.mxu0 0
        %4092 = vmatprep.subr.bf16.mxu0 0
        %4093 = vmatpush1.bf16.xpose.msra.mxu0 0
        %4094 = vmatprep.subr.bf16.mxu0 0
        %4095 = vmatpush1.bf16.xpose.msra.mxu0 0
        %4096 = vmatprep.subr.bf16.mxu0 0
        %4097 = vmatpush1.bf16.xpose.msra.mxu0 0
        %4098 = vmatprep.subr.bf16.mxu0 0
        %4099 = vmatpush1.bf16.xpose.msra.mxu0 0
        %4100 = vmatprep.subr.bf16.mxu0 0
        %4101 = vmatpush1.bf16.xpose.msra.mxu0 0
        %4102 = vmatprep.subr.bf16.mxu0 0
        %4103 = vmatpush1.bf16.xpose.msra.mxu0 0
        %4104 = vmatprep.subr.bf16.mxu0 0
        %4105 = vmatpush1.bf16.xpose.msra.mxu0 %v4088
        %4106 = vmatprep.subr.bf16.mxu0 0
        %4107 = vmatpush2.bf16.xpose.msra.mxu0 0
        %4108 = vmatprep.subr.bf16.mxu0 0
        %4109 = vmatpush2.bf16.xpose.msra.mxu0 0
        %4110 = vmatprep.subr.bf16.mxu0 0
        %4111 = vmatpush2.bf16.xpose.msra.mxu0 0
        %4112 = vmatprep.subr.bf16.mxu0 0
        %4113 = vmatpush2.bf16.xpose.msra.mxu0 0
        %4114 = vmatprep.subr.bf16.mxu0 0
        %4115 = vmatpush2.bf16.xpose.msra.mxu0 0
        %4116 = vmatprep.subr.bf16.mxu0 0
        %4117 = vmatpush2.bf16.xpose.msra.mxu0 0
        %4118 = vmatprep.subr.bf16.mxu0 0
        %4119 = vmatpush2.bf16.xpose.msra.mxu0 0
        %4120 = vmatprep.subr.bf16.mxu0 0
        %4121 = vmatpush2.bf16.xpose.msra.mxu0 0
        %4122 = vmatprep.mubr.bf16.mxu0 0
        %4123 = vmatmul.mubr.bf16.gmra.mxu0 %v4085
        %v4124 = vpop.f32.mrf.mxu0
        %v4125 = vadd.f32 0.0, %v4124
        %v4126 = vpop.f32.mrf.mxu0
        %v4127 = vpop.f32.mrf.mxu0
        %v4128 = vadd.f32 0.0, %v4127
        %v4129 = vpop.f32.mrf.mxu0
        %4130 = vdwg.mxu0
        %v4132 = vsel %vm3002, %v2930, 0
        %v4135 = vsel %vm3002, %v2962, 0
        %4137 = vmatprep.subr.bf16.mxu0 0
        %4138 = vmatpush1.bf16.xpose.msra.mxu0 0
        %4139 = vmatprep.subr.bf16.mxu0 0
        %4140 = vmatpush1.bf16.xpose.msra.mxu0 0
        %4141 = vmatprep.subr.bf16.mxu0 0
        %4142 = vmatpush1.bf16.xpose.msra.mxu0 0
        %4143 = vmatprep.subr.bf16.mxu0 0
        %4144 = vmatpush1.bf16.xpose.msra.mxu0 0
        %4145 = vmatprep.subr.bf16.mxu0 0
        %4146 = vmatpush1.bf16.xpose.msra.mxu0 0
        %4147 = vmatprep.subr.bf16.mxu0 0
        %4148 = vmatpush1.bf16.xpose.msra.mxu0 0
        %4149 = vmatprep.subr.bf16.mxu0 0
        %4150 = vmatpush1.bf16.xpose.msra.mxu0 0
        %4151 = vmatprep.subr.bf16.mxu0 0
        %4152 = vmatpush1.bf16.xpose.msra.mxu0 %v4135
        %4153 = vmatprep.subr.bf16.mxu0 0
        %4154 = vmatpush2.bf16.xpose.msra.mxu0 0
        %4155 = vmatprep.subr.bf16.mxu0 0
        %4156 = vmatpush2.bf16.xpose.msra.mxu0 0
        %4157 = vmatprep.subr.bf16.mxu0 0
        %4158 = vmatpush2.bf16.xpose.msra.mxu0 0
        %4159 = vmatprep.subr.bf16.mxu0 0
        %4160 = vmatpush2.bf16.xpose.msra.mxu0 0
        %4161 = vmatprep.subr.bf16.mxu0 0
        %4162 = vmatpush2.bf16.xpose.msra.mxu0 0
        %4163 = vmatprep.subr.bf16.mxu0 0
        %4164 = vmatpush2.bf16.xpose.msra.mxu0 0
        %4165 = vmatprep.subr.bf16.mxu0 0
        %4166 = vmatpush2.bf16.xpose.msra.mxu0 0
        %4167 = vmatprep.subr.bf16.mxu0 0
        %4168 = vmatpush2.bf16.xpose.msra.mxu0 0
        %4169 = vmatprep.mubr.bf16.mxu0 0
        %4170 = vmatmul.mubr.bf16.gmra.mxu0 %v4132
        %v4171 = vpop.f32.mrf.mxu0
        %v4172 = vadd.f32 0.0, %v4171
        %v4173 = vpop.f32.mrf.mxu0
        %v4174 = vpop.f32.mrf.mxu0
        %v4175 = vadd.f32 0.0, %v4174
        %v4176 = vpop.f32.mrf.mxu0
        %4177 = vdwg.mxu0
        %v4179 = vsel %vm3002, %v2931, 0
        %v4182 = vsel %vm3002, %v2963, 0
        %4184 = vmatprep.subr.bf16.mxu0 0
        %4185 = vmatpush1.bf16.xpose.msra.mxu0 0
        %4186 = vmatprep.subr.bf16.mxu0 0
        %4187 = vmatpush1.bf16.xpose.msra.mxu0 0
        %4188 = vmatprep.subr.bf16.mxu0 0
        %4189 = vmatpush1.bf16.xpose.msra.mxu0 0
        %4190 = vmatprep.subr.bf16.mxu0 0
        %4191 = vmatpush1.bf16.xpose.msra.mxu0 0
        %4192 = vmatprep.subr.bf16.mxu0 0
        %4193 = vmatpush1.bf16.xpose.msra.mxu0 0
        %4194 = vmatprep.subr.bf16.mxu0 0
        %4195 = vmatpush1.bf16.xpose.msra.mxu0 0
        %4196 = vmatprep.subr.bf16.mxu0 0
        %4197 = vmatpush1.bf16.xpose.msra.mxu0 0
        %4198 = vmatprep.subr.bf16.mxu0 0
        %4199 = vmatpush1.bf16.xpose.msra.mxu0 %v4182
        %4200 = vmatprep.subr.bf16.mxu0 0
        %4201 = vmatpush2.bf16.xpose.msra.mxu0 0
        %4202 = vmatprep.subr.bf16.mxu0 0
        %4203 = vmatpush2.bf16.xpose.msra.mxu0 0
        %4204 = vmatprep.subr.bf16.mxu0 0
        %4205 = vmatpush2.bf16.xpose.msra.mxu0 0
        %4206 = vmatprep.subr.bf16.mxu0 0
        %4207 = vmatpush2.bf16.xpose.msra.mxu0 0
        %4208 = vmatprep.subr.bf16.mxu0 0
        %4209 = vmatpush2.bf16.xpose.msra.mxu0 0
        %4210 = vmatprep.subr.bf16.mxu0 0
        %4211 = vmatpush2.bf16.xpose.msra.mxu0 0
        %4212 = vmatprep.subr.bf16.mxu0 0
        %4213 = vmatpush2.bf16.xpose.msra.mxu0 0
        %4214 = vmatprep.subr.bf16.mxu0 0
        %4215 = vmatpush2.bf16.xpose.msra.mxu0 0
        %4216 = vmatprep.mubr.bf16.mxu0 0
        %4217 = vmatmul.mubr.bf16.gmra.mxu0 %v4179
        %v4218 = vpop.f32.mrf.mxu0
        %v4219 = vadd.f32 0.0, %v4218
        %v4220 = vpop.f32.mrf.mxu0
        %v4221 = vpop.f32.mrf.mxu0
        %v4222 = vadd.f32 0.0, %v4221
        %v4223 = vpop.f32.mrf.mxu0
        %4224 = vdwg.mxu0
        %v4226 = vsel %vm3002, %v2932, 0
        %v4229 = vsel %vm3002, %v2964, 0
        %4231 = vmatprep.subr.bf16.mxu0 0
        %4232 = vmatpush1.bf16.xpose.msra.mxu0 0
        %4233 = vmatprep.subr.bf16.mxu0 0
        %4234 = vmatpush1.bf16.xpose.msra.mxu0 0
        %4235 = vmatprep.subr.bf16.mxu0 0
        %4236 = vmatpush1.bf16.xpose.msra.mxu0 0
        %4237 = vmatprep.subr.bf16.mxu0 0
        %4238 = vmatpush1.bf16.xpose.msra.mxu0 0
        %4239 = vmatprep.subr.bf16.mxu0 0
        %4240 = vmatpush1.bf16.xpose.msra.mxu0 0
        %4241 = vmatprep.subr.bf16.mxu0 0
        %4242 = vmatpush1.bf16.xpose.msra.mxu0 0
        %4243 = vmatprep.subr.bf16.mxu0 0
        %4244 = vmatpush1.bf16.xpose.msra.mxu0 0
        %4245 = vmatprep.subr.bf16.mxu0 0
        %4246 = vmatpush1.bf16.xpose.msra.mxu0 %v4229
        %4247 = vmatprep.subr.bf16.mxu0 0
        %4248 = vmatpush2.bf16.xpose.msra.mxu0 0
        %4249 = vmatprep.subr.bf16.mxu0 0
        %4250 = vmatpush2.bf16.xpose.msra.mxu0 0
        %4251 = vmatprep.subr.bf16.mxu0 0
        %4252 = vmatpush2.bf16.xpose.msra.mxu0 0
        %4253 = vmatprep.subr.bf16.mxu0 0
        %4254 = vmatpush2.bf16.xpose.msra.mxu0 0
        %4255 = vmatprep.subr.bf16.mxu0 0
        %4256 = vmatpush2.bf16.xpose.msra.mxu0 0
        %4257 = vmatprep.subr.bf16.mxu0 0
        %4258 = vmatpush2.bf16.xpose.msra.mxu0 0
        %4259 = vmatprep.subr.bf16.mxu0 0
        %4260 = vmatpush2.bf16.xpose.msra.mxu0 0
        %4261 = vmatprep.subr.bf16.mxu0 0
        %4262 = vmatpush2.bf16.xpose.msra.mxu0 0
        %4263 = vmatprep.mubr.bf16.mxu0 0
        %4264 = vmatmul.mubr.bf16.gmra.mxu0 %v4226
        %v4265 = vpop.f32.mrf.mxu0
        %v4266 = vadd.f32 0.0, %v4265
        %v4267 = vpop.f32.mrf.mxu0
        %v4268 = vpop.f32.mrf.mxu0
        %v4269 = vadd.f32 0.0, %v4268
        %v4270 = vpop.f32.mrf.mxu0
        %4271 = vdwg.mxu0
        %v4273 = vsel %vm3002, %v2933, 0
        %v4276 = vsel %vm3002, %v2965, 0
        %4278 = vmatprep.subr.bf16.mxu0 0
        %4279 = vmatpush1.bf16.xpose.msra.mxu0 0
        %4280 = vmatprep.subr.bf16.mxu0 0
        %4281 = vmatpush1.bf16.xpose.msra.mxu0 0
        %4282 = vmatprep.subr.bf16.mxu0 0
        %4283 = vmatpush1.bf16.xpose.msra.mxu0 0
        %4284 = vmatprep.subr.bf16.mxu0 0
        %4285 = vmatpush1.bf16.xpose.msra.mxu0 0
        %4286 = vmatprep.subr.bf16.mxu0 0
        %4287 = vmatpush1.bf16.xpose.msra.mxu0 0
        %4288 = vmatprep.subr.bf16.mxu0 0
        %4289 = vmatpush1.bf16.xpose.msra.mxu0 0
        %4290 = vmatprep.subr.bf16.mxu0 0
        %4291 = vmatpush1.bf16.xpose.msra.mxu0 0
        %4292 = vmatprep.subr.bf16.mxu0 0
        %4293 = vmatpush1.bf16.xpose.msra.mxu0 %v4276
        %4294 = vmatprep.subr.bf16.mxu0 0
        %4295 = vmatpush2.bf16.xpose.msra.mxu0 0
        %4296 = vmatprep.subr.bf16.mxu0 0
        %4297 = vmatpush2.bf16.xpose.msra.mxu0 0
        %4298 = vmatprep.subr.bf16.mxu0 0
        %4299 = vmatpush2.bf16.xpose.msra.mxu0 0
        %4300 = vmatprep.subr.bf16.mxu0 0
        %4301 = vmatpush2.bf16.xpose.msra.mxu0 0
        %4302 = vmatprep.subr.bf16.mxu0 0
        %4303 = vmatpush2.bf16.xpose.msra.mxu0 0
        %4304 = vmatprep.subr.bf16.mxu0 0
        %4305 = vmatpush2.bf16.xpose.msra.mxu0 0
        %4306 = vmatprep.subr.bf16.mxu0 0
        %4307 = vmatpush2.bf16.xpose.msra.mxu0 0
        %4308 = vmatprep.subr.bf16.mxu0 0
        %4309 = vmatpush2.bf16.xpose.msra.mxu0 0
        %4310 = vmatprep.mubr.bf16.mxu0 0
        %4311 = vmatmul.mubr.bf16.gmra.mxu0 %v4273
        %v4312 = vpop.f32.mrf.mxu0
        %v4313 = vadd.f32 0.0, %v4312
        %v4314 = vpop.f32.mrf.mxu0
        %v4315 = vpop.f32.mrf.mxu0
        %v4316 = vadd.f32 0.0, %v4315
        %v4317 = vpop.f32.mrf.mxu0
        %4318 = vdwg.mxu0
        %v4320 = vsel %vm3002, %v2934, 0
        %v4323 = vsel %vm3002, %v2966, 0
        %4325 = vmatprep.subr.bf16.mxu0 0
        %4326 = vmatpush1.bf16.xpose.msra.mxu0 0
        %4327 = vmatprep.subr.bf16.mxu0 0
        %4328 = vmatpush1.bf16.xpose.msra.mxu0 0
        %4329 = vmatprep.subr.bf16.mxu0 0
        %4330 = vmatpush1.bf16.xpose.msra.mxu0 0
        %4331 = vmatprep.subr.bf16.mxu0 0
        %4332 = vmatpush1.bf16.xpose.msra.mxu0 0
        %4333 = vmatprep.subr.bf16.mxu0 0
        %4334 = vmatpush1.bf16.xpose.msra.mxu0 0
        %4335 = vmatprep.subr.bf16.mxu0 0
        %4336 = vmatpush1.bf16.xpose.msra.mxu0 0
        %4337 = vmatprep.subr.bf16.mxu0 0
        %4338 = vmatpush1.bf16.xpose.msra.mxu0 0
        %4339 = vmatprep.subr.bf16.mxu0 0
        %4340 = vmatpush1.bf16.xpose.msra.mxu0 %v4323
        %4341 = vmatprep.subr.bf16.mxu0 0
        %4342 = vmatpush2.bf16.xpose.msra.mxu0 0
        %4343 = vmatprep.subr.bf16.mxu0 0
        %4344 = vmatpush2.bf16.xpose.msra.mxu0 0
        %4345 = vmatprep.subr.bf16.mxu0 0
        %4346 = vmatpush2.bf16.xpose.msra.mxu0 0
        %4347 = vmatprep.subr.bf16.mxu0 0
        %4348 = vmatpush2.bf16.xpose.msra.mxu0 0
        %4349 = vmatprep.subr.bf16.mxu0 0
        %4350 = vmatpush2.bf16.xpose.msra.mxu0 0
        %4351 = vmatprep.subr.bf16.mxu0 0
        %4352 = vmatpush2.bf16.xpose.msra.mxu0 0
        %4353 = vmatprep.subr.bf16.mxu0 0
        %4354 = vmatpush2.bf16.xpose.msra.mxu0 0
        %4355 = vmatprep.subr.bf16.mxu0 0
        %4356 = vmatpush2.bf16.xpose.msra.mxu0 0
        %4357 = vmatprep.mubr.bf16.mxu0 0
        %4358 = vmatmul.mubr.bf16.gmra.mxu0 %v4320
        %v4359 = vpop.f32.mrf.mxu0
        %v4360 = vadd.f32 0.0, %v4359
        %v4361 = vpop.f32.mrf.mxu0
        %v4362 = vpop.f32.mrf.mxu0
        %v4363 = vadd.f32 0.0, %v4362
        %v4364 = vpop.f32.mrf.mxu0
        %4365 = vdwg.mxu0
        %v4367 = vsel %vm3002, %v2935, 0
        %v4370 = vsel %vm3002, %v2967, 0
        %4372 = vmatprep.subr.bf16.mxu0 0
        %4373 = vmatpush1.bf16.xpose.msra.mxu0 0
        %4374 = vmatprep.subr.bf16.mxu0 0
        %4375 = vmatpush1.bf16.xpose.msra.mxu0 0
        %4376 = vmatprep.subr.bf16.mxu0 0
        %4377 = vmatpush1.bf16.xpose.msra.mxu0 0
        %4378 = vmatprep.subr.bf16.mxu0 0
        %4379 = vmatpush1.bf16.xpose.msra.mxu0 0
        %4380 = vmatprep.subr.bf16.mxu0 0
        %4381 = vmatpush1.bf16.xpose.msra.mxu0 0
        %4382 = vmatprep.subr.bf16.mxu0 0
        %4383 = vmatpush1.bf16.xpose.msra.mxu0 0
        %4384 = vmatprep.subr.bf16.mxu0 0
        %4385 = vmatpush1.bf16.xpose.msra.mxu0 0
        %4386 = vmatprep.subr.bf16.mxu0 0
        %4387 = vmatpush1.bf16.xpose.msra.mxu0 %v4370
        %4388 = vmatprep.subr.bf16.mxu0 0
        %4389 = vmatpush2.bf16.xpose.msra.mxu0 0
        %4390 = vmatprep.subr.bf16.mxu0 0
        %4391 = vmatpush2.bf16.xpose.msra.mxu0 0
        %4392 = vmatprep.subr.bf16.mxu0 0
        %4393 = vmatpush2.bf16.xpose.msra.mxu0 0
        %4394 = vmatprep.subr.bf16.mxu0 0
        %4395 = vmatpush2.bf16.xpose.msra.mxu0 0
        %4396 = vmatprep.subr.bf16.mxu0 0
        %4397 = vmatpush2.bf16.xpose.msra.mxu0 0
        %4398 = vmatprep.subr.bf16.mxu0 0
        %4399 = vmatpush2.bf16.xpose.msra.mxu0 0
        %4400 = vmatprep.subr.bf16.mxu0 0
        %4401 = vmatpush2.bf16.xpose.msra.mxu0 0
        %4402 = vmatprep.subr.bf16.mxu0 0
        %4403 = vmatpush2.bf16.xpose.msra.mxu0 0
        %4404 = vmatprep.mubr.bf16.mxu0 0
        %4405 = vmatmul.mubr.bf16.gmra.mxu0 %v4367
        %v4406 = vpop.f32.mrf.mxu0
        %v4407 = vadd.f32 0.0, %v4406
        %v4408 = vpop.f32.mrf.mxu0
        %v4409 = vpop.f32.mrf.mxu0
        %v4410 = vadd.f32 0.0, %v4409
        %v4411 = vpop.f32.mrf.mxu0
        %4412 = vdwg.mxu0
        %v4414 = vsel %vm3002, %v2936, 0
        %v4417 = vsel %vm3002, %v2968, 0
        %4419 = vmatprep.subr.bf16.mxu0 0
        %4420 = vmatpush1.bf16.xpose.msra.mxu0 0
        %4421 = vmatprep.subr.bf16.mxu0 0
        %4422 = vmatpush1.bf16.xpose.msra.mxu0 0
        %4423 = vmatprep.subr.bf16.mxu0 0
        %4424 = vmatpush1.bf16.xpose.msra.mxu0 0
        %4425 = vmatprep.subr.bf16.mxu0 0
        %4426 = vmatpush1.bf16.xpose.msra.mxu0 0
        %4427 = vmatprep.subr.bf16.mxu0 0
        %4428 = vmatpush1.bf16.xpose.msra.mxu0 0
        %4429 = vmatprep.subr.bf16.mxu0 0
        %4430 = vmatpush1.bf16.xpose.msra.mxu0 0
        %4431 = vmatprep.subr.bf16.mxu0 0
        %4432 = vmatpush1.bf16.xpose.msra.mxu0 0
        %4433 = vmatprep.subr.bf16.mxu0 0
        %4434 = vmatpush1.bf16.xpose.msra.mxu0 %v4417
        %4435 = vmatprep.subr.bf16.mxu0 0
        %4436 = vmatpush2.bf16.xpose.msra.mxu0 0
        %4437 = vmatprep.subr.bf16.mxu0 0
        %4438 = vmatpush2.bf16.xpose.msra.mxu0 0
        %4439 = vmatprep.subr.bf16.mxu0 0
        %4440 = vmatpush2.bf16.xpose.msra.mxu0 0
        %4441 = vmatprep.subr.bf16.mxu0 0
        %4442 = vmatpush2.bf16.xpose.msra.mxu0 0
        %4443 = vmatprep.subr.bf16.mxu0 0
        %4444 = vmatpush2.bf16.xpose.msra.mxu0 0
        %4445 = vmatprep.subr.bf16.mxu0 0
        %4446 = vmatpush2.bf16.xpose.msra.mxu0 0
        %4447 = vmatprep.subr.bf16.mxu0 0
        %4448 = vmatpush2.bf16.xpose.msra.mxu0 0
        %4449 = vmatprep.subr.bf16.mxu0 0
        %4450 = vmatpush2.bf16.xpose.msra.mxu0 0
        %4451 = vmatprep.mubr.bf16.mxu0 0
        %4452 = vmatmul.mubr.bf16.gmra.mxu0 %v4414
        %v4453 = vpop.f32.mrf.mxu0
        %v4454 = vadd.f32 0.0, %v4453
        %v4455 = vpop.f32.mrf.mxu0
        %v4456 = vpop.f32.mrf.mxu0
        %v4457 = vadd.f32 0.0, %v4456
        %v4458 = vpop.f32.mrf.mxu0
        %4459 = vdwg.mxu0
        %v4461 = vsel %vm3002, %v2937, 0
        %v4464 = vsel %vm3002, %v2969, 0
        %4466 = vmatprep.subr.bf16.mxu0 0
        %4467 = vmatpush1.bf16.xpose.msra.mxu0 0
        %4468 = vmatprep.subr.bf16.mxu0 0
        %4469 = vmatpush1.bf16.xpose.msra.mxu0 0
        %4470 = vmatprep.subr.bf16.mxu0 0
        %4471 = vmatpush1.bf16.xpose.msra.mxu0 0
        %4472 = vmatprep.subr.bf16.mxu0 0
        %4473 = vmatpush1.bf16.xpose.msra.mxu0 0
        %4474 = vmatprep.subr.bf16.mxu0 0
        %4475 = vmatpush1.bf16.xpose.msra.mxu0 0
        %4476 = vmatprep.subr.bf16.mxu0 0
        %4477 = vmatpush1.bf16.xpose.msra.mxu0 0
        %4478 = vmatprep.subr.bf16.mxu0 0
        %4479 = vmatpush1.bf16.xpose.msra.mxu0 0
        %4480 = vmatprep.subr.bf16.mxu0 0
        %4481 = vmatpush1.bf16.xpose.msra.mxu0 %v4464
        %4482 = vmatprep.subr.bf16.mxu0 0
        %4483 = vmatpush2.bf16.xpose.msra.mxu0 0
        %4484 = vmatprep.subr.bf16.mxu0 0
        %4485 = vmatpush2.bf16.xpose.msra.mxu0 0
        %4486 = vmatprep.subr.bf16.mxu0 0
        %4487 = vmatpush2.bf16.xpose.msra.mxu0 0
        %4488 = vmatprep.subr.bf16.mxu0 0
        %4489 = vmatpush2.bf16.xpose.msra.mxu0 0
        %4490 = vmatprep.subr.bf16.mxu0 0
        %4491 = vmatpush2.bf16.xpose.msra.mxu0 0
        %4492 = vmatprep.subr.bf16.mxu0 0
        %4493 = vmatpush2.bf16.xpose.msra.mxu0 0
        %4494 = vmatprep.subr.bf16.mxu0 0
        %4495 = vmatpush2.bf16.xpose.msra.mxu0 0
        %4496 = vmatprep.subr.bf16.mxu0 0
        %4497 = vmatpush2.bf16.xpose.msra.mxu0 0
        %4498 = vmatprep.mubr.bf16.mxu0 0
        %4499 = vmatmul.mubr.bf16.gmra.mxu0 %v4461
        %v4500 = vpop.f32.mrf.mxu0
        %v4501 = vadd.f32 0.0, %v4500
        %v4502 = vpop.f32.mrf.mxu0
        %v4503 = vpop.f32.mrf.mxu0
        %v4504 = vadd.f32 0.0, %v4503
        %v4505 = vpop.f32.mrf.mxu0
        %4506 = vdwg.mxu0
        %vm4507 = vcmask 130048
        %v4508 = vsel %vm4507, %v3044, -inf
        %4509 = vmax.xlane.f32.xlu0 %v4508
        %v4510 = vpop.xlane.xlu0 %4509
        %v4511 = vsel %vm4507, %v3047, -inf
        %4512 = vmax.xlane.f32.xlu0 %v4511
        %v4513 = vpop.xlane.xlu0 %4512
        %v4514 = vsel %vm4507, %v3091, -inf
        %4515 = vmax.xlane.f32.xlu0 %v4514
        %v4516 = vpop.xlane.xlu0 %4515
        %v4517 = vsel %vm4507, %v3094, -inf
        %4518 = vmax.xlane.f32.xlu0 %v4517
        %v4519 = vpop.xlane.xlu0 %4518
        %v4520 = vsel %vm4507, %v3138, -inf
        %4521 = vmax.xlane.f32.xlu0 %v4520
        %v4522 = vpop.xlane.xlu0 %4521
        %v4523 = vsel %vm4507, %v3141, -inf
        %4524 = vmax.xlane.f32.xlu0 %v4523
        %v4525 = vpop.xlane.xlu0 %4524
        %v4526 = vsel %vm4507, %v3185, -inf
        %4527 = vmax.xlane.f32.xlu0 %v4526
        %v4528 = vpop.xlane.xlu0 %4527
        %v4529 = vsel %vm4507, %v3188, -inf
        %4530 = vmax.xlane.f32.xlu0 %v4529
        %v4531 = vpop.xlane.xlu0 %4530
        %v4532 = vsel %vm4507, %v3232, -inf
        %4533 = vmax.xlane.f32.xlu0 %v4532
        %v4534 = vpop.xlane.xlu0 %4533
        %v4535 = vsel %vm4507, %v3235, -inf
        %4536 = vmax.xlane.f32.xlu0 %v4535
        %v4537 = vpop.xlane.xlu0 %4536
        %v4538 = vsel %vm4507, %v3279, -inf
        %4539 = vmax.xlane.f32.xlu0 %v4538
        %v4540 = vpop.xlane.xlu0 %4539
        %v4541 = vsel %vm4507, %v3282, -inf
        %4542 = vmax.xlane.f32.xlu0 %v4541
        %v4543 = vpop.xlane.xlu0 %4542
        %v4544 = vsel %vm4507, %v3326, -inf
        %4545 = vmax.xlane.f32.xlu0 %v4544
        %v4546 = vpop.xlane.xlu0 %4545
        %v4547 = vsel %vm4507, %v3329, -inf
        %4548 = vmax.xlane.f32.xlu0 %v4547
        %v4549 = vpop.xlane.xlu0 %4548
        %v4550 = vsel %vm4507, %v3373, -inf
        %4551 = vmax.xlane.f32.xlu0 %v4550
        %v4552 = vpop.xlane.xlu0 %4551
        %v4553 = vsel %vm4507, %v3376, -inf
        %4554 = vmax.xlane.f32.xlu0 %v4553
        %v4555 = vpop.xlane.xlu0 %4554
        %v4556 = vsel %vm4507, %v3420, -inf
        %4557 = vmax.xlane.f32.xlu0 %v4556
        %v4558 = vpop.xlane.xlu0 %4557
        %v4559 = vsel %vm4507, %v3423, -inf
        %4560 = vmax.xlane.f32.xlu0 %v4559
        %v4561 = vpop.xlane.xlu0 %4560
        %v4562 = vsel %vm4507, %v3467, -inf
        %4563 = vmax.xlane.f32.xlu0 %v4562
        %v4564 = vpop.xlane.xlu0 %4563
        %v4565 = vsel %vm4507, %v3470, -inf
        %4566 = vmax.xlane.f32.xlu0 %v4565
        %v4567 = vpop.xlane.xlu0 %4566
        %v4568 = vsel %vm4507, %v3514, -inf
        %4569 = vmax.xlane.f32.xlu0 %v4568
        %v4570 = vpop.xlane.xlu0 %4569
        %v4571 = vsel %vm4507, %v3517, -inf
        %4572 = vmax.xlane.f32.xlu0 %v4571
        %v4573 = vpop.xlane.xlu0 %4572
        %v4574 = vsel %vm4507, %v3561, -inf
        %4575 = vmax.xlane.f32.xlu0 %v4574
        %v4576 = vpop.xlane.xlu0 %4575
        %v4577 = vsel %vm4507, %v3564, -inf
        %4578 = vmax.xlane.f32.xlu0 %v4577
        %v4579 = vpop.xlane.xlu0 %4578
        %v4580 = vsel %vm4507, %v3608, -inf
        %4581 = vmax.xlane.f32.xlu0 %v4580
        %v4582 = vpop.xlane.xlu0 %4581
        %v4583 = vsel %vm4507, %v3611, -inf
        %4584 = vmax.xlane.f32.xlu0 %v4583
        %v4585 = vpop.xlane.xlu0 %4584
        %v4586 = vsel %vm4507, %v3655, -inf
        %4587 = vmax.xlane.f32.xlu0 %v4586
        %v4588 = vpop.xlane.xlu0 %4587
        %v4589 = vsel %vm4507, %v3658, -inf
        %4590 = vmax.xlane.f32.xlu0 %v4589
        %v4591 = vpop.xlane.xlu0 %4590
        %v4592 = vsel %vm4507, %v3702, -inf
        %4593 = vmax.xlane.f32.xlu0 %v4592
        %v4594 = vpop.xlane.xlu0 %4593
        %v4595 = vsel %vm4507, %v3705, -inf
        %4596 = vmax.xlane.f32.xlu0 %v4595
        %v4597 = vpop.xlane.xlu0 %4596
        %v4598 = vsel %vm4507, %v3749, -inf
        %4599 = vmax.xlane.f32.xlu0 %v4598
        %v4600 = vpop.xlane.xlu0 %4599
        %v4601 = vsel %vm4507, %v3752, -inf
        %4602 = vmax.xlane.f32.xlu0 %v4601
        %v4603 = vpop.xlane.xlu0 %4602
        %v4604 = vsel %vm4507, %v3796, -inf
        %4605 = vmax.xlane.f32.xlu0 %v4604
        %v4606 = vpop.xlane.xlu0 %4605
        %v4607 = vsel %vm4507, %v3799, -inf
        %4608 = vmax.xlane.f32.xlu0 %v4607
        %v4609 = vpop.xlane.xlu0 %4608
        %v4610 = vsel %vm4507, %v3843, -inf
        %4611 = vmax.xlane.f32.xlu0 %v4610
        %v4612 = vpop.xlane.xlu0 %4611
        %v4613 = vsel %vm4507, %v3846, -inf
        %4614 = vmax.xlane.f32.xlu0 %v4613
        %v4615 = vpop.xlane.xlu0 %4614
        %v4616 = vsel %vm4507, %v3890, -inf
        %4617 = vmax.xlane.f32.xlu0 %v4616
        %v4618 = vpop.xlane.xlu0 %4617
        %v4619 = vsel %vm4507, %v3893, -inf
        %4620 = vmax.xlane.f32.xlu0 %v4619
        %v4621 = vpop.xlane.xlu0 %4620
        %v4622 = vsel %vm4507, %v3937, -inf
        %4623 = vmax.xlane.f32.xlu0 %v4622
        %v4624 = vpop.xlane.xlu0 %4623
        %v4625 = vsel %vm4507, %v3940, -inf
        %4626 = vmax.xlane.f32.xlu0 %v4625
        %v4627 = vpop.xlane.xlu0 %4626
        %v4628 = vsel %vm4507, %v3984, -inf
        %4629 = vmax.xlane.f32.xlu0 %v4628
        %v4630 = vpop.xlane.xlu0 %4629
        %v4631 = vsel %vm4507, %v3987, -inf
        %4632 = vmax.xlane.f32.xlu0 %v4631
        %v4633 = vpop.xlane.xlu0 %4632
        %v4634 = vsel %vm4507, %v4031, -inf
        %4635 = vmax.xlane.f32.xlu0 %v4634
        %v4636 = vpop.xlane.xlu0 %4635
        %v4637 = vsel %vm4507, %v4034, -inf
        %4638 = vmax.xlane.f32.xlu0 %v4637
        %v4639 = vpop.xlane.xlu0 %4638
        %v4640 = vsel %vm4507, %v4078, -inf
        %4641 = vmax.xlane.f32.xlu0 %v4640
        %v4642 = vpop.xlane.xlu0 %4641
        %v4643 = vsel %vm4507, %v4081, -inf
        %4644 = vmax.xlane.f32.xlu0 %v4643
        %v4645 = vpop.xlane.xlu0 %4644
        %v4646 = vsel %vm4507, %v4125, -inf
        %4647 = vmax.xlane.f32.xlu0 %v4646
        %v4648 = vpop.xlane.xlu0 %4647
        %v4649 = vsel %vm4507, %v4128, -inf
        %4650 = vmax.xlane.f32.xlu0 %v4649
        %v4651 = vpop.xlane.xlu0 %4650
        %v4652 = vsel %vm4507, %v4172, -inf
        %4653 = vmax.xlane.f32.xlu0 %v4652
        %v4654 = vpop.xlane.xlu0 %4653
        %v4655 = vsel %vm4507, %v4175, -inf
        %4656 = vmax.xlane.f32.xlu0 %v4655
        %v4657 = vpop.xlane.xlu0 %4656
        %v4658 = vsel %vm4507, %v4219, -inf
        %4659 = vmax.xlane.f32.xlu0 %v4658
        %v4660 = vpop.xlane.xlu0 %4659
        %v4661 = vsel %vm4507, %v4222, -inf
        %4662 = vmax.xlane.f32.xlu0 %v4661
        %v4663 = vpop.xlane.xlu0 %4662
        %v4664 = vsel %vm4507, %v4266, -inf
        %4665 = vmax.xlane.f32.xlu0 %v4664
        %v4666 = vpop.xlane.xlu0 %4665
        %v4667 = vsel %vm4507, %v4269, -inf
        %4668 = vmax.xlane.f32.xlu0 %v4667
        %v4669 = vpop.xlane.xlu0 %4668
        %v4670 = vsel %vm4507, %v4313, -inf
        %4671 = vmax.xlane.f32.xlu0 %v4670
        %v4672 = vpop.xlane.xlu0 %4671
        %v4673 = vsel %vm4507, %v4316, -inf
        %4674 = vmax.xlane.f32.xlu0 %v4673
        %v4675 = vpop.xlane.xlu0 %4674
        %v4676 = vsel %vm4507, %v4360, -inf
        %4677 = vmax.xlane.f32.xlu0 %v4676
        %v4678 = vpop.xlane.xlu0 %4677
        %v4679 = vsel %vm4507, %v4363, -inf
        %4680 = vmax.xlane.f32.xlu0 %v4679
        %v4681 = vpop.xlane.xlu0 %4680
        %v4682 = vsel %vm4507, %v4407, -inf
        %4683 = vmax.xlane.f32.xlu0 %v4682
        %v4684 = vpop.xlane.xlu0 %4683
        %v4685 = vsel %vm4507, %v4410, -inf
        %4686 = vmax.xlane.f32.xlu0 %v4685
        %v4687 = vpop.xlane.xlu0 %4686
        %v4688 = vsel %vm4507, %v4454, -inf
        %4689 = vmax.xlane.f32.xlu0 %v4688
        %v4690 = vpop.xlane.xlu0 %4689
        %v4691 = vsel %vm4507, %v4457, -inf
        %4692 = vmax.xlane.f32.xlu0 %v4691
        %v4693 = vpop.xlane.xlu0 %4692
        %v4694 = vsel %vm4507, %v4501, -inf
        %4695 = vmax.xlane.f32.xlu0 %v4694
        %v4696 = vpop.xlane.xlu0 %4695
        %v4697 = vsel %vm4507, %v4504, -inf
        %4698 = vmax.xlane.f32.xlu0 %v4697
        %v4699 = vpop.xlane.xlu0 %4698
        %v4700 = vsub.f32 %v3044, %v4510
        %v4701 = vsub.f32 %v3047, %v4513
        %v4702 = vsub.f32 %v3091, %v4516
        %v4703 = vsub.f32 %v3094, %v4519
        %v4704 = vsub.f32 %v3138, %v4522
        %v4705 = vsub.f32 %v3141, %v4525
        %v4706 = vsub.f32 %v3185, %v4528
        %v4707 = vsub.f32 %v3188, %v4531
        %v4708 = vsub.f32 %v3232, %v4534
        %v4709 = vsub.f32 %v3235, %v4537
        %v4710 = vsub.f32 %v3279, %v4540
        %v4711 = vsub.f32 %v3282, %v4543
        %v4712 = vsub.f32 %v3326, %v4546
        %v4713 = vsub.f32 %v3329, %v4549
        %v4714 = vsub.f32 %v3373, %v4552
        %v4715 = vsub.f32 %v3376, %v4555
        %v4716 = vsub.f32 %v3420, %v4558
        %v4717 = vsub.f32 %v3423, %v4561
        %v4718 = vsub.f32 %v3467, %v4564
        %v4719 = vsub.f32 %v3470, %v4567
        %v4720 = vsub.f32 %v3514, %v4570
        %v4721 = vsub.f32 %v3517, %v4573
        %v4722 = vsub.f32 %v3561, %v4576
        %v4723 = vsub.f32 %v3564, %v4579
        %v4724 = vsub.f32 %v3608, %v4582
        %v4725 = vsub.f32 %v3611, %v4585
        %v4726 = vsub.f32 %v3655, %v4588
        %v4727 = vsub.f32 %v3658, %v4591
        %v4728 = vsub.f32 %v3702, %v4594
        %v4729 = vsub.f32 %v3705, %v4597
        %v4730 = vsub.f32 %v3749, %v4600
        %v4731 = vsub.f32 %v3752, %v4603
        %v4732 = vsub.f32 %v3796, %v4606
        %v4733 = vsub.f32 %v3799, %v4609
        %v4734 = vsub.f32 %v3843, %v4612
        %v4735 = vsub.f32 %v3846, %v4615
        %v4736 = vsub.f32 %v3890, %v4618
        %v4737 = vsub.f32 %v3893, %v4621
        %v4738 = vsub.f32 %v3937, %v4624
        %v4739 = vsub.f32 %v3940, %v4627
        %v4740 = vsub.f32 %v3984, %v4630
        %v4741 = vsub.f32 %v3987, %v4633
        %v4742 = vsub.f32 %v4031, %v4636
        %v4743 = vsub.f32 %v4034, %v4639
        %v4744 = vsub.f32 %v4078, %v4642
        %v4745 = vsub.f32 %v4081, %v4645
        %v4746 = vsub.f32 %v4125, %v4648
        %v4747 = vsub.f32 %v4128, %v4651
        %v4748 = vsub.f32 %v4172, %v4654
        %v4749 = vsub.f32 %v4175, %v4657
        %v4750 = vsub.f32 %v4219, %v4660
        %v4751 = vsub.f32 %v4222, %v4663
        %v4752 = vsub.f32 %v4266, %v4666
        %v4753 = vsub.f32 %v4269, %v4669
        %v4754 = vsub.f32 %v4313, %v4672
        %v4755 = vsub.f32 %v4316, %v4675
        %v4756 = vsub.f32 %v4360, %v4678
        %v4757 = vsub.f32 %v4363, %v4681
        %v4758 = vsub.f32 %v4407, %v4684
        %v4759 = vsub.f32 %v4410, %v4687
        %v4760 = vsub.f32 %v4454, %v4690
        %v4761 = vsub.f32 %v4457, %v4693
        %v4762 = vsub.f32 %v4501, %v4696
        %v4763 = vsub.f32 %v4504, %v4699
        %v4764 = vmul.f32 %v4700, 1.442695
        %v4765 = vpow.pop %v4764
        %v4766 = vmul.f32 %v4701, 1.442695
        %v4767 = vpow.pop %v4766
        %v4768 = vmul.f32 %v4702, 1.442695
        %v4769 = vpow.pop %v4768
        %v4770 = vmul.f32 %v4703, 1.442695
        %v4771 = vpow.pop %v4770
        %v4772 = vmul.f32 %v4704, 1.442695
        %v4773 = vpow.pop %v4772
        %v4774 = vmul.f32 %v4705, 1.442695
        %v4775 = vpow.pop %v4774
        %v4776 = vmul.f32 %v4706, 1.442695
        %v4777 = vpow.pop %v4776
        %v4778 = vmul.f32 %v4707, 1.442695
        %v4779 = vpow.pop %v4778
        %v4780 = vmul.f32 %v4708, 1.442695
        %v4781 = vpow.pop %v4780
        %v4782 = vmul.f32 %v4709, 1.442695
        %v4783 = vpow.pop %v4782
        %v4784 = vmul.f32 %v4710, 1.442695
        %v4785 = vpow.pop %v4784
        %v4786 = vmul.f32 %v4711, 1.442695
        %v4787 = vpow.pop %v4786
        %v4788 = vmul.f32 %v4712, 1.442695
        %v4789 = vpow.pop %v4788
        %v4790 = vmul.f32 %v4713, 1.442695
        %v4791 = vpow.pop %v4790
        %v4792 = vmul.f32 %v4714, 1.442695
        %v4793 = vpow.pop %v4792
        %v4794 = vmul.f32 %v4715, 1.442695
        %v4795 = vpow.pop %v4794
        %v4796 = vmul.f32 %v4716, 1.442695
        %v4797 = vpow.pop %v4796
        %v4798 = vmul.f32 %v4717, 1.442695
        %v4799 = vpow.pop %v4798
        %v4800 = vmul.f32 %v4718, 1.442695
        %v4801 = vpow.pop %v4800
        %v4802 = vmul.f32 %v4719, 1.442695
        %v4803 = vpow.pop %v4802
        %v4804 = vmul.f32 %v4720, 1.442695
        %v4805 = vpow.pop %v4804
        %v4806 = vmul.f32 %v4721, 1.442695
        %v4807 = vpow.pop %v4806
        %v4808 = vmul.f32 %v4722, 1.442695
        %v4809 = vpow.pop %v4808
        %v4810 = vmul.f32 %v4723, 1.442695
        %v4811 = vpow.pop %v4810
        %v4812 = vmul.f32 %v4724, 1.442695
        %v4813 = vpow.pop %v4812
        %v4814 = vmul.f32 %v4725, 1.442695
        %v4815 = vpow.pop %v4814
        %v4816 = vmul.f32 %v4726, 1.442695
        %v4817 = vpow.pop %v4816
        %v4818 = vmul.f32 %v4727, 1.442695
        %v4819 = vpow.pop %v4818
        %v4820 = vmul.f32 %v4728, 1.442695
        %v4821 = vpow.pop %v4820
        %v4822 = vmul.f32 %v4729, 1.442695
        %v4823 = vpow.pop %v4822
        %v4824 = vmul.f32 %v4730, 1.442695
        %v4825 = vpow.pop %v4824
        %v4826 = vmul.f32 %v4731, 1.442695
        %v4827 = vpow.pop %v4826
        %v4828 = vmul.f32 %v4732, 1.442695
        %v4829 = vpow.pop %v4828
        %v4830 = vmul.f32 %v4733, 1.442695
        %v4831 = vpow.pop %v4830
        %v4832 = vmul.f32 %v4734, 1.442695
        %v4833 = vpow.pop %v4832
        %v4834 = vmul.f32 %v4735, 1.442695
        %v4835 = vpow.pop %v4834
        %v4836 = vmul.f32 %v4736, 1.442695
        %v4837 = vpow.pop %v4836
        %v4838 = vmul.f32 %v4737, 1.442695
        %v4839 = vpow.pop %v4838
        %v4840 = vmul.f32 %v4738, 1.442695
        %v4841 = vpow.pop %v4840
        %v4842 = vmul.f32 %v4739, 1.442695
        %v4843 = vpow.pop %v4842
        %v4844 = vmul.f32 %v4740, 1.442695
        %v4845 = vpow.pop %v4844
        %v4846 = vmul.f32 %v4741, 1.442695
        %v4847 = vpow.pop %v4846
        %v4848 = vmul.f32 %v4742, 1.442695
        %v4849 = vpow.pop %v4848
        %v4850 = vmul.f32 %v4743, 1.442695
        %v4851 = vpow.pop %v4850
        %v4852 = vmul.f32 %v4744, 1.442695
        %v4853 = vpow.pop %v4852
        %v4854 = vmul.f32 %v4745, 1.442695
        %v4855 = vpow.pop %v4854
        %v4856 = vmul.f32 %v4746, 1.442695
        %v4857 = vpow.pop %v4856
        %v4858 = vmul.f32 %v4747, 1.442695
        %v4859 = vpow.pop %v4858
        %v4860 = vmul.f32 %v4748, 1.442695
        %v4861 = vpow.pop %v4860
        %v4862 = vmul.f32 %v4749, 1.442695
        %v4863 = vpow.pop %v4862
        %v4864 = vmul.f32 %v4750, 1.442695
        %v4865 = vpow.pop %v4864
        %v4866 = vmul.f32 %v4751, 1.442695
        %v4867 = vpow.pop %v4866
        %v4868 = vmul.f32 %v4752, 1.442695
        %v4869 = vpow.pop %v4868
        %v4870 = vmul.f32 %v4753, 1.442695
        %v4871 = vpow.pop %v4870
        %v4872 = vmul.f32 %v4754, 1.442695
        %v4873 = vpow.pop %v4872
        %v4874 = vmul.f32 %v4755, 1.442695
        %v4875 = vpow.pop %v4874
        %v4876 = vmul.f32 %v4756, 1.442695
        %v4877 = vpow.pop %v4876
        %v4878 = vmul.f32 %v4757, 1.442695
        %v4879 = vpow.pop %v4878
        %v4880 = vmul.f32 %v4758, 1.442695
        %v4881 = vpow.pop %v4880
        %v4882 = vmul.f32 %v4759, 1.442695
        %v4883 = vpow.pop %v4882
        %v4884 = vmul.f32 %v4760, 1.442695
        %v4885 = vpow.pop %v4884
        %v4886 = vmul.f32 %v4761, 1.442695
        %v4887 = vpow.pop %v4886
        %v4888 = vmul.f32 %v4762, 1.442695
        %v4889 = vpow.pop %v4888
        %v4890 = vmul.f32 %v4763, 1.442695
        %v4891 = vpow.pop %v4890
        %v4892 = vsel %vm4507, %v4765, 0.0
        %4893 = vadd.xlane.f32.xlu0 %v4892
        %v4894 = vpop.xlane.xlu0 %4893
        %v4895 = vsel %vm4507, %v4767, 0.0
        %4896 = vadd.xlane.f32.xlu0 %v4895
        %v4897 = vpop.xlane.xlu0 %4896
        %v4898 = vsel %vm4507, %v4769, 0.0
        %4899 = vadd.xlane.f32.xlu0 %v4898
        %v4900 = vpop.xlane.xlu0 %4899
        %v4901 = vsel %vm4507, %v4771, 0.0
        %4902 = vadd.xlane.f32.xlu0 %v4901
        %v4903 = vpop.xlane.xlu0 %4902
        %v4904 = vsel %vm4507, %v4773, 0.0
        %4905 = vadd.xlane.f32.xlu0 %v4904
        %v4906 = vpop.xlane.xlu0 %4905
        %v4907 = vsel %vm4507, %v4775, 0.0
        %4908 = vadd.xlane.f32.xlu0 %v4907
        %v4909 = vpop.xlane.xlu0 %4908
        %v4910 = vsel %vm4507, %v4777, 0.0
        %4911 = vadd.xlane.f32.xlu0 %v4910
        %v4912 = vpop.xlane.xlu0 %4911
        %v4913 = vsel %vm4507, %v4779, 0.0
        %4914 = vadd.xlane.f32.xlu0 %v4913
        %v4915 = vpop.xlane.xlu0 %4914
        %v4916 = vsel %vm4507, %v4781, 0.0
        %4917 = vadd.xlane.f32.xlu0 %v4916
        %v4918 = vpop.xlane.xlu0 %4917
        %v4919 = vsel %vm4507, %v4783, 0.0
        %4920 = vadd.xlane.f32.xlu0 %v4919
        %v4921 = vpop.xlane.xlu0 %4920
        %v4922 = vsel %vm4507, %v4785, 0.0
        %4923 = vadd.xlane.f32.xlu0 %v4922
        %v4924 = vpop.xlane.xlu0 %4923
        %v4925 = vsel %vm4507, %v4787, 0.0
        %4926 = vadd.xlane.f32.xlu0 %v4925
        %v4927 = vpop.xlane.xlu0 %4926
        %v4928 = vsel %vm4507, %v4789, 0.0
        %4929 = vadd.xlane.f32.xlu0 %v4928
        %v4930 = vpop.xlane.xlu0 %4929
        %v4931 = vsel %vm4507, %v4791, 0.0
        %4932 = vadd.xlane.f32.xlu0 %v4931
        %v4933 = vpop.xlane.xlu0 %4932
        %v4934 = vsel %vm4507, %v4793, 0.0
        %4935 = vadd.xlane.f32.xlu0 %v4934
        %v4936 = vpop.xlane.xlu0 %4935
        %v4937 = vsel %vm4507, %v4795, 0.0
        %4938 = vadd.xlane.f32.xlu0 %v4937
        %v4939 = vpop.xlane.xlu0 %4938
        %v4940 = vsel %vm4507, %v4797, 0.0
        %4941 = vadd.xlane.f32.xlu0 %v4940
        %v4942 = vpop.xlane.xlu0 %4941
        %v4943 = vsel %vm4507, %v4799, 0.0
        %4944 = vadd.xlane.f32.xlu0 %v4943
        %v4945 = vpop.xlane.xlu0 %4944
        %v4946 = vsel %vm4507, %v4801, 0.0
        %4947 = vadd.xlane.f32.xlu0 %v4946
        %v4948 = vpop.xlane.xlu0 %4947
        %v4949 = vsel %vm4507, %v4803, 0.0
        %4950 = vadd.xlane.f32.xlu0 %v4949
        %v4951 = vpop.xlane.xlu0 %4950
        %v4952 = vsel %vm4507, %v4805, 0.0
        %4953 = vadd.xlane.f32.xlu0 %v4952
        %v4954 = vpop.xlane.xlu0 %4953
        %v4955 = vsel %vm4507, %v4807, 0.0
        %4956 = vadd.xlane.f32.xlu0 %v4955
        %v4957 = vpop.xlane.xlu0 %4956
        %v4958 = vsel %vm4507, %v4809, 0.0
        %4959 = vadd.xlane.f32.xlu0 %v4958
        %v4960 = vpop.xlane.xlu0 %4959
        %v4961 = vsel %vm4507, %v4811, 0.0
        %4962 = vadd.xlane.f32.xlu0 %v4961
        %v4963 = vpop.xlane.xlu0 %4962
        %v4964 = vsel %vm4507, %v4813, 0.0
        %4965 = vadd.xlane.f32.xlu0 %v4964
        %v4966 = vpop.xlane.xlu0 %4965
        %v4967 = vsel %vm4507, %v4815, 0.0
        %4968 = vadd.xlane.f32.xlu0 %v4967
        %v4969 = vpop.xlane.xlu0 %4968
        %v4970 = vsel %vm4507, %v4817, 0.0
        %4971 = vadd.xlane.f32.xlu0 %v4970
        %v4972 = vpop.xlane.xlu0 %4971
        %v4973 = vsel %vm4507, %v4819, 0.0
        %4974 = vadd.xlane.f32.xlu0 %v4973
        %v4975 = vpop.xlane.xlu0 %4974
        %v4976 = vsel %vm4507, %v4821, 0.0
        %4977 = vadd.xlane.f32.xlu0 %v4976
        %v4978 = vpop.xlane.xlu0 %4977
        %v4979 = vsel %vm4507, %v4823, 0.0
        %4980 = vadd.xlane.f32.xlu0 %v4979
        %v4981 = vpop.xlane.xlu0 %4980
        %v4982 = vsel %vm4507, %v4825, 0.0
        %4983 = vadd.xlane.f32.xlu0 %v4982
        %v4984 = vpop.xlane.xlu0 %4983
        %v4985 = vsel %vm4507, %v4827, 0.0
        %4986 = vadd.xlane.f32.xlu0 %v4985
        %v4987 = vpop.xlane.xlu0 %4986
        %v4988 = vsel %vm4507, %v4829, 0.0
        %4989 = vadd.xlane.f32.xlu0 %v4988
        %v4990 = vpop.xlane.xlu0 %4989
        %v4991 = vsel %vm4507, %v4831, 0.0
        %4992 = vadd.xlane.f32.xlu0 %v4991
        %v4993 = vpop.xlane.xlu0 %4992
        %v4994 = vsel %vm4507, %v4833, 0.0
        %4995 = vadd.xlane.f32.xlu0 %v4994
        %v4996 = vpop.xlane.xlu0 %4995
        %v4997 = vsel %vm4507, %v4835, 0.0
        %4998 = vadd.xlane.f32.xlu0 %v4997
        %v4999 = vpop.xlane.xlu0 %4998
        %v5000 = vsel %vm4507, %v4837, 0.0
        %5001 = vadd.xlane.f32.xlu0 %v5000
        %v5002 = vpop.xlane.xlu0 %5001
        %v5003 = vsel %vm4507, %v4839, 0.0
        %5004 = vadd.xlane.f32.xlu0 %v5003
        %v5005 = vpop.xlane.xlu0 %5004
        %v5006 = vsel %vm4507, %v4841, 0.0
        %5007 = vadd.xlane.f32.xlu0 %v5006
        %v5008 = vpop.xlane.xlu0 %5007
        %v5009 = vsel %vm4507, %v4843, 0.0
        %5010 = vadd.xlane.f32.xlu0 %v5009
        %v5011 = vpop.xlane.xlu0 %5010
        %v5012 = vsel %vm4507, %v4845, 0.0
        %5013 = vadd.xlane.f32.xlu0 %v5012
        %v5014 = vpop.xlane.xlu0 %5013
        %v5015 = vsel %vm4507, %v4847, 0.0
        %5016 = vadd.xlane.f32.xlu0 %v5015
        %v5017 = vpop.xlane.xlu0 %5016
        %v5018 = vsel %vm4507, %v4849, 0.0
        %5019 = vadd.xlane.f32.xlu0 %v5018
        %v5020 = vpop.xlane.xlu0 %5019
        %v5021 = vsel %vm4507, %v4851, 0.0
        %5022 = vadd.xlane.f32.xlu0 %v5021
        %v5023 = vpop.xlane.xlu0 %5022
        %v5024 = vsel %vm4507, %v4853, 0.0
        %5025 = vadd.xlane.f32.xlu0 %v5024
        %v5026 = vpop.xlane.xlu0 %5025
        %v5027 = vsel %vm4507, %v4855, 0.0
        %5028 = vadd.xlane.f32.xlu0 %v5027
        %v5029 = vpop.xlane.xlu0 %5028
        %v5030 = vsel %vm4507, %v4857, 0.0
        %5031 = vadd.xlane.f32.xlu0 %v5030
        %v5032 = vpop.xlane.xlu0 %5031
        %v5033 = vsel %vm4507, %v4859, 0.0
        %5034 = vadd.xlane.f32.xlu0 %v5033
        %v5035 = vpop.xlane.xlu0 %5034
        %v5036 = vsel %vm4507, %v4861, 0.0
        %5037 = vadd.xlane.f32.xlu0 %v5036
        %v5038 = vpop.xlane.xlu0 %5037
        %v5039 = vsel %vm4507, %v4863, 0.0
        %5040 = vadd.xlane.f32.xlu0 %v5039
        %v5041 = vpop.xlane.xlu0 %5040
        %v5042 = vsel %vm4507, %v4865, 0.0
        %5043 = vadd.xlane.f32.xlu0 %v5042
        %v5044 = vpop.xlane.xlu0 %5043
        %v5045 = vsel %vm4507, %v4867, 0.0
        %5046 = vadd.xlane.f32.xlu0 %v5045
        %v5047 = vpop.xlane.xlu0 %5046
        %v5048 = vsel %vm4507, %v4869, 0.0
        %5049 = vadd.xlane.f32.xlu0 %v5048
        %v5050 = vpop.xlane.xlu0 %5049
        %v5051 = vsel %vm4507, %v4871, 0.0
        %5052 = vadd.xlane.f32.xlu0 %v5051
        %v5053 = vpop.xlane.xlu0 %5052
        %v5054 = vsel %vm4507, %v4873, 0.0
        %5055 = vadd.xlane.f32.xlu0 %v5054
        %v5056 = vpop.xlane.xlu0 %5055
        %v5057 = vsel %vm4507, %v4875, 0.0
        %5058 = vadd.xlane.f32.xlu0 %v5057
        %v5059 = vpop.xlane.xlu0 %5058
        %v5060 = vsel %vm4507, %v4877, 0.0
        %5061 = vadd.xlane.f32.xlu0 %v5060
        %v5062 = vpop.xlane.xlu0 %5061
        %v5063 = vsel %vm4507, %v4879, 0.0
        %5064 = vadd.xlane.f32.xlu0 %v5063
        %v5065 = vpop.xlane.xlu0 %5064
        %v5066 = vsel %vm4507, %v4881, 0.0
        %5067 = vadd.xlane.f32.xlu0 %v5066
        %v5068 = vpop.xlane.xlu0 %5067
        %v5069 = vsel %vm4507, %v4883, 0.0
        %5070 = vadd.xlane.f32.xlu0 %v5069
        %v5071 = vpop.xlane.xlu0 %5070
        %v5072 = vsel %vm4507, %v4885, 0.0
        %5073 = vadd.xlane.f32.xlu0 %v5072
        %v5074 = vpop.xlane.xlu0 %5073
        %v5075 = vsel %vm4507, %v4887, 0.0
        %5076 = vadd.xlane.f32.xlu0 %v5075
        %v5077 = vpop.xlane.xlu0 %5076
        %v5078 = vsel %vm4507, %v4889, 0.0
        %5079 = vadd.xlane.f32.xlu0 %v5078
        %v5080 = vpop.xlane.xlu0 %5079
        %v5081 = vsel %vm4507, %v4891, 0.0
        %5082 = vadd.xlane.f32.xlu0 %v5081
        %v5083 = vpop.xlane.xlu0 %5082
        %v5084 = vrcp.pop %v4894
        %v5085 = vrcp.pop %v4897
        %v5086 = vrcp.pop %v4900
        %v5087 = vrcp.pop %v4903
        %v5088 = vrcp.pop %v4906
        %v5089 = vrcp.pop %v4909
        %v5090 = vrcp.pop %v4912
        %v5091 = vrcp.pop %v4915
        %v5092 = vrcp.pop %v4918
        %v5093 = vrcp.pop %v4921
        %v5094 = vrcp.pop %v4924
        %v5095 = vrcp.pop %v4927
        %v5096 = vrcp.pop %v4930
        %v5097 = vrcp.pop %v4933
        %v5098 = vrcp.pop %v4936
        %v5099 = vrcp.pop %v4939
        %v5100 = vrcp.pop %v4942
        %v5101 = vrcp.pop %v4945
        %v5102 = vrcp.pop %v4948
        %v5103 = vrcp.pop %v4951
        %v5104 = vrcp.pop %v4954
        %v5105 = vrcp.pop %v4957
        %v5106 = vrcp.pop %v4960
        %v5107 = vrcp.pop %v4963
        %v5108 = vrcp.pop %v4966
        %v5109 = vrcp.pop %v4969
        %v5110 = vrcp.pop %v4972
        %v5111 = vrcp.pop %v4975
        %v5112 = vrcp.pop %v4978
        %v5113 = vrcp.pop %v4981
        %v5114 = vrcp.pop %v4984
        %v5115 = vrcp.pop %v4987
        %v5116 = vrcp.pop %v4990
        %v5117 = vrcp.pop %v4993
        %v5118 = vrcp.pop %v4996
        %v5119 = vrcp.pop %v4999
        %v5120 = vrcp.pop %v5002
        %v5121 = vrcp.pop %v5005
        %v5122 = vrcp.pop %v5008
        %v5123 = vrcp.pop %v5011
        %v5124 = vrcp.pop %v5014
        %v5125 = vrcp.pop %v5017
        %v5126 = vrcp.pop %v5020
        %v5127 = vrcp.pop %v5023
        %v5128 = vrcp.pop %v5026
        %v5129 = vrcp.pop %v5029
        %v5130 = vrcp.pop %v5032
        %v5131 = vrcp.pop %v5035
        %v5132 = vrcp.pop %v5038
        %v5133 = vrcp.pop %v5041
        %v5134 = vrcp.pop %v5044
        %v5135 = vrcp.pop %v5047
        %v5136 = vrcp.pop %v5050
        %v5137 = vrcp.pop %v5053
        %v5138 = vrcp.pop %v5056
        %v5139 = vrcp.pop %v5059
        %v5140 = vrcp.pop %v5062
        %v5141 = vrcp.pop %v5065
        %v5142 = vrcp.pop %v5068
        %v5143 = vrcp.pop %v5071
        %v5144 = vrcp.pop %v5074
        %v5145 = vrcp.pop %v5077
        %v5146 = vrcp.pop %v5080
        %v5147 = vrcp.pop %v5083
        %v5148 = vmul.f32 %v4765, %v5084
        %v5149 = vmul.f32 %v4767, %v5085
        %v5150 = vmul.f32 %v4769, %v5086
        %v5151 = vmul.f32 %v4771, %v5087
        %v5152 = vmul.f32 %v4773, %v5088
        %v5153 = vmul.f32 %v4775, %v5089
        %v5154 = vmul.f32 %v4777, %v5090
        %v5155 = vmul.f32 %v4779, %v5091
        %v5156 = vmul.f32 %v4781, %v5092
        %v5157 = vmul.f32 %v4783, %v5093
        %v5158 = vmul.f32 %v4785, %v5094
        %v5159 = vmul.f32 %v4787, %v5095
        %v5160 = vmul.f32 %v4789, %v5096
        %v5161 = vmul.f32 %v4791, %v5097
        %v5162 = vmul.f32 %v4793, %v5098
        %v5163 = vmul.f32 %v4795, %v5099
        %v5164 = vmul.f32 %v4797, %v5100
        %v5165 = vmul.f32 %v4799, %v5101
        %v5166 = vmul.f32 %v4801, %v5102
        %v5167 = vmul.f32 %v4803, %v5103
        %v5168 = vmul.f32 %v4805, %v5104
        %v5169 = vmul.f32 %v4807, %v5105
        %v5170 = vmul.f32 %v4809, %v5106
        %v5171 = vmul.f32 %v4811, %v5107
        %v5172 = vmul.f32 %v4813, %v5108
        %v5173 = vmul.f32 %v4815, %v5109
        %v5174 = vmul.f32 %v4817, %v5110
        %v5175 = vmul.f32 %v4819, %v5111
        %v5176 = vmul.f32 %v4821, %v5112
        %v5177 = vmul.f32 %v4823, %v5113
        %v5178 = vmul.f32 %v4825, %v5114
        %v5179 = vmul.f32 %v4827, %v5115
        %v5180 = vmul.f32 %v4829, %v5116
        %v5181 = vmul.f32 %v4831, %v5117
        %v5182 = vmul.f32 %v4833, %v5118
        %v5183 = vmul.f32 %v4835, %v5119
        %v5184 = vmul.f32 %v4837, %v5120
        %v5185 = vmul.f32 %v4839, %v5121
        %v5186 = vmul.f32 %v4841, %v5122
        %v5187 = vmul.f32 %v4843, %v5123
        %v5188 = vmul.f32 %v4845, %v5124
        %v5189 = vmul.f32 %v4847, %v5125
        %v5190 = vmul.f32 %v4849, %v5126
        %v5191 = vmul.f32 %v4851, %v5127
        %v5192 = vmul.f32 %v4853, %v5128
        %v5193 = vmul.f32 %v4855, %v5129
        %v5194 = vmul.f32 %v4857, %v5130
        %v5195 = vmul.f32 %v4859, %v5131
        %v5196 = vmul.f32 %v4861, %v5132
        %v5197 = vmul.f32 %v4863, %v5133
        %v5198 = vmul.f32 %v4865, %v5134
        %v5199 = vmul.f32 %v4867, %v5135
        %v5200 = vmul.f32 %v4869, %v5136
        %v5201 = vmul.f32 %v4871, %v5137
        %v5202 = vmul.f32 %v4873, %v5138
        %v5203 = vmul.f32 %v4875, %v5139
        %v5204 = vmul.f32 %v4877, %v5140
        %v5205 = vmul.f32 %v4879, %v5141
        %v5206 = vmul.f32 %v4881, %v5142
        %v5207 = vmul.f32 %v4883, %v5143
        %v5208 = vmul.f32 %v4885, %v5144
        %v5209 = vmul.f32 %v4887, %v5145
        %v5210 = vmul.f32 %v4889, %v5146
        %v5211 = vmul.f32 %v4891, %v5147
        %v5212 = vpack.c.bf16 %v5149, %v5148
        %v5213 = vpack.c.bf16 %v5151, %v5150
        %v5214 = vpack.c.bf16 %v5153, %v5152
        %v5215 = vpack.c.bf16 %v5155, %v5154
        %v5216 = vpack.c.bf16 %v5157, %v5156
        %v5217 = vpack.c.bf16 %v5159, %v5158
        %v5218 = vpack.c.bf16 %v5161, %v5160
        %v5219 = vpack.c.bf16 %v5163, %v5162
        %v5220 = vpack.c.bf16 %v5165, %v5164
        %v5221 = vpack.c.bf16 %v5167, %v5166
        %v5222 = vpack.c.bf16 %v5169, %v5168
        %v5223 = vpack.c.bf16 %v5171, %v5170
        %v5224 = vpack.c.bf16 %v5173, %v5172
        %v5225 = vpack.c.bf16 %v5175, %v5174
        %v5226 = vpack.c.bf16 %v5177, %v5176
        %v5227 = vpack.c.bf16 %v5179, %v5178
        %v5228 = vpack.c.bf16 %v5181, %v5180
        %v5229 = vpack.c.bf16 %v5183, %v5182
        %v5230 = vpack.c.bf16 %v5185, %v5184
        %v5231 = vpack.c.bf16 %v5187, %v5186
        %v5232 = vpack.c.bf16 %v5189, %v5188
        %v5233 = vpack.c.bf16 %v5191, %v5190
        %v5234 = vpack.c.bf16 %v5193, %v5192
        %v5235 = vpack.c.bf16 %v5195, %v5194
        %v5236 = vpack.c.bf16 %v5197, %v5196
        %v5237 = vpack.c.bf16 %v5199, %v5198
        %v5238 = vpack.c.bf16 %v5201, %v5200
        %v5239 = vpack.c.bf16 %v5203, %v5202
        %v5240 = vpack.c.bf16 %v5205, %v5204
        %v5241 = vpack.c.bf16 %v5207, %v5206
        %v5242 = vpack.c.bf16 %v5209, %v5208
        %v5243 = vpack.c.bf16 %v5211, %v5210
        %v5245 = vsel %vm4507, %v5212, 0
        %5247 = vmatprep.subr.bf16.mxu0 0
        %5248 = vmatpush1.bf16.msra.mxu0 0
        %5249 = vmatprep.subr.bf16.mxu0 0
        %5250 = vmatpush1.bf16.msra.mxu0 0
        %5251 = vmatprep.subr.bf16.mxu0 0
        %5252 = vmatpush1.bf16.msra.mxu0 0
        %5253 = vmatprep.subr.bf16.mxu0 0
        %5254 = vmatpush1.bf16.msra.mxu0 0
        %5255 = vmatprep.subr.bf16.mxu0 0
        %5256 = vmatpush1.bf16.msra.mxu0 0
        %5257 = vmatprep.subr.bf16.mxu0 0
        %5258 = vmatpush1.bf16.msra.mxu0 0
        %5259 = vmatprep.subr.bf16.mxu0 0
        %5260 = vmatpush1.bf16.msra.mxu0 0
        %5261 = vmatprep.subr.bf16.mxu0 0
        %5262 = vmatpush1.bf16.msra.mxu0 %v2970
        %5263 = vmatprep.subr.bf16.mxu0 0
        %5264 = vmatpush2.bf16.msra.mxu0 0
        %5265 = vmatprep.subr.bf16.mxu0 0
        %5266 = vmatpush2.bf16.msra.mxu0 0
        %5267 = vmatprep.subr.bf16.mxu0 0
        %5268 = vmatpush2.bf16.msra.mxu0 0
        %5269 = vmatprep.subr.bf16.mxu0 0
        %5270 = vmatpush2.bf16.msra.mxu0 0
        %5271 = vmatprep.subr.bf16.mxu0 0
        %5272 = vmatpush2.bf16.msra.mxu0 0
        %5273 = vmatprep.subr.bf16.mxu0 0
        %5274 = vmatpush2.bf16.msra.mxu0 0
        %5275 = vmatprep.subr.bf16.mxu0 0
        %5276 = vmatpush2.bf16.msra.mxu0 0
        %5277 = vmatprep.subr.bf16.mxu0 0
        %5278 = vmatpush2.bf16.msra.mxu0 0
        %5279 = vmatprep.mubr.bf16.mxu0 0
        %5280 = vmatmul.mubr.bf16.gmra.mxu0 %v5245
        %v5281 = vpop.f32.mrf.mxu0
        %v5282 = vadd.f32 0.0, %v5281
        %v5283 = vpop.f32.mrf.mxu0
        %v5284 = vpop.f32.mrf.mxu0
        %v5285 = vadd.f32 0.0, %v5284
        %v5286 = vpop.f32.mrf.mxu0
        %5287 = vdwg.mxu0
        %v5289 = vsel %vm4507, %v5213, 0
        %5291 = vmatprep.subr.bf16.mxu0 0
        %5292 = vmatpush1.bf16.msra.mxu0 0
        %5293 = vmatprep.subr.bf16.mxu0 0
        %5294 = vmatpush1.bf16.msra.mxu0 0
        %5295 = vmatprep.subr.bf16.mxu0 0
        %5296 = vmatpush1.bf16.msra.mxu0 0
        %5297 = vmatprep.subr.bf16.mxu0 0
        %5298 = vmatpush1.bf16.msra.mxu0 0
        %5299 = vmatprep.subr.bf16.mxu0 0
        %5300 = vmatpush1.bf16.msra.mxu0 0
        %5301 = vmatprep.subr.bf16.mxu0 0
        %5302 = vmatpush1.bf16.msra.mxu0 0
        %5303 = vmatprep.subr.bf16.mxu0 0
        %5304 = vmatpush1.bf16.msra.mxu0 0
        %5305 = vmatprep.subr.bf16.mxu0 0
        %5306 = vmatpush1.bf16.msra.mxu0 %v2971
        %5307 = vmatprep.subr.bf16.mxu0 0
        %5308 = vmatpush2.bf16.msra.mxu0 0
        %5309 = vmatprep.subr.bf16.mxu0 0
        %5310 = vmatpush2.bf16.msra.mxu0 0
        %5311 = vmatprep.subr.bf16.mxu0 0
        %5312 = vmatpush2.bf16.msra.mxu0 0
        %5313 = vmatprep.subr.bf16.mxu0 0
        %5314 = vmatpush2.bf16.msra.mxu0 0
        %5315 = vmatprep.subr.bf16.mxu0 0
        %5316 = vmatpush2.bf16.msra.mxu0 0
        %5317 = vmatprep.subr.bf16.mxu0 0
        %5318 = vmatpush2.bf16.msra.mxu0 0
        %5319 = vmatprep.subr.bf16.mxu0 0
        %5320 = vmatpush2.bf16.msra.mxu0 0
        %5321 = vmatprep.subr.bf16.mxu0 0
        %5322 = vmatpush2.bf16.msra.mxu0 0
        %5323 = vmatprep.mubr.bf16.mxu0 0
        %5324 = vmatmul.mubr.bf16.gmra.mxu0 %v5289
        %v5325 = vpop.f32.mrf.mxu0
        %v5326 = vadd.f32 0.0, %v5325
        %v5327 = vpop.f32.mrf.mxu0
        %v5328 = vpop.f32.mrf.mxu0
        %v5329 = vadd.f32 0.0, %v5328
        %v5330 = vpop.f32.mrf.mxu0
        %5331 = vdwg.mxu0
        %v5333 = vsel %vm4507, %v5214, 0
        %5335 = vmatprep.subr.bf16.mxu0 0
        %5336 = vmatpush1.bf16.msra.mxu0 0
        %5337 = vmatprep.subr.bf16.mxu0 0
        %5338 = vmatpush1.bf16.msra.mxu0 0
        %5339 = vmatprep.subr.bf16.mxu0 0
        %5340 = vmatpush1.bf16.msra.mxu0 0
        %5341 = vmatprep.subr.bf16.mxu0 0
        %5342 = vmatpush1.bf16.msra.mxu0 0
        %5343 = vmatprep.subr.bf16.mxu0 0
        %5344 = vmatpush1.bf16.msra.mxu0 0
        %5345 = vmatprep.subr.bf16.mxu0 0
        %5346 = vmatpush1.bf16.msra.mxu0 0
        %5347 = vmatprep.subr.bf16.mxu0 0
        %5348 = vmatpush1.bf16.msra.mxu0 0
        %5349 = vmatprep.subr.bf16.mxu0 0
        %5350 = vmatpush1.bf16.msra.mxu0 %v2972
        %5351 = vmatprep.subr.bf16.mxu0 0
        %5352 = vmatpush2.bf16.msra.mxu0 0
        %5353 = vmatprep.subr.bf16.mxu0 0
        %5354 = vmatpush2.bf16.msra.mxu0 0
        %5355 = vmatprep.subr.bf16.mxu0 0
        %5356 = vmatpush2.bf16.msra.mxu0 0
        %5357 = vmatprep.subr.bf16.mxu0 0
        %5358 = vmatpush2.bf16.msra.mxu0 0
        %5359 = vmatprep.subr.bf16.mxu0 0
        %5360 = vmatpush2.bf16.msra.mxu0 0
        %5361 = vmatprep.subr.bf16.mxu0 0
        %5362 = vmatpush2.bf16.msra.mxu0 0
        %5363 = vmatprep.subr.bf16.mxu0 0
        %5364 = vmatpush2.bf16.msra.mxu0 0
        %5365 = vmatprep.subr.bf16.mxu0 0
        %5366 = vmatpush2.bf16.msra.mxu0 0
        %5367 = vmatprep.mubr.bf16.mxu0 0
        %5368 = vmatmul.mubr.bf16.gmra.mxu0 %v5333
        %v5369 = vpop.f32.mrf.mxu0
        %v5370 = vadd.f32 0.0, %v5369
        %v5371 = vpop.f32.mrf.mxu0
        %v5372 = vpop.f32.mrf.mxu0
        %v5373 = vadd.f32 0.0, %v5372
        %v5374 = vpop.f32.mrf.mxu0
        %5375 = vdwg.mxu0
        %v5377 = vsel %vm4507, %v5215, 0
        %5379 = vmatprep.subr.bf16.mxu0 0
        %5380 = vmatpush1.bf16.msra.mxu0 0
        %5381 = vmatprep.subr.bf16.mxu0 0
        %5382 = vmatpush1.bf16.msra.mxu0 0
        %5383 = vmatprep.subr.bf16.mxu0 0
        %5384 = vmatpush1.bf16.msra.mxu0 0
        %5385 = vmatprep.subr.bf16.mxu0 0
        %5386 = vmatpush1.bf16.msra.mxu0 0
        %5387 = vmatprep.subr.bf16.mxu0 0
        %5388 = vmatpush1.bf16.msra.mxu0 0
        %5389 = vmatprep.subr.bf16.mxu0 0
        %5390 = vmatpush1.bf16.msra.mxu0 0
        %5391 = vmatprep.subr.bf16.mxu0 0
        %5392 = vmatpush1.bf16.msra.mxu0 0
        %5393 = vmatprep.subr.bf16.mxu0 0
        %5394 = vmatpush1.bf16.msra.mxu0 %v2973
        %5395 = vmatprep.subr.bf16.mxu0 0
        %5396 = vmatpush2.bf16.msra.mxu0 0
        %5397 = vmatprep.subr.bf16.mxu0 0
        %5398 = vmatpush2.bf16.msra.mxu0 0
        %5399 = vmatprep.subr.bf16.mxu0 0
        %5400 = vmatpush2.bf16.msra.mxu0 0
        %5401 = vmatprep.subr.bf16.mxu0 0
        %5402 = vmatpush2.bf16.msra.mxu0 0
        %5403 = vmatprep.subr.bf16.mxu0 0
        %5404 = vmatpush2.bf16.msra.mxu0 0
        %5405 = vmatprep.subr.bf16.mxu0 0
        %5406 = vmatpush2.bf16.msra.mxu0 0
        %5407 = vmatprep.subr.bf16.mxu0 0
        %5408 = vmatpush2.bf16.msra.mxu0 0
        %5409 = vmatprep.subr.bf16.mxu0 0
        %5410 = vmatpush2.bf16.msra.mxu0 0
        %5411 = vmatprep.mubr.bf16.mxu0 0
        %5412 = vmatmul.mubr.bf16.gmra.mxu0 %v5377
        %v5413 = vpop.f32.mrf.mxu0
        %v5414 = vadd.f32 0.0, %v5413
        %v5415 = vpop.f32.mrf.mxu0
        %v5416 = vpop.f32.mrf.mxu0
        %v5417 = vadd.f32 0.0, %v5416
        %v5418 = vpop.f32.mrf.mxu0
        %5419 = vdwg.mxu0
        %v5421 = vsel %vm4507, %v5216, 0
        %5423 = vmatprep.subr.bf16.mxu0 0
        %5424 = vmatpush1.bf16.msra.mxu0 0
        %5425 = vmatprep.subr.bf16.mxu0 0
        %5426 = vmatpush1.bf16.msra.mxu0 0
        %5427 = vmatprep.subr.bf16.mxu0 0
        %5428 = vmatpush1.bf16.msra.mxu0 0
        %5429 = vmatprep.subr.bf16.mxu0 0
        %5430 = vmatpush1.bf16.msra.mxu0 0
        %5431 = vmatprep.subr.bf16.mxu0 0
        %5432 = vmatpush1.bf16.msra.mxu0 0
        %5433 = vmatprep.subr.bf16.mxu0 0
        %5434 = vmatpush1.bf16.msra.mxu0 0
        %5435 = vmatprep.subr.bf16.mxu0 0
        %5436 = vmatpush1.bf16.msra.mxu0 0
        %5437 = vmatprep.subr.bf16.mxu0 0
        %5438 = vmatpush1.bf16.msra.mxu0 %v2974
        %5439 = vmatprep.subr.bf16.mxu0 0
        %5440 = vmatpush2.bf16.msra.mxu0 0
        %5441 = vmatprep.subr.bf16.mxu0 0
        %5442 = vmatpush2.bf16.msra.mxu0 0
        %5443 = vmatprep.subr.bf16.mxu0 0
        %5444 = vmatpush2.bf16.msra.mxu0 0
        %5445 = vmatprep.subr.bf16.mxu0 0
        %5446 = vmatpush2.bf16.msra.mxu0 0
        %5447 = vmatprep.subr.bf16.mxu0 0
        %5448 = vmatpush2.bf16.msra.mxu0 0
        %5449 = vmatprep.subr.bf16.mxu0 0
        %5450 = vmatpush2.bf16.msra.mxu0 0
        %5451 = vmatprep.subr.bf16.mxu0 0
        %5452 = vmatpush2.bf16.msra.mxu0 0
        %5453 = vmatprep.subr.bf16.mxu0 0
        %5454 = vmatpush2.bf16.msra.mxu0 0
        %5455 = vmatprep.mubr.bf16.mxu0 0
        %5456 = vmatmul.mubr.bf16.gmra.mxu0 %v5421
        %v5457 = vpop.f32.mrf.mxu0
        %v5458 = vadd.f32 0.0, %v5457
        %v5459 = vpop.f32.mrf.mxu0
        %v5460 = vpop.f32.mrf.mxu0
        %v5461 = vadd.f32 0.0, %v5460
        %v5462 = vpop.f32.mrf.mxu0
        %5463 = vdwg.mxu0
        %v5465 = vsel %vm4507, %v5217, 0
        %5467 = vmatprep.subr.bf16.mxu0 0
        %5468 = vmatpush1.bf16.msra.mxu0 0
        %5469 = vmatprep.subr.bf16.mxu0 0
        %5470 = vmatpush1.bf16.msra.mxu0 0
        %5471 = vmatprep.subr.bf16.mxu0 0
        %5472 = vmatpush1.bf16.msra.mxu0 0
        %5473 = vmatprep.subr.bf16.mxu0 0
        %5474 = vmatpush1.bf16.msra.mxu0 0
        %5475 = vmatprep.subr.bf16.mxu0 0
        %5476 = vmatpush1.bf16.msra.mxu0 0
        %5477 = vmatprep.subr.bf16.mxu0 0
        %5478 = vmatpush1.bf16.msra.mxu0 0
        %5479 = vmatprep.subr.bf16.mxu0 0
        %5480 = vmatpush1.bf16.msra.mxu0 0
        %5481 = vmatprep.subr.bf16.mxu0 0
        %5482 = vmatpush1.bf16.msra.mxu0 %v2975
        %5483 = vmatprep.subr.bf16.mxu0 0
        %5484 = vmatpush2.bf16.msra.mxu0 0
        %5485 = vmatprep.subr.bf16.mxu0 0
        %5486 = vmatpush2.bf16.msra.mxu0 0
        %5487 = vmatprep.subr.bf16.mxu0 0
        %5488 = vmatpush2.bf16.msra.mxu0 0
        %5489 = vmatprep.subr.bf16.mxu0 0
        %5490 = vmatpush2.bf16.msra.mxu0 0
        %5491 = vmatprep.subr.bf16.mxu0 0
        %5492 = vmatpush2.bf16.msra.mxu0 0
        %5493 = vmatprep.subr.bf16.mxu0 0
        %5494 = vmatpush2.bf16.msra.mxu0 0
        %5495 = vmatprep.subr.bf16.mxu0 0
        %5496 = vmatpush2.bf16.msra.mxu0 0
        %5497 = vmatprep.subr.bf16.mxu0 0
        %5498 = vmatpush2.bf16.msra.mxu0 0
        %5499 = vmatprep.mubr.bf16.mxu0 0
        %5500 = vmatmul.mubr.bf16.gmra.mxu0 %v5465
        %v5501 = vpop.f32.mrf.mxu0
        %v5502 = vadd.f32 0.0, %v5501
        %v5503 = vpop.f32.mrf.mxu0
        %v5504 = vpop.f32.mrf.mxu0
        %v5505 = vadd.f32 0.0, %v5504
        %v5506 = vpop.f32.mrf.mxu0
        %5507 = vdwg.mxu0
        %v5509 = vsel %vm4507, %v5218, 0
        %5511 = vmatprep.subr.bf16.mxu0 0
        %5512 = vmatpush1.bf16.msra.mxu0 0
        %5513 = vmatprep.subr.bf16.mxu0 0
        %5514 = vmatpush1.bf16.msra.mxu0 0
        %5515 = vmatprep.subr.bf16.mxu0 0
        %5516 = vmatpush1.bf16.msra.mxu0 0
        %5517 = vmatprep.subr.bf16.mxu0 0
        %5518 = vmatpush1.bf16.msra.mxu0 0
        %5519 = vmatprep.subr.bf16.mxu0 0
        %5520 = vmatpush1.bf16.msra.mxu0 0
        %5521 = vmatprep.subr.bf16.mxu0 0
        %5522 = vmatpush1.bf16.msra.mxu0 0
        %5523 = vmatprep.subr.bf16.mxu0 0
        %5524 = vmatpush1.bf16.msra.mxu0 0
        %5525 = vmatprep.subr.bf16.mxu0 0
        %5526 = vmatpush1.bf16.msra.mxu0 %v2976
        %5527 = vmatprep.subr.bf16.mxu0 0
        %5528 = vmatpush2.bf16.msra.mxu0 0
        %5529 = vmatprep.subr.bf16.mxu0 0
        %5530 = vmatpush2.bf16.msra.mxu0 0
        %5531 = vmatprep.subr.bf16.mxu0 0
        %5532 = vmatpush2.bf16.msra.mxu0 0
        %5533 = vmatprep.subr.bf16.mxu0 0
        %5534 = vmatpush2.bf16.msra.mxu0 0
        %5535 = vmatprep.subr.bf16.mxu0 0
        %5536 = vmatpush2.bf16.msra.mxu0 0
        %5537 = vmatprep.subr.bf16.mxu0 0
        %5538 = vmatpush2.bf16.msra.mxu0 0
        %5539 = vmatprep.subr.bf16.mxu0 0
        %5540 = vmatpush2.bf16.msra.mxu0 0
        %5541 = vmatprep.subr.bf16.mxu0 0
        %5542 = vmatpush2.bf16.msra.mxu0 0
        %5543 = vmatprep.mubr.bf16.mxu0 0
        %5544 = vmatmul.mubr.bf16.gmra.mxu0 %v5509
        %v5545 = vpop.f32.mrf.mxu0
        %v5546 = vadd.f32 0.0, %v5545
        %v5547 = vpop.f32.mrf.mxu0
        %v5548 = vpop.f32.mrf.mxu0
        %v5549 = vadd.f32 0.0, %v5548
        %v5550 = vpop.f32.mrf.mxu0
        %5551 = vdwg.mxu0
        %v5553 = vsel %vm4507, %v5219, 0
        %5555 = vmatprep.subr.bf16.mxu0 0
        %5556 = vmatpush1.bf16.msra.mxu0 0
        %5557 = vmatprep.subr.bf16.mxu0 0
        %5558 = vmatpush1.bf16.msra.mxu0 0
        %5559 = vmatprep.subr.bf16.mxu0 0
        %5560 = vmatpush1.bf16.msra.mxu0 0
        %5561 = vmatprep.subr.bf16.mxu0 0
        %5562 = vmatpush1.bf16.msra.mxu0 0
        %5563 = vmatprep.subr.bf16.mxu0 0
        %5564 = vmatpush1.bf16.msra.mxu0 0
        %5565 = vmatprep.subr.bf16.mxu0 0
        %5566 = vmatpush1.bf16.msra.mxu0 0
        %5567 = vmatprep.subr.bf16.mxu0 0
        %5568 = vmatpush1.bf16.msra.mxu0 0
        %5569 = vmatprep.subr.bf16.mxu0 0
        %5570 = vmatpush1.bf16.msra.mxu0 %v2977
        %5571 = vmatprep.subr.bf16.mxu0 0
        %5572 = vmatpush2.bf16.msra.mxu0 0
        %5573 = vmatprep.subr.bf16.mxu0 0
        %5574 = vmatpush2.bf16.msra.mxu0 0
        %5575 = vmatprep.subr.bf16.mxu0 0
        %5576 = vmatpush2.bf16.msra.mxu0 0
        %5577 = vmatprep.subr.bf16.mxu0 0
        %5578 = vmatpush2.bf16.msra.mxu0 0
        %5579 = vmatprep.subr.bf16.mxu0 0
        %5580 = vmatpush2.bf16.msra.mxu0 0
        %5581 = vmatprep.subr.bf16.mxu0 0
        %5582 = vmatpush2.bf16.msra.mxu0 0
        %5583 = vmatprep.subr.bf16.mxu0 0
        %5584 = vmatpush2.bf16.msra.mxu0 0
        %5585 = vmatprep.subr.bf16.mxu0 0
        %5586 = vmatpush2.bf16.msra.mxu0 0
        %5587 = vmatprep.mubr.bf16.mxu0 0
        %5588 = vmatmul.mubr.bf16.gmra.mxu0 %v5553
        %v5589 = vpop.f32.mrf.mxu0
        %v5590 = vadd.f32 0.0, %v5589
        %v5591 = vpop.f32.mrf.mxu0
        %v5592 = vpop.f32.mrf.mxu0
        %v5593 = vadd.f32 0.0, %v5592
        %v5594 = vpop.f32.mrf.mxu0
        %5595 = vdwg.mxu0
        %v5597 = vsel %vm4507, %v5220, 0
        %5599 = vmatprep.subr.bf16.mxu0 0
        %5600 = vmatpush1.bf16.msra.mxu0 0
        %5601 = vmatprep.subr.bf16.mxu0 0
        %5602 = vmatpush1.bf16.msra.mxu0 0
        %5603 = vmatprep.subr.bf16.mxu0 0
        %5604 = vmatpush1.bf16.msra.mxu0 0
        %5605 = vmatprep.subr.bf16.mxu0 0
        %5606 = vmatpush1.bf16.msra.mxu0 0
        %5607 = vmatprep.subr.bf16.mxu0 0
        %5608 = vmatpush1.bf16.msra.mxu0 0
        %5609 = vmatprep.subr.bf16.mxu0 0
        %5610 = vmatpush1.bf16.msra.mxu0 0
        %5611 = vmatprep.subr.bf16.mxu0 0
        %5612 = vmatpush1.bf16.msra.mxu0 0
        %5613 = vmatprep.subr.bf16.mxu0 0
        %5614 = vmatpush1.bf16.msra.mxu0 %v2978
        %5615 = vmatprep.subr.bf16.mxu0 0
        %5616 = vmatpush2.bf16.msra.mxu0 0
        %5617 = vmatprep.subr.bf16.mxu0 0
        %5618 = vmatpush2.bf16.msra.mxu0 0
        %5619 = vmatprep.subr.bf16.mxu0 0
        %5620 = vmatpush2.bf16.msra.mxu0 0
        %5621 = vmatprep.subr.bf16.mxu0 0
        %5622 = vmatpush2.bf16.msra.mxu0 0
        %5623 = vmatprep.subr.bf16.mxu0 0
        %5624 = vmatpush2.bf16.msra.mxu0 0
        %5625 = vmatprep.subr.bf16.mxu0 0
        %5626 = vmatpush2.bf16.msra.mxu0 0
        %5627 = vmatprep.subr.bf16.mxu0 0
        %5628 = vmatpush2.bf16.msra.mxu0 0
        %5629 = vmatprep.subr.bf16.mxu0 0
        %5630 = vmatpush2.bf16.msra.mxu0 0
        %5631 = vmatprep.mubr.bf16.mxu0 0
        %5632 = vmatmul.mubr.bf16.gmra.mxu0 %v5597
        %v5633 = vpop.f32.mrf.mxu0
        %v5634 = vadd.f32 0.0, %v5633
        %v5635 = vpop.f32.mrf.mxu0
        %v5636 = vpop.f32.mrf.mxu0
        %v5637 = vadd.f32 0.0, %v5636
        %v5638 = vpop.f32.mrf.mxu0
        %5639 = vdwg.mxu0
        %v5641 = vsel %vm4507, %v5221, 0
        %5643 = vmatprep.subr.bf16.mxu0 0
        %5644 = vmatpush1.bf16.msra.mxu0 0
        %5645 = vmatprep.subr.bf16.mxu0 0
        %5646 = vmatpush1.bf16.msra.mxu0 0
        %5647 = vmatprep.subr.bf16.mxu0 0
        %5648 = vmatpush1.bf16.msra.mxu0 0
        %5649 = vmatprep.subr.bf16.mxu0 0
        %5650 = vmatpush1.bf16.msra.mxu0 0
        %5651 = vmatprep.subr.bf16.mxu0 0
        %5652 = vmatpush1.bf16.msra.mxu0 0
        %5653 = vmatprep.subr.bf16.mxu0 0
        %5654 = vmatpush1.bf16.msra.mxu0 0
        %5655 = vmatprep.subr.bf16.mxu0 0
        %5656 = vmatpush1.bf16.msra.mxu0 0
        %5657 = vmatprep.subr.bf16.mxu0 0
        %5658 = vmatpush1.bf16.msra.mxu0 %v2979
        %5659 = vmatprep.subr.bf16.mxu0 0
        %5660 = vmatpush2.bf16.msra.mxu0 0
        %5661 = vmatprep.subr.bf16.mxu0 0
        %5662 = vmatpush2.bf16.msra.mxu0 0
        %5663 = vmatprep.subr.bf16.mxu0 0
        %5664 = vmatpush2.bf16.msra.mxu0 0
        %5665 = vmatprep.subr.bf16.mxu0 0
        %5666 = vmatpush2.bf16.msra.mxu0 0
        %5667 = vmatprep.subr.bf16.mxu0 0
        %5668 = vmatpush2.bf16.msra.mxu0 0
        %5669 = vmatprep.subr.bf16.mxu0 0
        %5670 = vmatpush2.bf16.msra.mxu0 0
        %5671 = vmatprep.subr.bf16.mxu0 0
        %5672 = vmatpush2.bf16.msra.mxu0 0
        %5673 = vmatprep.subr.bf16.mxu0 0
        %5674 = vmatpush2.bf16.msra.mxu0 0
        %5675 = vmatprep.mubr.bf16.mxu0 0
        %5676 = vmatmul.mubr.bf16.gmra.mxu0 %v5641
        %v5677 = vpop.f32.mrf.mxu0
        %v5678 = vadd.f32 0.0, %v5677
        %v5679 = vpop.f32.mrf.mxu0
        %v5680 = vpop.f32.mrf.mxu0
        %v5681 = vadd.f32 0.0, %v5680
        %v5682 = vpop.f32.mrf.mxu0
        %5683 = vdwg.mxu0
        %v5685 = vsel %vm4507, %v5222, 0
        %5687 = vmatprep.subr.bf16.mxu0 0
        %5688 = vmatpush1.bf16.msra.mxu0 0
        %5689 = vmatprep.subr.bf16.mxu0 0
        %5690 = vmatpush1.bf16.msra.mxu0 0
        %5691 = vmatprep.subr.bf16.mxu0 0
        %5692 = vmatpush1.bf16.msra.mxu0 0
        %5693 = vmatprep.subr.bf16.mxu0 0
        %5694 = vmatpush1.bf16.msra.mxu0 0
        %5695 = vmatprep.subr.bf16.mxu0 0
        %5696 = vmatpush1.bf16.msra.mxu0 0
        %5697 = vmatprep.subr.bf16.mxu0 0
        %5698 = vmatpush1.bf16.msra.mxu0 0
        %5699 = vmatprep.subr.bf16.mxu0 0
        %5700 = vmatpush1.bf16.msra.mxu0 0
        %5701 = vmatprep.subr.bf16.mxu0 0
        %5702 = vmatpush1.bf16.msra.mxu0 %v2980
        %5703 = vmatprep.subr.bf16.mxu0 0
        %5704 = vmatpush2.bf16.msra.mxu0 0
        %5705 = vmatprep.subr.bf16.mxu0 0
        %5706 = vmatpush2.bf16.msra.mxu0 0
        %5707 = vmatprep.subr.bf16.mxu0 0
        %5708 = vmatpush2.bf16.msra.mxu0 0
        %5709 = vmatprep.subr.bf16.mxu0 0
        %5710 = vmatpush2.bf16.msra.mxu0 0
        %5711 = vmatprep.subr.bf16.mxu0 0
        %5712 = vmatpush2.bf16.msra.mxu0 0
        %5713 = vmatprep.subr.bf16.mxu0 0
        %5714 = vmatpush2.bf16.msra.mxu0 0
        %5715 = vmatprep.subr.bf16.mxu0 0
        %5716 = vmatpush2.bf16.msra.mxu0 0
        %5717 = vmatprep.subr.bf16.mxu0 0
        %5718 = vmatpush2.bf16.msra.mxu0 0
        %5719 = vmatprep.mubr.bf16.mxu0 0
        %5720 = vmatmul.mubr.bf16.gmra.mxu0 %v5685
        %v5721 = vpop.f32.mrf.mxu0
        %v5722 = vadd.f32 0.0, %v5721
        %v5723 = vpop.f32.mrf.mxu0
        %v5724 = vpop.f32.mrf.mxu0
        %v5725 = vadd.f32 0.0, %v5724
        %v5726 = vpop.f32.mrf.mxu0
        %5727 = vdwg.mxu0
        %v5729 = vsel %vm4507, %v5223, 0
        %5731 = vmatprep.subr.bf16.mxu0 0
        %5732 = vmatpush1.bf16.msra.mxu0 0
        %5733 = vmatprep.subr.bf16.mxu0 0
        %5734 = vmatpush1.bf16.msra.mxu0 0
        %5735 = vmatprep.subr.bf16.mxu0 0
        %5736 = vmatpush1.bf16.msra.mxu0 0
        %5737 = vmatprep.subr.bf16.mxu0 0
        %5738 = vmatpush1.bf16.msra.mxu0 0
        %5739 = vmatprep.subr.bf16.mxu0 0
        %5740 = vmatpush1.bf16.msra.mxu0 0
        %5741 = vmatprep.subr.bf16.mxu0 0
        %5742 = vmatpush1.bf16.msra.mxu0 0
        %5743 = vmatprep.subr.bf16.mxu0 0
        %5744 = vmatpush1.bf16.msra.mxu0 0
        %5745 = vmatprep.subr.bf16.mxu0 0
        %5746 = vmatpush1.bf16.msra.mxu0 %v2981
        %5747 = vmatprep.subr.bf16.mxu0 0
        %5748 = vmatpush2.bf16.msra.mxu0 0
        %5749 = vmatprep.subr.bf16.mxu0 0
        %5750 = vmatpush2.bf16.msra.mxu0 0
        %5751 = vmatprep.subr.bf16.mxu0 0
        %5752 = vmatpush2.bf16.msra.mxu0 0
        %5753 = vmatprep.subr.bf16.mxu0 0
        %5754 = vmatpush2.bf16.msra.mxu0 0
        %5755 = vmatprep.subr.bf16.mxu0 0
        %5756 = vmatpush2.bf16.msra.mxu0 0
        %5757 = vmatprep.subr.bf16.mxu0 0
        %5758 = vmatpush2.bf16.msra.mxu0 0
        %5759 = vmatprep.subr.bf16.mxu0 0
        %5760 = vmatpush2.bf16.msra.mxu0 0
        %5761 = vmatprep.subr.bf16.mxu0 0
        %5762 = vmatpush2.bf16.msra.mxu0 0
        %5763 = vmatprep.mubr.bf16.mxu0 0
        %5764 = vmatmul.mubr.bf16.gmra.mxu0 %v5729
        %v5765 = vpop.f32.mrf.mxu0
        %v5766 = vadd.f32 0.0, %v5765
        %v5767 = vpop.f32.mrf.mxu0
        %v5768 = vpop.f32.mrf.mxu0
        %v5769 = vadd.f32 0.0, %v5768
        %v5770 = vpop.f32.mrf.mxu0
        %5771 = vdwg.mxu0
        %v5773 = vsel %vm4507, %v5224, 0
        %5775 = vmatprep.subr.bf16.mxu0 0
        %5776 = vmatpush1.bf16.msra.mxu0 0
        %5777 = vmatprep.subr.bf16.mxu0 0
        %5778 = vmatpush1.bf16.msra.mxu0 0
        %5779 = vmatprep.subr.bf16.mxu0 0
        %5780 = vmatpush1.bf16.msra.mxu0 0
        %5781 = vmatprep.subr.bf16.mxu0 0
        %5782 = vmatpush1.bf16.msra.mxu0 0
        %5783 = vmatprep.subr.bf16.mxu0 0
        %5784 = vmatpush1.bf16.msra.mxu0 0
        %5785 = vmatprep.subr.bf16.mxu0 0
        %5786 = vmatpush1.bf16.msra.mxu0 0
        %5787 = vmatprep.subr.bf16.mxu0 0
        %5788 = vmatpush1.bf16.msra.mxu0 0
        %5789 = vmatprep.subr.bf16.mxu0 0
        %5790 = vmatpush1.bf16.msra.mxu0 %v2982
        %5791 = vmatprep.subr.bf16.mxu0 0
        %5792 = vmatpush2.bf16.msra.mxu0 0
        %5793 = vmatprep.subr.bf16.mxu0 0
        %5794 = vmatpush2.bf16.msra.mxu0 0
        %5795 = vmatprep.subr.bf16.mxu0 0
        %5796 = vmatpush2.bf16.msra.mxu0 0
        %5797 = vmatprep.subr.bf16.mxu0 0
        %5798 = vmatpush2.bf16.msra.mxu0 0
        %5799 = vmatprep.subr.bf16.mxu0 0
        %5800 = vmatpush2.bf16.msra.mxu0 0
        %5801 = vmatprep.subr.bf16.mxu0 0
        %5802 = vmatpush2.bf16.msra.mxu0 0
        %5803 = vmatprep.subr.bf16.mxu0 0
        %5804 = vmatpush2.bf16.msra.mxu0 0
        %5805 = vmatprep.subr.bf16.mxu0 0
        %5806 = vmatpush2.bf16.msra.mxu0 0
        %5807 = vmatprep.mubr.bf16.mxu0 0
        %5808 = vmatmul.mubr.bf16.gmra.mxu0 %v5773
        %v5809 = vpop.f32.mrf.mxu0
        %v5810 = vadd.f32 0.0, %v5809
        %v5811 = vpop.f32.mrf.mxu0
        %v5812 = vpop.f32.mrf.mxu0
        %v5813 = vadd.f32 0.0, %v5812
        %v5814 = vpop.f32.mrf.mxu0
        %5815 = vdwg.mxu0
        %v5817 = vsel %vm4507, %v5225, 0
        %5819 = vmatprep.subr.bf16.mxu0 0
        %5820 = vmatpush1.bf16.msra.mxu0 0
        %5821 = vmatprep.subr.bf16.mxu0 0
        %5822 = vmatpush1.bf16.msra.mxu0 0
        %5823 = vmatprep.subr.bf16.mxu0 0
        %5824 = vmatpush1.bf16.msra.mxu0 0
        %5825 = vmatprep.subr.bf16.mxu0 0
        %5826 = vmatpush1.bf16.msra.mxu0 0
        %5827 = vmatprep.subr.bf16.mxu0 0
        %5828 = vmatpush1.bf16.msra.mxu0 0
        %5829 = vmatprep.subr.bf16.mxu0 0
        %5830 = vmatpush1.bf16.msra.mxu0 0
        %5831 = vmatprep.subr.bf16.mxu0 0
        %5832 = vmatpush1.bf16.msra.mxu0 0
        %5833 = vmatprep.subr.bf16.mxu0 0
        %5834 = vmatpush1.bf16.msra.mxu0 %v2983
        %5835 = vmatprep.subr.bf16.mxu0 0
        %5836 = vmatpush2.bf16.msra.mxu0 0
        %5837 = vmatprep.subr.bf16.mxu0 0
        %5838 = vmatpush2.bf16.msra.mxu0 0
        %5839 = vmatprep.subr.bf16.mxu0 0
        %5840 = vmatpush2.bf16.msra.mxu0 0
        %5841 = vmatprep.subr.bf16.mxu0 0
        %5842 = vmatpush2.bf16.msra.mxu0 0
        %5843 = vmatprep.subr.bf16.mxu0 0
        %5844 = vmatpush2.bf16.msra.mxu0 0
        %5845 = vmatprep.subr.bf16.mxu0 0
        %5846 = vmatpush2.bf16.msra.mxu0 0
        %5847 = vmatprep.subr.bf16.mxu0 0
        %5848 = vmatpush2.bf16.msra.mxu0 0
        %5849 = vmatprep.subr.bf16.mxu0 0
        %5850 = vmatpush2.bf16.msra.mxu0 0
        %5851 = vmatprep.mubr.bf16.mxu0 0
        %5852 = vmatmul.mubr.bf16.gmra.mxu0 %v5817
        %v5853 = vpop.f32.mrf.mxu0
        %v5854 = vadd.f32 0.0, %v5853
        %v5855 = vpop.f32.mrf.mxu0
        %v5856 = vpop.f32.mrf.mxu0
        %v5857 = vadd.f32 0.0, %v5856
        %v5858 = vpop.f32.mrf.mxu0
        %5859 = vdwg.mxu0
        %v5861 = vsel %vm4507, %v5226, 0
        %5863 = vmatprep.subr.bf16.mxu0 0
        %5864 = vmatpush1.bf16.msra.mxu0 0
        %5865 = vmatprep.subr.bf16.mxu0 0
        %5866 = vmatpush1.bf16.msra.mxu0 0
        %5867 = vmatprep.subr.bf16.mxu0 0
        %5868 = vmatpush1.bf16.msra.mxu0 0
        %5869 = vmatprep.subr.bf16.mxu0 0
        %5870 = vmatpush1.bf16.msra.mxu0 0
        %5871 = vmatprep.subr.bf16.mxu0 0
        %5872 = vmatpush1.bf16.msra.mxu0 0
        %5873 = vmatprep.subr.bf16.mxu0 0
        %5874 = vmatpush1.bf16.msra.mxu0 0
        %5875 = vmatprep.subr.bf16.mxu0 0
        %5876 = vmatpush1.bf16.msra.mxu0 0
        %5877 = vmatprep.subr.bf16.mxu0 0
        %5878 = vmatpush1.bf16.msra.mxu0 %v2984
        %5879 = vmatprep.subr.bf16.mxu0 0
        %5880 = vmatpush2.bf16.msra.mxu0 0
        %5881 = vmatprep.subr.bf16.mxu0 0
        %5882 = vmatpush2.bf16.msra.mxu0 0
        %5883 = vmatprep.subr.bf16.mxu0 0
        %5884 = vmatpush2.bf16.msra.mxu0 0
        %5885 = vmatprep.subr.bf16.mxu0 0
        %5886 = vmatpush2.bf16.msra.mxu0 0
        %5887 = vmatprep.subr.bf16.mxu0 0
        %5888 = vmatpush2.bf16.msra.mxu0 0
        %5889 = vmatprep.subr.bf16.mxu0 0
        %5890 = vmatpush2.bf16.msra.mxu0 0
        %5891 = vmatprep.subr.bf16.mxu0 0
        %5892 = vmatpush2.bf16.msra.mxu0 0
        %5893 = vmatprep.subr.bf16.mxu0 0
        %5894 = vmatpush2.bf16.msra.mxu0 0
        %5895 = vmatprep.mubr.bf16.mxu0 0
        %5896 = vmatmul.mubr.bf16.gmra.mxu0 %v5861
        %v5897 = vpop.f32.mrf.mxu0
        %v5898 = vadd.f32 0.0, %v5897
        %v5899 = vpop.f32.mrf.mxu0
        %v5900 = vpop.f32.mrf.mxu0
        %v5901 = vadd.f32 0.0, %v5900
        %v5902 = vpop.f32.mrf.mxu0
        %5903 = vdwg.mxu0
        %v5905 = vsel %vm4507, %v5227, 0
        %5907 = vmatprep.subr.bf16.mxu0 0
        %5908 = vmatpush1.bf16.msra.mxu0 0
        %5909 = vmatprep.subr.bf16.mxu0 0
        %5910 = vmatpush1.bf16.msra.mxu0 0
        %5911 = vmatprep.subr.bf16.mxu0 0
        %5912 = vmatpush1.bf16.msra.mxu0 0
        %5913 = vmatprep.subr.bf16.mxu0 0
        %5914 = vmatpush1.bf16.msra.mxu0 0
        %5915 = vmatprep.subr.bf16.mxu0 0
        %5916 = vmatpush1.bf16.msra.mxu0 0
        %5917 = vmatprep.subr.bf16.mxu0 0
        %5918 = vmatpush1.bf16.msra.mxu0 0
        %5919 = vmatprep.subr.bf16.mxu0 0
        %5920 = vmatpush1.bf16.msra.mxu0 0
        %5921 = vmatprep.subr.bf16.mxu0 0
        %5922 = vmatpush1.bf16.msra.mxu0 %v2985
        %5923 = vmatprep.subr.bf16.mxu0 0
        %5924 = vmatpush2.bf16.msra.mxu0 0
        %5925 = vmatprep.subr.bf16.mxu0 0
        %5926 = vmatpush2.bf16.msra.mxu0 0
        %5927 = vmatprep.subr.bf16.mxu0 0
        %5928 = vmatpush2.bf16.msra.mxu0 0
        %5929 = vmatprep.subr.bf16.mxu0 0
        %5930 = vmatpush2.bf16.msra.mxu0 0
        %5931 = vmatprep.subr.bf16.mxu0 0
        %5932 = vmatpush2.bf16.msra.mxu0 0
        %5933 = vmatprep.subr.bf16.mxu0 0
        %5934 = vmatpush2.bf16.msra.mxu0 0
        %5935 = vmatprep.subr.bf16.mxu0 0
        %5936 = vmatpush2.bf16.msra.mxu0 0
        %5937 = vmatprep.subr.bf16.mxu0 0
        %5938 = vmatpush2.bf16.msra.mxu0 0
        %5939 = vmatprep.mubr.bf16.mxu0 0
        %5940 = vmatmul.mubr.bf16.gmra.mxu0 %v5905
        %v5941 = vpop.f32.mrf.mxu0
        %v5942 = vadd.f32 0.0, %v5941
        %v5943 = vpop.f32.mrf.mxu0
        %v5944 = vpop.f32.mrf.mxu0
        %v5945 = vadd.f32 0.0, %v5944
        %v5946 = vpop.f32.mrf.mxu0
        %5947 = vdwg.mxu0
        %v5949 = vsel %vm4507, %v5228, 0
        %5951 = vmatprep.subr.bf16.mxu0 0
        %5952 = vmatpush1.bf16.msra.mxu0 0
        %5953 = vmatprep.subr.bf16.mxu0 0
        %5954 = vmatpush1.bf16.msra.mxu0 0
        %5955 = vmatprep.subr.bf16.mxu0 0
        %5956 = vmatpush1.bf16.msra.mxu0 0
        %5957 = vmatprep.subr.bf16.mxu0 0
        %5958 = vmatpush1.bf16.msra.mxu0 0
        %5959 = vmatprep.subr.bf16.mxu0 0
        %5960 = vmatpush1.bf16.msra.mxu0 0
        %5961 = vmatprep.subr.bf16.mxu0 0
        %5962 = vmatpush1.bf16.msra.mxu0 0
        %5963 = vmatprep.subr.bf16.mxu0 0
        %5964 = vmatpush1.bf16.msra.mxu0 0
        %5965 = vmatprep.subr.bf16.mxu0 0
        %5966 = vmatpush1.bf16.msra.mxu0 %v2986
        %5967 = vmatprep.subr.bf16.mxu0 0
        %5968 = vmatpush2.bf16.msra.mxu0 0
        %5969 = vmatprep.subr.bf16.mxu0 0
        %5970 = vmatpush2.bf16.msra.mxu0 0
        %5971 = vmatprep.subr.bf16.mxu0 0
        %5972 = vmatpush2.bf16.msra.mxu0 0
        %5973 = vmatprep.subr.bf16.mxu0 0
        %5974 = vmatpush2.bf16.msra.mxu0 0
        %5975 = vmatprep.subr.bf16.mxu0 0
        %5976 = vmatpush2.bf16.msra.mxu0 0
        %5977 = vmatprep.subr.bf16.mxu0 0
        %5978 = vmatpush2.bf16.msra.mxu0 0
        %5979 = vmatprep.subr.bf16.mxu0 0
        %5980 = vmatpush2.bf16.msra.mxu0 0
        %5981 = vmatprep.subr.bf16.mxu0 0
        %5982 = vmatpush2.bf16.msra.mxu0 0
        %5983 = vmatprep.mubr.bf16.mxu0 0
        %5984 = vmatmul.mubr.bf16.gmra.mxu0 %v5949
        %v5985 = vpop.f32.mrf.mxu0
        %v5986 = vadd.f32 0.0, %v5985
        %v5987 = vpop.f32.mrf.mxu0
        %v5988 = vpop.f32.mrf.mxu0
        %v5989 = vadd.f32 0.0, %v5988
        %v5990 = vpop.f32.mrf.mxu0
        %5991 = vdwg.mxu0
        %v5993 = vsel %vm4507, %v5229, 0
        %5995 = vmatprep.subr.bf16.mxu0 0
        %5996 = vmatpush1.bf16.msra.mxu0 0
        %5997 = vmatprep.subr.bf16.mxu0 0
        %5998 = vmatpush1.bf16.msra.mxu0 0
        %5999 = vmatprep.subr.bf16.mxu0 0
        %6000 = vmatpush1.bf16.msra.mxu0 0
        %6001 = vmatprep.subr.bf16.mxu0 0
        %6002 = vmatpush1.bf16.msra.mxu0 0
        %6003 = vmatprep.subr.bf16.mxu0 0
        %6004 = vmatpush1.bf16.msra.mxu0 0
        %6005 = vmatprep.subr.bf16.mxu0 0
        %6006 = vmatpush1.bf16.msra.mxu0 0
        %6007 = vmatprep.subr.bf16.mxu0 0
        %6008 = vmatpush1.bf16.msra.mxu0 0
        %6009 = vmatprep.subr.bf16.mxu0 0
        %6010 = vmatpush1.bf16.msra.mxu0 %v2987
        %6011 = vmatprep.subr.bf16.mxu0 0
        %6012 = vmatpush2.bf16.msra.mxu0 0
        %6013 = vmatprep.subr.bf16.mxu0 0
        %6014 = vmatpush2.bf16.msra.mxu0 0
        %6015 = vmatprep.subr.bf16.mxu0 0
        %6016 = vmatpush2.bf16.msra.mxu0 0
        %6017 = vmatprep.subr.bf16.mxu0 0
        %6018 = vmatpush2.bf16.msra.mxu0 0
        %6019 = vmatprep.subr.bf16.mxu0 0
        %6020 = vmatpush2.bf16.msra.mxu0 0
        %6021 = vmatprep.subr.bf16.mxu0 0
        %6022 = vmatpush2.bf16.msra.mxu0 0
        %6023 = vmatprep.subr.bf16.mxu0 0
        %6024 = vmatpush2.bf16.msra.mxu0 0
        %6025 = vmatprep.subr.bf16.mxu0 0
        %6026 = vmatpush2.bf16.msra.mxu0 0
        %6027 = vmatprep.mubr.bf16.mxu0 0
        %6028 = vmatmul.mubr.bf16.gmra.mxu0 %v5993
        %v6029 = vpop.f32.mrf.mxu0
        %v6030 = vadd.f32 0.0, %v6029
        %v6031 = vpop.f32.mrf.mxu0
        %v6032 = vpop.f32.mrf.mxu0
        %v6033 = vadd.f32 0.0, %v6032
        %v6034 = vpop.f32.mrf.mxu0
        %6035 = vdwg.mxu0
        %v6037 = vsel %vm4507, %v5230, 0
        %6039 = vmatprep.subr.bf16.mxu0 0
        %6040 = vmatpush1.bf16.msra.mxu0 0
        %6041 = vmatprep.subr.bf16.mxu0 0
        %6042 = vmatpush1.bf16.msra.mxu0 0
        %6043 = vmatprep.subr.bf16.mxu0 0
        %6044 = vmatpush1.bf16.msra.mxu0 0
        %6045 = vmatprep.subr.bf16.mxu0 0
        %6046 = vmatpush1.bf16.msra.mxu0 0
        %6047 = vmatprep.subr.bf16.mxu0 0
        %6048 = vmatpush1.bf16.msra.mxu0 0
        %6049 = vmatprep.subr.bf16.mxu0 0
        %6050 = vmatpush1.bf16.msra.mxu0 0
        %6051 = vmatprep.subr.bf16.mxu0 0
        %6052 = vmatpush1.bf16.msra.mxu0 0
        %6053 = vmatprep.subr.bf16.mxu0 0
        %6054 = vmatpush1.bf16.msra.mxu0 %v2988
        %6055 = vmatprep.subr.bf16.mxu0 0
        %6056 = vmatpush2.bf16.msra.mxu0 0
        %6057 = vmatprep.subr.bf16.mxu0 0
        %6058 = vmatpush2.bf16.msra.mxu0 0
        %6059 = vmatprep.subr.bf16.mxu0 0
        %6060 = vmatpush2.bf16.msra.mxu0 0
        %6061 = vmatprep.subr.bf16.mxu0 0
        %6062 = vmatpush2.bf16.msra.mxu0 0
        %6063 = vmatprep.subr.bf16.mxu0 0
        %6064 = vmatpush2.bf16.msra.mxu0 0
        %6065 = vmatprep.subr.bf16.mxu0 0
        %6066 = vmatpush2.bf16.msra.mxu0 0
        %6067 = vmatprep.subr.bf16.mxu0 0
        %6068 = vmatpush2.bf16.msra.mxu0 0
        %6069 = vmatprep.subr.bf16.mxu0 0
        %6070 = vmatpush2.bf16.msra.mxu0 0
        %6071 = vmatprep.mubr.bf16.mxu0 0
        %6072 = vmatmul.mubr.bf16.gmra.mxu0 %v6037
        %v6073 = vpop.f32.mrf.mxu0
        %v6074 = vadd.f32 0.0, %v6073
        %v6075 = vpop.f32.mrf.mxu0
        %v6076 = vpop.f32.mrf.mxu0
        %v6077 = vadd.f32 0.0, %v6076
        %v6078 = vpop.f32.mrf.mxu0
        %6079 = vdwg.mxu0
        %v6081 = vsel %vm4507, %v5231, 0
        %6083 = vmatprep.subr.bf16.mxu0 0
        %6084 = vmatpush1.bf16.msra.mxu0 0
        %6085 = vmatprep.subr.bf16.mxu0 0
        %6086 = vmatpush1.bf16.msra.mxu0 0
        %6087 = vmatprep.subr.bf16.mxu0 0
        %6088 = vmatpush1.bf16.msra.mxu0 0
        %6089 = vmatprep.subr.bf16.mxu0 0
        %6090 = vmatpush1.bf16.msra.mxu0 0
        %6091 = vmatprep.subr.bf16.mxu0 0
        %6092 = vmatpush1.bf16.msra.mxu0 0
        %6093 = vmatprep.subr.bf16.mxu0 0
        %6094 = vmatpush1.bf16.msra.mxu0 0
        %6095 = vmatprep.subr.bf16.mxu0 0
        %6096 = vmatpush1.bf16.msra.mxu0 0
        %6097 = vmatprep.subr.bf16.mxu0 0
        %6098 = vmatpush1.bf16.msra.mxu0 %v2989
        %6099 = vmatprep.subr.bf16.mxu0 0
        %6100 = vmatpush2.bf16.msra.mxu0 0
        %6101 = vmatprep.subr.bf16.mxu0 0
        %6102 = vmatpush2.bf16.msra.mxu0 0
        %6103 = vmatprep.subr.bf16.mxu0 0
        %6104 = vmatpush2.bf16.msra.mxu0 0
        %6105 = vmatprep.subr.bf16.mxu0 0
        %6106 = vmatpush2.bf16.msra.mxu0 0
        %6107 = vmatprep.subr.bf16.mxu0 0
        %6108 = vmatpush2.bf16.msra.mxu0 0
        %6109 = vmatprep.subr.bf16.mxu0 0
        %6110 = vmatpush2.bf16.msra.mxu0 0
        %6111 = vmatprep.subr.bf16.mxu0 0
        %6112 = vmatpush2.bf16.msra.mxu0 0
        %6113 = vmatprep.subr.bf16.mxu0 0
        %6114 = vmatpush2.bf16.msra.mxu0 0
        %6115 = vmatprep.mubr.bf16.mxu0 0
        %6116 = vmatmul.mubr.bf16.gmra.mxu0 %v6081
        %v6117 = vpop.f32.mrf.mxu0
        %v6118 = vadd.f32 0.0, %v6117
        %v6119 = vpop.f32.mrf.mxu0
        %v6120 = vpop.f32.mrf.mxu0
        %v6121 = vadd.f32 0.0, %v6120
        %v6122 = vpop.f32.mrf.mxu0
        %6123 = vdwg.mxu0
        %v6125 = vsel %vm4507, %v5232, 0
        %6127 = vmatprep.subr.bf16.mxu0 0
        %6128 = vmatpush1.bf16.msra.mxu0 0
        %6129 = vmatprep.subr.bf16.mxu0 0
        %6130 = vmatpush1.bf16.msra.mxu0 0
        %6131 = vmatprep.subr.bf16.mxu0 0
        %6132 = vmatpush1.bf16.msra.mxu0 0
        %6133 = vmatprep.subr.bf16.mxu0 0
        %6134 = vmatpush1.bf16.msra.mxu0 0
        %6135 = vmatprep.subr.bf16.mxu0 0
        %6136 = vmatpush1.bf16.msra.mxu0 0
        %6137 = vmatprep.subr.bf16.mxu0 0
        %6138 = vmatpush1.bf16.msra.mxu0 0
        %6139 = vmatprep.subr.bf16.mxu0 0
        %6140 = vmatpush1.bf16.msra.mxu0 0
        %6141 = vmatprep.subr.bf16.mxu0 0
        %6142 = vmatpush1.bf16.msra.mxu0 %v2990
        %6143 = vmatprep.subr.bf16.mxu0 0
        %6144 = vmatpush2.bf16.msra.mxu0 0
        %6145 = vmatprep.subr.bf16.mxu0 0
        %6146 = vmatpush2.bf16.msra.mxu0 0
        %6147 = vmatprep.subr.bf16.mxu0 0
        %6148 = vmatpush2.bf16.msra.mxu0 0
        %6149 = vmatprep.subr.bf16.mxu0 0
        %6150 = vmatpush2.bf16.msra.mxu0 0
        %6151 = vmatprep.subr.bf16.mxu0 0
        %6152 = vmatpush2.bf16.msra.mxu0 0
        %6153 = vmatprep.subr.bf16.mxu0 0
        %6154 = vmatpush2.bf16.msra.mxu0 0
        %6155 = vmatprep.subr.bf16.mxu0 0
        %6156 = vmatpush2.bf16.msra.mxu0 0
        %6157 = vmatprep.subr.bf16.mxu0 0
        %6158 = vmatpush2.bf16.msra.mxu0 0
        %6159 = vmatprep.mubr.bf16.mxu0 0
        %6160 = vmatmul.mubr.bf16.gmra.mxu0 %v6125
        %v6161 = vpop.f32.mrf.mxu0
        %v6162 = vadd.f32 0.0, %v6161
        %v6163 = vpop.f32.mrf.mxu0
        %v6164 = vpop.f32.mrf.mxu0
        %v6165 = vadd.f32 0.0, %v6164
        %v6166 = vpop.f32.mrf.mxu0
        %6167 = vdwg.mxu0
        %v6169 = vsel %vm4507, %v5233, 0
        %6171 = vmatprep.subr.bf16.mxu0 0
        %6172 = vmatpush1.bf16.msra.mxu0 0
        %6173 = vmatprep.subr.bf16.mxu0 0
        %6174 = vmatpush1.bf16.msra.mxu0 0
        %6175 = vmatprep.subr.bf16.mxu0 0
        %6176 = vmatpush1.bf16.msra.mxu0 0
        %6177 = vmatprep.subr.bf16.mxu0 0
        %6178 = vmatpush1.bf16.msra.mxu0 0
        %6179 = vmatprep.subr.bf16.mxu0 0
        %6180 = vmatpush1.bf16.msra.mxu0 0
        %6181 = vmatprep.subr.bf16.mxu0 0
        %6182 = vmatpush1.bf16.msra.mxu0 0
        %6183 = vmatprep.subr.bf16.mxu0 0
        %6184 = vmatpush1.bf16.msra.mxu0 0
        %6185 = vmatprep.subr.bf16.mxu0 0
        %6186 = vmatpush1.bf16.msra.mxu0 %v2991
        %6187 = vmatprep.subr.bf16.mxu0 0
        %6188 = vmatpush2.bf16.msra.mxu0 0
        %6189 = vmatprep.subr.bf16.mxu0 0
        %6190 = vmatpush2.bf16.msra.mxu0 0
        %6191 = vmatprep.subr.bf16.mxu0 0
        %6192 = vmatpush2.bf16.msra.mxu0 0
        %6193 = vmatprep.subr.bf16.mxu0 0
        %6194 = vmatpush2.bf16.msra.mxu0 0
        %6195 = vmatprep.subr.bf16.mxu0 0
        %6196 = vmatpush2.bf16.msra.mxu0 0
        %6197 = vmatprep.subr.bf16.mxu0 0
        %6198 = vmatpush2.bf16.msra.mxu0 0
        %6199 = vmatprep.subr.bf16.mxu0 0
        %6200 = vmatpush2.bf16.msra.mxu0 0
        %6201 = vmatprep.subr.bf16.mxu0 0
        %6202 = vmatpush2.bf16.msra.mxu0 0
        %6203 = vmatprep.mubr.bf16.mxu0 0
        %6204 = vmatmul.mubr.bf16.gmra.mxu0 %v6169
        %v6205 = vpop.f32.mrf.mxu0
        %v6206 = vadd.f32 0.0, %v6205
        %v6207 = vpop.f32.mrf.mxu0
        %v6208 = vpop.f32.mrf.mxu0
        %v6209 = vadd.f32 0.0, %v6208
        %v6210 = vpop.f32.mrf.mxu0
        %6211 = vdwg.mxu0
        %v6213 = vsel %vm4507, %v5234, 0
        %6215 = vmatprep.subr.bf16.mxu0 0
        %6216 = vmatpush1.bf16.msra.mxu0 0
        %6217 = vmatprep.subr.bf16.mxu0 0
        %6218 = vmatpush1.bf16.msra.mxu0 0
        %6219 = vmatprep.subr.bf16.mxu0 0
        %6220 = vmatpush1.bf16.msra.mxu0 0
        %6221 = vmatprep.subr.bf16.mxu0 0
        %6222 = vmatpush1.bf16.msra.mxu0 0
        %6223 = vmatprep.subr.bf16.mxu0 0
        %6224 = vmatpush1.bf16.msra.mxu0 0
        %6225 = vmatprep.subr.bf16.mxu0 0
        %6226 = vmatpush1.bf16.msra.mxu0 0
        %6227 = vmatprep.subr.bf16.mxu0 0
        %6228 = vmatpush1.bf16.msra.mxu0 0
        %6229 = vmatprep.subr.bf16.mxu0 0
        %6230 = vmatpush1.bf16.msra.mxu0 %v2992
        %6231 = vmatprep.subr.bf16.mxu0 0
        %6232 = vmatpush2.bf16.msra.mxu0 0
        %6233 = vmatprep.subr.bf16.mxu0 0
        %6234 = vmatpush2.bf16.msra.mxu0 0
        %6235 = vmatprep.subr.bf16.mxu0 0
        %6236 = vmatpush2.bf16.msra.mxu0 0
        %6237 = vmatprep.subr.bf16.mxu0 0
        %6238 = vmatpush2.bf16.msra.mxu0 0
        %6239 = vmatprep.subr.bf16.mxu0 0
        %6240 = vmatpush2.bf16.msra.mxu0 0
        %6241 = vmatprep.subr.bf16.mxu0 0
        %6242 = vmatpush2.bf16.msra.mxu0 0
        %6243 = vmatprep.subr.bf16.mxu0 0
        %6244 = vmatpush2.bf16.msra.mxu0 0
        %6245 = vmatprep.subr.bf16.mxu0 0
        %6246 = vmatpush2.bf16.msra.mxu0 0
        %6247 = vmatprep.mubr.bf16.mxu0 0
        %6248 = vmatmul.mubr.bf16.gmra.mxu0 %v6213
        %v6249 = vpop.f32.mrf.mxu0
        %v6250 = vadd.f32 0.0, %v6249
        %v6251 = vpop.f32.mrf.mxu0
        %v6252 = vpop.f32.mrf.mxu0
        %v6253 = vadd.f32 0.0, %v6252
        %v6254 = vpop.f32.mrf.mxu0
        %6255 = vdwg.mxu0
        %v6257 = vsel %vm4507, %v5235, 0
        %6259 = vmatprep.subr.bf16.mxu0 0
        %6260 = vmatpush1.bf16.msra.mxu0 0
        %6261 = vmatprep.subr.bf16.mxu0 0
        %6262 = vmatpush1.bf16.msra.mxu0 0
        %6263 = vmatprep.subr.bf16.mxu0 0
        %6264 = vmatpush1.bf16.msra.mxu0 0
        %6265 = vmatprep.subr.bf16.mxu0 0
        %6266 = vmatpush1.bf16.msra.mxu0 0
        %6267 = vmatprep.subr.bf16.mxu0 0
        %6268 = vmatpush1.bf16.msra.mxu0 0
        %6269 = vmatprep.subr.bf16.mxu0 0
        %6270 = vmatpush1.bf16.msra.mxu0 0
        %6271 = vmatprep.subr.bf16.mxu0 0
        %6272 = vmatpush1.bf16.msra.mxu0 0
        %6273 = vmatprep.subr.bf16.mxu0 0
        %6274 = vmatpush1.bf16.msra.mxu0 %v2993
        %6275 = vmatprep.subr.bf16.mxu0 0
        %6276 = vmatpush2.bf16.msra.mxu0 0
        %6277 = vmatprep.subr.bf16.mxu0 0
        %6278 = vmatpush2.bf16.msra.mxu0 0
        %6279 = vmatprep.subr.bf16.mxu0 0
        %6280 = vmatpush2.bf16.msra.mxu0 0
        %6281 = vmatprep.subr.bf16.mxu0 0
        %6282 = vmatpush2.bf16.msra.mxu0 0
        %6283 = vmatprep.subr.bf16.mxu0 0
        %6284 = vmatpush2.bf16.msra.mxu0 0
        %6285 = vmatprep.subr.bf16.mxu0 0
        %6286 = vmatpush2.bf16.msra.mxu0 0
        %6287 = vmatprep.subr.bf16.mxu0 0
        %6288 = vmatpush2.bf16.msra.mxu0 0
        %6289 = vmatprep.subr.bf16.mxu0 0
        %6290 = vmatpush2.bf16.msra.mxu0 0
        %6291 = vmatprep.mubr.bf16.mxu0 0
        %6292 = vmatmul.mubr.bf16.gmra.mxu0 %v6257
        %v6293 = vpop.f32.mrf.mxu0
        %v6294 = vadd.f32 0.0, %v6293
        %v6295 = vpop.f32.mrf.mxu0
        %v6296 = vpop.f32.mrf.mxu0
        %v6297 = vadd.f32 0.0, %v6296
        %v6298 = vpop.f32.mrf.mxu0
        %6299 = vdwg.mxu0
        %v6301 = vsel %vm4507, %v5236, 0
        %6303 = vmatprep.subr.bf16.mxu0 0
        %6304 = vmatpush1.bf16.msra.mxu0 0
        %6305 = vmatprep.subr.bf16.mxu0 0
        %6306 = vmatpush1.bf16.msra.mxu0 0
        %6307 = vmatprep.subr.bf16.mxu0 0
        %6308 = vmatpush1.bf16.msra.mxu0 0
        %6309 = vmatprep.subr.bf16.mxu0 0
        %6310 = vmatpush1.bf16.msra.mxu0 0
        %6311 = vmatprep.subr.bf16.mxu0 0
        %6312 = vmatpush1.bf16.msra.mxu0 0
        %6313 = vmatprep.subr.bf16.mxu0 0
        %6314 = vmatpush1.bf16.msra.mxu0 0
        %6315 = vmatprep.subr.bf16.mxu0 0
        %6316 = vmatpush1.bf16.msra.mxu0 0
        %6317 = vmatprep.subr.bf16.mxu0 0
        %6318 = vmatpush1.bf16.msra.mxu0 %v2994
        %6319 = vmatprep.subr.bf16.mxu0 0
        %6320 = vmatpush2.bf16.msra.mxu0 0
        %6321 = vmatprep.subr.bf16.mxu0 0
        %6322 = vmatpush2.bf16.msra.mxu0 0
        %6323 = vmatprep.subr.bf16.mxu0 0
        %6324 = vmatpush2.bf16.msra.mxu0 0
        %6325 = vmatprep.subr.bf16.mxu0 0
        %6326 = vmatpush2.bf16.msra.mxu0 0
        %6327 = vmatprep.subr.bf16.mxu0 0
        %6328 = vmatpush2.bf16.msra.mxu0 0
        %6329 = vmatprep.subr.bf16.mxu0 0
        %6330 = vmatpush2.bf16.msra.mxu0 0
        %6331 = vmatprep.subr.bf16.mxu0 0
        %6332 = vmatpush2.bf16.msra.mxu0 0
        %6333 = vmatprep.subr.bf16.mxu0 0
        %6334 = vmatpush2.bf16.msra.mxu0 0
        %6335 = vmatprep.mubr.bf16.mxu0 0
        %6336 = vmatmul.mubr.bf16.gmra.mxu0 %v6301
        %v6337 = vpop.f32.mrf.mxu0
        %v6338 = vadd.f32 0.0, %v6337
        %v6339 = vpop.f32.mrf.mxu0
        %v6340 = vpop.f32.mrf.mxu0
        %v6341 = vadd.f32 0.0, %v6340
        %v6342 = vpop.f32.mrf.mxu0
        %6343 = vdwg.mxu0
        %v6345 = vsel %vm4507, %v5237, 0
        %6347 = vmatprep.subr.bf16.mxu0 0
        %6348 = vmatpush1.bf16.msra.mxu0 0
        %6349 = vmatprep.subr.bf16.mxu0 0
        %6350 = vmatpush1.bf16.msra.mxu0 0
        %6351 = vmatprep.subr.bf16.mxu0 0
        %6352 = vmatpush1.bf16.msra.mxu0 0
        %6353 = vmatprep.subr.bf16.mxu0 0
        %6354 = vmatpush1.bf16.msra.mxu0 0
        %6355 = vmatprep.subr.bf16.mxu0 0
        %6356 = vmatpush1.bf16.msra.mxu0 0
        %6357 = vmatprep.subr.bf16.mxu0 0
        %6358 = vmatpush1.bf16.msra.mxu0 0
        %6359 = vmatprep.subr.bf16.mxu0 0
        %6360 = vmatpush1.bf16.msra.mxu0 0
        %6361 = vmatprep.subr.bf16.mxu0 0
        %6362 = vmatpush1.bf16.msra.mxu0 %v2995
        %6363 = vmatprep.subr.bf16.mxu0 0
        %6364 = vmatpush2.bf16.msra.mxu0 0
        %6365 = vmatprep.subr.bf16.mxu0 0
        %6366 = vmatpush2.bf16.msra.mxu0 0
        %6367 = vmatprep.subr.bf16.mxu0 0
        %6368 = vmatpush2.bf16.msra.mxu0 0
        %6369 = vmatprep.subr.bf16.mxu0 0
        %6370 = vmatpush2.bf16.msra.mxu0 0
        %6371 = vmatprep.subr.bf16.mxu0 0
        %6372 = vmatpush2.bf16.msra.mxu0 0
        %6373 = vmatprep.subr.bf16.mxu0 0
        %6374 = vmatpush2.bf16.msra.mxu0 0
        %6375 = vmatprep.subr.bf16.mxu0 0
        %6376 = vmatpush2.bf16.msra.mxu0 0
        %6377 = vmatprep.subr.bf16.mxu0 0
        %6378 = vmatpush2.bf16.msra.mxu0 0
        %6379 = vmatprep.mubr.bf16.mxu0 0
        %6380 = vmatmul.mubr.bf16.gmra.mxu0 %v6345
        %v6381 = vpop.f32.mrf.mxu0
        %v6382 = vadd.f32 0.0, %v6381
        %v6383 = vpop.f32.mrf.mxu0
        %v6384 = vpop.f32.mrf.mxu0
        %v6385 = vadd.f32 0.0, %v6384
        %v6386 = vpop.f32.mrf.mxu0
        %6387 = vdwg.mxu0
        %v6389 = vsel %vm4507, %v5238, 0
        %6391 = vmatprep.subr.bf16.mxu0 0
        %6392 = vmatpush1.bf16.msra.mxu0 0
        %6393 = vmatprep.subr.bf16.mxu0 0
        %6394 = vmatpush1.bf16.msra.mxu0 0
        %6395 = vmatprep.subr.bf16.mxu0 0
        %6396 = vmatpush1.bf16.msra.mxu0 0
        %6397 = vmatprep.subr.bf16.mxu0 0
        %6398 = vmatpush1.bf16.msra.mxu0 0
        %6399 = vmatprep.subr.bf16.mxu0 0
        %6400 = vmatpush1.bf16.msra.mxu0 0
        %6401 = vmatprep.subr.bf16.mxu0 0
        %6402 = vmatpush1.bf16.msra.mxu0 0
        %6403 = vmatprep.subr.bf16.mxu0 0
        %6404 = vmatpush1.bf16.msra.mxu0 0
        %6405 = vmatprep.subr.bf16.mxu0 0
        %6406 = vmatpush1.bf16.msra.mxu0 %v2996
        %6407 = vmatprep.subr.bf16.mxu0 0
        %6408 = vmatpush2.bf16.msra.mxu0 0
        %6409 = vmatprep.subr.bf16.mxu0 0
        %6410 = vmatpush2.bf16.msra.mxu0 0
        %6411 = vmatprep.subr.bf16.mxu0 0
        %6412 = vmatpush2.bf16.msra.mxu0 0
        %6413 = vmatprep.subr.bf16.mxu0 0
        %6414 = vmatpush2.bf16.msra.mxu0 0
        %6415 = vmatprep.subr.bf16.mxu0 0
        %6416 = vmatpush2.bf16.msra.mxu0 0
        %6417 = vmatprep.subr.bf16.mxu0 0
        %6418 = vmatpush2.bf16.msra.mxu0 0
        %6419 = vmatprep.subr.bf16.mxu0 0
        %6420 = vmatpush2.bf16.msra.mxu0 0
        %6421 = vmatprep.subr.bf16.mxu0 0
        %6422 = vmatpush2.bf16.msra.mxu0 0
        %6423 = vmatprep.mubr.bf16.mxu0 0
        %6424 = vmatmul.mubr.bf16.gmra.mxu0 %v6389
        %v6425 = vpop.f32.mrf.mxu0
        %v6426 = vadd.f32 0.0, %v6425
        %v6427 = vpop.f32.mrf.mxu0
        %v6428 = vpop.f32.mrf.mxu0
        %v6429 = vadd.f32 0.0, %v6428
        %v6430 = vpop.f32.mrf.mxu0
        %6431 = vdwg.mxu0
        %v6433 = vsel %vm4507, %v5239, 0
        %6435 = vmatprep.subr.bf16.mxu0 0
        %6436 = vmatpush1.bf16.msra.mxu0 0
        %6437 = vmatprep.subr.bf16.mxu0 0
        %6438 = vmatpush1.bf16.msra.mxu0 0
        %6439 = vmatprep.subr.bf16.mxu0 0
        %6440 = vmatpush1.bf16.msra.mxu0 0
        %6441 = vmatprep.subr.bf16.mxu0 0
        %6442 = vmatpush1.bf16.msra.mxu0 0
        %6443 = vmatprep.subr.bf16.mxu0 0
        %6444 = vmatpush1.bf16.msra.mxu0 0
        %6445 = vmatprep.subr.bf16.mxu0 0
        %6446 = vmatpush1.bf16.msra.mxu0 0
        %6447 = vmatprep.subr.bf16.mxu0 0
        %6448 = vmatpush1.bf16.msra.mxu0 0
        %6449 = vmatprep.subr.bf16.mxu0 0
        %6450 = vmatpush1.bf16.msra.mxu0 %v2997
        %6451 = vmatprep.subr.bf16.mxu0 0
        %6452 = vmatpush2.bf16.msra.mxu0 0
        %6453 = vmatprep.subr.bf16.mxu0 0
        %6454 = vmatpush2.bf16.msra.mxu0 0
        %6455 = vmatprep.subr.bf16.mxu0 0
        %6456 = vmatpush2.bf16.msra.mxu0 0
        %6457 = vmatprep.subr.bf16.mxu0 0
        %6458 = vmatpush2.bf16.msra.mxu0 0
        %6459 = vmatprep.subr.bf16.mxu0 0
        %6460 = vmatpush2.bf16.msra.mxu0 0
        %6461 = vmatprep.subr.bf16.mxu0 0
        %6462 = vmatpush2.bf16.msra.mxu0 0
        %6463 = vmatprep.subr.bf16.mxu0 0
        %6464 = vmatpush2.bf16.msra.mxu0 0
        %6465 = vmatprep.subr.bf16.mxu0 0
        %6466 = vmatpush2.bf16.msra.mxu0 0
        %6467 = vmatprep.mubr.bf16.mxu0 0
        %6468 = vmatmul.mubr.bf16.gmra.mxu0 %v6433
        %v6469 = vpop.f32.mrf.mxu0
        %v6470 = vadd.f32 0.0, %v6469
        %v6471 = vpop.f32.mrf.mxu0
        %v6472 = vpop.f32.mrf.mxu0
        %v6473 = vadd.f32 0.0, %v6472
        %v6474 = vpop.f32.mrf.mxu0
        %6475 = vdwg.mxu0
        %v6477 = vsel %vm4507, %v5240, 0
        %6479 = vmatprep.subr.bf16.mxu0 0
        %6480 = vmatpush1.bf16.msra.mxu0 0
        %6481 = vmatprep.subr.bf16.mxu0 0
        %6482 = vmatpush1.bf16.msra.mxu0 0
        %6483 = vmatprep.subr.bf16.mxu0 0
        %6484 = vmatpush1.bf16.msra.mxu0 0
        %6485 = vmatprep.subr.bf16.mxu0 0
        %6486 = vmatpush1.bf16.msra.mxu0 0
        %6487 = vmatprep.subr.bf16.mxu0 0
        %6488 = vmatpush1.bf16.msra.mxu0 0
        %6489 = vmatprep.subr.bf16.mxu0 0
        %6490 = vmatpush1.bf16.msra.mxu0 0
        %6491 = vmatprep.subr.bf16.mxu0 0
        %6492 = vmatpush1.bf16.msra.mxu0 0
        %6493 = vmatprep.subr.bf16.mxu0 0
        %6494 = vmatpush1.bf16.msra.mxu0 %v2998
        %6495 = vmatprep.subr.bf16.mxu0 0
        %6496 = vmatpush2.bf16.msra.mxu0 0
        %6497 = vmatprep.subr.bf16.mxu0 0
        %6498 = vmatpush2.bf16.msra.mxu0 0
        %6499 = vmatprep.subr.bf16.mxu0 0
        %6500 = vmatpush2.bf16.msra.mxu0 0
        %6501 = vmatprep.subr.bf16.mxu0 0
        %6502 = vmatpush2.bf16.msra.mxu0 0
        %6503 = vmatprep.subr.bf16.mxu0 0
        %6504 = vmatpush2.bf16.msra.mxu0 0
        %6505 = vmatprep.subr.bf16.mxu0 0
        %6506 = vmatpush2.bf16.msra.mxu0 0
        %6507 = vmatprep.subr.bf16.mxu0 0
        %6508 = vmatpush2.bf16.msra.mxu0 0
        %6509 = vmatprep.subr.bf16.mxu0 0
        %6510 = vmatpush2.bf16.msra.mxu0 0
        %6511 = vmatprep.mubr.bf16.mxu0 0
        %6512 = vmatmul.mubr.bf16.gmra.mxu0 %v6477
        %v6513 = vpop.f32.mrf.mxu0
        %v6514 = vadd.f32 0.0, %v6513
        %v6515 = vpop.f32.mrf.mxu0
        %v6516 = vpop.f32.mrf.mxu0
        %v6517 = vadd.f32 0.0, %v6516
        %v6518 = vpop.f32.mrf.mxu0
        %6519 = vdwg.mxu0
        %v6521 = vsel %vm4507, %v5241, 0
        %6523 = vmatprep.subr.bf16.mxu0 0
        %6524 = vmatpush1.bf16.msra.mxu0 0
        %6525 = vmatprep.subr.bf16.mxu0 0
        %6526 = vmatpush1.bf16.msra.mxu0 0
        %6527 = vmatprep.subr.bf16.mxu0 0
        %6528 = vmatpush1.bf16.msra.mxu0 0
        %6529 = vmatprep.subr.bf16.mxu0 0
        %6530 = vmatpush1.bf16.msra.mxu0 0
        %6531 = vmatprep.subr.bf16.mxu0 0
        %6532 = vmatpush1.bf16.msra.mxu0 0
        %6533 = vmatprep.subr.bf16.mxu0 0
        %6534 = vmatpush1.bf16.msra.mxu0 0
        %6535 = vmatprep.subr.bf16.mxu0 0
        %6536 = vmatpush1.bf16.msra.mxu0 0
        %6537 = vmatprep.subr.bf16.mxu0 0
        %6538 = vmatpush1.bf16.msra.mxu0 %v2999
        %6539 = vmatprep.subr.bf16.mxu0 0
        %6540 = vmatpush2.bf16.msra.mxu0 0
        %6541 = vmatprep.subr.bf16.mxu0 0
        %6542 = vmatpush2.bf16.msra.mxu0 0
        %6543 = vmatprep.subr.bf16.mxu0 0
        %6544 = vmatpush2.bf16.msra.mxu0 0
        %6545 = vmatprep.subr.bf16.mxu0 0
        %6546 = vmatpush2.bf16.msra.mxu0 0
        %6547 = vmatprep.subr.bf16.mxu0 0
        %6548 = vmatpush2.bf16.msra.mxu0 0
        %6549 = vmatprep.subr.bf16.mxu0 0
        %6550 = vmatpush2.bf16.msra.mxu0 0
        %6551 = vmatprep.subr.bf16.mxu0 0
        %6552 = vmatpush2.bf16.msra.mxu0 0
        %6553 = vmatprep.subr.bf16.mxu0 0
        %6554 = vmatpush2.bf16.msra.mxu0 0
        %6555 = vmatprep.mubr.bf16.mxu0 0
        %6556 = vmatmul.mubr.bf16.gmra.mxu0 %v6521
        %v6557 = vpop.f32.mrf.mxu0
        %v6558 = vadd.f32 0.0, %v6557
        %v6559 = vpop.f32.mrf.mxu0
        %v6560 = vpop.f32.mrf.mxu0
        %v6561 = vadd.f32 0.0, %v6560
        %v6562 = vpop.f32.mrf.mxu0
        %6563 = vdwg.mxu0
        %v6565 = vsel %vm4507, %v5242, 0
        %6567 = vmatprep.subr.bf16.mxu0 0
        %6568 = vmatpush1.bf16.msra.mxu0 0
        %6569 = vmatprep.subr.bf16.mxu0 0
        %6570 = vmatpush1.bf16.msra.mxu0 0
        %6571 = vmatprep.subr.bf16.mxu0 0
        %6572 = vmatpush1.bf16.msra.mxu0 0
        %6573 = vmatprep.subr.bf16.mxu0 0
        %6574 = vmatpush1.bf16.msra.mxu0 0
        %6575 = vmatprep.subr.bf16.mxu0 0
        %6576 = vmatpush1.bf16.msra.mxu0 0
        %6577 = vmatprep.subr.bf16.mxu0 0
        %6578 = vmatpush1.bf16.msra.mxu0 0
        %6579 = vmatprep.subr.bf16.mxu0 0
        %6580 = vmatpush1.bf16.msra.mxu0 0
        %6581 = vmatprep.subr.bf16.mxu0 0
        %6582 = vmatpush1.bf16.msra.mxu0 %v3000
        %6583 = vmatprep.subr.bf16.mxu0 0
        %6584 = vmatpush2.bf16.msra.mxu0 0
        %6585 = vmatprep.subr.bf16.mxu0 0
        %6586 = vmatpush2.bf16.msra.mxu0 0
        %6587 = vmatprep.subr.bf16.mxu0 0
        %6588 = vmatpush2.bf16.msra.mxu0 0
        %6589 = vmatprep.subr.bf16.mxu0 0
        %6590 = vmatpush2.bf16.msra.mxu0 0
        %6591 = vmatprep.subr.bf16.mxu0 0
        %6592 = vmatpush2.bf16.msra.mxu0 0
        %6593 = vmatprep.subr.bf16.mxu0 0
        %6594 = vmatpush2.bf16.msra.mxu0 0
        %6595 = vmatprep.subr.bf16.mxu0 0
        %6596 = vmatpush2.bf16.msra.mxu0 0
        %6597 = vmatprep.subr.bf16.mxu0 0
        %6598 = vmatpush2.bf16.msra.mxu0 0
        %6599 = vmatprep.mubr.bf16.mxu0 0
        %6600 = vmatmul.mubr.bf16.gmra.mxu0 %v6565
        %v6601 = vpop.f32.mrf.mxu0
        %v6602 = vadd.f32 0.0, %v6601
        %v6603 = vpop.f32.mrf.mxu0
        %v6604 = vpop.f32.mrf.mxu0
        %v6605 = vadd.f32 0.0, %v6604
        %v6606 = vpop.f32.mrf.mxu0
        %6607 = vdwg.mxu0
        %v6609 = vsel %vm4507, %v5243, 0
        %6611 = vmatprep.subr.bf16.mxu0 0
        %6612 = vmatpush1.bf16.msra.mxu0 0
        %6613 = vmatprep.subr.bf16.mxu0 0
        %6614 = vmatpush1.bf16.msra.mxu0 0
        %6615 = vmatprep.subr.bf16.mxu0 0
        %6616 = vmatpush1.bf16.msra.mxu0 0
        %6617 = vmatprep.subr.bf16.mxu0 0
        %6618 = vmatpush1.bf16.msra.mxu0 0
        %6619 = vmatprep.subr.bf16.mxu0 0
        %6620 = vmatpush1.bf16.msra.mxu0 0
        %6621 = vmatprep.subr.bf16.mxu0 0
        %6622 = vmatpush1.bf16.msra.mxu0 0
        %6623 = vmatprep.subr.bf16.mxu0 0
        %6624 = vmatpush1.bf16.msra.mxu0 0
        %6625 = vmatprep.subr.bf16.mxu0 0
        %6626 = vmatpush1.bf16.msra.mxu0 %v3001
        %6627 = vmatprep.subr.bf16.mxu0 0
        %6628 = vmatpush2.bf16.msra.mxu0 0
        %6629 = vmatprep.subr.bf16.mxu0 0
        %6630 = vmatpush2.bf16.msra.mxu0 0
        %6631 = vmatprep.subr.bf16.mxu0 0
        %6632 = vmatpush2.bf16.msra.mxu0 0
        %6633 = vmatprep.subr.bf16.mxu0 0
        %6634 = vmatpush2.bf16.msra.mxu0 0
        %6635 = vmatprep.subr.bf16.mxu0 0
        %6636 = vmatpush2.bf16.msra.mxu0 0
        %6637 = vmatprep.subr.bf16.mxu0 0
        %6638 = vmatpush2.bf16.msra.mxu0 0
        %6639 = vmatprep.subr.bf16.mxu0 0
        %6640 = vmatpush2.bf16.msra.mxu0 0
        %6641 = vmatprep.subr.bf16.mxu0 0
        %6642 = vmatpush2.bf16.msra.mxu0 0
        %6643 = vmatprep.mubr.bf16.mxu0 0
        %6644 = vmatmul.mubr.bf16.gmra.mxu0 %v6609
        %v6645 = vpop.f32.mrf.mxu0
        %v6646 = vadd.f32 0.0, %v6645
        %v6647 = vpop.f32.mrf.mxu0
        %v6648 = vpop.f32.mrf.mxu0
        %v6649 = vadd.f32 0.0, %v6648
        %v6650 = vpop.f32.mrf.mxu0
        %6651 = vdwg.mxu0
        %v6652 = vpack.c.bf16 %v5285, %v5282
        %v6653 = vpack.c.bf16 %v5329, %v5326
        %v6654 = vpack.c.bf16 %v5373, %v5370
        %v6655 = vpack.c.bf16 %v5417, %v5414
        %v6656 = vpack.c.bf16 %v5461, %v5458
        %v6657 = vpack.c.bf16 %v5505, %v5502
        %v6658 = vpack.c.bf16 %v5549, %v5546
        %v6659 = vpack.c.bf16 %v5593, %v5590
        %v6660 = vpack.c.bf16 %v5637, %v5634
        %v6661 = vpack.c.bf16 %v5681, %v5678
        %v6662 = vpack.c.bf16 %v5725, %v5722
        %v6663 = vpack.c.bf16 %v5769, %v5766
        %v6664 = vpack.c.bf16 %v5813, %v5810
        %v6665 = vpack.c.bf16 %v5857, %v5854
        %v6666 = vpack.c.bf16 %v5901, %v5898
        %v6667 = vpack.c.bf16 %v5945, %v5942
        %v6668 = vpack.c.bf16 %v5989, %v5986
        %v6669 = vpack.c.bf16 %v6033, %v6030
        %v6670 = vpack.c.bf16 %v6077, %v6074
        %v6671 = vpack.c.bf16 %v6121, %v6118
        %v6672 = vpack.c.bf16 %v6165, %v6162
        %v6673 = vpack.c.bf16 %v6209, %v6206
        %v6674 = vpack.c.bf16 %v6253, %v6250
        %v6675 = vpack.c.bf16 %v6297, %v6294
        %v6676 = vpack.c.bf16 %v6341, %v6338
        %v6677 = vpack.c.bf16 %v6385, %v6382
        %v6678 = vpack.c.bf16 %v6429, %v6426
        %v6679 = vpack.c.bf16 %v6473, %v6470
        %v6680 = vpack.c.bf16 %v6517, %v6514
        %v6681 = vpack.c.bf16 %v6561, %v6558
        %v6682 = vpack.c.bf16 %v6605, %v6602
        %v6683 = vpack.c.bf16 %v6649, %v6646
        %v6684 = vld [vmem:[%s833] sm:$0xf]
        %v6685 = vld [vmem:[%s833 + $0x4] sm:$0xf]
        %v6686 = vld [vmem:[%s833 + $0x8] sm:$0xf]
        %v6687 = vld [vmem:[%s833 + $0xc] sm:$0xf]
        %v6688 = vld [vmem:[%s833 + $0x10] sm:$0xf]
        %v6689 = vld [vmem:[%s833 + $0x14] sm:$0xf]
        %v6690 = vld [vmem:[%s833 + $0x18] sm:$0xf]
        %v6691 = vld [vmem:[%s833 + $0x1c] sm:$0xf]
        %v6692 = vld [vmem:[%s833 + $0x20] sm:$0xf]
        %v6693 = vld [vmem:[%s833 + $0x24] sm:$0xf]
        %v6694 = vld [vmem:[%s833 + $0x28] sm:$0xf]
        %v6695 = vld [vmem:[%s833 + $0x2c] sm:$0xf]
        %v6696 = vld [vmem:[%s833 + $0x30] sm:$0xf]
        %v6697 = vld [vmem:[%s833 + $0x34] sm:$0xf]
        %v6698 = vld [vmem:[%s833 + $0x38] sm:$0xf]
        %v6699 = vld [vmem:[%s833 + $0x3c] sm:$0xf]
        %v6708 = vunpack.c.l.b16 %v6684
        %v6709 = vunpack.c.l.b16 %v6685
        %v6710 = vunpack.c.l.b16 %v6686
        %v6711 = vunpack.c.l.b16 %v6687
        %v6712 = vunpack.c.l.b16 %v6688
        %v6713 = vunpack.c.l.b16 %v6689
        %v6714 = vunpack.c.l.b16 %v6690
        %v6715 = vunpack.c.l.b16 %v6691
        %v6716 = vpack.c.b16 %v6709, %v6708
        %v6717 = vpack.c.b16 %v6711, %v6710
        %v6718 = vpack.c.b16 %v6713, %v6712
        %v6719 = vpack.c.b16 %v6715, %v6714
        %v6725 = vsel %vm3002, %v6652, 0
        %v6728 = vsel %vm3002, %v6653, 0
        %v6731 = vsel %vm3002, %v6654, 0
        %v6734 = vsel %vm3002, %v6655, 0
        %v6737 = vsel %vm3002, %v6656, 0
        %v6740 = vsel %vm3002, %v6657, 0
        %v6743 = vsel %vm3002, %v6658, 0
        %v6746 = vsel %vm3002, %v6659, 0
        %v6749 = vsel %vm3002, %v6660, 0
        %v6752 = vsel %vm3002, %v6661, 0
        %v6755 = vsel %vm3002, %v6662, 0
        %v6758 = vsel %vm3002, %v6663, 0
        %v6761 = vsel %vm3002, %v6664, 0
        %v6764 = vsel %vm3002, %v6665, 0
        %v6767 = vsel %vm3002, %v6666, 0
        %v6770 = vsel %vm3002, %v6667, 0
        %6772 = vmatprep.subr.bf16.mxu0 0
        %6773 = vmatpush1.bf16.msra.mxu0 0
        %6774 = vmatprep.subr.bf16.mxu0 0
        %6775 = vmatpush1.bf16.msra.mxu0 0
        %6776 = vmatprep.subr.bf16.mxu0 0
        %6777 = vmatpush1.bf16.msra.mxu0 0
        %6778 = vmatprep.subr.bf16.mxu0 0
        %6779 = vmatpush1.bf16.msra.mxu0 0
        %6780 = vmatprep.subr.bf16.mxu0 0
        %6781 = vmatpush1.bf16.msra.mxu0 %v6719
        %6782 = vmatprep.subr.bf16.mxu0 0
        %6783 = vmatpush1.bf16.msra.mxu0 %v6718
        %6784 = vmatprep.subr.bf16.mxu0 0
        %6785 = vmatpush1.bf16.msra.mxu0 %v6717
        %6786 = vmatprep.subr.bf16.mxu0 0
        %6787 = vmatpush1.bf16.msra.mxu0 %v6716
        %6788 = vmatprep.subr.bf16.mxu0 0
        %6789 = vmatpush2.bf16.msra.mxu0 0
        %6790 = vmatprep.subr.bf16.mxu0 0
        %6791 = vmatpush2.bf16.msra.mxu0 0
        %6792 = vmatprep.subr.bf16.mxu0 0
        %6793 = vmatpush2.bf16.msra.mxu0 0
        %6794 = vmatprep.subr.bf16.mxu0 0
        %6795 = vmatpush2.bf16.msra.mxu0 0
        %6796 = vmatprep.subr.bf16.mxu0 0
        %6797 = vmatpush2.bf16.msra.mxu0 0
        %6798 = vmatprep.subr.bf16.mxu0 0
        %6799 = vmatpush2.bf16.msra.mxu0 0
        %6800 = vmatprep.subr.bf16.mxu0 0
        %6801 = vmatpush2.bf16.msra.mxu0 0
        %6802 = vmatprep.subr.bf16.mxu0 0
        %6803 = vmatpush2.bf16.msra.mxu0 0
        %6804 = vmatprep.mubr.bf16.mxu0 0
        %6805 = vmatmul.mubr.bf16.gmra.mxu0 %v6725
        %v6806 = vpop.f32.mrf.mxu0
        %v6807 = vadd.f32 0.0, %v6806
        %v6808 = vpop.f32.mrf.mxu0
        %v6809 = vpop.f32.mrf.mxu0
        %v6810 = vadd.f32 0.0, %v6809
        %v6811 = vpop.f32.mrf.mxu0
        %6812 = vmatprep.mubr.bf16.mxu0 0
        %6813 = vmatmul.mubr.bf16.gmra.mxu0 %v6728
        %v6814 = vpop.f32.mrf.mxu0
        %v6815 = vadd.f32 0.0, %v6814
        %v6816 = vpop.f32.mrf.mxu0
        %v6817 = vpop.f32.mrf.mxu0
        %v6818 = vadd.f32 0.0, %v6817
        %v6819 = vpop.f32.mrf.mxu0
        %6820 = vmatprep.mubr.bf16.mxu0 0
        %6821 = vmatmul.mubr.bf16.gmra.mxu0 %v6731
        %v6822 = vpop.f32.mrf.mxu0
        %v6823 = vadd.f32 0.0, %v6822
        %v6824 = vpop.f32.mrf.mxu0
        %v6825 = vpop.f32.mrf.mxu0
        %v6826 = vadd.f32 0.0, %v6825
        %v6827 = vpop.f32.mrf.mxu0
        %6828 = vmatprep.mubr.bf16.mxu0 0
        %6829 = vmatmul.mubr.bf16.gmra.mxu0 %v6734
        %v6830 = vpop.f32.mrf.mxu0
        %v6831 = vadd.f32 0.0, %v6830
        %v6832 = vpop.f32.mrf.mxu0
        %v6833 = vpop.f32.mrf.mxu0
        %v6834 = vadd.f32 0.0, %v6833
        %v6835 = vpop.f32.mrf.mxu0
        %6836 = vmatprep.mubr.bf16.mxu0 0
        %6837 = vmatmul.mubr.bf16.gmra.mxu0 %v6737
        %v6838 = vpop.f32.mrf.mxu0
        %v6839 = vadd.f32 0.0, %v6838
        %v6840 = vpop.f32.mrf.mxu0
        %v6841 = vpop.f32.mrf.mxu0
        %v6842 = vadd.f32 0.0, %v6841
        %v6843 = vpop.f32.mrf.mxu0
        %6844 = vmatprep.mubr.bf16.mxu0 0
        %6845 = vmatmul.mubr.bf16.gmra.mxu0 %v6740
        %v6846 = vpop.f32.mrf.mxu0
        %v6847 = vadd.f32 0.0, %v6846
        %v6848 = vpop.f32.mrf.mxu0
        %v6849 = vpop.f32.mrf.mxu0
        %v6850 = vadd.f32 0.0, %v6849
        %v6851 = vpop.f32.mrf.mxu0
        %6852 = vmatprep.mubr.bf16.mxu0 0
        %6853 = vmatmul.mubr.bf16.gmra.mxu0 %v6743
        %v6854 = vpop.f32.mrf.mxu0
        %v6855 = vadd.f32 0.0, %v6854
        %v6856 = vpop.f32.mrf.mxu0
        %v6857 = vpop.f32.mrf.mxu0
        %v6858 = vadd.f32 0.0, %v6857
        %v6859 = vpop.f32.mrf.mxu0
        %6860 = vmatprep.mubr.bf16.mxu0 0
        %6861 = vmatmul.mubr.bf16.gmra.mxu0 %v6746
        %v6862 = vpop.f32.mrf.mxu0
        %v6863 = vadd.f32 0.0, %v6862
        %v6864 = vpop.f32.mrf.mxu0
        %v6865 = vpop.f32.mrf.mxu0
        %v6866 = vadd.f32 0.0, %v6865
        %v6867 = vpop.f32.mrf.mxu0
        %6868 = vmatprep.mubr.bf16.mxu0 0
        %6869 = vmatmul.mubr.bf16.gmra.mxu0 %v6749
        %v6870 = vpop.f32.mrf.mxu0
        %v6871 = vadd.f32 0.0, %v6870
        %v6872 = vpop.f32.mrf.mxu0
        %v6873 = vpop.f32.mrf.mxu0
        %v6874 = vadd.f32 0.0, %v6873
        %v6875 = vpop.f32.mrf.mxu0
        %6876 = vmatprep.mubr.bf16.mxu0 0
        %6877 = vmatmul.mubr.bf16.gmra.mxu0 %v6752
        %v6878 = vpop.f32.mrf.mxu0
        %v6879 = vadd.f32 0.0, %v6878
        %v6880 = vpop.f32.mrf.mxu0
        %v6881 = vpop.f32.mrf.mxu0
        %v6882 = vadd.f32 0.0, %v6881
        %v6883 = vpop.f32.mrf.mxu0
        %6884 = vmatprep.mubr.bf16.mxu0 0
        %6885 = vmatmul.mubr.bf16.gmra.mxu0 %v6755
        %v6886 = vpop.f32.mrf.mxu0
        %v6887 = vadd.f32 0.0, %v6886
        %v6888 = vpop.f32.mrf.mxu0
        %v6889 = vpop.f32.mrf.mxu0
        %v6890 = vadd.f32 0.0, %v6889
        %v6891 = vpop.f32.mrf.mxu0
        %6892 = vmatprep.mubr.bf16.mxu0 0
        %6893 = vmatmul.mubr.bf16.gmra.mxu0 %v6758
        %v6894 = vpop.f32.mrf.mxu0
        %v6895 = vadd.f32 0.0, %v6894
        %v6896 = vpop.f32.mrf.mxu0
        %v6897 = vpop.f32.mrf.mxu0
        %v6898 = vadd.f32 0.0, %v6897
        %v6899 = vpop.f32.mrf.mxu0
        %6900 = vmatprep.mubr.bf16.mxu0 0
        %6901 = vmatmul.mubr.bf16.gmra.mxu0 %v6761
        %v6902 = vpop.f32.mrf.mxu0
        %v6903 = vadd.f32 0.0, %v6902
        %v6904 = vpop.f32.mrf.mxu0
        %v6905 = vpop.f32.mrf.mxu0
        %v6906 = vadd.f32 0.0, %v6905
        %v6907 = vpop.f32.mrf.mxu0
        %6908 = vmatprep.mubr.bf16.mxu0 0
        %6909 = vmatmul.mubr.bf16.gmra.mxu0 %v6764
        %v6910 = vpop.f32.mrf.mxu0
        %v6911 = vadd.f32 0.0, %v6910
        %v6912 = vpop.f32.mrf.mxu0
        %v6913 = vpop.f32.mrf.mxu0
        %v6914 = vadd.f32 0.0, %v6913
        %v6915 = vpop.f32.mrf.mxu0
        %6916 = vmatprep.mubr.bf16.mxu0 0
        %6917 = vmatmul.mubr.bf16.gmra.mxu0 %v6767
        %v6918 = vpop.f32.mrf.mxu0
        %v6919 = vadd.f32 0.0, %v6918
        %v6920 = vpop.f32.mrf.mxu0
        %v6921 = vpop.f32.mrf.mxu0
        %v6922 = vadd.f32 0.0, %v6921
        %v6923 = vpop.f32.mrf.mxu0
        %6924 = vmatprep.mubr.bf16.mxu0 0
        %6925 = vmatmul.mubr.bf16.gmra.mxu0 %v6770
        %v6926 = vpop.f32.mrf.mxu0
        %v6927 = vadd.f32 0.0, %v6926
        %v6928 = vpop.f32.mrf.mxu0
        %v6929 = vpop.f32.mrf.mxu0
        %v6930 = vadd.f32 0.0, %v6929
        %v6931 = vpop.f32.mrf.mxu0
        %6932 = vdwg.mxu0
        %v6941 = vunpack.c.l.b16 %v6692
        %v6942 = vunpack.c.l.b16 %v6693
        %v6943 = vunpack.c.l.b16 %v6694
        %v6944 = vunpack.c.l.b16 %v6695
        %v6945 = vunpack.c.l.b16 %v6696
        %v6946 = vunpack.c.l.b16 %v6697
        %v6947 = vunpack.c.l.b16 %v6698
        %v6948 = vunpack.c.l.b16 %v6699
        %v6949 = vpack.c.b16 %v6942, %v6941
        %v6950 = vpack.c.b16 %v6944, %v6943
        %v6951 = vpack.c.b16 %v6946, %v6945
        %v6952 = vpack.c.b16 %v6948, %v6947
        %v6958 = vsel %vm3002, %v6668, 0
        %v6961 = vsel %vm3002, %v6669, 0
        %v6964 = vsel %vm3002, %v6670, 0
        %v6967 = vsel %vm3002, %v6671, 0
        %v6970 = vsel %vm3002, %v6672, 0
        %v6973 = vsel %vm3002, %v6673, 0
        %v6976 = vsel %vm3002, %v6674, 0
        %v6979 = vsel %vm3002, %v6675, 0
        %v6982 = vsel %vm3002, %v6676, 0
        %v6985 = vsel %vm3002, %v6677, 0
        %v6988 = vsel %vm3002, %v6678, 0
        %v6991 = vsel %vm3002, %v6679, 0
        %v6994 = vsel %vm3002, %v6680, 0
        %v6997 = vsel %vm3002, %v6681, 0
        %v7000 = vsel %vm3002, %v6682, 0
        %v7003 = vsel %vm3002, %v6683, 0
        %7005 = vmatprep.subr.bf16.mxu0 0
        %7006 = vmatpush1.bf16.msra.mxu0 0
        %7007 = vmatprep.subr.bf16.mxu0 0
        %7008 = vmatpush1.bf16.msra.mxu0 0
        %7009 = vmatprep.subr.bf16.mxu0 0
        %7010 = vmatpush1.bf16.msra.mxu0 0
        %7011 = vmatprep.subr.bf16.mxu0 0
        %7012 = vmatpush1.bf16.msra.mxu0 0
        %7013 = vmatprep.subr.bf16.mxu0 0
        %7014 = vmatpush1.bf16.msra.mxu0 %v6952
        %7015 = vmatprep.subr.bf16.mxu0 0
        %7016 = vmatpush1.bf16.msra.mxu0 %v6951
        %7017 = vmatprep.subr.bf16.mxu0 0
        %7018 = vmatpush1.bf16.msra.mxu0 %v6950
        %7019 = vmatprep.subr.bf16.mxu0 0
        %7020 = vmatpush1.bf16.msra.mxu0 %v6949
        %7021 = vmatprep.subr.bf16.mxu0 0
        %7022 = vmatpush2.bf16.msra.mxu0 0
        %7023 = vmatprep.subr.bf16.mxu0 0
        %7024 = vmatpush2.bf16.msra.mxu0 0
        %7025 = vmatprep.subr.bf16.mxu0 0
        %7026 = vmatpush2.bf16.msra.mxu0 0
        %7027 = vmatprep.subr.bf16.mxu0 0
        %7028 = vmatpush2.bf16.msra.mxu0 0
        %7029 = vmatprep.subr.bf16.mxu0 0
        %7030 = vmatpush2.bf16.msra.mxu0 0
        %7031 = vmatprep.subr.bf16.mxu0 0
        %7032 = vmatpush2.bf16.msra.mxu0 0
        %7033 = vmatprep.subr.bf16.mxu0 0
        %7034 = vmatpush2.bf16.msra.mxu0 0
        %7035 = vmatprep.subr.bf16.mxu0 0
        %7036 = vmatpush2.bf16.msra.mxu0 0
        %7037 = vmatprep.mubr.bf16.mxu0 0
        %7038 = vmatmul.mubr.bf16.gmra.mxu0 %v6958
        %v7039 = vpop.f32.mrf.mxu0
        %v7040 = vadd.f32 0.0, %v7039
        %v7041 = vpop.f32.mrf.mxu0
        %v7042 = vpop.f32.mrf.mxu0
        %v7043 = vadd.f32 0.0, %v7042
        %v7044 = vpop.f32.mrf.mxu0
        %7045 = vmatprep.mubr.bf16.mxu0 0
        %7046 = vmatmul.mubr.bf16.gmra.mxu0 %v6961
        %v7047 = vpop.f32.mrf.mxu0
        %v7048 = vadd.f32 0.0, %v7047
        %v7049 = vpop.f32.mrf.mxu0
        %v7050 = vpop.f32.mrf.mxu0
        %v7051 = vadd.f32 0.0, %v7050
        %v7052 = vpop.f32.mrf.mxu0
        %7053 = vmatprep.mubr.bf16.mxu0 0
        %7054 = vmatmul.mubr.bf16.gmra.mxu0 %v6964
        %v7055 = vpop.f32.mrf.mxu0
        %v7056 = vadd.f32 0.0, %v7055
        %v7057 = vpop.f32.mrf.mxu0
        %v7058 = vpop.f32.mrf.mxu0
        %v7059 = vadd.f32 0.0, %v7058
        %v7060 = vpop.f32.mrf.mxu0
        %7061 = vmatprep.mubr.bf16.mxu0 0
        %7062 = vmatmul.mubr.bf16.gmra.mxu0 %v6967
        %v7063 = vpop.f32.mrf.mxu0
        %v7064 = vadd.f32 0.0, %v7063
        %v7065 = vpop.f32.mrf.mxu0
        %v7066 = vpop.f32.mrf.mxu0
        %v7067 = vadd.f32 0.0, %v7066
        %v7068 = vpop.f32.mrf.mxu0
        %7069 = vmatprep.mubr.bf16.mxu0 0
        %7070 = vmatmul.mubr.bf16.gmra.mxu0 %v6970
        %v7071 = vpop.f32.mrf.mxu0
        %v7072 = vadd.f32 0.0, %v7071
        %v7073 = vpop.f32.mrf.mxu0
        %v7074 = vpop.f32.mrf.mxu0
        %v7075 = vadd.f32 0.0, %v7074
        %v7076 = vpop.f32.mrf.mxu0
        %7077 = vmatprep.mubr.bf16.mxu0 0
        %7078 = vmatmul.mubr.bf16.gmra.mxu0 %v6973
        %v7079 = vpop.f32.mrf.mxu0
        %v7080 = vadd.f32 0.0, %v7079
        %v7081 = vpop.f32.mrf.mxu0
        %v7082 = vpop.f32.mrf.mxu0
        %v7083 = vadd.f32 0.0, %v7082
        %v7084 = vpop.f32.mrf.mxu0
        %7085 = vmatprep.mubr.bf16.mxu0 0
        %7086 = vmatmul.mubr.bf16.gmra.mxu0 %v6976
        %v7087 = vpop.f32.mrf.mxu0
        %v7088 = vadd.f32 0.0, %v7087
        %v7089 = vpop.f32.mrf.mxu0
        %v7090 = vpop.f32.mrf.mxu0
        %v7091 = vadd.f32 0.0, %v7090
        %v7092 = vpop.f32.mrf.mxu0
        %7093 = vmatprep.mubr.bf16.mxu0 0
        %7094 = vmatmul.mubr.bf16.gmra.mxu0 %v6979
        %v7095 = vpop.f32.mrf.mxu0
        %v7096 = vadd.f32 0.0, %v7095
        %v7097 = vpop.f32.mrf.mxu0
        %v7098 = vpop.f32.mrf.mxu0
        %v7099 = vadd.f32 0.0, %v7098
        %v7100 = vpop.f32.mrf.mxu0
        %7101 = vmatprep.mubr.bf16.mxu0 0
        %7102 = vmatmul.mubr.bf16.gmra.mxu0 %v6982
        %v7103 = vpop.f32.mrf.mxu0
        %v7104 = vadd.f32 0.0, %v7103
        %v7105 = vpop.f32.mrf.mxu0
        %v7106 = vpop.f32.mrf.mxu0
        %v7107 = vadd.f32 0.0, %v7106
        %v7108 = vpop.f32.mrf.mxu0
        %7109 = vmatprep.mubr.bf16.mxu0 0
        %7110 = vmatmul.mubr.bf16.gmra.mxu0 %v6985
        %v7111 = vpop.f32.mrf.mxu0
        %v7112 = vadd.f32 0.0, %v7111
        %v7113 = vpop.f32.mrf.mxu0
        %v7114 = vpop.f32.mrf.mxu0
        %v7115 = vadd.f32 0.0, %v7114
        %v7116 = vpop.f32.mrf.mxu0
        %7117 = vmatprep.mubr.bf16.mxu0 0
        %7118 = vmatmul.mubr.bf16.gmra.mxu0 %v6988
        %v7119 = vpop.f32.mrf.mxu0
        %v7120 = vadd.f32 0.0, %v7119
        %v7121 = vpop.f32.mrf.mxu0
        %v7122 = vpop.f32.mrf.mxu0
        %v7123 = vadd.f32 0.0, %v7122
        %v7124 = vpop.f32.mrf.mxu0
        %7125 = vmatprep.mubr.bf16.mxu0 0
        %7126 = vmatmul.mubr.bf16.gmra.mxu0 %v6991
        %v7127 = vpop.f32.mrf.mxu0
        %v7128 = vadd.f32 0.0, %v7127
        %v7129 = vpop.f32.mrf.mxu0
        %v7130 = vpop.f32.mrf.mxu0
        %v7131 = vadd.f32 0.0, %v7130
        %v7132 = vpop.f32.mrf.mxu0
        %7133 = vmatprep.mubr.bf16.mxu0 0
        %7134 = vmatmul.mubr.bf16.gmra.mxu0 %v6994
        %v7135 = vpop.f32.mrf.mxu0
        %v7136 = vadd.f32 0.0, %v7135
        %v7137 = vpop.f32.mrf.mxu0
        %v7138 = vpop.f32.mrf.mxu0
        %v7139 = vadd.f32 0.0, %v7138
        %v7140 = vpop.f32.mrf.mxu0
        %7141 = vmatprep.mubr.bf16.mxu0 0
        %7142 = vmatmul.mubr.bf16.gmra.mxu0 %v6997
        %v7143 = vpop.f32.mrf.mxu0
        %v7144 = vadd.f32 0.0, %v7143
        %v7145 = vpop.f32.mrf.mxu0
        %v7146 = vpop.f32.mrf.mxu0
        %v7147 = vadd.f32 0.0, %v7146
        %v7148 = vpop.f32.mrf.mxu0
        %7149 = vmatprep.mubr.bf16.mxu0 0
        %7150 = vmatmul.mubr.bf16.gmra.mxu0 %v7000
        %v7151 = vpop.f32.mrf.mxu0
        %v7152 = vadd.f32 0.0, %v7151
        %v7153 = vpop.f32.mrf.mxu0
        %v7154 = vpop.f32.mrf.mxu0
        %v7155 = vadd.f32 0.0, %v7154
        %v7156 = vpop.f32.mrf.mxu0
        %7157 = vmatprep.mubr.bf16.mxu0 0
        %7158 = vmatmul.mubr.bf16.gmra.mxu0 %v7003
        %v7159 = vpop.f32.mrf.mxu0
        %v7160 = vadd.f32 0.0, %v7159
        %v7161 = vpop.f32.mrf.mxu0
        %v7162 = vpop.f32.mrf.mxu0
        %v7163 = vadd.f32 0.0, %v7162
        %v7164 = vpop.f32.mrf.mxu0
        %7165 = vdwg.mxu0
        %v7166 = vadd.f32 %v6807, %v7040
        %v7167 = vadd.f32 %v6810, %v7043
        %v7168 = vadd.f32 %v6815, %v7048
        %v7169 = vadd.f32 %v6818, %v7051
        %v7170 = vadd.f32 %v6823, %v7056
        %v7171 = vadd.f32 %v6826, %v7059
        %v7172 = vadd.f32 %v6831, %v7064
        %v7173 = vadd.f32 %v6834, %v7067
        %v7174 = vadd.f32 %v6839, %v7072
        %v7175 = vadd.f32 %v6842, %v7075
        %v7176 = vadd.f32 %v6847, %v7080
        %v7177 = vadd.f32 %v6850, %v7083
        %v7178 = vadd.f32 %v6855, %v7088
        %v7179 = vadd.f32 %v6858, %v7091
        %v7180 = vadd.f32 %v6863, %v7096
        %v7181 = vadd.f32 %v6866, %v7099
        %v7182 = vadd.f32 %v6871, %v7104
        %v7183 = vadd.f32 %v6874, %v7107
        %v7184 = vadd.f32 %v6879, %v7112
        %v7185 = vadd.f32 %v6882, %v7115
        %v7186 = vadd.f32 %v6887, %v7120
        %v7187 = vadd.f32 %v6890, %v7123
        %v7188 = vadd.f32 %v6895, %v7128
        %v7189 = vadd.f32 %v6898, %v7131
        %v7190 = vadd.f32 %v6903, %v7136
        %v7191 = vadd.f32 %v6906, %v7139
        %v7192 = vadd.f32 %v6911, %v7144
        %v7193 = vadd.f32 %v6914, %v7147
        %v7194 = vadd.f32 %v6919, %v7152
        %v7195 = vadd.f32 %v6922, %v7155
        %v7196 = vadd.f32 %v6927, %v7160
        %v7197 = vadd.f32 %v6930, %v7163
        %v7198 = vld [vmem:[%s836] sm:$0x1]
        %v7200 = vlaneseq
        %v7201 = vshrl.u32 %v7200, 7
        %v7202 = vsub.s32 0, %v7201
        %v7203 = vrot.slane %v7198, %v7202
        %v7205 = vadd.f32 %v7166, %v7203
        %v7206 = vadd.f32 %v7167, %v7203
        %v7207 = vadd.f32 %v7168, %v7203
        %v7208 = vadd.f32 %v7169, %v7203
        %v7209 = vadd.f32 %v7170, %v7203
        %v7210 = vadd.f32 %v7171, %v7203
        %v7211 = vadd.f32 %v7172, %v7203
        %v7212 = vadd.f32 %v7173, %v7203
        %v7213 = vadd.f32 %v7174, %v7203
        %v7214 = vadd.f32 %v7175, %v7203
        %v7215 = vadd.f32 %v7176, %v7203
        %v7216 = vadd.f32 %v7177, %v7203
        %v7217 = vadd.f32 %v7178, %v7203
        %v7218 = vadd.f32 %v7179, %v7203
        %v7219 = vadd.f32 %v7180, %v7203
        %v7220 = vadd.f32 %v7181, %v7203
        %v7221 = vadd.f32 %v7182, %v7203
        %v7222 = vadd.f32 %v7183, %v7203
        %v7223 = vadd.f32 %v7184, %v7203
        %v7224 = vadd.f32 %v7185, %v7203
        %v7225 = vadd.f32 %v7186, %v7203
        %v7226 = vadd.f32 %v7187, %v7203
        %v7227 = vadd.f32 %v7188, %v7203
        %v7228 = vadd.f32 %v7189, %v7203
        %v7229 = vadd.f32 %v7190, %v7203
        %v7230 = vadd.f32 %v7191, %v7203
        %v7231 = vadd.f32 %v7192, %v7203
        %v7232 = vadd.f32 %v7193, %v7203
        %v7233 = vadd.f32 %v7194, %v7203
        %v7234 = vadd.f32 %v7195, %v7203
        %v7235 = vadd.f32 %v7196, %v7203
        %v7236 = vadd.f32 %v7197, %v7203
        %v7237 = vld [vmem:[%s844] sm:$0xff]
        %v7238 = vld [vmem:[%s844 + $0x8] sm:$0xff]
        %v7239 = vld [vmem:[%s844 + $0x10] sm:$0xff]
        %v7240 = vld [vmem:[%s844 + $0x18] sm:$0xff]
        %v7241 = vld [vmem:[%s844 + $0x20] sm:$0xff]
        %v7242 = vld [vmem:[%s844 + $0x28] sm:$0xff]
        %v7243 = vld [vmem:[%s844 + $0x30] sm:$0xff]
        %v7244 = vld [vmem:[%s844 + $0x38] sm:$0xff]
        %v7245 = vld [vmem:[%s844 + $0x40] sm:$0xff]
        %v7246 = vld [vmem:[%s844 + $0x48] sm:$0xff]
        %v7247 = vld [vmem:[%s844 + $0x50] sm:$0xff]
        %v7248 = vld [vmem:[%s844 + $0x58] sm:$0xff]
        %v7249 = vld [vmem:[%s844 + $0x60] sm:$0xff]
        %v7250 = vld [vmem:[%s844 + $0x68] sm:$0xff]
        %v7251 = vld [vmem:[%s844 + $0x70] sm:$0xff]
        %v7252 = vld [vmem:[%s844 + $0x78] sm:$0xff]
        %v7253 = vld [vmem:[%s844 + $0x80] sm:$0xff]
        %v7254 = vld [vmem:[%s844 + $0x88] sm:$0xff]
        %v7255 = vld [vmem:[%s844 + $0x90] sm:$0xff]
        %v7256 = vld [vmem:[%s844 + $0x98] sm:$0xff]
        %v7257 = vld [vmem:[%s844 + $0xa0] sm:$0xff]
        %v7258 = vld [vmem:[%s844 + $0xa8] sm:$0xff]
        %v7259 = vld [vmem:[%s844 + $0xb0] sm:$0xff]
        %v7260 = vld [vmem:[%s844 + $0xb8] sm:$0xff]
        %v7261 = vld [vmem:[%s844 + $0xc0] sm:$0xff]
        %v7262 = vld [vmem:[%s844 + $0xc8] sm:$0xff]
        %v7263 = vld [vmem:[%s844 + $0xd0] sm:$0xff]
        %v7264 = vld [vmem:[%s844 + $0xd8] sm:$0xff]
        %v7265 = vld [vmem:[%s844 + $0xe0] sm:$0xff]
        %v7266 = vld [vmem:[%s844 + $0xe8] sm:$0xff]
        %v7267 = vld [vmem:[%s844 + $0xf0] sm:$0xff]
        %v7268 = vld [vmem:[%s844 + $0xf8] sm:$0xff]
        %v7269 = vld [vmem:[%s848] sm:$0xf]
        %v7271 = vlaneseq
        %v7272 = vshrl.u32 %v7271, 7
        %v7273 = vsub.s32 0, %v7272
        %v7274 = vrot.slane %v7269, %v7273
        %v7275 = vlaneseq
        %v7276 = vshrl.u32 %v7275, 7
        %v7277 = vsub.s32 1, %v7276
        %v7278 = vrot.slane %v7269, %v7277
        %v7279 = vlaneseq
        %v7280 = vshrl.u32 %v7279, 7
        %v7281 = vsub.s32 2, %v7280
        %v7282 = vrot.slane %v7269, %v7281
        %v7283 = vlaneseq
        %v7284 = vshrl.u32 %v7283, 7
        %v7285 = vsub.s32 3, %v7284
        %v7286 = vrot.slane %v7269, %v7285
        %v7323 = vunpack.c.l.b16 %v7237
        %v7324 = vunpack.c.h.b16 %v7237
        %v7325 = vunpack.c.l.b16 %v7238
        %v7326 = vunpack.c.h.b16 %v7238
        %v7327 = vunpack.c.l.b16 %v7239
        %v7328 = vunpack.c.h.b16 %v7239
        %v7329 = vunpack.c.l.b16 %v7240
        %v7330 = vunpack.c.h.b16 %v7240
        %v7331 = vunpack.c.l.b16 %v7241
        %v7332 = vunpack.c.h.b16 %v7241
        %v7333 = vunpack.c.l.b16 %v7242
        %v7334 = vunpack.c.h.b16 %v7242
        %v7335 = vunpack.c.l.b16 %v7243
        %v7336 = vunpack.c.h.b16 %v7243
        %v7337 = vunpack.c.l.b16 %v7244
        %v7338 = vunpack.c.h.b16 %v7244
        %v7339 = vunpack.c.l.b16 %v7245
        %v7340 = vunpack.c.h.b16 %v7245
        %v7341 = vunpack.c.l.b16 %v7246
        %v7342 = vunpack.c.h.b16 %v7246
        %v7343 = vunpack.c.l.b16 %v7247
        %v7344 = vunpack.c.h.b16 %v7247
        %v7345 = vunpack.c.l.b16 %v7248
        %v7346 = vunpack.c.h.b16 %v7248
        %v7347 = vunpack.c.l.b16 %v7249
        %v7348 = vunpack.c.h.b16 %v7249
        %v7349 = vunpack.c.l.b16 %v7250
        %v7350 = vunpack.c.h.b16 %v7250
        %v7351 = vunpack.c.l.b16 %v7251
        %v7352 = vunpack.c.h.b16 %v7251
        %v7353 = vunpack.c.l.b16 %v7252
        %v7354 = vunpack.c.h.b16 %v7252
        %v7355 = vunpack.c.l.b16 %v7253
        %v7356 = vunpack.c.h.b16 %v7253
        %v7357 = vunpack.c.l.b16 %v7254
        %v7358 = vunpack.c.h.b16 %v7254
        %v7359 = vunpack.c.l.b16 %v7255
        %v7360 = vunpack.c.h.b16 %v7255
        %v7361 = vunpack.c.l.b16 %v7256
        %v7362 = vunpack.c.h.b16 %v7256
        %v7363 = vunpack.c.l.b16 %v7257
        %v7364 = vunpack.c.h.b16 %v7257
        %v7365 = vunpack.c.l.b16 %v7258
        %v7366 = vunpack.c.h.b16 %v7258
        %v7367 = vunpack.c.l.b16 %v7259
        %v7368 = vunpack.c.h.b16 %v7259
        %v7369 = vunpack.c.l.b16 %v7260
        %v7370 = vunpack.c.h.b16 %v7260
        %v7371 = vunpack.c.l.b16 %v7261
        %v7372 = vunpack.c.h.b16 %v7261
        %v7373 = vunpack.c.l.b16 %v7262
        %v7374 = vunpack.c.h.b16 %v7262
        %v7375 = vunpack.c.l.b16 %v7263
        %v7376 = vunpack.c.h.b16 %v7263
        %v7377 = vunpack.c.l.b16 %v7264
        %v7378 = vunpack.c.h.b16 %v7264
        %v7379 = vunpack.c.l.b16 %v7265
        %v7380 = vunpack.c.h.b16 %v7265
        %v7381 = vunpack.c.l.b16 %v7266
        %v7382 = vunpack.c.h.b16 %v7266
        %v7383 = vunpack.c.l.b16 %v7267
        %v7384 = vunpack.c.h.b16 %v7267
        %v7385 = vunpack.c.l.b16 %v7268
        %v7386 = vunpack.c.h.b16 %v7268
        %v7387 = vpack.c.b16 %v7327, %v7323
        %v7388 = vpack.c.b16 %v7328, %v7324
        %v7389 = vpack.c.b16 %v7329, %v7325
        %v7390 = vpack.c.b16 %v7330, %v7326
        %v7391 = vpack.c.b16 %v7335, %v7331
        %v7392 = vpack.c.b16 %v7336, %v7332
        %v7393 = vpack.c.b16 %v7337, %v7333
        %v7394 = vpack.c.b16 %v7338, %v7334
        %v7395 = vpack.c.b16 %v7343, %v7339
        %v7396 = vpack.c.b16 %v7344, %v7340
        %v7397 = vpack.c.b16 %v7345, %v7341
        %v7398 = vpack.c.b16 %v7346, %v7342
        %v7399 = vpack.c.b16 %v7351, %v7347
        %v7400 = vpack.c.b16 %v7352, %v7348
        %v7401 = vpack.c.b16 %v7353, %v7349
        %v7402 = vpack.c.b16 %v7354, %v7350
        %v7403 = vpack.c.b16 %v7359, %v7355
        %v7404 = vpack.c.b16 %v7360, %v7356
        %v7405 = vpack.c.b16 %v7361, %v7357
        %v7406 = vpack.c.b16 %v7362, %v7358
        %v7407 = vpack.c.b16 %v7367, %v7363
        %v7408 = vpack.c.b16 %v7368, %v7364
        %v7409 = vpack.c.b16 %v7369, %v7365
        %v7410 = vpack.c.b16 %v7370, %v7366
        %v7411 = vpack.c.b16 %v7375, %v7371
        %v7412 = vpack.c.b16 %v7376, %v7372
        %v7413 = vpack.c.b16 %v7377, %v7373
        %v7414 = vpack.c.b16 %v7378, %v7374
        %v7415 = vpack.c.b16 %v7383, %v7379
        %v7416 = vpack.c.b16 %v7384, %v7380
        %v7417 = vpack.c.b16 %v7385, %v7381
        %v7418 = vpack.c.b16 %v7386, %v7382
        %7451 = vmatprep.subr.bf16.mxu0 %v7416
        %7452 = vmatpush1.bf16.msra.mxu0 %v7415
        %7453 = vmatprep.subr.bf16.mxu0 %v7412
        %7454 = vmatpush1.bf16.msra.mxu0 %v7411
        %7455 = vmatprep.subr.bf16.mxu0 %v7408
        %7456 = vmatpush1.bf16.msra.mxu0 %v7407
        %7457 = vmatprep.subr.bf16.mxu0 %v7404
        %7458 = vmatpush1.bf16.msra.mxu0 %v7403
        %7459 = vmatprep.subr.bf16.mxu0 %v7400
        %7460 = vmatpush1.bf16.msra.mxu0 %v7399
        %7461 = vmatprep.subr.bf16.mxu0 %v7396
        %7462 = vmatpush1.bf16.msra.mxu0 %v7395
        %7463 = vmatprep.subr.bf16.mxu0 %v7392
        %7464 = vmatpush1.bf16.msra.mxu0 %v7391
        %7465 = vmatprep.subr.bf16.mxu0 %v7388
        %7466 = vmatpush1.bf16.msra.mxu0 %v7387
        %7467 = vmatprep.subr.bf16.mxu0 0
        %7468 = vmatpush2.bf16.msra.mxu0 0
        %7469 = vmatprep.subr.bf16.mxu0 0
        %7470 = vmatpush2.bf16.msra.mxu0 0
        %7471 = vmatprep.subr.bf16.mxu0 0
        %7472 = vmatpush2.bf16.msra.mxu0 0
        %7473 = vmatprep.subr.bf16.mxu0 0
        %7474 = vmatpush2.bf16.msra.mxu0 0
        %7475 = vmatprep.subr.bf16.mxu0 0
        %7476 = vmatpush2.bf16.msra.mxu0 0
        %7477 = vmatprep.subr.bf16.mxu0 0
        %7478 = vmatpush2.bf16.msra.mxu0 0
        %7479 = vmatprep.subr.bf16.mxu0 0
        %7480 = vmatpush2.bf16.msra.mxu0 0
        %7481 = vmatprep.subr.bf16.mxu0 0
        %7482 = vmatpush2.bf16.msra.mxu0 0
        %7483 = vmatprep.mubr.bf16.mxu0 0
        %7484 = vmatmul.mubr.bf16.gmra.mxu0 %v1476
        %v7485 = vpop.f32.mrf.mxu0
        %v7486 = vadd.f32 %v7274, %v7485
        %v7487 = vpop.f32.mrf.mxu0
        %v7488 = vadd.f32 %v7278, %v7487
        %v7489 = vpop.f32.mrf.mxu0
        %v7490 = vadd.f32 %v7274, %v7489
        %v7491 = vpop.f32.mrf.mxu0
        %v7492 = vadd.f32 %v7278, %v7491
        %7493 = vmatprep.mubr.bf16.mxu0 0
        %7494 = vmatmul.mubr.bf16.gmra.mxu0 %v1477
        %v7495 = vpop.f32.mrf.mxu0
        %v7496 = vadd.f32 %v7274, %v7495
        %v7497 = vpop.f32.mrf.mxu0
        %v7498 = vadd.f32 %v7278, %v7497
        %v7499 = vpop.f32.mrf.mxu0
        %v7500 = vadd.f32 %v7274, %v7499
        %v7501 = vpop.f32.mrf.mxu0
        %v7502 = vadd.f32 %v7278, %v7501
        %7503 = vmatprep.mubr.bf16.mxu0 0
        %7504 = vmatmul.mubr.bf16.gmra.mxu0 %v1478
        %v7505 = vpop.f32.mrf.mxu0
        %v7506 = vadd.f32 %v7274, %v7505
        %v7507 = vpop.f32.mrf.mxu0
        %v7508 = vadd.f32 %v7278, %v7507
        %v7509 = vpop.f32.mrf.mxu0
        %v7510 = vadd.f32 %v7274, %v7509
        %v7511 = vpop.f32.mrf.mxu0
        %v7512 = vadd.f32 %v7278, %v7511
        %7513 = vmatprep.mubr.bf16.mxu0 0
        %7514 = vmatmul.mubr.bf16.gmra.mxu0 %v1479
        %v7515 = vpop.f32.mrf.mxu0
        %v7516 = vadd.f32 %v7274, %v7515
        %v7517 = vpop.f32.mrf.mxu0
        %v7518 = vadd.f32 %v7278, %v7517
        %v7519 = vpop.f32.mrf.mxu0
        %v7520 = vadd.f32 %v7274, %v7519
        %v7521 = vpop.f32.mrf.mxu0
        %v7522 = vadd.f32 %v7278, %v7521
        %7523 = vmatprep.mubr.bf16.mxu0 0
        %7524 = vmatmul.mubr.bf16.gmra.mxu0 %v1480
        %v7525 = vpop.f32.mrf.mxu0
        %v7526 = vadd.f32 %v7274, %v7525
        %v7527 = vpop.f32.mrf.mxu0
        %v7528 = vadd.f32 %v7278, %v7527
        %v7529 = vpop.f32.mrf.mxu0
        %v7530 = vadd.f32 %v7274, %v7529
        %v7531 = vpop.f32.mrf.mxu0
        %v7532 = vadd.f32 %v7278, %v7531
        %7533 = vmatprep.mubr.bf16.mxu0 0
        %7534 = vmatmul.mubr.bf16.gmra.mxu0 %v1481
        %v7535 = vpop.f32.mrf.mxu0
        %v7536 = vadd.f32 %v7274, %v7535
        %v7537 = vpop.f32.mrf.mxu0
        %v7538 = vadd.f32 %v7278, %v7537
        %v7539 = vpop.f32.mrf.mxu0
        %v7540 = vadd.f32 %v7274, %v7539
        %v7541 = vpop.f32.mrf.mxu0
        %v7542 = vadd.f32 %v7278, %v7541
        %7543 = vmatprep.mubr.bf16.mxu0 0
        %7544 = vmatmul.mubr.bf16.gmra.mxu0 %v1482
        %v7545 = vpop.f32.mrf.mxu0
        %v7546 = vadd.f32 %v7274, %v7545
        %v7547 = vpop.f32.mrf.mxu0
        %v7548 = vadd.f32 %v7278, %v7547
        %v7549 = vpop.f32.mrf.mxu0
        %v7550 = vadd.f32 %v7274, %v7549
        %v7551 = vpop.f32.mrf.mxu0
        %v7552 = vadd.f32 %v7278, %v7551
        %7553 = vmatprep.mubr.bf16.mxu0 0
        %7554 = vmatmul.mubr.bf16.gmra.mxu0 %v1483
        %v7555 = vpop.f32.mrf.mxu0
        %v7556 = vadd.f32 %v7274, %v7555
        %v7557 = vpop.f32.mrf.mxu0
        %v7558 = vadd.f32 %v7278, %v7557
        %v7559 = vpop.f32.mrf.mxu0
        %v7560 = vadd.f32 %v7274, %v7559
        %v7561 = vpop.f32.mrf.mxu0
        %v7562 = vadd.f32 %v7278, %v7561
        %7563 = vmatprep.mubr.bf16.mxu0 0
        %7564 = vmatmul.mubr.bf16.gmra.mxu0 %v1484
        %v7565 = vpop.f32.mrf.mxu0
        %v7566 = vadd.f32 %v7274, %v7565
        %v7567 = vpop.f32.mrf.mxu0
        %v7568 = vadd.f32 %v7278, %v7567
        %v7569 = vpop.f32.mrf.mxu0
        %v7570 = vadd.f32 %v7274, %v7569
        %v7571 = vpop.f32.mrf.mxu0
        %v7572 = vadd.f32 %v7278, %v7571
        %7573 = vmatprep.mubr.bf16.mxu0 0
        %7574 = vmatmul.mubr.bf16.gmra.mxu0 %v1485
        %v7575 = vpop.f32.mrf.mxu0
        %v7576 = vadd.f32 %v7274, %v7575
        %v7577 = vpop.f32.mrf.mxu0
        %v7578 = vadd.f32 %v7278, %v7577
        %v7579 = vpop.f32.mrf.mxu0
        %v7580 = vadd.f32 %v7274, %v7579
        %v7581 = vpop.f32.mrf.mxu0
        %v7582 = vadd.f32 %v7278, %v7581
        %7583 = vmatprep.mubr.bf16.mxu0 0
        %7584 = vmatmul.mubr.bf16.gmra.mxu0 %v1486
        %v7585 = vpop.f32.mrf.mxu0
        %v7586 = vadd.f32 %v7274, %v7585
        %v7587 = vpop.f32.mrf.mxu0
        %v7588 = vadd.f32 %v7278, %v7587
        %v7589 = vpop.f32.mrf.mxu0
        %v7590 = vadd.f32 %v7274, %v7589
        %v7591 = vpop.f32.mrf.mxu0
        %v7592 = vadd.f32 %v7278, %v7591
        %7593 = vmatprep.mubr.bf16.mxu0 0
        %7594 = vmatmul.mubr.bf16.gmra.mxu0 %v1487
        %v7595 = vpop.f32.mrf.mxu0
        %v7596 = vadd.f32 %v7274, %v7595
        %v7597 = vpop.f32.mrf.mxu0
        %v7598 = vadd.f32 %v7278, %v7597
        %v7599 = vpop.f32.mrf.mxu0
        %v7600 = vadd.f32 %v7274, %v7599
        %v7601 = vpop.f32.mrf.mxu0
        %v7602 = vadd.f32 %v7278, %v7601
        %7603 = vmatprep.mubr.bf16.mxu0 0
        %7604 = vmatmul.mubr.bf16.gmra.mxu0 %v1488
        %v7605 = vpop.f32.mrf.mxu0
        %v7606 = vadd.f32 %v7274, %v7605
        %v7607 = vpop.f32.mrf.mxu0
        %v7608 = vadd.f32 %v7278, %v7607
        %v7609 = vpop.f32.mrf.mxu0
        %v7610 = vadd.f32 %v7274, %v7609
        %v7611 = vpop.f32.mrf.mxu0
        %v7612 = vadd.f32 %v7278, %v7611
        %7613 = vmatprep.mubr.bf16.mxu0 0
        %7614 = vmatmul.mubr.bf16.gmra.mxu0 %v1489
        %v7615 = vpop.f32.mrf.mxu0
        %v7616 = vadd.f32 %v7274, %v7615
        %v7617 = vpop.f32.mrf.mxu0
        %v7618 = vadd.f32 %v7278, %v7617
        %v7619 = vpop.f32.mrf.mxu0
        %v7620 = vadd.f32 %v7274, %v7619
        %v7621 = vpop.f32.mrf.mxu0
        %v7622 = vadd.f32 %v7278, %v7621
        %7623 = vmatprep.mubr.bf16.mxu0 0
        %7624 = vmatmul.mubr.bf16.gmra.mxu0 %v1490
        %v7625 = vpop.f32.mrf.mxu0
        %v7626 = vadd.f32 %v7274, %v7625
        %v7627 = vpop.f32.mrf.mxu0
        %v7628 = vadd.f32 %v7278, %v7627
        %v7629 = vpop.f32.mrf.mxu0
        %v7630 = vadd.f32 %v7274, %v7629
        %v7631 = vpop.f32.mrf.mxu0
        %v7632 = vadd.f32 %v7278, %v7631
        %7633 = vmatprep.mubr.bf16.mxu0 0
        %7634 = vmatmul.mubr.bf16.gmra.mxu0 %v1491
        %v7635 = vpop.f32.mrf.mxu0
        %v7636 = vadd.f32 %v7274, %v7635
        %v7637 = vpop.f32.mrf.mxu0
        %v7638 = vadd.f32 %v7278, %v7637
        %v7639 = vpop.f32.mrf.mxu0
        %v7640 = vadd.f32 %v7274, %v7639
        %v7641 = vpop.f32.mrf.mxu0
        %v7642 = vadd.f32 %v7278, %v7641
        %7643 = vdwg.mxu0
        %7644 = vmatprep.subr.bf16.mxu0 %v7418
        %7645 = vmatpush1.bf16.msra.mxu0 %v7417
        %7646 = vmatprep.subr.bf16.mxu0 %v7414
        %7647 = vmatpush1.bf16.msra.mxu0 %v7413
        %7648 = vmatprep.subr.bf16.mxu0 %v7410
        %7649 = vmatpush1.bf16.msra.mxu0 %v7409
        %7650 = vmatprep.subr.bf16.mxu0 %v7406
        %7651 = vmatpush1.bf16.msra.mxu0 %v7405
        %7652 = vmatprep.subr.bf16.mxu0 %v7402
        %7653 = vmatpush1.bf16.msra.mxu0 %v7401
        %7654 = vmatprep.subr.bf16.mxu0 %v7398
        %7655 = vmatpush1.bf16.msra.mxu0 %v7397
        %7656 = vmatprep.subr.bf16.mxu0 %v7394
        %7657 = vmatpush1.bf16.msra.mxu0 %v7393
        %7658 = vmatprep.subr.bf16.mxu0 %v7390
        %7659 = vmatpush1.bf16.msra.mxu0 %v7389
        %7660 = vmatprep.subr.bf16.mxu0 0
        %7661 = vmatpush2.bf16.msra.mxu0 0
        %7662 = vmatprep.subr.bf16.mxu0 0
        %7663 = vmatpush2.bf16.msra.mxu0 0
        %7664 = vmatprep.subr.bf16.mxu0 0
        %7665 = vmatpush2.bf16.msra.mxu0 0
        %7666 = vmatprep.subr.bf16.mxu0 0
        %7667 = vmatpush2.bf16.msra.mxu0 0
        %7668 = vmatprep.subr.bf16.mxu0 0
        %7669 = vmatpush2.bf16.msra.mxu0 0
        %7670 = vmatprep.subr.bf16.mxu0 0
        %7671 = vmatpush2.bf16.msra.mxu0 0
        %7672 = vmatprep.subr.bf16.mxu0 0
        %7673 = vmatpush2.bf16.msra.mxu0 0
        %7674 = vmatprep.subr.bf16.mxu0 0
        %7675 = vmatpush2.bf16.msra.mxu0 0
        %7676 = vmatprep.mubr.bf16.mxu0 0
        %7677 = vmatmul.mubr.bf16.gmra.mxu0 %v1476
        %v7678 = vpop.f32.mrf.mxu0
        %v7679 = vadd.f32 %v7282, %v7678
        %v7680 = vpop.f32.mrf.mxu0
        %v7681 = vadd.f32 %v7286, %v7680
        %v7682 = vpop.f32.mrf.mxu0
        %v7683 = vadd.f32 %v7282, %v7682
        %v7684 = vpop.f32.mrf.mxu0
        %v7685 = vadd.f32 %v7286, %v7684
        %7686 = vmatprep.mubr.bf16.mxu0 0
        %7687 = vmatmul.mubr.bf16.gmra.mxu0 %v1477
        %v7688 = vpop.f32.mrf.mxu0
        %v7689 = vadd.f32 %v7282, %v7688
        %v7690 = vpop.f32.mrf.mxu0
        %v7691 = vadd.f32 %v7286, %v7690
        %v7692 = vpop.f32.mrf.mxu0
        %v7693 = vadd.f32 %v7282, %v7692
        %v7694 = vpop.f32.mrf.mxu0
        %v7695 = vadd.f32 %v7286, %v7694
        %7696 = vmatprep.mubr.bf16.mxu0 0
        %7697 = vmatmul.mubr.bf16.gmra.mxu0 %v1478
        %v7698 = vpop.f32.mrf.mxu0
        %v7699 = vadd.f32 %v7282, %v7698
        %v7700 = vpop.f32.mrf.mxu0
        %v7701 = vadd.f32 %v7286, %v7700
        %v7702 = vpop.f32.mrf.mxu0
        %v7703 = vadd.f32 %v7282, %v7702
        %v7704 = vpop.f32.mrf.mxu0
        %v7705 = vadd.f32 %v7286, %v7704
        %7706 = vmatprep.mubr.bf16.mxu0 0
        %7707 = vmatmul.mubr.bf16.gmra.mxu0 %v1479
        %v7708 = vpop.f32.mrf.mxu0
        %v7709 = vadd.f32 %v7282, %v7708
        %v7710 = vpop.f32.mrf.mxu0
        %v7711 = vadd.f32 %v7286, %v7710
        %v7712 = vpop.f32.mrf.mxu0
        %v7713 = vadd.f32 %v7282, %v7712
        %v7714 = vpop.f32.mrf.mxu0
        %v7715 = vadd.f32 %v7286, %v7714
        %7716 = vmatprep.mubr.bf16.mxu0 0
        %7717 = vmatmul.mubr.bf16.gmra.mxu0 %v1480
        %v7718 = vpop.f32.mrf.mxu0
        %v7719 = vadd.f32 %v7282, %v7718
        %v7720 = vpop.f32.mrf.mxu0
        %v7721 = vadd.f32 %v7286, %v7720
        %v7722 = vpop.f32.mrf.mxu0
        %v7723 = vadd.f32 %v7282, %v7722
        %v7724 = vpop.f32.mrf.mxu0
        %v7725 = vadd.f32 %v7286, %v7724
        %7726 = vmatprep.mubr.bf16.mxu0 0
        %7727 = vmatmul.mubr.bf16.gmra.mxu0 %v1481
        %v7728 = vpop.f32.mrf.mxu0
        %v7729 = vadd.f32 %v7282, %v7728
        %v7730 = vpop.f32.mrf.mxu0
        %v7731 = vadd.f32 %v7286, %v7730
        %v7732 = vpop.f32.mrf.mxu0
        %v7733 = vadd.f32 %v7282, %v7732
        %v7734 = vpop.f32.mrf.mxu0
        %v7735 = vadd.f32 %v7286, %v7734
        %7736 = vmatprep.mubr.bf16.mxu0 0
        %7737 = vmatmul.mubr.bf16.gmra.mxu0 %v1482
        %v7738 = vpop.f32.mrf.mxu0
        %v7739 = vadd.f32 %v7282, %v7738
        %v7740 = vpop.f32.mrf.mxu0
        %v7741 = vadd.f32 %v7286, %v7740
        %v7742 = vpop.f32.mrf.mxu0
        %v7743 = vadd.f32 %v7282, %v7742
        %v7744 = vpop.f32.mrf.mxu0
        %v7745 = vadd.f32 %v7286, %v7744
        %7746 = vmatprep.mubr.bf16.mxu0 0
        %7747 = vmatmul.mubr.bf16.gmra.mxu0 %v1483
        %v7748 = vpop.f32.mrf.mxu0
        %v7749 = vadd.f32 %v7282, %v7748
        %v7750 = vpop.f32.mrf.mxu0
        %v7751 = vadd.f32 %v7286, %v7750
        %v7752 = vpop.f32.mrf.mxu0
        %v7753 = vadd.f32 %v7282, %v7752
        %v7754 = vpop.f32.mrf.mxu0
        %v7755 = vadd.f32 %v7286, %v7754
        %7756 = vmatprep.mubr.bf16.mxu0 0
        %7757 = vmatmul.mubr.bf16.gmra.mxu0 %v1484
        %v7758 = vpop.f32.mrf.mxu0
        %v7759 = vadd.f32 %v7282, %v7758
        %v7760 = vpop.f32.mrf.mxu0
        %v7761 = vadd.f32 %v7286, %v7760
        %v7762 = vpop.f32.mrf.mxu0
        %v7763 = vadd.f32 %v7282, %v7762
        %v7764 = vpop.f32.mrf.mxu0
        %v7765 = vadd.f32 %v7286, %v7764
        %7766 = vmatprep.mubr.bf16.mxu0 0
        %7767 = vmatmul.mubr.bf16.gmra.mxu0 %v1485
        %v7768 = vpop.f32.mrf.mxu0
        %v7769 = vadd.f32 %v7282, %v7768
        %v7770 = vpop.f32.mrf.mxu0
        %v7771 = vadd.f32 %v7286, %v7770
        %v7772 = vpop.f32.mrf.mxu0
        %v7773 = vadd.f32 %v7282, %v7772
        %v7774 = vpop.f32.mrf.mxu0
        %v7775 = vadd.f32 %v7286, %v7774
        %7776 = vmatprep.mubr.bf16.mxu0 0
        %7777 = vmatmul.mubr.bf16.gmra.mxu0 %v1486
        %v7778 = vpop.f32.mrf.mxu0
        %v7779 = vadd.f32 %v7282, %v7778
        %v7780 = vpop.f32.mrf.mxu0
        %v7781 = vadd.f32 %v7286, %v7780
        %v7782 = vpop.f32.mrf.mxu0
        %v7783 = vadd.f32 %v7282, %v7782
        %v7784 = vpop.f32.mrf.mxu0
        %v7785 = vadd.f32 %v7286, %v7784
        %7786 = vmatprep.mubr.bf16.mxu0 0
        %7787 = vmatmul.mubr.bf16.gmra.mxu0 %v1487
        %v7788 = vpop.f32.mrf.mxu0
        %v7789 = vadd.f32 %v7282, %v7788
        %v7790 = vpop.f32.mrf.mxu0
        %v7791 = vadd.f32 %v7286, %v7790
        %v7792 = vpop.f32.mrf.mxu0
        %v7793 = vadd.f32 %v7282, %v7792
        %v7794 = vpop.f32.mrf.mxu0
        %v7795 = vadd.f32 %v7286, %v7794
        %7796 = vmatprep.mubr.bf16.mxu0 0
        %7797 = vmatmul.mubr.bf16.gmra.mxu0 %v1488
        %v7798 = vpop.f32.mrf.mxu0
        %v7799 = vadd.f32 %v7282, %v7798
        %v7800 = vpop.f32.mrf.mxu0
        %v7801 = vadd.f32 %v7286, %v7800
        %v7802 = vpop.f32.mrf.mxu0
        %v7803 = vadd.f32 %v7282, %v7802
        %v7804 = vpop.f32.mrf.mxu0
        %v7805 = vadd.f32 %v7286, %v7804
        %7806 = vmatprep.mubr.bf16.mxu0 0
        %7807 = vmatmul.mubr.bf16.gmra.mxu0 %v1489
        %v7808 = vpop.f32.mrf.mxu0
        %v7809 = vadd.f32 %v7282, %v7808
        %v7810 = vpop.f32.mrf.mxu0
        %v7811 = vadd.f32 %v7286, %v7810
        %v7812 = vpop.f32.mrf.mxu0
        %v7813 = vadd.f32 %v7282, %v7812
        %v7814 = vpop.f32.mrf.mxu0
        %v7815 = vadd.f32 %v7286, %v7814
        %7816 = vmatprep.mubr.bf16.mxu0 0
        %7817 = vmatmul.mubr.bf16.gmra.mxu0 %v1490
        %v7818 = vpop.f32.mrf.mxu0
        %v7819 = vadd.f32 %v7282, %v7818
        %v7820 = vpop.f32.mrf.mxu0
        %v7821 = vadd.f32 %v7286, %v7820
        %v7822 = vpop.f32.mrf.mxu0
        %v7823 = vadd.f32 %v7282, %v7822
        %v7824 = vpop.f32.mrf.mxu0
        %v7825 = vadd.f32 %v7286, %v7824
        %7826 = vmatprep.mubr.bf16.mxu0 0
        %7827 = vmatmul.mubr.bf16.gmra.mxu0 %v1491
        %v7828 = vpop.f32.mrf.mxu0
        %v7829 = vadd.f32 %v7282, %v7828
        %v7830 = vpop.f32.mrf.mxu0
        %v7831 = vadd.f32 %v7286, %v7830
        %v7832 = vpop.f32.mrf.mxu0
        %v7833 = vadd.f32 %v7282, %v7832
        %v7834 = vpop.f32.mrf.mxu0
        %v7835 = vadd.f32 %v7286, %v7834
        %7836 = vdwg.mxu0
        %v7837 = vmax.f32 %v7486, 0.0
        %v7838 = vmax.f32 %v7488, 0.0
        %v7839 = vmax.f32 %v7679, 0.0
        %v7840 = vmax.f32 %v7681, 0.0
        %v7841 = vmax.f32 %v7490, 0.0
        %v7842 = vmax.f32 %v7492, 0.0
        %v7843 = vmax.f32 %v7683, 0.0
        %v7844 = vmax.f32 %v7685, 0.0
        %v7845 = vmax.f32 %v7496, 0.0
        %v7846 = vmax.f32 %v7498, 0.0
        %v7847 = vmax.f32 %v7689, 0.0
        %v7848 = vmax.f32 %v7691, 0.0
        %v7849 = vmax.f32 %v7500, 0.0
        %v7850 = vmax.f32 %v7502, 0.0
        %v7851 = vmax.f32 %v7693, 0.0
        %v7852 = vmax.f32 %v7695, 0.0
        %v7853 = vmax.f32 %v7506, 0.0
        %v7854 = vmax.f32 %v7508, 0.0
        %v7855 = vmax.f32 %v7699, 0.0
        %v7856 = vmax.f32 %v7701, 0.0
        %v7857 = vmax.f32 %v7510, 0.0
        %v7858 = vmax.f32 %v7512, 0.0
        %v7859 = vmax.f32 %v7703, 0.0
        %v7860 = vmax.f32 %v7705, 0.0
        %v7861 = vmax.f32 %v7516, 0.0
        %v7862 = vmax.f32 %v7518, 0.0
        %v7863 = vmax.f32 %v7709, 0.0
        %v7864 = vmax.f32 %v7711, 0.0
        %v7865 = vmax.f32 %v7520, 0.0
        %v7866 = vmax.f32 %v7522, 0.0
        %v7867 = vmax.f32 %v7713, 0.0
        %v7868 = vmax.f32 %v7715, 0.0
        %v7869 = vmax.f32 %v7526, 0.0
        %v7870 = vmax.f32 %v7528, 0.0
        %v7871 = vmax.f32 %v7719, 0.0
        %v7872 = vmax.f32 %v7721, 0.0
        %v7873 = vmax.f32 %v7530, 0.0
        %v7874 = vmax.f32 %v7532, 0.0
        %v7875 = vmax.f32 %v7723, 0.0
        %v7876 = vmax.f32 %v7725, 0.0
        %v7877 = vmax.f32 %v7536, 0.0
        %v7878 = vmax.f32 %v7538, 0.0
        %v7879 = vmax.f32 %v7729, 0.0
        %v7880 = vmax.f32 %v7731, 0.0
        %v7881 = vmax.f32 %v7540, 0.0
        %v7882 = vmax.f32 %v7542, 0.0
        %v7883 = vmax.f32 %v7733, 0.0
        %v7884 = vmax.f32 %v7735, 0.0
        %v7885 = vmax.f32 %v7546, 0.0
        %v7886 = vmax.f32 %v7548, 0.0
        %v7887 = vmax.f32 %v7739, 0.0
        %v7888 = vmax.f32 %v7741, 0.0
        %v7889 = vmax.f32 %v7550, 0.0
        %v7890 = vmax.f32 %v7552, 0.0
        %v7891 = vmax.f32 %v7743, 0.0
        %v7892 = vmax.f32 %v7745, 0.0
        %v7893 = vmax.f32 %v7556, 0.0
        %v7894 = vmax.f32 %v7558, 0.0
        %v7895 = vmax.f32 %v7749, 0.0
        %v7896 = vmax.f32 %v7751, 0.0
        %v7897 = vmax.f32 %v7560, 0.0
        %v7898 = vmax.f32 %v7562, 0.0
        %v7899 = vmax.f32 %v7753, 0.0
        %v7900 = vmax.f32 %v7755, 0.0
        %v7901 = vmax.f32 %v7566, 0.0
        %v7902 = vmax.f32 %v7568, 0.0
        %v7903 = vmax.f32 %v7759, 0.0
        %v7904 = vmax.f32 %v7761, 0.0
        %v7905 = vmax.f32 %v7570, 0.0
        %v7906 = vmax.f32 %v7572, 0.0
        %v7907 = vmax.f32 %v7763, 0.0
        %v7908 = vmax.f32 %v7765, 0.0
        %v7909 = vmax.f32 %v7576, 0.0
        %v7910 = vmax.f32 %v7578, 0.0
        %v7911 = vmax.f32 %v7769, 0.0
        %v7912 = vmax.f32 %v7771, 0.0
        %v7913 = vmax.f32 %v7580, 0.0
        %v7914 = vmax.f32 %v7582, 0.0
        %v7915 = vmax.f32 %v7773, 0.0
        %v7916 = vmax.f32 %v7775, 0.0
        %v7917 = vmax.f32 %v7586, 0.0
        %v7918 = vmax.f32 %v7588, 0.0
        %v7919 = vmax.f32 %v7779, 0.0
        %v7920 = vmax.f32 %v7781, 0.0
        %v7921 = vmax.f32 %v7590, 0.0
        %v7922 = vmax.f32 %v7592, 0.0
        %v7923 = vmax.f32 %v7783, 0.0
        %v7924 = vmax.f32 %v7785, 0.0
        %v7925 = vmax.f32 %v7596, 0.0
        %v7926 = vmax.f32 %v7598, 0.0
        %v7927 = vmax.f32 %v7789, 0.0
        %v7928 = vmax.f32 %v7791, 0.0
        %v7929 = vmax.f32 %v7600, 0.0
        %v7930 = vmax.f32 %v7602, 0.0
        %v7931 = vmax.f32 %v7793, 0.0
        %v7932 = vmax.f32 %v7795, 0.0
        %v7933 = vmax.f32 %v7606, 0.0
        %v7934 = vmax.f32 %v7608, 0.0
        %v7935 = vmax.f32 %v7799, 0.0
        %v7936 = vmax.f32 %v7801, 0.0
        %v7937 = vmax.f32 %v7610, 0.0
        %v7938 = vmax.f32 %v7612, 0.0
        %v7939 = vmax.f32 %v7803, 0.0
        %v7940 = vmax.f32 %v7805, 0.0
        %v7941 = vmax.f32 %v7616, 0.0
        %v7942 = vmax.f32 %v7618, 0.0
        %v7943 = vmax.f32 %v7809, 0.0
        %v7944 = vmax.f32 %v7811, 0.0
        %v7945 = vmax.f32 %v7620, 0.0
        %v7946 = vmax.f32 %v7622, 0.0
        %v7947 = vmax.f32 %v7813, 0.0
        %v7948 = vmax.f32 %v7815, 0.0
        %v7949 = vmax.f32 %v7626, 0.0
        %v7950 = vmax.f32 %v7628, 0.0
        %v7951 = vmax.f32 %v7819, 0.0
        %v7952 = vmax.f32 %v7821, 0.0
        %v7953 = vmax.f32 %v7630, 0.0
        %v7954 = vmax.f32 %v7632, 0.0
        %v7955 = vmax.f32 %v7823, 0.0
        %v7956 = vmax.f32 %v7825, 0.0
        %v7957 = vmax.f32 %v7636, 0.0
        %v7958 = vmax.f32 %v7638, 0.0
        %v7959 = vmax.f32 %v7829, 0.0
        %v7960 = vmax.f32 %v7831, 0.0
        %v7961 = vmax.f32 %v7640, 0.0
        %v7962 = vmax.f32 %v7642, 0.0
        %v7963 = vmax.f32 %v7833, 0.0
        %v7964 = vmax.f32 %v7835, 0.0
        %v7965 = vpack.c.bf16 %v7841, %v7837
        %v7966 = vpack.c.bf16 %v7842, %v7838
        %v7967 = vpack.c.bf16 %v7843, %v7839
        %v7968 = vpack.c.bf16 %v7844, %v7840
        %v7969 = vpack.c.bf16 %v7849, %v7845
        %v7970 = vpack.c.bf16 %v7850, %v7846
        %v7971 = vpack.c.bf16 %v7851, %v7847
        %v7972 = vpack.c.bf16 %v7852, %v7848
        %v7973 = vpack.c.bf16 %v7857, %v7853
        %v7974 = vpack.c.bf16 %v7858, %v7854
        %v7975 = vpack.c.bf16 %v7859, %v7855
        %v7976 = vpack.c.bf16 %v7860, %v7856
        %v7977 = vpack.c.bf16 %v7865, %v7861
        %v7978 = vpack.c.bf16 %v7866, %v7862
        %v7979 = vpack.c.bf16 %v7867, %v7863
        %v7980 = vpack.c.bf16 %v7868, %v7864
        %v7981 = vpack.c.bf16 %v7873, %v7869
        %v7982 = vpack.c.bf16 %v7874, %v7870
        %v7983 = vpack.c.bf16 %v7875, %v7871
        %v7984 = vpack.c.bf16 %v7876, %v7872
        %v7985 = vpack.c.bf16 %v7881, %v7877
        %v7986 = vpack.c.bf16 %v7882, %v7878
        %v7987 = vpack.c.bf16 %v7883, %v7879
        %v7988 = vpack.c.bf16 %v7884, %v7880
        %v7989 = vpack.c.bf16 %v7889, %v7885
        %v7990 = vpack.c.bf16 %v7890, %v7886
        %v7991 = vpack.c.bf16 %v7891, %v7887
        %v7992 = vpack.c.bf16 %v7892, %v7888
        %v7993 = vpack.c.bf16 %v7897, %v7893
        %v7994 = vpack.c.bf16 %v7898, %v7894
        %v7995 = vpack.c.bf16 %v7899, %v7895
        %v7996 = vpack.c.bf16 %v7900, %v7896
        %v7997 = vpack.c.bf16 %v7905, %v7901
        %v7998 = vpack.c.bf16 %v7906, %v7902
        %v7999 = vpack.c.bf16 %v7907, %v7903
        %v8000 = vpack.c.bf16 %v7908, %v7904
        %v8001 = vpack.c.bf16 %v7913, %v7909
        %v8002 = vpack.c.bf16 %v7914, %v7910
        %v8003 = vpack.c.bf16 %v7915, %v7911
        %v8004 = vpack.c.bf16 %v7916, %v7912
        %v8005 = vpack.c.bf16 %v7921, %v7917
        %v8006 = vpack.c.bf16 %v7922, %v7918
        %v8007 = vpack.c.bf16 %v7923, %v7919
        %v8008 = vpack.c.bf16 %v7924, %v7920
        %v8009 = vpack.c.bf16 %v7929, %v7925
        %v8010 = vpack.c.bf16 %v7930, %v7926
        %v8011 = vpack.c.bf16 %v7931, %v7927
        %v8012 = vpack.c.bf16 %v7932, %v7928
        %v8013 = vpack.c.bf16 %v7937, %v7933
        %v8014 = vpack.c.bf16 %v7938, %v7934
        %v8015 = vpack.c.bf16 %v7939, %v7935
        %v8016 = vpack.c.bf16 %v7940, %v7936
        %v8017 = vpack.c.bf16 %v7945, %v7941
        %v8018 = vpack.c.bf16 %v7946, %v7942
        %v8019 = vpack.c.bf16 %v7947, %v7943
        %v8020 = vpack.c.bf16 %v7948, %v7944
        %v8021 = vpack.c.bf16 %v7953, %v7949
        %v8022 = vpack.c.bf16 %v7954, %v7950
        %v8023 = vpack.c.bf16 %v7955, %v7951
        %v8024 = vpack.c.bf16 %v7956, %v7952
        %v8025 = vpack.c.bf16 %v7961, %v7957
        %v8026 = vpack.c.bf16 %v7962, %v7958
        %v8027 = vpack.c.bf16 %v7963, %v7959
        %v8028 = vpack.c.bf16 %v7964, %v7960
        %v8029 = vld [vmem:[%s695] sm:$0xf]
        %v8030 = vld [vmem:[%s695 + $0x4] sm:$0xf]
        %v8031 = vld [vmem:[%s695 + $0x8] sm:$0xf]
        %v8032 = vld [vmem:[%s695 + $0xc] sm:$0xf]
        %v8033 = vld [vmem:[%s695 + $0x10] sm:$0xf]
        %v8034 = vld [vmem:[%s695 + $0x14] sm:$0xf]
        %v8035 = vld [vmem:[%s695 + $0x18] sm:$0xf]
        %v8036 = vld [vmem:[%s695 + $0x1c] sm:$0xf]
        %v8037 = vld [vmem:[%s695 + $0x20] sm:$0xf]
        %v8038 = vld [vmem:[%s695 + $0x24] sm:$0xf]
        %v8039 = vld [vmem:[%s695 + $0x28] sm:$0xf]
        %v8040 = vld [vmem:[%s695 + $0x2c] sm:$0xf]
        %v8041 = vld [vmem:[%s695 + $0x30] sm:$0xf]
        %v8042 = vld [vmem:[%s695 + $0x34] sm:$0xf]
        %v8043 = vld [vmem:[%s695 + $0x38] sm:$0xf]
        %v8044 = vld [vmem:[%s695 + $0x3c] sm:$0xf]
        %v8045 = vld [vmem:[%s695 + $0x40] sm:$0xf]
        %v8046 = vld [vmem:[%s695 + $0x44] sm:$0xf]
        %v8047 = vld [vmem:[%s695 + $0x48] sm:$0xf]
        %v8048 = vld [vmem:[%s695 + $0x4c] sm:$0xf]
        %v8049 = vld [vmem:[%s695 + $0x50] sm:$0xf]
        %v8050 = vld [vmem:[%s695 + $0x54] sm:$0xf]
        %v8051 = vld [vmem:[%s695 + $0x58] sm:$0xf]
        %v8052 = vld [vmem:[%s695 + $0x5c] sm:$0xf]
        %v8053 = vld [vmem:[%s695 + $0x60] sm:$0xf]
        %v8054 = vld [vmem:[%s695 + $0x64] sm:$0xf]
        %v8055 = vld [vmem:[%s695 + $0x68] sm:$0xf]
        %v8056 = vld [vmem:[%s695 + $0x6c] sm:$0xf]
        %v8057 = vld [vmem:[%s695 + $0x70] sm:$0xf]
        %v8058 = vld [vmem:[%s695 + $0x74] sm:$0xf]
        %v8059 = vld [vmem:[%s695 + $0x78] sm:$0xf]
        %v8060 = vld [vmem:[%s695 + $0x7c] sm:$0xf]
        %v8061 = vld [vmem:[%s695 + $0x80] sm:$0xf]
        %v8062 = vld [vmem:[%s695 + $0x84] sm:$0xf]
        %v8063 = vld [vmem:[%s695 + $0x88] sm:$0xf]
        %v8064 = vld [vmem:[%s695 + $0x8c] sm:$0xf]
        %v8065 = vld [vmem:[%s695 + $0x90] sm:$0xf]
        %v8066 = vld [vmem:[%s695 + $0x94] sm:$0xf]
        %v8067 = vld [vmem:[%s695 + $0x98] sm:$0xf]
        %v8068 = vld [vmem:[%s695 + $0x9c] sm:$0xf]
        %v8069 = vld [vmem:[%s695 + $0xa0] sm:$0xf]
        %v8070 = vld [vmem:[%s695 + $0xa4] sm:$0xf]
        %v8071 = vld [vmem:[%s695 + $0xa8] sm:$0xf]
        %v8072 = vld [vmem:[%s695 + $0xac] sm:$0xf]
        %v8073 = vld [vmem:[%s695 + $0xb0] sm:$0xf]
        %v8074 = vld [vmem:[%s695 + $0xb4] sm:$0xf]
        %v8075 = vld [vmem:[%s695 + $0xb8] sm:$0xf]
        %v8076 = vld [vmem:[%s695 + $0xbc] sm:$0xf]
        %v8077 = vld [vmem:[%s695 + $0xc0] sm:$0xf]
        %v8078 = vld [vmem:[%s695 + $0xc4] sm:$0xf]
        %v8079 = vld [vmem:[%s695 + $0xc8] sm:$0xf]
        %v8080 = vld [vmem:[%s695 + $0xcc] sm:$0xf]
        %v8081 = vld [vmem:[%s695 + $0xd0] sm:$0xf]
        %v8082 = vld [vmem:[%s695 + $0xd4] sm:$0xf]
        %v8083 = vld [vmem:[%s695 + $0xd8] sm:$0xf]
        %v8084 = vld [vmem:[%s695 + $0xdc] sm:$0xf]
        %v8085 = vld [vmem:[%s695 + $0xe0] sm:$0xf]
        %v8086 = vld [vmem:[%s695 + $0xe4] sm:$0xf]
        %v8087 = vld [vmem:[%s695 + $0xe8] sm:$0xf]
        %v8088 = vld [vmem:[%s695 + $0xec] sm:$0xf]
        %v8089 = vld [vmem:[%s695 + $0xf0] sm:$0xf]
        %v8090 = vld [vmem:[%s695 + $0xf4] sm:$0xf]
        %v8091 = vld [vmem:[%s695 + $0xf8] sm:$0xf]
        %v8092 = vld [vmem:[%s695 + $0xfc] sm:$0xf]
        %v8093 = vld [vmem:[%s703] sm:$0x1]
        %v8095 = vlaneseq
        %v8096 = vshrl.u32 %v8095, 7
        %v8097 = vsub.s32 0, %v8096
        %v8098 = vrot.slane %v8093, %v8097
        %v8164 = vunpack.c.l.b16 %v8029
        %v8165 = vunpack.c.l.b16 %v8030
        %v8166 = vunpack.c.l.b16 %v8031
        %v8167 = vunpack.c.l.b16 %v8032
        %v8168 = vunpack.c.l.b16 %v8033
        %v8169 = vunpack.c.l.b16 %v8034
        %v8170 = vunpack.c.l.b16 %v8035
        %v8171 = vunpack.c.l.b16 %v8036
        %v8172 = vunpack.c.l.b16 %v8037
        %v8173 = vunpack.c.l.b16 %v8038
        %v8174 = vunpack.c.l.b16 %v8039
        %v8175 = vunpack.c.l.b16 %v8040
        %v8176 = vunpack.c.l.b16 %v8041
        %v8177 = vunpack.c.l.b16 %v8042
        %v8178 = vunpack.c.l.b16 %v8043
        %v8179 = vunpack.c.l.b16 %v8044
        %v8180 = vunpack.c.l.b16 %v8045
        %v8181 = vunpack.c.l.b16 %v8046
        %v8182 = vunpack.c.l.b16 %v8047
        %v8183 = vunpack.c.l.b16 %v8048
        %v8184 = vunpack.c.l.b16 %v8049
        %v8185 = vunpack.c.l.b16 %v8050
        %v8186 = vunpack.c.l.b16 %v8051
        %v8187 = vunpack.c.l.b16 %v8052
        %v8188 = vunpack.c.l.b16 %v8053
        %v8189 = vunpack.c.l.b16 %v8054
        %v8190 = vunpack.c.l.b16 %v8055
        %v8191 = vunpack.c.l.b16 %v8056
        %v8192 = vunpack.c.l.b16 %v8057
        %v8193 = vunpack.c.l.b16 %v8058
        %v8194 = vunpack.c.l.b16 %v8059
        %v8195 = vunpack.c.l.b16 %v8060
        %v8196 = vunpack.c.l.b16 %v8061
        %v8197 = vunpack.c.l.b16 %v8062
        %v8198 = vunpack.c.l.b16 %v8063
        %v8199 = vunpack.c.l.b16 %v8064
        %v8200 = vunpack.c.l.b16 %v8065
        %v8201 = vunpack.c.l.b16 %v8066
        %v8202 = vunpack.c.l.b16 %v8067
        %v8203 = vunpack.c.l.b16 %v8068
        %v8204 = vunpack.c.l.b16 %v8069
        %v8205 = vunpack.c.l.b16 %v8070
        %v8206 = vunpack.c.l.b16 %v8071
        %v8207 = vunpack.c.l.b16 %v8072
        %v8208 = vunpack.c.l.b16 %v8073
        %v8209 = vunpack.c.l.b16 %v8074
        %v8210 = vunpack.c.l.b16 %v8075
        %v8211 = vunpack.c.l.b16 %v8076
        %v8212 = vunpack.c.l.b16 %v8077
        %v8213 = vunpack.c.l.b16 %v8078
        %v8214 = vunpack.c.l.b16 %v8079
        %v8215 = vunpack.c.l.b16 %v8080
        %v8216 = vunpack.c.l.b16 %v8081
        %v8217 = vunpack.c.l.b16 %v8082
        %v8218 = vunpack.c.l.b16 %v8083
        %v8219 = vunpack.c.l.b16 %v8084
        %v8220 = vunpack.c.l.b16 %v8085
        %v8221 = vunpack.c.l.b16 %v8086
        %v8222 = vunpack.c.l.b16 %v8087
        %v8223 = vunpack.c.l.b16 %v8088
        %v8224 = vunpack.c.l.b16 %v8089
        %v8225 = vunpack.c.l.b16 %v8090
        %v8226 = vunpack.c.l.b16 %v8091
        %v8227 = vunpack.c.l.b16 %v8092
        %v8228 = vpack.c.b16 %v8165, %v8164
        %v8229 = vpack.c.b16 %v8167, %v8166
        %v8230 = vpack.c.b16 %v8169, %v8168
        %v8231 = vpack.c.b16 %v8171, %v8170
        %v8232 = vpack.c.b16 %v8173, %v8172
        %v8233 = vpack.c.b16 %v8175, %v8174
        %v8234 = vpack.c.b16 %v8177, %v8176
        %v8235 = vpack.c.b16 %v8179, %v8178
        %v8236 = vpack.c.b16 %v8181, %v8180
        %v8237 = vpack.c.b16 %v8183, %v8182
        %v8238 = vpack.c.b16 %v8185, %v8184
        %v8239 = vpack.c.b16 %v8187, %v8186
        %v8240 = vpack.c.b16 %v8189, %v8188
        %v8241 = vpack.c.b16 %v8191, %v8190
        %v8242 = vpack.c.b16 %v8193, %v8192
        %v8243 = vpack.c.b16 %v8195, %v8194
        %v8244 = vpack.c.b16 %v8197, %v8196
        %v8245 = vpack.c.b16 %v8199, %v8198
        %v8246 = vpack.c.b16 %v8201, %v8200
        %v8247 = vpack.c.b16 %v8203, %v8202
        %v8248 = vpack.c.b16 %v8205, %v8204
        %v8249 = vpack.c.b16 %v8207, %v8206
        %v8250 = vpack.c.b16 %v8209, %v8208
        %v8251 = vpack.c.b16 %v8211, %v8210
        %v8252 = vpack.c.b16 %v8213, %v8212
        %v8253 = vpack.c.b16 %v8215, %v8214
        %v8254 = vpack.c.b16 %v8217, %v8216
        %v8255 = vpack.c.b16 %v8219, %v8218
        %v8256 = vpack.c.b16 %v8221, %v8220
        %v8257 = vpack.c.b16 %v8223, %v8222
        %v8258 = vpack.c.b16 %v8225, %v8224
        %v8259 = vpack.c.b16 %v8227, %v8226
        %8292 = vmatprep.subr.bf16.mxu0 0
        %8293 = vmatpush1.bf16.msra.mxu0 %v8235
        %8294 = vmatprep.subr.bf16.mxu0 0
        %8295 = vmatpush1.bf16.msra.mxu0 %v8234
        %8296 = vmatprep.subr.bf16.mxu0 0
        %8297 = vmatpush1.bf16.msra.mxu0 %v8233
        %8298 = vmatprep.subr.bf16.mxu0 0
        %8299 = vmatpush1.bf16.msra.mxu0 %v8232
        %8300 = vmatprep.subr.bf16.mxu0 0
        %8301 = vmatpush1.bf16.msra.mxu0 %v8231
        %8302 = vmatprep.subr.bf16.mxu0 0
        %8303 = vmatpush1.bf16.msra.mxu0 %v8230
        %8304 = vmatprep.subr.bf16.mxu0 0
        %8305 = vmatpush1.bf16.msra.mxu0 %v8229
        %8306 = vmatprep.subr.bf16.mxu0 0
        %8307 = vmatpush1.bf16.msra.mxu0 %v8228
        %8308 = vmatprep.subr.bf16.mxu0 0
        %8309 = vmatpush2.bf16.msra.mxu0 %v8243
        %8310 = vmatprep.subr.bf16.mxu0 0
        %8311 = vmatpush2.bf16.msra.mxu0 %v8242
        %8312 = vmatprep.subr.bf16.mxu0 0
        %8313 = vmatpush2.bf16.msra.mxu0 %v8241
        %8314 = vmatprep.subr.bf16.mxu0 0
        %8315 = vmatpush2.bf16.msra.mxu0 %v8240
        %8316 = vmatprep.subr.bf16.mxu0 0
        %8317 = vmatpush2.bf16.msra.mxu0 %v8239
        %8318 = vmatprep.subr.bf16.mxu0 0
        %8319 = vmatpush2.bf16.msra.mxu0 %v8238
        %8320 = vmatprep.subr.bf16.mxu0 0
        %8321 = vmatpush2.bf16.msra.mxu0 %v8237
        %8322 = vmatprep.subr.bf16.mxu0 0
        %8323 = vmatpush2.bf16.msra.mxu0 %v8236
        %8324 = vmatprep.mubr.bf16.mxu0 %v7966
        %8325 = vmatmul.mubr.bf16.gmra.mxu0 %v7965
        %v8326 = vpop.f32.mrf.mxu0
        %v8327 = vadd.f32 %v8098, %v8326
        %v8328 = vpop.f32.mrf.mxu0
        %v8329 = vpop.f32.mrf.mxu0
        %v8330 = vadd.f32 %v8098, %v8329
        %v8331 = vpop.f32.mrf.mxu0
        %8332 = vmatprep.mubr.bf16.mxu0 %v7970
        %8333 = vmatmul.mubr.bf16.gmra.mxu0 %v7969
        %v8334 = vpop.f32.mrf.mxu0
        %v8335 = vadd.f32 %v8098, %v8334
        %v8336 = vpop.f32.mrf.mxu0
        %v8337 = vpop.f32.mrf.mxu0
        %v8338 = vadd.f32 %v8098, %v8337
        %v8339 = vpop.f32.mrf.mxu0
        %8340 = vmatprep.mubr.bf16.mxu0 %v7974
        %8341 = vmatmul.mubr.bf16.gmra.mxu0 %v7973
        %v8342 = vpop.f32.mrf.mxu0
        %v8343 = vadd.f32 %v8098, %v8342
        %v8344 = vpop.f32.mrf.mxu0
        %v8345 = vpop.f32.mrf.mxu0
        %v8346 = vadd.f32 %v8098, %v8345
        %v8347 = vpop.f32.mrf.mxu0
        %8348 = vmatprep.mubr.bf16.mxu0 %v7978
        %8349 = vmatmul.mubr.bf16.gmra.mxu0 %v7977
        %v8350 = vpop.f32.mrf.mxu0
        %v8351 = vadd.f32 %v8098, %v8350
        %v8352 = vpop.f32.mrf.mxu0
        %v8353 = vpop.f32.mrf.mxu0
        %v8354 = vadd.f32 %v8098, %v8353
        %v8355 = vpop.f32.mrf.mxu0
        %8356 = vmatprep.mubr.bf16.mxu0 %v7982
        %8357 = vmatmul.mubr.bf16.gmra.mxu0 %v7981
        %v8358 = vpop.f32.mrf.mxu0
        %v8359 = vadd.f32 %v8098, %v8358
        %v8360 = vpop.f32.mrf.mxu0
        %v8361 = vpop.f32.mrf.mxu0
        %v8362 = vadd.f32 %v8098, %v8361
        %v8363 = vpop.f32.mrf.mxu0
        %8364 = vmatprep.mubr.bf16.mxu0 %v7986
        %8365 = vmatmul.mubr.bf16.gmra.mxu0 %v7985
        %v8366 = vpop.f32.mrf.mxu0
        %v8367 = vadd.f32 %v8098, %v8366
        %v8368 = vpop.f32.mrf.mxu0
        %v8369 = vpop.f32.mrf.mxu0
        %v8370 = vadd.f32 %v8098, %v8369
        %v8371 = vpop.f32.mrf.mxu0
        %8372 = vmatprep.mubr.bf16.mxu0 %v7990
        %8373 = vmatmul.mubr.bf16.gmra.mxu0 %v7989
        %v8374 = vpop.f32.mrf.mxu0
        %v8375 = vadd.f32 %v8098, %v8374
        %v8376 = vpop.f32.mrf.mxu0
        %v8377 = vpop.f32.mrf.mxu0
        %v8378 = vadd.f32 %v8098, %v8377
        %v8379 = vpop.f32.mrf.mxu0
        %8380 = vmatprep.mubr.bf16.mxu0 %v7994
        %8381 = vmatmul.mubr.bf16.gmra.mxu0 %v7993
        %v8382 = vpop.f32.mrf.mxu0
        %v8383 = vadd.f32 %v8098, %v8382
        %v8384 = vpop.f32.mrf.mxu0
        %v8385 = vpop.f32.mrf.mxu0
        %v8386 = vadd.f32 %v8098, %v8385
        %v8387 = vpop.f32.mrf.mxu0
        %8388 = vmatprep.mubr.bf16.mxu0 %v7998
        %8389 = vmatmul.mubr.bf16.gmra.mxu0 %v7997
        %v8390 = vpop.f32.mrf.mxu0
        %v8391 = vadd.f32 %v8098, %v8390
        %v8392 = vpop.f32.mrf.mxu0
        %v8393 = vpop.f32.mrf.mxu0
        %v8394 = vadd.f32 %v8098, %v8393
        %v8395 = vpop.f32.mrf.mxu0
        %8396 = vmatprep.mubr.bf16.mxu0 %v8002
        %8397 = vmatmul.mubr.bf16.gmra.mxu0 %v8001
        %v8398 = vpop.f32.mrf.mxu0
        %v8399 = vadd.f32 %v8098, %v8398
        %v8400 = vpop.f32.mrf.mxu0
        %v8401 = vpop.f32.mrf.mxu0
        %v8402 = vadd.f32 %v8098, %v8401
        %v8403 = vpop.f32.mrf.mxu0
        %8404 = vmatprep.mubr.bf16.mxu0 %v8006
        %8405 = vmatmul.mubr.bf16.gmra.mxu0 %v8005
        %v8406 = vpop.f32.mrf.mxu0
        %v8407 = vadd.f32 %v8098, %v8406
        %v8408 = vpop.f32.mrf.mxu0
        %v8409 = vpop.f32.mrf.mxu0
        %v8410 = vadd.f32 %v8098, %v8409
        %v8411 = vpop.f32.mrf.mxu0
        %8412 = vmatprep.mubr.bf16.mxu0 %v8010
        %8413 = vmatmul.mubr.bf16.gmra.mxu0 %v8009
        %v8414 = vpop.f32.mrf.mxu0
        %v8415 = vadd.f32 %v8098, %v8414
        %v8416 = vpop.f32.mrf.mxu0
        %v8417 = vpop.f32.mrf.mxu0
        %v8418 = vadd.f32 %v8098, %v8417
        %v8419 = vpop.f32.mrf.mxu0
        %8420 = vmatprep.mubr.bf16.mxu0 %v8014
        %8421 = vmatmul.mubr.bf16.gmra.mxu0 %v8013
        %v8422 = vpop.f32.mrf.mxu0
        %v8423 = vadd.f32 %v8098, %v8422
        %v8424 = vpop.f32.mrf.mxu0
        %v8425 = vpop.f32.mrf.mxu0
        %v8426 = vadd.f32 %v8098, %v8425
        %v8427 = vpop.f32.mrf.mxu0
        %8428 = vmatprep.mubr.bf16.mxu0 %v8018
        %8429 = vmatmul.mubr.bf16.gmra.mxu0 %v8017
        %v8430 = vpop.f32.mrf.mxu0
        %v8431 = vadd.f32 %v8098, %v8430
        %v8432 = vpop.f32.mrf.mxu0
        %v8433 = vpop.f32.mrf.mxu0
        %v8434 = vadd.f32 %v8098, %v8433
        %v8435 = vpop.f32.mrf.mxu0
        %8436 = vmatprep.mubr.bf16.mxu0 %v8022
        %8437 = vmatmul.mubr.bf16.gmra.mxu0 %v8021
        %v8438 = vpop.f32.mrf.mxu0
        %v8439 = vadd.f32 %v8098, %v8438
        %v8440 = vpop.f32.mrf.mxu0
        %v8441 = vpop.f32.mrf.mxu0
        %v8442 = vadd.f32 %v8098, %v8441
        %v8443 = vpop.f32.mrf.mxu0
        %8444 = vmatprep.mubr.bf16.mxu0 %v8026
        %8445 = vmatmul.mubr.bf16.gmra.mxu0 %v8025
        %v8446 = vpop.f32.mrf.mxu0
        %v8447 = vadd.f32 %v8098, %v8446
        %v8448 = vpop.f32.mrf.mxu0
        %v8449 = vpop.f32.mrf.mxu0
        %v8450 = vadd.f32 %v8098, %v8449
        %v8451 = vpop.f32.mrf.mxu0
        %8452 = vdwg.mxu0
        %8453 = vmatprep.subr.bf16.mxu0 0
        %8454 = vmatpush1.bf16.msra.mxu0 %v8251
        %8455 = vmatprep.subr.bf16.mxu0 0
        %8456 = vmatpush1.bf16.msra.mxu0 %v8250
        %8457 = vmatprep.subr.bf16.mxu0 0
        %8458 = vmatpush1.bf16.msra.mxu0 %v8249
        %8459 = vmatprep.subr.bf16.mxu0 0
        %8460 = vmatpush1.bf16.msra.mxu0 %v8248
        %8461 = vmatprep.subr.bf16.mxu0 0
        %8462 = vmatpush1.bf16.msra.mxu0 %v8247
        %8463 = vmatprep.subr.bf16.mxu0 0
        %8464 = vmatpush1.bf16.msra.mxu0 %v8246
        %8465 = vmatprep.subr.bf16.mxu0 0
        %8466 = vmatpush1.bf16.msra.mxu0 %v8245
        %8467 = vmatprep.subr.bf16.mxu0 0
        %8468 = vmatpush1.bf16.msra.mxu0 %v8244
        %8469 = vmatprep.subr.bf16.mxu0 0
        %8470 = vmatpush2.bf16.msra.mxu0 %v8259
        %8471 = vmatprep.subr.bf16.mxu0 0
        %8472 = vmatpush2.bf16.msra.mxu0 %v8258
        %8473 = vmatprep.subr.bf16.mxu0 0
        %8474 = vmatpush2.bf16.msra.mxu0 %v8257
        %8475 = vmatprep.subr.bf16.mxu0 0
        %8476 = vmatpush2.bf16.msra.mxu0 %v8256
        %8477 = vmatprep.subr.bf16.mxu0 0
        %8478 = vmatpush2.bf16.msra.mxu0 %v8255
        %8479 = vmatprep.subr.bf16.mxu0 0
        %8480 = vmatpush2.bf16.msra.mxu0 %v8254
        %8481 = vmatprep.subr.bf16.mxu0 0
        %8482 = vmatpush2.bf16.msra.mxu0 %v8253
        %8483 = vmatprep.subr.bf16.mxu0 0
        %8484 = vmatpush2.bf16.msra.mxu0 %v8252
        %8485 = vmatprep.mubr.bf16.mxu0 %v7968
        %8486 = vmatmul.mubr.bf16.gmra.mxu0 %v7967
        %v8487 = vpop.f32.mrf.mxu0
        %v8488 = vadd.f32 %v8327, %v8487
        %v8489 = vpop.f32.mrf.mxu0
        %v8490 = vpop.f32.mrf.mxu0
        %v8491 = vadd.f32 %v8330, %v8490
        %v8492 = vpop.f32.mrf.mxu0
        %8493 = vmatprep.mubr.bf16.mxu0 %v7972
        %8494 = vmatmul.mubr.bf16.gmra.mxu0 %v7971
        %v8495 = vpop.f32.mrf.mxu0
        %v8496 = vadd.f32 %v8335, %v8495
        %v8497 = vpop.f32.mrf.mxu0
        %v8498 = vpop.f32.mrf.mxu0
        %v8499 = vadd.f32 %v8338, %v8498
        %v8500 = vpop.f32.mrf.mxu0
        %8501 = vmatprep.mubr.bf16.mxu0 %v7976
        %8502 = vmatmul.mubr.bf16.gmra.mxu0 %v7975
        %v8503 = vpop.f32.mrf.mxu0
        %v8504 = vadd.f32 %v8343, %v8503
        %v8505 = vpop.f32.mrf.mxu0
        %v8506 = vpop.f32.mrf.mxu0
        %v8507 = vadd.f32 %v8346, %v8506
        %v8508 = vpop.f32.mrf.mxu0
        %8509 = vmatprep.mubr.bf16.mxu0 %v7980
        %8510 = vmatmul.mubr.bf16.gmra.mxu0 %v7979
        %v8511 = vpop.f32.mrf.mxu0
        %v8512 = vadd.f32 %v8351, %v8511
        %v8513 = vpop.f32.mrf.mxu0
        %v8514 = vpop.f32.mrf.mxu0
        %v8515 = vadd.f32 %v8354, %v8514
        %v8516 = vpop.f32.mrf.mxu0
        %8517 = vmatprep.mubr.bf16.mxu0 %v7984
        %8518 = vmatmul.mubr.bf16.gmra.mxu0 %v7983
        %v8519 = vpop.f32.mrf.mxu0
        %v8520 = vadd.f32 %v8359, %v8519
        %v8521 = vpop.f32.mrf.mxu0
        %v8522 = vpop.f32.mrf.mxu0
        %v8523 = vadd.f32 %v8362, %v8522
        %v8524 = vpop.f32.mrf.mxu0
        %8525 = vmatprep.mubr.bf16.mxu0 %v7988
        %8526 = vmatmul.mubr.bf16.gmra.mxu0 %v7987
        %v8527 = vpop.f32.mrf.mxu0
        %v8528 = vadd.f32 %v8367, %v8527
        %v8529 = vpop.f32.mrf.mxu0
        %v8530 = vpop.f32.mrf.mxu0
        %v8531 = vadd.f32 %v8370, %v8530
        %v8532 = vpop.f32.mrf.mxu0
        %8533 = vmatprep.mubr.bf16.mxu0 %v7992
        %8534 = vmatmul.mubr.bf16.gmra.mxu0 %v7991
        %v8535 = vpop.f32.mrf.mxu0
        %v8536 = vadd.f32 %v8375, %v8535
        %v8537 = vpop.f32.mrf.mxu0
        %v8538 = vpop.f32.mrf.mxu0
        %v8539 = vadd.f32 %v8378, %v8538
        %v8540 = vpop.f32.mrf.mxu0
        %8541 = vmatprep.mubr.bf16.mxu0 %v7996
        %8542 = vmatmul.mubr.bf16.gmra.mxu0 %v7995
        %v8543 = vpop.f32.mrf.mxu0
        %v8544 = vadd.f32 %v8383, %v8543
        %v8545 = vpop.f32.mrf.mxu0
        %v8546 = vpop.f32.mrf.mxu0
        %v8547 = vadd.f32 %v8386, %v8546
        %v8548 = vpop.f32.mrf.mxu0
        %8549 = vmatprep.mubr.bf16.mxu0 %v8000
        %8550 = vmatmul.mubr.bf16.gmra.mxu0 %v7999
        %v8551 = vpop.f32.mrf.mxu0
        %v8552 = vadd.f32 %v8391, %v8551
        %v8553 = vpop.f32.mrf.mxu0
        %v8554 = vpop.f32.mrf.mxu0
        %v8555 = vadd.f32 %v8394, %v8554
        %v8556 = vpop.f32.mrf.mxu0
        %8557 = vmatprep.mubr.bf16.mxu0 %v8004
        %8558 = vmatmul.mubr.bf16.gmra.mxu0 %v8003
        %v8559 = vpop.f32.mrf.mxu0
        %v8560 = vadd.f32 %v8399, %v8559
        %v8561 = vpop.f32.mrf.mxu0
        %v8562 = vpop.f32.mrf.mxu0
        %v8563 = vadd.f32 %v8402, %v8562
        %v8564 = vpop.f32.mrf.mxu0
        %8565 = vmatprep.mubr.bf16.mxu0 %v8008
        %8566 = vmatmul.mubr.bf16.gmra.mxu0 %v8007
        %v8567 = vpop.f32.mrf.mxu0
        %v8568 = vadd.f32 %v8407, %v8567
        %v8569 = vpop.f32.mrf.mxu0
        %v8570 = vpop.f32.mrf.mxu0
        %v8571 = vadd.f32 %v8410, %v8570
        %v8572 = vpop.f32.mrf.mxu0
        %8573 = vmatprep.mubr.bf16.mxu0 %v8012
        %8574 = vmatmul.mubr.bf16.gmra.mxu0 %v8011
        %v8575 = vpop.f32.mrf.mxu0
        %v8576 = vadd.f32 %v8415, %v8575
        %v8577 = vpop.f32.mrf.mxu0
        %v8578 = vpop.f32.mrf.mxu0
        %v8579 = vadd.f32 %v8418, %v8578
        %v8580 = vpop.f32.mrf.mxu0
        %8581 = vmatprep.mubr.bf16.mxu0 %v8016
        %8582 = vmatmul.mubr.bf16.gmra.mxu0 %v8015
        %v8583 = vpop.f32.mrf.mxu0
        %v8584 = vadd.f32 %v8423, %v8583
        %v8585 = vpop.f32.mrf.mxu0
        %v8586 = vpop.f32.mrf.mxu0
        %v8587 = vadd.f32 %v8426, %v8586
        %v8588 = vpop.f32.mrf.mxu0
        %8589 = vmatprep.mubr.bf16.mxu0 %v8020
        %8590 = vmatmul.mubr.bf16.gmra.mxu0 %v8019
        %v8591 = vpop.f32.mrf.mxu0
        %v8592 = vadd.f32 %v8431, %v8591
        %v8593 = vpop.f32.mrf.mxu0
        %v8594 = vpop.f32.mrf.mxu0
        %v8595 = vadd.f32 %v8434, %v8594
        %v8596 = vpop.f32.mrf.mxu0
        %8597 = vmatprep.mubr.bf16.mxu0 %v8024
        %8598 = vmatmul.mubr.bf16.gmra.mxu0 %v8023
        %v8599 = vpop.f32.mrf.mxu0
        %v8600 = vadd.f32 %v8439, %v8599
        %v8601 = vpop.f32.mrf.mxu0
        %v8602 = vpop.f32.mrf.mxu0
        %v8603 = vadd.f32 %v8442, %v8602
        %v8604 = vpop.f32.mrf.mxu0
        %8605 = vmatprep.mubr.bf16.mxu0 %v8028
        %8606 = vmatmul.mubr.bf16.gmra.mxu0 %v8027
        %v8607 = vpop.f32.mrf.mxu0
        %v8608 = vadd.f32 %v8447, %v8607
        %v8609 = vpop.f32.mrf.mxu0
        %v8610 = vpop.f32.mrf.mxu0
        %v8611 = vadd.f32 %v8450, %v8610
        %v8612 = vpop.f32.mrf.mxu0
        %8613 = vdwg.mxu0
        %v8614 = vadd.f32 %v919, %v8488
        %v8615 = vadd.f32 %v920, %v8491
        %v8616 = vadd.f32 %v921, %v8496
        %v8617 = vadd.f32 %v922, %v8499
        %v8618 = vadd.f32 %v923, %v8504
        %v8619 = vadd.f32 %v924, %v8507
        %v8620 = vadd.f32 %v925, %v8512
        %v8621 = vadd.f32 %v926, %v8515
        %v8622 = vadd.f32 %v927, %v8520
        %v8623 = vadd.f32 %v928, %v8523
        %v8624 = vadd.f32 %v929, %v8528
        %v8625 = vadd.f32 %v930, %v8531
        %v8626 = vadd.f32 %v931, %v8536
        %v8627 = vadd.f32 %v932, %v8539
        %v8628 = vadd.f32 %v933, %v8544
        %v8629 = vadd.f32 %v934, %v8547
        %v8630 = vadd.f32 %v935, %v8552
        %v8631 = vadd.f32 %v936, %v8555
        %v8632 = vadd.f32 %v937, %v8560
        %v8633 = vadd.f32 %v938, %v8563
        %v8634 = vadd.f32 %v939, %v8568
        %v8635 = vadd.f32 %v940, %v8571
        %v8636 = vadd.f32 %v941, %v8576
        %v8637 = vadd.f32 %v942, %v8579
        %v8638 = vadd.f32 %v943, %v8584
        %v8639 = vadd.f32 %v944, %v8587
        %v8640 = vadd.f32 %v945, %v8592
        %v8641 = vadd.f32 %v946, %v8595
        %v8642 = vadd.f32 %v947, %v8600
        %v8643 = vadd.f32 %v948, %v8603
        %v8644 = vadd.f32 %v949, %v8608
        %v8645 = vadd.f32 %v950, %v8611
        %v8646 = vadd.f32 %v8614, %v7205
        %v8647 = vadd.f32 %v8615, %v7206
        %v8648 = vadd.f32 %v8616, %v7207
        %v8649 = vadd.f32 %v8617, %v7208
        %v8650 = vadd.f32 %v8618, %v7209
        %v8651 = vadd.f32 %v8619, %v7210
        %v8652 = vadd.f32 %v8620, %v7211
        %v8653 = vadd.f32 %v8621, %v7212
        %v8654 = vadd.f32 %v8622, %v7213
        %v8655 = vadd.f32 %v8623, %v7214
        %v8656 = vadd.f32 %v8624, %v7215
        %v8657 = vadd.f32 %v8625, %v7216
        %v8658 = vadd.f32 %v8626, %v7217
        %v8659 = vadd.f32 %v8627, %v7218
        %v8660 = vadd.f32 %v8628, %v7219
        %v8661 = vadd.f32 %v8629, %v7220
        %v8662 = vadd.f32 %v8630, %v7221
        %v8663 = vadd.f32 %v8631, %v7222
        %v8664 = vadd.f32 %v8632, %v7223
        %v8665 = vadd.f32 %v8633, %v7224
        %v8666 = vadd.f32 %v8634, %v7225
        %v8667 = vadd.f32 %v8635, %v7226
        %v8668 = vadd.f32 %v8636, %v7227
        %v8669 = vadd.f32 %v8637, %v7228
        %v8670 = vadd.f32 %v8638, %v7229
        %v8671 = vadd.f32 %v8639, %v7230
        %v8672 = vadd.f32 %v8640, %v7231
        %v8673 = vadd.f32 %v8641, %v7232
        %v8674 = vadd.f32 %v8642, %v7233
        %v8675 = vadd.f32 %v8643, %v7234
        %v8676 = vadd.f32 %v8644, %v7235
        %v8677 = vadd.f32 %v8645, %v7236
        %8678 = vst [vmem:[#allocation2] sm:$0xff] %v8646
        %8679 = vst [vmem:[#allocation2 + $0x8] sm:$0xff] %v8647
        %8680 = vst [vmem:[#allocation2 + $0x10] sm:$0xff] %v8648
        %8681 = vst [vmem:[#allocation2 + $0x18] sm:$0xff] %v8649
        %8682 = vst [vmem:[#allocation2 + $0x20] sm:$0xff] %v8650
        %8683 = vst [vmem:[#allocation2 + $0x28] sm:$0xff] %v8651
        %8684 = vst [vmem:[#allocation2 + $0x30] sm:$0xff] %v8652
        %8685 = vst [vmem:[#allocation2 + $0x38] sm:$0xff] %v8653
        %8686 = vst [vmem:[#allocation2 + $0x40] sm:$0xff] %v8654
        %8687 = vst [vmem:[#allocation2 + $0x48] sm:$0xff] %v8655
        %8688 = vst [vmem:[#allocation2 + $0x50] sm:$0xff] %v8656
        %8689 = vst [vmem:[#allocation2 + $0x58] sm:$0xff] %v8657
        %8690 = vst [vmem:[#allocation2 + $0x60] sm:$0xff] %v8658
        %8691 = vst [vmem:[#allocation2 + $0x68] sm:$0xff] %v8659
        %8692 = vst [vmem:[#allocation2 + $0x70] sm:$0xff] %v8660
        %8693 = vst [vmem:[#allocation2 + $0x78] sm:$0xff] %v8661
        %8694 = vst [vmem:[#allocation2 + $0x80] sm:$0xff] %v8662
        %8695 = vst [vmem:[#allocation2 + $0x88] sm:$0xff] %v8663
        %8696 = vst [vmem:[#allocation2 + $0x90] sm:$0xff] %v8664
        %8697 = vst [vmem:[#allocation2 + $0x98] sm:$0xff] %v8665
        %8698 = vst [vmem:[#allocation2 + $0xa0] sm:$0xff] %v8666
        %8699 = vst [vmem:[#allocation2 + $0xa8] sm:$0xff] %v8667
        %8700 = vst [vmem:[#allocation2 + $0xb0] sm:$0xff] %v8668
        %8701 = vst [vmem:[#allocation2 + $0xb8] sm:$0xff] %v8669
        %8702 = vst [vmem:[#allocation2 + $0xc0] sm:$0xff] %v8670
        %8703 = vst [vmem:[#allocation2 + $0xc8] sm:$0xff] %v8671
        %8704 = vst [vmem:[#allocation2 + $0xd0] sm:$0xff] %v8672
        %8705 = vst [vmem:[#allocation2 + $0xd8] sm:$0xff] %v8673
        %8706 = vst [vmem:[#allocation2 + $0xe0] sm:$0xff] %v8674
        %8707 = vst [vmem:[#allocation2 + $0xe8] sm:$0xff] %v8675
        %8708 = vst [vmem:[#allocation2 + $0xf0] sm:$0xff] %v8676
        %8709 = vst [vmem:[#allocation2 + $0xf8] sm:$0xff] %v8677
        %p8710 = scmp.eq.s32.totalorder %s44, 1
        // Predicated region
        $region109: #{tpu_custom_call.1} parent=83 // pred_check
          %p8711 = pneg %p8710
        $region110: #{tpu_custom_call.1} parent=83 // pred_check_branch
          %8713 = sbr.rel (%p8711) target = $region112
        $region111: #{tpu_custom_call.1} parent=83 // pred_region
          %8714 = vadd.xlane.f32.xlu0 %v8646
          %v8715 = vpop.xlane.xlu0 %8714
          %8716 = vadd.xlane.f32.xlu0 %v8647
          %v8717 = vpop.xlane.xlu0 %8716
          %8718 = vadd.xlane.f32.xlu0 %v8648
          %v8719 = vpop.xlane.xlu0 %8718
          %8720 = vadd.xlane.f32.xlu0 %v8649
          %v8721 = vpop.xlane.xlu0 %8720
          %8722 = vadd.xlane.f32.xlu0 %v8650
          %v8723 = vpop.xlane.xlu0 %8722
          %8724 = vadd.xlane.f32.xlu0 %v8651
          %v8725 = vpop.xlane.xlu0 %8724
          %8726 = vadd.xlane.f32.xlu0 %v8652
          %v8727 = vpop.xlane.xlu0 %8726
          %8728 = vadd.xlane.f32.xlu0 %v8653
          %v8729 = vpop.xlane.xlu0 %8728
          %8730 = vadd.xlane.f32.xlu0 %v8654
          %v8731 = vpop.xlane.xlu0 %8730
          %8732 = vadd.xlane.f32.xlu0 %v8655
          %v8733 = vpop.xlane.xlu0 %8732
          %8734 = vadd.xlane.f32.xlu0 %v8656
          %v8735 = vpop.xlane.xlu0 %8734
          %8736 = vadd.xlane.f32.xlu0 %v8657
          %v8737 = vpop.xlane.xlu0 %8736
          %8738 = vadd.xlane.f32.xlu0 %v8658
          %v8739 = vpop.xlane.xlu0 %8738
          %8740 = vadd.xlane.f32.xlu0 %v8659
          %v8741 = vpop.xlane.xlu0 %8740
          %8742 = vadd.xlane.f32.xlu0 %v8660
          %v8743 = vpop.xlane.xlu0 %8742
          %8744 = vadd.xlane.f32.xlu0 %v8661
          %v8745 = vpop.xlane.xlu0 %8744
          %8746 = vadd.xlane.f32.xlu0 %v8662
          %v8747 = vpop.xlane.xlu0 %8746
          %8748 = vadd.xlane.f32.xlu0 %v8663
          %v8749 = vpop.xlane.xlu0 %8748
          %8750 = vadd.xlane.f32.xlu0 %v8664
          %v8751 = vpop.xlane.xlu0 %8750
          %8752 = vadd.xlane.f32.xlu0 %v8665
          %v8753 = vpop.xlane.xlu0 %8752
          %8754 = vadd.xlane.f32.xlu0 %v8666
          %v8755 = vpop.xlane.xlu0 %8754
          %8756 = vadd.xlane.f32.xlu0 %v8667
          %v8757 = vpop.xlane.xlu0 %8756
          %8758 = vadd.xlane.f32.xlu0 %v8668
          %v8759 = vpop.xlane.xlu0 %8758
          %8760 = vadd.xlane.f32.xlu0 %v8669
          %v8761 = vpop.xlane.xlu0 %8760
          %8762 = vadd.xlane.f32.xlu0 %v8670
          %v8763 = vpop.xlane.xlu0 %8762
          %8764 = vadd.xlane.f32.xlu0 %v8671
          %v8765 = vpop.xlane.xlu0 %8764
          %8766 = vadd.xlane.f32.xlu0 %v8672
          %v8767 = vpop.xlane.xlu0 %8766
          %8768 = vadd.xlane.f32.xlu0 %v8673
          %v8769 = vpop.xlane.xlu0 %8768
          %8770 = vadd.xlane.f32.xlu0 %v8674
          %v8771 = vpop.xlane.xlu0 %8770
          %8772 = vadd.xlane.f32.xlu0 %v8675
          %v8773 = vpop.xlane.xlu0 %8772
          %8774 = vadd.xlane.f32.xlu0 %v8676
          %v8775 = vpop.xlane.xlu0 %8774
          %8776 = vadd.xlane.f32.xlu0 %v8677
          %v8777 = vpop.xlane.xlu0 %8776
          %v8778 = vmul.f32 %v8715, %v1015
          %v8779 = vmul.f32 %v8717, %v1015
          %v8780 = vmul.f32 %v8719, %v1015
          %v8781 = vmul.f32 %v8721, %v1015
          %v8782 = vmul.f32 %v8723, %v1015
          %v8783 = vmul.f32 %v8725, %v1015
          %v8784 = vmul.f32 %v8727, %v1015
          %v8785 = vmul.f32 %v8729, %v1015
          %v8786 = vmul.f32 %v8731, %v1015
          %v8787 = vmul.f32 %v8733, %v1015
          %v8788 = vmul.f32 %v8735, %v1015
          %v8789 = vmul.f32 %v8737, %v1015
          %v8790 = vmul.f32 %v8739, %v1015
          %v8791 = vmul.f32 %v8741, %v1015
          %v8792 = vmul.f32 %v8743, %v1015
          %v8793 = vmul.f32 %v8745, %v1015
          %v8794 = vmul.f32 %v8747, %v1015
          %v8795 = vmul.f32 %v8749, %v1015
          %v8796 = vmul.f32 %v8751, %v1015
          %v8797 = vmul.f32 %v8753, %v1015
          %v8798 = vmul.f32 %v8755, %v1015
          %v8799 = vmul.f32 %v8757, %v1015
          %v8800 = vmul.f32 %v8759, %v1015
          %v8801 = vmul.f32 %v8761, %v1015
          %v8802 = vmul.f32 %v8763, %v1015
          %v8803 = vmul.f32 %v8765, %v1015
          %v8804 = vmul.f32 %v8767, %v1015
          %v8805 = vmul.f32 %v8769, %v1015
          %v8806 = vmul.f32 %v8771, %v1015
          %v8807 = vmul.f32 %v8773, %v1015
          %v8808 = vmul.f32 %v8775, %v1015
          %v8809 = vmul.f32 %v8777, %v1015
          %v8810 = vsub.f32 %v8646, %v8778
          %v8811 = vsub.f32 %v8647, %v8779
          %v8812 = vsub.f32 %v8648, %v8780
          %v8813 = vsub.f32 %v8649, %v8781
          %v8814 = vsub.f32 %v8650, %v8782
          %v8815 = vsub.f32 %v8651, %v8783
          %v8816 = vsub.f32 %v8652, %v8784
          %v8817 = vsub.f32 %v8653, %v8785
          %v8818 = vsub.f32 %v8654, %v8786
          %v8819 = vsub.f32 %v8655, %v8787
          %v8820 = vsub.f32 %v8656, %v8788
          %v8821 = vsub.f32 %v8657, %v8789
          %v8822 = vsub.f32 %v8658, %v8790
          %v8823 = vsub.f32 %v8659, %v8791
          %v8824 = vsub.f32 %v8660, %v8792
          %v8825 = vsub.f32 %v8661, %v8793
          %v8826 = vsub.f32 %v8662, %v8794
          %v8827 = vsub.f32 %v8663, %v8795
          %v8828 = vsub.f32 %v8664, %v8796
          %v8829 = vsub.f32 %v8665, %v8797
          %v8830 = vsub.f32 %v8666, %v8798
          %v8831 = vsub.f32 %v8667, %v8799
          %v8832 = vsub.f32 %v8668, %v8800
          %v8833 = vsub.f32 %v8669, %v8801
          %v8834 = vsub.f32 %v8670, %v8802
          %v8835 = vsub.f32 %v8671, %v8803
          %v8836 = vsub.f32 %v8672, %v8804
          %v8837 = vsub.f32 %v8673, %v8805
          %v8838 = vsub.f32 %v8674, %v8806
          %v8839 = vsub.f32 %v8675, %v8807
          %v8840 = vsub.f32 %v8676, %v8808
          %v8841 = vsub.f32 %v8677, %v8809
          %v8842 = vmul.f32 %v8810, %v8810
          %v8843 = vmul.f32 %v8811, %v8811
          %v8844 = vmul.f32 %v8812, %v8812
          %v8845 = vmul.f32 %v8813, %v8813
          %v8846 = vmul.f32 %v8814, %v8814
          %v8847 = vmul.f32 %v8815, %v8815
          %v8848 = vmul.f32 %v8816, %v8816
          %v8849 = vmul.f32 %v8817, %v8817
          %v8850 = vmul.f32 %v8818, %v8818
          %v8851 = vmul.f32 %v8819, %v8819
          %v8852 = vmul.f32 %v8820, %v8820
          %v8853 = vmul.f32 %v8821, %v8821
          %v8854 = vmul.f32 %v8822, %v8822
          %v8855 = vmul.f32 %v8823, %v8823
          %v8856 = vmul.f32 %v8824, %v8824
          %v8857 = vmul.f32 %v8825, %v8825
          %v8858 = vmul.f32 %v8826, %v8826
          %v8859 = vmul.f32 %v8827, %v8827
          %v8860 = vmul.f32 %v8828, %v8828
          %v8861 = vmul.f32 %v8829, %v8829
          %v8862 = vmul.f32 %v8830, %v8830
          %v8863 = vmul.f32 %v8831, %v8831
          %v8864 = vmul.f32 %v8832, %v8832
          %v8865 = vmul.f32 %v8833, %v8833
          %v8866 = vmul.f32 %v8834, %v8834
          %v8867 = vmul.f32 %v8835, %v8835
          %v8868 = vmul.f32 %v8836, %v8836
          %v8869 = vmul.f32 %v8837, %v8837
          %v8870 = vmul.f32 %v8838, %v8838
          %v8871 = vmul.f32 %v8839, %v8839
          %v8872 = vmul.f32 %v8840, %v8840
          %v8873 = vmul.f32 %v8841, %v8841
          %8874 = vadd.xlane.f32.xlu0 %v8842
          %v8875 = vpop.xlane.xlu0 %8874
          %8876 = vadd.xlane.f32.xlu0 %v8843
          %v8877 = vpop.xlane.xlu0 %8876
          %8878 = vadd.xlane.f32.xlu0 %v8844
          %v8879 = vpop.xlane.xlu0 %8878
          %8880 = vadd.xlane.f32.xlu0 %v8845
          %v8881 = vpop.xlane.xlu0 %8880
          %8882 = vadd.xlane.f32.xlu0 %v8846
          %v8883 = vpop.xlane.xlu0 %8882
          %8884 = vadd.xlane.f32.xlu0 %v8847
          %v8885 = vpop.xlane.xlu0 %8884
          %8886 = vadd.xlane.f32.xlu0 %v8848
          %v8887 = vpop.xlane.xlu0 %8886
          %8888 = vadd.xlane.f32.xlu0 %v8849
          %v8889 = vpop.xlane.xlu0 %8888
          %8890 = vadd.xlane.f32.xlu0 %v8850
          %v8891 = vpop.xlane.xlu0 %8890
          %8892 = vadd.xlane.f32.xlu0 %v8851
          %v8893 = vpop.xlane.xlu0 %8892
          %8894 = vadd.xlane.f32.xlu0 %v8852
          %v8895 = vpop.xlane.xlu0 %8894
          %8896 = vadd.xlane.f32.xlu0 %v8853
          %v8897 = vpop.xlane.xlu0 %8896
          %8898 = vadd.xlane.f32.xlu0 %v8854
          %v8899 = vpop.xlane.xlu0 %8898
          %8900 = vadd.xlane.f32.xlu0 %v8855
          %v8901 = vpop.xlane.xlu0 %8900
          %8902 = vadd.xlane.f32.xlu0 %v8856
          %v8903 = vpop.xlane.xlu0 %8902
          %8904 = vadd.xlane.f32.xlu0 %v8857
          %v8905 = vpop.xlane.xlu0 %8904
          %8906 = vadd.xlane.f32.xlu0 %v8858
          %v8907 = vpop.xlane.xlu0 %8906
          %8908 = vadd.xlane.f32.xlu0 %v8859
          %v8909 = vpop.xlane.xlu0 %8908
          %8910 = vadd.xlane.f32.xlu0 %v8860
          %v8911 = vpop.xlane.xlu0 %8910
          %8912 = vadd.xlane.f32.xlu0 %v8861
          %v8913 = vpop.xlane.xlu0 %8912
          %8914 = vadd.xlane.f32.xlu0 %v8862
          %v8915 = vpop.xlane.xlu0 %8914
          %8916 = vadd.xlane.f32.xlu0 %v8863
          %v8917 = vpop.xlane.xlu0 %8916
          %8918 = vadd.xlane.f32.xlu0 %v8864
          %v8919 = vpop.xlane.xlu0 %8918
          %8920 = vadd.xlane.f32.xlu0 %v8865
          %v8921 = vpop.xlane.xlu0 %8920
          %8922 = vadd.xlane.f32.xlu0 %v8866
          %v8923 = vpop.xlane.xlu0 %8922
          %8924 = vadd.xlane.f32.xlu0 %v8867
          %v8925 = vpop.xlane.xlu0 %8924
          %8926 = vadd.xlane.f32.xlu0 %v8868
          %v8927 = vpop.xlane.xlu0 %8926
          %8928 = vadd.xlane.f32.xlu0 %v8869
          %v8929 = vpop.xlane.xlu0 %8928
          %8930 = vadd.xlane.f32.xlu0 %v8870
          %v8931 = vpop.xlane.xlu0 %8930
          %8932 = vadd.xlane.f32.xlu0 %v8871
          %v8933 = vpop.xlane.xlu0 %8932
          %8934 = vadd.xlane.f32.xlu0 %v8872
          %v8935 = vpop.xlane.xlu0 %8934
          %8936 = vadd.xlane.f32.xlu0 %v8873
          %v8937 = vpop.xlane.xlu0 %8936
          %v8938 = vmul.f32 %v8875, %v1015
          %v8939 = vmul.f32 %v8877, %v1015
          %v8940 = vmul.f32 %v8879, %v1015
          %v8941 = vmul.f32 %v8881, %v1015
          %v8942 = vmul.f32 %v8883, %v1015
          %v8943 = vmul.f32 %v8885, %v1015
          %v8944 = vmul.f32 %v8887, %v1015
          %v8945 = vmul.f32 %v8889, %v1015
          %v8946 = vmul.f32 %v8891, %v1015
          %v8947 = vmul.f32 %v8893, %v1015
          %v8948 = vmul.f32 %v8895, %v1015
          %v8949 = vmul.f32 %v8897, %v1015
          %v8950 = vmul.f32 %v8899, %v1015
          %v8951 = vmul.f32 %v8901, %v1015
          %v8952 = vmul.f32 %v8903, %v1015
          %v8953 = vmul.f32 %v8905, %v1015
          %v8954 = vmul.f32 %v8907, %v1015
          %v8955 = vmul.f32 %v8909, %v1015
          %v8956 = vmul.f32 %v8911, %v1015
          %v8957 = vmul.f32 %v8913, %v1015
          %v8958 = vmul.f32 %v8915, %v1015
          %v8959 = vmul.f32 %v8917, %v1015
          %v8960 = vmul.f32 %v8919, %v1015
          %v8961 = vmul.f32 %v8921, %v1015
          %v8962 = vmul.f32 %v8923, %v1015
          %v8963 = vmul.f32 %v8925, %v1015
          %v8964 = vmul.f32 %v8927, %v1015
          %v8965 = vmul.f32 %v8929, %v1015
          %v8966 = vmul.f32 %v8931, %v1015
          %v8967 = vmul.f32 %v8933, %v1015
          %v8968 = vmul.f32 %v8935, %v1015
          %v8969 = vmul.f32 %v8937, %v1015
          %v8970 = vadd.f32 %v8938, 1e-05
          %v8971 = vadd.f32 %v8939, 1e-05
          %v8972 = vadd.f32 %v8940, 1e-05
          %v8973 = vadd.f32 %v8941, 1e-05
          %v8974 = vadd.f32 %v8942, 1e-05
          %v8975 = vadd.f32 %v8943, 1e-05
          %v8976 = vadd.f32 %v8944, 1e-05
          %v8977 = vadd.f32 %v8945, 1e-05
          %v8978 = vadd.f32 %v8946, 1e-05
          %v8979 = vadd.f32 %v8947, 1e-05
          %v8980 = vadd.f32 %v8948, 1e-05
          %v8981 = vadd.f32 %v8949, 1e-05
          %v8982 = vadd.f32 %v8950, 1e-05
          %v8983 = vadd.f32 %v8951, 1e-05
          %v8984 = vadd.f32 %v8952, 1e-05
          %v8985 = vadd.f32 %v8953, 1e-05
          %v8986 = vadd.f32 %v8954, 1e-05
          %v8987 = vadd.f32 %v8955, 1e-05
          %v8988 = vadd.f32 %v8956, 1e-05
          %v8989 = vadd.f32 %v8957, 1e-05
          %v8990 = vadd.f32 %v8958, 1e-05
          %v8991 = vadd.f32 %v8959, 1e-05
          %v8992 = vadd.f32 %v8960, 1e-05
          %v8993 = vadd.f32 %v8961, 1e-05
          %v8994 = vadd.f32 %v8962, 1e-05
          %v8995 = vadd.f32 %v8963, 1e-05
          %v8996 = vadd.f32 %v8964, 1e-05
          %v8997 = vadd.f32 %v8965, 1e-05
          %v8998 = vadd.f32 %v8966, 1e-05
          %v8999 = vadd.f32 %v8967, 1e-05
          %v9000 = vadd.f32 %v8968, 1e-05
          %v9001 = vadd.f32 %v8969, 1e-05
          %v9002 = vrsqrt.pop %v8970
          %v9003 = vrsqrt.pop %v8971
          %v9004 = vrsqrt.pop %v8972
          %v9005 = vrsqrt.pop %v8973
          %v9006 = vrsqrt.pop %v8974
          %v9007 = vrsqrt.pop %v8975
          %v9008 = vrsqrt.pop %v8976
          %v9009 = vrsqrt.pop %v8977
          %v9010 = vrsqrt.pop %v8978
          %v9011 = vrsqrt.pop %v8979
          %v9012 = vrsqrt.pop %v8980
          %v9013 = vrsqrt.pop %v8981
          %v9014 = vrsqrt.pop %v8982
          %v9015 = vrsqrt.pop %v8983
          %v9016 = vrsqrt.pop %v8984
          %v9017 = vrsqrt.pop %v8985
          %v9018 = vrsqrt.pop %v8986
          %v9019 = vrsqrt.pop %v8987
          %v9020 = vrsqrt.pop %v8988
          %v9021 = vrsqrt.pop %v8989
          %v9022 = vrsqrt.pop %v8990
          %v9023 = vrsqrt.pop %v8991
          %v9024 = vrsqrt.pop %v8992
          %v9025 = vrsqrt.pop %v8993
          %v9026 = vrsqrt.pop %v8994
          %v9027 = vrsqrt.pop %v8995
          %v9028 = vrsqrt.pop %v8996
          %v9029 = vrsqrt.pop %v8997
          %v9030 = vrsqrt.pop %v8998
          %v9031 = vrsqrt.pop %v8999
          %v9032 = vrsqrt.pop %v9000
          %v9033 = vrsqrt.pop %v9001
          %v9034 = vmul.f32 %v8810, %v9002
          %v9035 = vmul.f32 %v8811, %v9003
          %v9036 = vmul.f32 %v8812, %v9004
          %v9037 = vmul.f32 %v8813, %v9005
          %v9038 = vmul.f32 %v8814, %v9006
          %v9039 = vmul.f32 %v8815, %v9007
          %v9040 = vmul.f32 %v8816, %v9008
          %v9041 = vmul.f32 %v8817, %v9009
          %v9042 = vmul.f32 %v8818, %v9010
          %v9043 = vmul.f32 %v8819, %v9011
          %v9044 = vmul.f32 %v8820, %v9012
          %v9045 = vmul.f32 %v8821, %v9013
          %v9046 = vmul.f32 %v8822, %v9014
          %v9047 = vmul.f32 %v8823, %v9015
          %v9048 = vmul.f32 %v8824, %v9016
          %v9049 = vmul.f32 %v8825, %v9017
          %v9050 = vmul.f32 %v8826, %v9018
          %v9051 = vmul.f32 %v8827, %v9019
          %v9052 = vmul.f32 %v8828, %v9020
          %v9053 = vmul.f32 %v8829, %v9021
          %v9054 = vmul.f32 %v8830, %v9022
          %v9055 = vmul.f32 %v8831, %v9023
          %v9056 = vmul.f32 %v8832, %v9024
          %v9057 = vmul.f32 %v8833, %v9025
          %v9058 = vmul.f32 %v8834, %v9026
          %v9059 = vmul.f32 %v8835, %v9027
          %v9060 = vmul.f32 %v8836, %v9028
          %v9061 = vmul.f32 %v8837, %v9029
          %v9062 = vmul.f32 %v8838, %v9030
          %v9063 = vmul.f32 %v8839, %v9031
          %v9064 = vmul.f32 %v8840, %v9032
          %v9065 = vmul.f32 %v8841, %v9033
          %v9066 = vld [vmem:[%s14] sm:$0x1]
          %v9068 = vlaneseq
          %v9069 = vshrl.u32 %v9068, 7
          %v9070 = vsub.s32 0, %v9069
          %v9071 = vrot.slane %v9066, %v9070
          %v9073 = vmul.f32 %v9034, %v9071
          %v9074 = vmul.f32 %v9035, %v9071
          %v9075 = vmul.f32 %v9036, %v9071
          %v9076 = vmul.f32 %v9037, %v9071
          %v9077 = vmul.f32 %v9038, %v9071
          %v9078 = vmul.f32 %v9039, %v9071
          %v9079 = vmul.f32 %v9040, %v9071
          %v9080 = vmul.f32 %v9041, %v9071
          %v9081 = vmul.f32 %v9042, %v9071
          %v9082 = vmul.f32 %v9043, %v9071
          %v9083 = vmul.f32 %v9044, %v9071
          %v9084 = vmul.f32 %v9045, %v9071
          %v9085 = vmul.f32 %v9046, %v9071
          %v9086 = vmul.f32 %v9047, %v9071
          %v9087 = vmul.f32 %v9048, %v9071
          %v9088 = vmul.f32 %v9049, %v9071
          %v9089 = vmul.f32 %v9050, %v9071
          %v9090 = vmul.f32 %v9051, %v9071
          %v9091 = vmul.f32 %v9052, %v9071
          %v9092 = vmul.f32 %v9053, %v9071
          %v9093 = vmul.f32 %v9054, %v9071
          %v9094 = vmul.f32 %v9055, %v9071
          %v9095 = vmul.f32 %v9056, %v9071
          %v9096 = vmul.f32 %v9057, %v9071
          %v9097 = vmul.f32 %v9058, %v9071
          %v9098 = vmul.f32 %v9059, %v9071
          %v9099 = vmul.f32 %v9060, %v9071
          %v9100 = vmul.f32 %v9061, %v9071
          %v9101 = vmul.f32 %v9062, %v9071
          %v9102 = vmul.f32 %v9063, %v9071
          %v9103 = vmul.f32 %v9064, %v9071
          %v9104 = vmul.f32 %v9065, %v9071
          %v9105 = vld [vmem:[%s15] sm:$0x1]
          %v9107 = vlaneseq
          %v9108 = vshrl.u32 %v9107, 7
          %v9109 = vsub.s32 0, %v9108
          %v9110 = vrot.slane %v9105, %v9109
          %v9112 = vadd.f32 %v9073, %v9110
          %v9113 = vadd.f32 %v9074, %v9110
          %v9114 = vadd.f32 %v9075, %v9110
          %v9115 = vadd.f32 %v9076, %v9110
          %v9116 = vadd.f32 %v9077, %v9110
          %v9117 = vadd.f32 %v9078, %v9110
          %v9118 = vadd.f32 %v9079, %v9110
          %v9119 = vadd.f32 %v9080, %v9110
          %v9120 = vadd.f32 %v9081, %v9110
          %v9121 = vadd.f32 %v9082, %v9110
          %v9122 = vadd.f32 %v9083, %v9110
          %v9123 = vadd.f32 %v9084, %v9110
          %v9124 = vadd.f32 %v9085, %v9110
          %v9125 = vadd.f32 %v9086, %v9110
          %v9126 = vadd.f32 %v9087, %v9110
          %v9127 = vadd.f32 %v9088, %v9110
          %v9128 = vadd.f32 %v9089, %v9110
          %v9129 = vadd.f32 %v9090, %v9110
          %v9130 = vadd.f32 %v9091, %v9110
          %v9131 = vadd.f32 %v9092, %v9110
          %v9132 = vadd.f32 %v9093, %v9110
          %v9133 = vadd.f32 %v9094, %v9110
          %v9134 = vadd.f32 %v9095, %v9110
          %v9135 = vadd.f32 %v9096, %v9110
          %v9136 = vadd.f32 %v9097, %v9110
          %v9137 = vadd.f32 %v9098, %v9110
          %v9138 = vadd.f32 %v9099, %v9110
          %v9139 = vadd.f32 %v9100, %v9110
          %v9140 = vadd.f32 %v9101, %v9110
          %v9141 = vadd.f32 %v9102, %v9110
          %v9142 = vadd.f32 %v9103, %v9110
          %v9143 = vadd.f32 %v9104, %v9110
          %v9144 = vpack.c.bf16 %v9113, %v9112
          %v9145 = vpack.c.bf16 %v9115, %v9114
          %v9146 = vpack.c.bf16 %v9117, %v9116
          %v9147 = vpack.c.bf16 %v9119, %v9118
          %v9148 = vpack.c.bf16 %v9121, %v9120
          %v9149 = vpack.c.bf16 %v9123, %v9122
          %v9150 = vpack.c.bf16 %v9125, %v9124
          %v9151 = vpack.c.bf16 %v9127, %v9126
          %v9152 = vpack.c.bf16 %v9129, %v9128
          %v9153 = vpack.c.bf16 %v9131, %v9130
          %v9154 = vpack.c.bf16 %v9133, %v9132
          %v9155 = vpack.c.bf16 %v9135, %v9134
          %v9156 = vpack.c.bf16 %v9137, %v9136
          %v9157 = vpack.c.bf16 %v9139, %v9138
          %v9158 = vpack.c.bf16 %v9141, %v9140
          %v9159 = vpack.c.bf16 %v9143, %v9142
          %v9176 = vunpack.c.l.b16 %v9144
          %v9177 = vunpack.c.h.b16 %v9144
          %v9178 = vunpack.c.l.b16 %v9145
          %v9179 = vunpack.c.h.b16 %v9145
          %v9180 = vunpack.c.l.b16 %v9146
          %v9181 = vunpack.c.h.b16 %v9146
          %v9182 = vunpack.c.l.b16 %v9147
          %v9183 = vunpack.c.h.b16 %v9147
          %v9184 = vunpack.c.l.b16 %v9148
          %v9185 = vunpack.c.h.b16 %v9148
          %v9186 = vunpack.c.l.b16 %v9149
          %v9187 = vunpack.c.h.b16 %v9149
          %v9188 = vunpack.c.l.b16 %v9150
          %v9189 = vunpack.c.h.b16 %v9150
          %v9190 = vunpack.c.l.b16 %v9151
          %v9191 = vunpack.c.h.b16 %v9151
          %v9192 = vunpack.c.l.b16 %v9152
          %v9193 = vunpack.c.h.b16 %v9152
          %v9194 = vunpack.c.l.b16 %v9153
          %v9195 = vunpack.c.h.b16 %v9153
          %v9196 = vunpack.c.l.b16 %v9154
          %v9197 = vunpack.c.h.b16 %v9154
          %v9198 = vunpack.c.l.b16 %v9155
          %v9199 = vunpack.c.h.b16 %v9155
          %v9200 = vunpack.c.l.b16 %v9156
          %v9201 = vunpack.c.h.b16 %v9156
          %v9202 = vunpack.c.l.b16 %v9157
          %v9203 = vunpack.c.h.b16 %v9157
          %v9204 = vunpack.c.l.b16 %v9158
          %v9205 = vunpack.c.h.b16 %v9158
          %v9206 = vunpack.c.l.b16 %v9159
          %v9207 = vunpack.c.h.b16 %v9159
          %v9208 = vpack.c.b16 %v9176, %v9176
          %v9209 = vpack.c.b16 %v9177, %v9177
          %v9210 = vpack.c.b16 %v9178, %v9178
          %v9211 = vpack.c.b16 %v9179, %v9179
          %v9212 = vpack.c.b16 %v9180, %v9180
          %v9213 = vpack.c.b16 %v9181, %v9181
          %v9214 = vpack.c.b16 %v9182, %v9182
          %v9215 = vpack.c.b16 %v9183, %v9183
          %v9216 = vpack.c.b16 %v9184, %v9184
          %v9217 = vpack.c.b16 %v9185, %v9185
          %v9218 = vpack.c.b16 %v9186, %v9186
          %v9219 = vpack.c.b16 %v9187, %v9187
          %v9220 = vpack.c.b16 %v9188, %v9188
          %v9221 = vpack.c.b16 %v9189, %v9189
          %v9222 = vpack.c.b16 %v9190, %v9190
          %v9223 = vpack.c.b16 %v9191, %v9191
          %v9224 = vpack.c.b16 %v9192, %v9192
          %v9225 = vpack.c.b16 %v9193, %v9193
          %v9226 = vpack.c.b16 %v9194, %v9194
          %v9227 = vpack.c.b16 %v9195, %v9195
          %v9228 = vpack.c.b16 %v9196, %v9196
          %v9229 = vpack.c.b16 %v9197, %v9197
          %v9230 = vpack.c.b16 %v9198, %v9198
          %v9231 = vpack.c.b16 %v9199, %v9199
          %v9232 = vpack.c.b16 %v9200, %v9200
          %v9233 = vpack.c.b16 %v9201, %v9201
          %v9234 = vpack.c.b16 %v9202, %v9202
          %v9235 = vpack.c.b16 %v9203, %v9203
          %v9236 = vpack.c.b16 %v9204, %v9204
          %v9237 = vpack.c.b16 %v9205, %v9205
          %v9238 = vpack.c.b16 %v9206, %v9206
          %v9239 = vpack.c.b16 %v9207, %v9207
          %9272 = vst [vmem:[%s807] sm:$0xf] %v9208
          %9273 = vst [vmem:[%s807 + $0x4] sm:$0xf] %v9209
          %9274 = vst [vmem:[%s807 + $0x8] sm:$0xf] %v9210
          %9275 = vst [vmem:[%s807 + $0xc] sm:$0xf] %v9211
          %9276 = vst [vmem:[%s807 + $0x10] sm:$0xf] %v9212
          %9277 = vst [vmem:[%s807 + $0x14] sm:$0xf] %v9213
          %9278 = vst [vmem:[%s807 + $0x18] sm:$0xf] %v9214
          %9279 = vst [vmem:[%s807 + $0x1c] sm:$0xf] %v9215
          %9280 = vst [vmem:[%s807 + $0x20] sm:$0xf] %v9216
          %9281 = vst [vmem:[%s807 + $0x24] sm:$0xf] %v9217
          %9282 = vst [vmem:[%s807 + $0x28] sm:$0xf] %v9218
          %9283 = vst [vmem:[%s807 + $0x2c] sm:$0xf] %v9219
          %9284 = vst [vmem:[%s807 + $0x30] sm:$0xf] %v9220
          %9285 = vst [vmem:[%s807 + $0x34] sm:$0xf] %v9221
          %9286 = vst [vmem:[%s807 + $0x38] sm:$0xf] %v9222
          %9287 = vst [vmem:[%s807 + $0x3c] sm:$0xf] %v9223
          %9288 = vst [vmem:[%s807 + $0x40] sm:$0xf] %v9224
          %9289 = vst [vmem:[%s807 + $0x44] sm:$0xf] %v9225
          %9290 = vst [vmem:[%s807 + $0x48] sm:$0xf] %v9226
          %9291 = vst [vmem:[%s807 + $0x4c] sm:$0xf] %v9227
          %9292 = vst [vmem:[%s807 + $0x50] sm:$0xf] %v9228
          %9293 = vst [vmem:[%s807 + $0x54] sm:$0xf] %v9229
          %9294 = vst [vmem:[%s807 + $0x58] sm:$0xf] %v9230
          %9295 = vst [vmem:[%s807 + $0x5c] sm:$0xf] %v9231
          %9296 = vst [vmem:[%s807 + $0x60] sm:$0xf] %v9232
          %9297 = vst [vmem:[%s807 + $0x64] sm:$0xf] %v9233
          %9298 = vst [vmem:[%s807 + $0x68] sm:$0xf] %v9234
          %9299 = vst [vmem:[%s807 + $0x6c] sm:$0xf] %v9235
          %9300 = vst [vmem:[%s807 + $0x70] sm:$0xf] %v9236
          %9301 = vst [vmem:[%s807 + $0x74] sm:$0xf] %v9237
          %9302 = vst [vmem:[%s807 + $0x78] sm:$0xf] %v9238
          %9303 = vst [vmem:[%s807 + $0x7c] sm:$0xf] %v9239
        $region112: #{tpu_custom_call.1} parent=83 // pred_fallthru
          _
        %s9304 = sand.u32 %s465, 1
        %s9305 = scalar_lea.sflag [#allocation5], %s9304
        %s9306 = sand.u32 %s465, 1
        %s9307 = smul.addr %s9306, 128
        %s9308 = scalar_lea.vmem [#allocation12], %s9307
        // Predicated region
        $region113: #{tpu_custom_call.1} parent=83 // pred_check
          %p9309 = pneg %p475
        $region114: #{tpu_custom_call.1} parent=83 // pred_check_branch
          %9311 = sbr.rel (%p9309) target = $region116
        $region115: #{tpu_custom_call.1} parent=83 // pred_region
          %s9312 = smul.u32 32, %s43
          %s9314 = ssub.s32 2048, 2048
          %9315 = vsyncadd %s9305, %s9314
          %s9316 = smul.addr %s9312, 64
          %s9317 = scalar_lea.hbm %s16, %s9316
          %s9318 = sshll.u32 %s9308, 4
          %s9319 = int_to_ptr.vmem [resolvable:$true] %s9318
          %9324 = dma.vmem_to_hbm [thread:$0]  %s9319, 2048, %s9317, %s9305, 64, 64, 4
        $region116: #{tpu_custom_call.1} parent=83 // pred_fallthru
          _
      $region84: #{tpu_custom_call.1} parent=5 // pred_fallthru
        _
      %p9325 = scmp.le.s32.totalorder 2, %s34
      // Predicated region
      $region117: #{tpu_custom_call.1} parent=5 // pred_check
        %p9326 = pneg %p9325
      $region118: #{tpu_custom_call.1} parent=5 // pred_check_branch
        %9328 = sbr.rel (%p9326) target = $region120
      $region119: #{tpu_custom_call.1} parent=5 // pred_region
        %s9329 = ssub.s32 %s34, 2
        // Predicated region
        $region121: #{tpu_custom_call.1} parent=119 // pred_check
          %p9330 = pneg %p481
        $region122: #{tpu_custom_call.1} parent=119 // pred_check_branch
          %9332 = sbr.rel (%p9330) target = $region124
        $region123: #{tpu_custom_call.1} parent=119 // pred_region
          %s9333 = sand.u32 %s466, 1
          %s9334 = scalar_lea.sflag [#allocation5], %s9333
          %s9335 = sand.u32 %s466, 1
          %s9336 = smul.addr %s9335, 128
          %s9337 = scalar_lea.vmem [#allocation12], %s9336
          %9338 = dma.done %s9334, 2048
        $region124: #{tpu_custom_call.1} parent=119 // pred_fallthru
          _
      $region120: #{tpu_custom_call.1} parent=5 // pred_fallthru
        _
    $region6: #{tpu_custom_call.1} parent=1 // loop_footer
      %s38 = sadd.s32 1, %s34
    $region7: #{tpu_custom_call.1} parent=1 // loop_footer_branch
      %33 = sbr.rel target = $region3
    $region8: #{tpu_custom_call.1} parent=1 // loop_exit
      _
    %9339 = vsyncpa [#allocation4], 1
    %s9340 = scalar_lea.sflag [#allocation4], 1
    %9341 = vsyncpa %s9340, 1
    %9342 = vsyncpa [#allocation7], 1
    %s9343 = scalar_lea.sflag [#allocation7], 1
    %9344 = vsyncpa %s9343, 1
    %9345 = vsyncpa [#allocation10], 1
    %s9346 = scalar_lea.sflag [#allocation10], 1
    %9347 = vsyncpa %s9346, 1
    %9348 = vsyncpa [#allocation5], 1
    %s9349 = scalar_lea.sflag [#allocation5], 1
    %9350 = vsyncpa %s9349, 1

</llo_original>
